<compile_context>
chip_gen: v6e
topology: v6e:2x2x1
jax: 0.10.0
libtpu: 0.0.40
codegen_flags: <defaults>
</compile_context>

<pallas_src>
import numpy as np
import jax
import jax.numpy as jnp
from jax.experimental import pallas as pl
from jax.experimental.pallas import tpu as pltpu

# ----------------------------- small config ---------------------------------
B = 2          # batch
T = 32         # sequence length
E = 64         # text / categorical embedding width (stands in for 1024)
L = 4          # number of text tokens
D_NV = 6       # numeric variables
D_CV = 4       # categorical variables
N_VARS = D_NV + D_CV
D_MODEL = 32
PATCH = 8
STRIDE = 8     # == patch -> patching is a pure reshape
NPATCH = (T - PATCH) // STRIDE + 1
assert NPATCH * PATCH == T

BN = B * NPATCH
D2 = D_MODEL // 2
D4 = D_MODEL // 4
PE = PATCH * E
VD4 = N_VARS * D4
OUT_W = 256                       # packed lane-dense small-output slab width
_EPS = 1e-5

PARAM_NAMES = ["W320", "W160", "W80", "Wp1", "Wp2",
               "B320", "B160", "B80", "b_p1", "b_p2",
               "M_P", "M_d", "M_d2", "M_d4", "S_bn", "S_bb"]


def _full_spec(shape):
    return pl.BlockSpec(shape, lambda i: (0,) * len(shape))


# --------------------------- parameter building ------------------------------
def _init_linear(key, k_in, k_out):
    kw, kb = jax.random.split(key)
    w = np.asarray(jax.random.normal(kw, (k_in, k_out), jnp.float32)) / np.sqrt(k_in)
    b = 0.02 * np.asarray(jax.random.normal(kb, (k_out,), jnp.float32))
    return w.astype(np.float32), b.astype(np.float32)


def _init_mixer(key, d):
    k1, k2, k3 = jax.random.split(key, 3)
    return {"ln_g": np.ones((d,), np.float32), "ln_b": np.zeros((d,), np.float32),
            "fc1": _init_linear(k1, d, d), "fc2": _init_linear(k2, d, d),
            "cproj": _init_linear(k3, d, d)}


def _blkdiag(w, reps):
    k, f = w.shape
    out = np.zeros((reps * k, reps * f), np.float32)
    for r in range(reps):
        out[r * k:(r + 1) * k, r * f:(r + 1) * f] = w
    return out


def _tile_row(b, reps):
    return np.tile(np.asarray(b, np.float32).reshape(1, -1), (1, reps))


def _pack_mixer(m):
    # LayerNorm affine (g, b) folded into fc1: (n*g + b) @ W1 + b1
    g = _tile_row(m["ln_g"], N_VARS)
    bln = _tile_row(m["ln_b"], N_VARS)
    w1, b1 = m["fc1"]
    w2, b2 = m["fc2"]
    wc, bc = m["cproj"]
    w1_bd = _blkdiag(w1, N_VARS)
    return {"w1": g.T * w1_bd, "b1": bln @ w1_bd + _tile_row(b1, N_VARS),
            "w2": _blkdiag(w2, N_VARS), "b2": _tile_row(b2, N_VARS),
            "wc": _blkdiag(wc, N_VARS), "bc": _tile_row(bc, N_VARS)}


def _block_mean_matrix(dk):
    m = np.zeros((N_VARS * dk, N_VARS * dk), np.float32)
    for v in range(N_VARS):
        m[v * dk:(v + 1) * dk, v * dk:(v + 1) * dk] = 1.0 / dk
    return m


def build_params(seed=42):
    """Init logical CVAE parameters, pack into few bf16/f32 slabs + indices."""
    D = D_MODEL
    ki = iter(jax.random.split(jax.random.PRNGKey(seed), 32))

    w_e1, b_e1 = _init_linear(next(ki), PATCH, D)          # NumEmbedding
    w_e2, b_e2 = _init_linear(next(ki), E, D)              # CatEmbedding
    w_e3, b_e3 = _init_linear(next(ki), E, N_VARS * D)     # TextEmbedding
    enc1 = _init_mixer(next(ki), D)
    ds1x = _init_linear(next(ki), D, D2)
    ds1c = _init_linear(next(ki), D, D2)
    enc2 = _init_mixer(next(ki), D2)
    ds2x = _init_linear(next(ki), D2, D4)
    ds2c = _init_linear(next(ki), D2, D4)
    enc3 = _init_mixer(next(ki), D4)
    w_lin, b_lin = _init_linear(next(ki), D4, D2)          # mu / log_var
    dec1 = _init_mixer(next(ki), D4)
    us1x = _init_linear(next(ki), D4, D2)
    us1c = _init_linear(next(ki), D4, D2)
    dec2 = _init_mixer(next(ki), D2)
    us2x = _init_linear(next(ki), D2, D)
    us2c = _init_linear(next(ki), D2, D)
    dec3 = _init_mixer(next(ki), D)
    w_p1, b_p1 = _init_linear(next(ki), D, PATCH)          # NumProjection
    w_p2, b_p2 = _init_linear(next(ki), D, PE)             # CatProjection
    rev_w = np.ones((D_NV,), np.float32)                   # RevIN affine
    rev_b = np.zeros((D_NV,), np.float32)
    # TODO(synk): if rev_w were learned near 0 add an eps guard to 1/rev_w.

    rev_w_l = np.repeat(rev_w, PATCH)
    rev_b_l = np.repeat(rev_b, PATCH)

    # ---- embeddings (kernel variable order: categorical first, then numeric) -
    W_e1 = np.zeros((D_NV * PATCH, N_VARS * D), np.float32)
    for v in range(D_NV):
        W_e1[v * PATCH:(v + 1) * PATCH, (D_CV + v) * D:(D_CV + v + 1) * D] = w_e1
    b_rev = rev_b_l[None, :] @ W_e1            # RevIN shift folded in
    W_e1 = rev_w_l[:, None] * W_e1             # RevIN scale folded in

    W_e2 = np.zeros((D_CV * E, N_VARS * D), np.float32)
    for j in range(D_CV):
        W_e2[j * E:(j + 1) * E, j * D:(j + 1) * D] = w_e2

    b_e = (np.concatenate([np.tile(b_e2, D_CV), np.tile(b_e1, D_NV)])[None, :]
           + b_rev).astype(np.float32)

    perm_e3 = list(range(D_NV, N_VARS)) + list(range(D_NV))   # cat blocks first
    w_e3_k = np.concatenate([w_e3[:, v * D:(v + 1) * D] for v in perm_e3], axis=1)
    b_e3_k = np.concatenate([b_e3[v * D:(v + 1) * D] for v in perm_e3])[None, :]
    W_e3 = (np.tile(w_e3_k, (L, 1)) / L).astype(np.float32)   # mean-over-L folded

    # ---- bottleneck & projections --------------------------------------------
    W_mu = _blkdiag(w_lin[:, :D4], N_VARS)
    b_mu = _tile_row(b_lin[:D4], N_VARS)
    W_lv = _blkdiag(w_lin[:, D4:], N_VARS)
    b_lv = _tile_row(b_lin[D4:], N_VARS)

    W_p1 = np.zeros((D_NV * D, D_NV * PATCH), np.float32)
    for v in range(D_NV):
        W_p1[v * D:(v + 1) * D, v * PATCH:(v + 1) * PATCH] = w_p1
    W_p1 = W_p1 / rev_w_l[None, :]                       # RevIN denorm fold
    b_p1k = ((np.tile(b_p1, D_NV) - rev_b_l) / rev_w_l)[None, :].astype(np.float32)

    W_p2 = np.zeros((D_CV * D, D_CV * PE), np.float32)
    for j in range(D_CV):
        W_p2[j * D:(j + 1) * D, j * PE:(j + 1) * PE] = w_p2
    b_p2k = _tile_row(b_p2, D_CV)

    # ---- constant pooling / broadcast matrices (pre-multiplied) --------------
    M_P = np.zeros((D_NV * PATCH, D_NV * PATCH), np.float32)
    for v in range(D_NV):
        M_P[v * PATCH:(v + 1) * PATCH, v * PATCH:(v + 1) * PATCH] = 1.0 / T
    M_d, M_d2, M_d4 = (_block_mean_matrix(d) for d in (D, D2, D4))
    S_bn = np.zeros((BN, B), np.float32)
    S_bb = np.zeros((BN, BN), np.float32)
    for b in range(B):
        S_bn[b * NPATCH:(b + 1) * NPATCH, b] = 1.0
        S_bb[b * NPATCH:(b + 1) * NPATCH, b * NPATCH:(b + 1) * NPATCH] = 1.0

    # ---- slab packing ---------------------------------------------------------
    mix = {n: _pack_mixer(m) for n, m in
           (("enc1", enc1), ("enc2", enc2), ("enc3", enc3),
            ("dec1", dec1), ("dec2", dec2), ("dec3", dec3))}

    def mixw(t): return [(f"{t}_w1", mix[t]["w1"]), (f"{t}_w2", mix[t]["w2"]),
                         (f"{t}_wc", mix[t]["wc"])]

    def mixb(t): return [(f"{t}_b1", mix[t]["b1"]), (f"{t}_b2", mix[t]["b2"]),
                         (f"{t}_bc", mix[t]["bc"])]

    def rsw(t, lx, lc): return [(f"{t}_wx", _blkdiag(lx[0], N_VARS)),
                                (f"{t}_wc", _blkdiag(lc[0], N_VARS))]

    def rsb(t, lx, lc): return [(f"{t}_bx", _tile_row(lx[1], N_VARS)),
                                (f"{t}_bc", _tile_row(lc[1], N_VARS))]

    slab_entries = {
        "W320": [("W_e1", W_e1), ("W_e2", W_e2), ("W_e3", W_e3)]
                + mixw("enc1") + mixw("dec3") + rsw("us2", us2x, us2c),
        "W160": rsw("ds1", ds1x, ds1c) + mixw("enc2") + mixw("dec2")
                + rsw("us1", us1x, us1c),
        "W80": rsw("ds2", ds2x, ds2c) + mixw("enc3") + mixw("dec1")
               + [("W_mu", W_mu), ("W_lv", W_lv)],
    }
    bias_entries = {
        "B320": [("b_e", b_e), ("b_e3", b_e3_k)] + mixb("enc1") + mixb("dec3")
                + rsb("us2", us2x, us2c),
        "B160": rsb("ds1", ds1x, ds1c) + mixb("enc2") + mixb("dec2")
                + rsb("us1", us1x, us1c),
        "B80": rsb("ds2", ds2x, ds2c) + mixb("enc3") + mixb("dec1")
               + [("b_mu", b_mu), ("b_lv", b_lv)],
    }

    arrays, widx, bidx = {}, {}, {}
    for sname, entries in slab_entries.items():        # bf16 weight slabs
        off, mats = 0, []
        for name, a in entries:
            widx[name] = (sname, off, a.shape[0])
            mats.append(np.asarray(a, np.float32))
            off += a.shape[0]
        arrays[sname] = jnp.asarray(np.concatenate(mats, 0), jnp.bfloat16)
    for sname, entries in bias_entries.items():        # f32 bias slabs
        rows = []
        for r, (name, a) in enumerate(entries):
            bidx[name] = (sname, r)
            rows.append(np.asarray(a, np.float32).reshape(1, -1))
        arrays[sname] = jnp.asarray(np.concatenate(rows, 0), jnp.float32)

    widx["W_p1"] = ("Wp1", 0, W_p1.shape[0])
    widx["W_p2"] = ("Wp2", 0, W_p2.shape[0])
    arrays["Wp1"] = jnp.asarray(W_p1, jnp.bfloat16)
    arrays["Wp2"] = jnp.asarray(W_p2, jnp.bfloat16)
    arrays["b_p1"] = jnp.asarray(b_p1k, jnp.float32)
    arrays["b_p2"] = jnp.asarray(b_p2k, jnp.float32)
    for n, a in (("M_P", M_P), ("M_d", M_d), ("M_d2", M_d2), ("M_d4", M_d4),
                 ("S_bn", S_bn), ("S_bb", S_bb)):
        arrays[n] = jnp.asarray(a, jnp.float32)
    return arrays, widx, bidx


# ------------------------------ fused kernel ---------------------------------
def _make_cvae_kernel(widx, bidx):
    pos = {n: i for i, n in enumerate(PARAM_NAMES)}
    NP = len(PARAM_NAMES)

    def kernel(*refs):
        x1p = refs[0][...]            # (BN, D_NV*P)    numeric patches
        x2m = refs[1][...]            # (BN, D_CV*E)    cat, pooled over patch
        c_in = refs[2][...]           # (B,  L*E)       text tokens
        noise = refs[3][...]          # (BN, V*D4)      reparameterization noise
        pr = refs[4:4 + NP]
        out_small_ref, y2_ref = refs[4 + NP:]

        def W(name):                                   # bf16 weight (rows slice)
            slab, off, n = widx[name]
            return pr[pos[slab]][off:off + n, :]

        def Bv(name):                                  # f32 bias row
            slab, r = bidx[name]
            return pr[pos[slab]][r:r + 1, :]

        def P(name):
            return pr[pos[name]][...]

        def bdot(a, w):   # bf16 MXU operands, f32 accumulation
            return jnp.dot(a.astype(jnp.bfloat16), w,
                           preferred_element_type=jnp.float32)

        def fdot(a, w):   # f32 statistics / broadcast matmuls
            return jnp.dot(a, w, preferred_element_type=jnp.float32)

        S_bn, S_bb, M_P = P("S_bn"), P("S_bb"), P("M_P")

        # ---- RevIN 'norm': per-(batch, numeric-var) stats over T (f32) -------
        mean_l = fdot(S_bb, fdot(x1p, M_P))             # (BN, D_NV*P)
        xc0 = x1p - mean_l
        var_l = fdot(S_bb, fdot(xc0 * xc0, M_P))
        inv_std = jax.lax.rsqrt(var_l + _EPS)
        std_l = jnp.sqrt(var_l + _EPS)
        x1n = xc0 * inv_std                             # affine folded into W_e1

        # ---- embeddings (cat vars occupy lanes [0,128), numeric the rest) ----
        x = bdot(x1n, W("W_e1")) + bdot(x2m, W("W_e2")) + Bv("b_e")   # (BN, V*D)
        cond = bdot(c_in, W("W_e3")) + Bv("b_e3")                     # (B,  V*D)

        def mixer(x, cond, tag, M):
            mu_b = fdot(x, M)                           # per-var-block mean
            xc = x - mu_b
            var_b = fdot(xc * xc, M)
            h = xc * jax.lax.rsqrt(var_b + _EPS)        # LN affine folded in w1/b1
            h = jax.nn.gelu(bdot(h, W(tag + "_w1")) + Bv(tag + "_b1"),
                            approximate=True)
            h = bdot(h, W(tag + "_w2")) + Bv(tag + "_b2")
            cadd = bdot(cond, W(tag + "_wc")) + Bv(tag + "_bc")   # B rows only
            return x + h + fdot(S_bn, cadd)

        def resample(x, cond, tag):
            return (bdot(x, W(tag + "_wx")) + Bv(tag + "_bx"),
                    bdot(cond, W(tag + "_wc")) + Bv(tag + "_bc"))

        M_d, M_d2, M_d4 = P("M_d"), P("M_d2"), P("M_d4")

        # ---- encoder ----
        x = mixer(x, cond, "enc1", M_d)
        x, cond = resample(x, cond, "ds1")
        x = mixer(x, cond, "enc2", M_d2)
        x, cond = resample(x, cond, "ds2")
        x = mixer(x, cond, "enc3", M_d4)

        # ---- bottleneck: (mu, log_var) -> reparameterize (f32 elementwise) ---
        mu = bdot(x, W("W_mu")) + Bv("b_mu")
        lv = bdot(x, W("W_lv")) + Bv("b_lv")
        z = mu + noise * jnp.exp(0.5 * lv)

        # ---- decoder ----
        h = mixer(z, cond, "dec1", M_d4)
        h, cond = resample(h, cond, "us1")
        h = mixer(h, cond, "dec2", M_d2)
        h, cond = resample(h, cond, "us2")
        h = mixer(h, cond, "dec3", M_d)

        # ---- projections (128-lane aligned slices) + RevIN 'denorm' ----------
        h_cat = h[:, :D_CV * D_MODEL]                   # lanes [0, 128)
        h_num = h[:, D_CV * D_MODEL:]                   # lanes [128, 320)
        y2_ref[...] = bdot(h_cat, W("W_p2")) + P("b_p2")
        y1 = (bdot(h_num, W("W_p1")) + P("b_p1")) * std_l + mean_l

        pad = jnp.zeros((BN, OUT_W - 2 * VD4 - D_NV * PATCH), jnp.float32)
        out_small_ref[...] = jnp.concatenate([mu, lv, y1, pad], axis=-1)

    return kernel


# ------------------------------ forward wrapper -------------------------------
def make_forward(widx, bidx):
    kernel = _make_cvae_kernel(widx, bidx)
    out_shapes = (jax.ShapeDtypeStruct((BN, OUT_W), jnp.float32),
                  jax.ShapeDtypeStruct((BN, D_CV * PE), jnp.float32))

    def forward(params, x1, x2, c, eps_key):
        # -- boundary layout plumbing (contiguous reshapes + patch pooling) ----
        x1p = jnp.transpose(x1.reshape(B, NPATCH, PATCH, D_NV),
                            (0, 1, 3, 2)).reshape(BN, D_NV * PATCH)
        x2m = x2.reshape(B, NPATCH, PATCH, D_CV, E).mean(axis=2)
        x2m = x2m.reshape(BN, D_CV * E)
        c_in = c.reshape(B, L * E)
        noise = jax.random.normal(eps_key, (BN, VD4), jnp.float32)

        args = [x1p, x2m, c_in, noise] + [params[n] for n in PARAM_NAMES]
        in_specs = [_full_spec(a.shape) for a in args]
        out_specs = tuple(_full_spec(s.shape) for s in out_shapes)

        small, y2p = pl.pallas_call(
            kernel,
            grid=(1,),
            out_shape=out_shapes,
            in_specs=in_specs,
            out_specs=out_specs,
            compiler_params=pltpu.CompilerParams(
                dimension_semantics=("arbitrary",),
                vmem_limit_bytes=32 * 1024 * 1024),
        )(*args)

        # -- split lane-dense output slab, back to reference layouts -----------
        mu2 = small[:, :VD4]
        lv2 = small[:, VD4:2 * VD4]
        y1p = small[:, 2 * VD4:2 * VD4 + D_NV * PATCH]

        y1 = jnp.transpose(y1p.reshape(B, NPATCH, D_NV, PATCH),
                           (0, 1, 3, 2)).reshape(B, T, D_NV)
        y2 = jnp.transpose(y2p.reshape(B, NPATCH, D_CV, PATCH, E),
                           (0, 1, 3, 2, 4)).reshape(B, T, D_CV, E)
        # kernel uses cat-first variable order; reference returns num-first
        perm = list(range(D_CV, N_VARS)) + list(range(D_CV))
        mu = jnp.transpose(mu2.reshape(B, NPATCH, N_VARS, D4)[:, :, perm, :],
                           (0, 2, 1, 3))
        log_var = jnp.transpose(lv2.reshape(B, NPATCH, N_VARS, D4)[:, :, perm, :],
                                (0, 2, 1, 3))
        return y1, y2, mu, log_var

    return forward


if __name__ == "__main__":
    key = jax.random.PRNGKey(0)
    k1, k2, k3, keps = jax.random.split(key, 4)
    x1 = jax.random.normal(k1, (B, T, D_NV), jnp.float32)
    x2 = jax.random.normal(k2, (B, T, D_CV, E), jnp.float32)
    c = jax.random.normal(k3, (B, L, E), jnp.float32)

    params, widx, bidx = build_params(42)
    fwd = jax.jit(make_forward(widx, bidx))

    y1, y2, mu, log_var = fwd(params, x1, x2, c, keps)
    jax.block_until_ready((y1, y2, mu, log_var))

    assert y1.shape == (B, T, D_NV)
    assert y2.shape == (B, T, D_CV, E)
    assert mu.shape == (B, N_VARS, NPATCH, D_MODEL // 4)
    assert log_var.shape == mu.shape
    assert all(bool(jnp.isfinite(a).all()) for a in (y1, y2, mu, log_var))
    print("KERNEL_OK")
</pallas_src>

<mosaic_0001>
module attributes {stable_mosaic.version = 11 : i64} {
  func.func @kernel(%arg0: i32, %arg1: memref<8x48xf32, #tpu.memory_space<vmem>>, %arg2: memref<8x256xf32, #tpu.memory_space<vmem>>, %arg3: memref<2x256xf32, #tpu.memory_space<vmem>>, %arg4: memref<8x80xf32, #tpu.memory_space<vmem>>, %arg5: memref<2800x320xbf16, #tpu.memory_space<vmem>>, %arg6: memref<1760x160xbf16, #tpu.memory_space<vmem>>, %arg7: memref<960x80xbf16, #tpu.memory_space<vmem>>, %arg8: memref<192x48xbf16, #tpu.memory_space<vmem>>, %arg9: memref<128x2048xbf16, #tpu.memory_space<vmem>>, %arg10: memref<10x320xf32, #tpu.memory_space<vmem>>, %arg11: memref<10x160xf32, #tpu.memory_space<vmem>>, %arg12: memref<10x80xf32, #tpu.memory_space<vmem>>, %arg13: memref<1x48xf32, #tpu.memory_space<vmem>>, %arg14: memref<1x2048xf32, #tpu.memory_space<vmem>>, %arg15: memref<48x48xf32, #tpu.memory_space<vmem>>, %arg16: memref<320x320xf32, #tpu.memory_space<vmem>>, %arg17: memref<160x160xf32, #tpu.memory_space<vmem>>, %arg18: memref<80x80xf32, #tpu.memory_space<vmem>>, %arg19: memref<8x2xf32, #tpu.memory_space<vmem>>, %arg20: memref<8x8xf32, #tpu.memory_space<vmem>>, %arg21: memref<8x256xf32, #tpu.memory_space<vmem>>, %arg22: memref<8x2048xf32, #tpu.memory_space<vmem>>) attributes {dimension_semantics = [#tpu.dimension_semantics<arbitrary>], iteration_bounds = array<i64: 1>, scalar_prefetch = 0 : i64, scratch_operands = 0 : i64, tpu.core_type = #tpu.core_type<tc>, window_params = [{pipeline_mode = #tpu.pipeline_mode<synchronous>, transform_indices = @transform_0, window_bounds = array<i64: 8, 48>}, {pipeline_mode = #tpu.pipeline_mode<synchronous>, transform_indices = @transform_1, window_bounds = array<i64: 8, 256>}, {pipeline_mode = #tpu.pipeline_mode<synchronous>, transform_indices = @transform_2, window_bounds = array<i64: 2, 256>}, {pipeline_mode = #tpu.pipeline_mode<synchronous>, transform_indices = @transform_3, window_bounds = array<i64: 8, 80>}, {pipeline_mode = #tpu.pipeline_mode<synchronous>, transform_indices = @transform_4, window_bounds = array<i64: 2800, 320>}, {pipeline_mode = #tpu.pipeline_mode<synchronous>, transform_indices = @transform_5, window_bounds = array<i64: 1760, 160>}, {pipeline_mode = #tpu.pipeline_mode<synchronous>, transform_indices = @transform_6, window_bounds = array<i64: 960, 80>}, {pipeline_mode = #tpu.pipeline_mode<synchronous>, transform_indices = @transform_7, window_bounds = array<i64: 192, 48>}, {pipeline_mode = #tpu.pipeline_mode<synchronous>, transform_indices = @transform_8, window_bounds = array<i64: 128, 2048>}, {pipeline_mode = #tpu.pipeline_mode<synchronous>, transform_indices = @transform_9, window_bounds = array<i64: 10, 320>}, {pipeline_mode = #tpu.pipeline_mode<synchronous>, transform_indices = @transform_10, window_bounds = array<i64: 10, 160>}, {pipeline_mode = #tpu.pipeline_mode<synchronous>, transform_indices = @transform_11, window_bounds = array<i64: 10, 80>}, {pipeline_mode = #tpu.pipeline_mode<synchronous>, transform_indices = @transform_12, window_bounds = array<i64: 1, 48>}, {pipeline_mode = #tpu.pipeline_mode<synchronous>, transform_indices = @transform_13, window_bounds = array<i64: 1, 2048>}, {pipeline_mode = #tpu.pipeline_mode<synchronous>, transform_indices = @transform_14, window_bounds = array<i64: 48, 48>}, {pipeline_mode = #tpu.pipeline_mode<synchronous>, transform_indices = @transform_15, window_bounds = array<i64: 320, 320>}, {pipeline_mode = #tpu.pipeline_mode<synchronous>, transform_indices = @transform_16, window_bounds = array<i64: 160, 160>}, {pipeline_mode = #tpu.pipeline_mode<synchronous>, transform_indices = @transform_17, window_bounds = array<i64: 80, 80>}, {pipeline_mode = #tpu.pipeline_mode<synchronous>, transform_indices = @transform_18, window_bounds = array<i64: 8, 2>}, {pipeline_mode = #tpu.pipeline_mode<synchronous>, transform_indices = @transform_19, window_bounds = array<i64: 8, 8>}, {pipeline_mode = #tpu.pipeline_mode<synchronous>, transform_indices = @transform_20, window_bounds = array<i64: 8, 256>}, {pipeline_mode = #tpu.pipeline_mode<synchronous>, transform_indices = @transform_21, window_bounds = array<i64: 8, 2048>}]} {
    %c0 = arith.constant 0 : index
    %c0_0 = arith.constant 0 : index
    %0 = vector.load %arg1[%c0, %c0_0] : memref<8x48xf32, #tpu.memory_space<vmem>>, vector<8x48xf32>
    %c0_1 = arith.constant 0 : index
    %c0_2 = arith.constant 0 : index
    %1 = vector.load %arg2[%c0_1, %c0_2] : memref<8x256xf32, #tpu.memory_space<vmem>>, vector<8x256xf32>
    %c0_3 = arith.constant 0 : index
    %c0_4 = arith.constant 0 : index
    %2 = vector.load %arg3[%c0_3, %c0_4] : memref<2x256xf32, #tpu.memory_space<vmem>>, vector<2x256xf32>
    %c0_5 = arith.constant 0 : index
    %c0_6 = arith.constant 0 : index
    %3 = vector.load %arg4[%c0_5, %c0_6] : memref<8x80xf32, #tpu.memory_space<vmem>>, vector<8x80xf32>
    %c0_7 = arith.constant 0 : index
    %c0_8 = arith.constant 0 : index
    %4 = vector.load %arg19[%c0_7, %c0_8] : memref<8x2xf32, #tpu.memory_space<vmem>>, vector<8x2xf32>
    %c0_9 = arith.constant 0 : index
    %c0_10 = arith.constant 0 : index
    %5 = vector.load %arg20[%c0_9, %c0_10] : memref<8x8xf32, #tpu.memory_space<vmem>>, vector<8x8xf32>
    %c0_11 = arith.constant 0 : index
    %c0_12 = arith.constant 0 : index
    %6 = vector.load %arg15[%c0_11, %c0_12] : memref<48x48xf32, #tpu.memory_space<vmem>>, vector<48x48xf32>
    %cst = arith.constant dense<0.000000e+00> : vector<8x48xf32>
    %7 = tpu.matmul %0, %6, %cst {dimension_numbers = #tpu.dot_dimension_numbers<[1], [0], [0], [1], [0, 0, 1, 1], [], []>} : vector<8x48xf32>, vector<48x48xf32>, vector<8x48xf32> -> vector<8x48xf32>
    %cst_13 = arith.constant dense<0.000000e+00> : vector<8x48xf32>
    %8 = tpu.matmul %5, %7, %cst_13 {dimension_numbers = #tpu.dot_dimension_numbers<[1], [0], [0], [1], [0, 0, 1, 1], [], []>} : vector<8x8xf32>, vector<8x48xf32>, vector<8x48xf32> -> vector<8x48xf32>
    %9 = arith.subf %0, %8 : vector<8x48xf32>
    %10 = arith.mulf %9, %9 : vector<8x48xf32>
    %cst_14 = arith.constant dense<0.000000e+00> : vector<8x48xf32>
    %11 = tpu.matmul %10, %6, %cst_14 {dimension_numbers = #tpu.dot_dimension_numbers<[1], [0], [0], [1], [0, 0, 1, 1], [], []>} : vector<8x48xf32>, vector<48x48xf32>, vector<8x48xf32> -> vector<8x48xf32>
    %cst_15 = arith.constant dense<0.000000e+00> : vector<8x48xf32>
    %12 = tpu.matmul %5, %11, %cst_15 {dimension_numbers = #tpu.dot_dimension_numbers<[1], [0], [0], [1], [0, 0, 1, 1], [], []>} : vector<8x8xf32>, vector<8x48xf32>, vector<8x48xf32> -> vector<8x48xf32>
    %cst_16 = arith.constant 9.99999974E-6 : f32
    %13 = vector.broadcast %cst_16 : f32 to vector<8x48xf32>
    %14 = arith.addf %12, %13 : vector<8x48xf32>
    %15 = math.rsqrt %14 : vector<8x48xf32>
    %cst_17 = arith.constant 9.99999974E-6 : f32
    %16 = vector.broadcast %cst_17 : f32 to vector<8x48xf32>
    %17 = arith.addf %12, %16 : vector<8x48xf32>
    %18 = math.sqrt %17 : vector<8x48xf32>
    %19 = arith.mulf %9, %15 : vector<8x48xf32>
    %c0_18 = arith.constant 0 : index
    %c0_19 = arith.constant 0 : index
    %20 = vector.load %arg5[%c0_18, %c0_19] : memref<2800x320xbf16, #tpu.memory_space<vmem>>, vector<48x320xbf16>
    %21 = arith.truncf %19 : vector<8x48xf32> to vector<8x48xbf16>
    %cst_20 = arith.constant dense<0.000000e+00> : vector<8x320xf32>
    %22 = tpu.matmul %21, %20, %cst_20 {dimension_numbers = #tpu.dot_dimension_numbers<[1], [0], [0], [1], [0, 0, 1, 1], [], []>} : vector<8x48xbf16>, vector<48x320xbf16>, vector<8x320xf32> -> vector<8x320xf32>
    %c48 = arith.constant 48 : index
    %c0_21 = arith.constant 0 : index
    %23 = vector.load %arg5[%c48, %c0_21] : memref<2800x320xbf16, #tpu.memory_space<vmem>>, vector<256x320xbf16>
    %24 = arith.truncf %1 : vector<8x256xf32> to vector<8x256xbf16>
    %cst_22 = arith.constant dense<0.000000e+00> : vector<8x320xf32>
    %25 = tpu.matmul %24, %23, %cst_22 {dimension_numbers = #tpu.dot_dimension_numbers<[1], [0], [0], [1], [0, 0, 1, 1], [], []>} : vector<8x256xbf16>, vector<256x320xbf16>, vector<8x320xf32> -> vector<8x320xf32>
    %26 = arith.addf %22, %25 : vector<8x320xf32>
    %c0_23 = arith.constant 0 : index
    %c0_24 = arith.constant 0 : index
    %27 = vector.load %arg10[%c0_23, %c0_24] : memref<10x320xf32, #tpu.memory_space<vmem>>, vector<1x320xf32>
    %28 = vector.broadcast %27 : vector<1x320xf32> to vector<8x320xf32>
    %29 = arith.addf %26, %28 : vector<8x320xf32>
    %c304 = arith.constant 304 : index
    %c0_25 = arith.constant 0 : index
    %30 = vector.load %arg5[%c304, %c0_25] : memref<2800x320xbf16, #tpu.memory_space<vmem>>, vector<256x320xbf16>
    %31 = arith.truncf %2 : vector<2x256xf32> to vector<2x256xbf16>
    %cst_26 = arith.constant dense<0.000000e+00> : vector<2x320xf32>
    %32 = tpu.matmul %31, %30, %cst_26 {dimension_numbers = #tpu.dot_dimension_numbers<[1], [0], [0], [1], [0, 0, 1, 1], [], []>} : vector<2x256xbf16>, vector<256x320xbf16>, vector<2x320xf32> -> vector<2x320xf32>
    %c1 = arith.constant 1 : index
    %c0_27 = arith.constant 0 : index
    %33 = vector.load %arg10[%c1, %c0_27] : memref<10x320xf32, #tpu.memory_space<vmem>>, vector<1x320xf32>
    %34 = vector.broadcast %33 : vector<1x320xf32> to vector<2x320xf32>
    %35 = arith.addf %32, %34 : vector<2x320xf32>
    %c0_28 = arith.constant 0 : index
    %c0_29 = arith.constant 0 : index
    %36 = vector.load %arg16[%c0_28, %c0_29] : memref<320x320xf32, #tpu.memory_space<vmem>>, vector<320x320xf32>
    %c0_30 = arith.constant 0 : index
    %c0_31 = arith.constant 0 : index
    %37 = vector.load %arg17[%c0_30, %c0_31] : memref<160x160xf32, #tpu.memory_space<vmem>>, vector<160x160xf32>
    %c0_32 = arith.constant 0 : index
    %c0_33 = arith.constant 0 : index
    %38 = vector.load %arg18[%c0_32, %c0_33] : memref<80x80xf32, #tpu.memory_space<vmem>>, vector<80x80xf32>
    %cst_34 = arith.constant dense<0.000000e+00> : vector<8x320xf32>
    %39 = tpu.matmul %29, %36, %cst_34 {dimension_numbers = #tpu.dot_dimension_numbers<[1], [0], [0], [1], [0, 0, 1, 1], [], []>} : vector<8x320xf32>, vector<320x320xf32>, vector<8x320xf32> -> vector<8x320xf32>
    %40 = arith.subf %29, %39 : vector<8x320xf32>
    %41 = arith.mulf %40, %40 : vector<8x320xf32>
    %cst_35 = arith.constant dense<0.000000e+00> : vector<8x320xf32>
    %42 = tpu.matmul %41, %36, %cst_35 {dimension_numbers = #tpu.dot_dimension_numbers<[1], [0], [0], [1], [0, 0, 1, 1], [], []>} : vector<8x320xf32>, vector<320x320xf32>, vector<8x320xf32> -> vector<8x320xf32>
    %cst_36 = arith.constant 9.99999974E-6 : f32
    %43 = vector.broadcast %cst_36 : f32 to vector<8x320xf32>
    %44 = arith.addf %42, %43 : vector<8x320xf32>
    %45 = math.rsqrt %44 : vector<8x320xf32>
    %46 = arith.mulf %40, %45 : vector<8x320xf32>
    %c560 = arith.constant 560 : index
    %c0_37 = arith.constant 0 : index
    %47 = vector.load %arg5[%c560, %c0_37] : memref<2800x320xbf16, #tpu.memory_space<vmem>>, vector<320x320xbf16>
    %48 = arith.truncf %46 : vector<8x320xf32> to vector<8x320xbf16>
    %cst_38 = arith.constant dense<0.000000e+00> : vector<8x320xf32>
    %49 = tpu.matmul %48, %47, %cst_38 {dimension_numbers = #tpu.dot_dimension_numbers<[1], [0], [0], [1], [0, 0, 1, 1], [], []>} : vector<8x320xbf16>, vector<320x320xbf16>, vector<8x320xf32> -> vector<8x320xf32>
    %c2 = arith.constant 2 : index
    %c0_39 = arith.constant 0 : index
    %50 = vector.load %arg10[%c2, %c0_39] : memref<10x320xf32, #tpu.memory_space<vmem>>, vector<1x320xf32>
    %51 = vector.broadcast %50 : vector<1x320xf32> to vector<8x320xf32>
    %52 = arith.addf %49, %51 : vector<8x320xf32>
    %53 = arith.mulf %52, %52 : vector<8x320xf32>
    %54 = arith.mulf %52, %53 : vector<8x320xf32>
    %cst_40 = arith.constant 4.471500e-02 : f32
    %55 = vector.broadcast %cst_40 : f32 to vector<8x320xf32>
    %56 = arith.mulf %55, %54 : vector<8x320xf32>
    %57 = arith.addf %52, %56 : vector<8x320xf32>
    %cst_41 = arith.constant 0.797884583 : f32
    %58 = vector.broadcast %cst_41 : f32 to vector<8x320xf32>
    %59 = arith.mulf %58, %57 : vector<8x320xf32>
    %60 = math.tanh %59 : vector<8x320xf32>
    %cst_42 = arith.constant 1.000000e+00 : f32
    %61 = vector.broadcast %cst_42 : f32 to vector<8x320xf32>
    %62 = arith.addf %61, %60 : vector<8x320xf32>
    %cst_43 = arith.constant 5.000000e-01 : f32
    %63 = vector.broadcast %cst_43 : f32 to vector<8x320xf32>
    %64 = arith.mulf %63, %62 : vector<8x320xf32>
    %65 = arith.mulf %52, %64 : vector<8x320xf32>
    %c880 = arith.constant 880 : index
    %c0_44 = arith.constant 0 : index
    %66 = vector.load %arg5[%c880, %c0_44] : memref<2800x320xbf16, #tpu.memory_space<vmem>>, vector<320x320xbf16>
    %67 = arith.truncf %65 : vector<8x320xf32> to vector<8x320xbf16>
    %cst_45 = arith.constant dense<0.000000e+00> : vector<8x320xf32>
    %68 = tpu.matmul %67, %66, %cst_45 {dimension_numbers = #tpu.dot_dimension_numbers<[1], [0], [0], [1], [0, 0, 1, 1], [], []>} : vector<8x320xbf16>, vector<320x320xbf16>, vector<8x320xf32> -> vector<8x320xf32>
    %c3 = arith.constant 3 : index
    %c0_46 = arith.constant 0 : index
    %69 = vector.load %arg10[%c3, %c0_46] : memref<10x320xf32, #tpu.memory_space<vmem>>, vector<1x320xf32>
    %70 = vector.broadcast %69 : vector<1x320xf32> to vector<8x320xf32>
    %71 = arith.addf %68, %70 : vector<8x320xf32>
    %c1200 = arith.constant 1200 : index
    %c0_47 = arith.constant 0 : index
    %72 = vector.load %arg5[%c1200, %c0_47] : memref<2800x320xbf16, #tpu.memory_space<vmem>>, vector<320x320xbf16>
    %73 = arith.truncf %35 : vector<2x320xf32> to vector<2x320xbf16>
    %cst_48 = arith.constant dense<0.000000e+00> : vector<2x320xf32>
    %74 = tpu.matmul %73, %72, %cst_48 {dimension_numbers = #tpu.dot_dimension_numbers<[1], [0], [0], [1], [0, 0, 1, 1], [], []>} : vector<2x320xbf16>, vector<320x320xbf16>, vector<2x320xf32> -> vector<2x320xf32>
    %c4 = arith.constant 4 : index
    %c0_49 = arith.constant 0 : index
    %75 = vector.load %arg10[%c4, %c0_49] : memref<10x320xf32, #tpu.memory_space<vmem>>, vector<1x320xf32>
    %76 = vector.broadcast %75 : vector<1x320xf32> to vector<2x320xf32>
    %77 = arith.addf %74, %76 : vector<2x320xf32>
    %78 = arith.addf %29, %71 : vector<8x320xf32>
    %cst_50 = arith.constant dense<0.000000e+00> : vector<8x320xf32>
    %79 = tpu.matmul %4, %77, %cst_50 {dimension_numbers = #tpu.dot_dimension_numbers<[1], [0], [0], [1], [0, 0, 1, 1], [], []>} : vector<8x2xf32>, vector<2x320xf32>, vector<8x320xf32> -> vector<8x320xf32>
    %80 = arith.addf %78, %79 : vector<8x320xf32>
    %c0_51 = arith.constant 0 : index
    %c0_52 = arith.constant 0 : index
    %81 = vector.load %arg6[%c0_51, %c0_52] : memref<1760x160xbf16, #tpu.memory_space<vmem>>, vector<320x160xbf16>
    %82 = arith.truncf %80 : vector<8x320xf32> to vector<8x320xbf16>
    %cst_53 = arith.constant dense<0.000000e+00> : vector<8x160xf32>
    %83 = tpu.matmul %82, %81, %cst_53 {dimension_numbers = #tpu.dot_dimension_numbers<[1], [0], [0], [1], [0, 0, 1, 1], [], []>} : vector<8x320xbf16>, vector<320x160xbf16>, vector<8x160xf32> -> vector<8x160xf32>
    %c0_54 = arith.constant 0 : index
    %c0_55 = arith.constant 0 : index
    %84 = vector.load %arg11[%c0_54, %c0_55] : memref<10x160xf32, #tpu.memory_space<vmem>>, vector<1x160xf32>
    %85 = vector.broadcast %84 : vector<1x160xf32> to vector<8x160xf32>
    %86 = arith.addf %83, %85 : vector<8x160xf32>
    %c320 = arith.constant 320 : index
    %c0_56 = arith.constant 0 : index
    %87 = vector.load %arg6[%c320, %c0_56] : memref<1760x160xbf16, #tpu.memory_space<vmem>>, vector<320x160xbf16>
    %88 = arith.truncf %35 : vector<2x320xf32> to vector<2x320xbf16>
    %cst_57 = arith.constant dense<0.000000e+00> : vector<2x160xf32>
    %89 = tpu.matmul %88, %87, %cst_57 {dimension_numbers = #tpu.dot_dimension_numbers<[1], [0], [0], [1], [0, 0, 1, 1], [], []>} : vector<2x320xbf16>, vector<320x160xbf16>, vector<2x160xf32> -> vector<2x160xf32>
    %c1_58 = arith.constant 1 : index
    %c0_59 = arith.constant 0 : index
    %90 = vector.load %arg11[%c1_58, %c0_59] : memref<10x160xf32, #tpu.memory_space<vmem>>, vector<1x160xf32>
    %91 = vector.broadcast %90 : vector<1x160xf32> to vector<2x160xf32>
    %92 = arith.addf %89, %91 : vector<2x160xf32>
    %cst_60 = arith.constant dense<0.000000e+00> : vector<8x160xf32>
    %93 = tpu.matmul %86, %37, %cst_60 {dimension_numbers = #tpu.dot_dimension_numbers<[1], [0], [0], [1], [0, 0, 1, 1], [], []>} : vector<8x160xf32>, vector<160x160xf32>, vector<8x160xf32> -> vector<8x160xf32>
    %94 = arith.subf %86, %93 : vector<8x160xf32>
    %95 = arith.mulf %94, %94 : vector<8x160xf32>
    %cst_61 = arith.constant dense<0.000000e+00> : vector<8x160xf32>
    %96 = tpu.matmul %95, %37, %cst_61 {dimension_numbers = #tpu.dot_dimension_numbers<[1], [0], [0], [1], [0, 0, 1, 1], [], []>} : vector<8x160xf32>, vector<160x160xf32>, vector<8x160xf32> -> vector<8x160xf32>
    %cst_62 = arith.constant 9.99999974E-6 : f32
    %97 = vector.broadcast %cst_62 : f32 to vector<8x160xf32>
    %98 = arith.addf %96, %97 : vector<8x160xf32>
    %99 = math.rsqrt %98 : vector<8x160xf32>
    %100 = arith.mulf %94, %99 : vector<8x160xf32>
    %c640 = arith.constant 640 : index
    %c0_63 = arith.constant 0 : index
    %101 = vector.load %arg6[%c640, %c0_63] : memref<1760x160xbf16, #tpu.memory_space<vmem>>, vector<160x160xbf16>
    %102 = arith.truncf %100 : vector<8x160xf32> to vector<8x160xbf16>
    %cst_64 = arith.constant dense<0.000000e+00> : vector<8x160xf32>
    %103 = tpu.matmul %102, %101, %cst_64 {dimension_numbers = #tpu.dot_dimension_numbers<[1], [0], [0], [1], [0, 0, 1, 1], [], []>} : vector<8x160xbf16>, vector<160x160xbf16>, vector<8x160xf32> -> vector<8x160xf32>
    %c2_65 = arith.constant 2 : index
    %c0_66 = arith.constant 0 : index
    %104 = vector.load %arg11[%c2_65, %c0_66] : memref<10x160xf32, #tpu.memory_space<vmem>>, vector<1x160xf32>
    %105 = vector.broadcast %104 : vector<1x160xf32> to vector<8x160xf32>
    %106 = arith.addf %103, %105 : vector<8x160xf32>
    %107 = arith.mulf %106, %106 : vector<8x160xf32>
    %108 = arith.mulf %106, %107 : vector<8x160xf32>
    %cst_67 = arith.constant 4.471500e-02 : f32
    %109 = vector.broadcast %cst_67 : f32 to vector<8x160xf32>
    %110 = arith.mulf %109, %108 : vector<8x160xf32>
    %111 = arith.addf %106, %110 : vector<8x160xf32>
    %cst_68 = arith.constant 0.797884583 : f32
    %112 = vector.broadcast %cst_68 : f32 to vector<8x160xf32>
    %113 = arith.mulf %112, %111 : vector<8x160xf32>
    %114 = math.tanh %113 : vector<8x160xf32>
    %cst_69 = arith.constant 1.000000e+00 : f32
    %115 = vector.broadcast %cst_69 : f32 to vector<8x160xf32>
    %116 = arith.addf %115, %114 : vector<8x160xf32>
    %cst_70 = arith.constant 5.000000e-01 : f32
    %117 = vector.broadcast %cst_70 : f32 to vector<8x160xf32>
    %118 = arith.mulf %117, %116 : vector<8x160xf32>
    %119 = arith.mulf %106, %118 : vector<8x160xf32>
    %c800 = arith.constant 800 : index
    %c0_71 = arith.constant 0 : index
    %120 = vector.load %arg6[%c800, %c0_71] : memref<1760x160xbf16, #tpu.memory_space<vmem>>, vector<160x160xbf16>
    %121 = arith.truncf %119 : vector<8x160xf32> to vector<8x160xbf16>
    %cst_72 = arith.constant dense<0.000000e+00> : vector<8x160xf32>
    %122 = tpu.matmul %121, %120, %cst_72 {dimension_numbers = #tpu.dot_dimension_numbers<[1], [0], [0], [1], [0, 0, 1, 1], [], []>} : vector<8x160xbf16>, vector<160x160xbf16>, vector<8x160xf32> -> vector<8x160xf32>
    %c3_73 = arith.constant 3 : index
    %c0_74 = arith.constant 0 : index
    %123 = vector.load %arg11[%c3_73, %c0_74] : memref<10x160xf32, #tpu.memory_space<vmem>>, vector<1x160xf32>
    %124 = vector.broadcast %123 : vector<1x160xf32> to vector<8x160xf32>
    %125 = arith.addf %122, %124 : vector<8x160xf32>
    %c960 = arith.constant 960 : index
    %c0_75 = arith.constant 0 : index
    %126 = vector.load %arg6[%c960, %c0_75] : memref<1760x160xbf16, #tpu.memory_space<vmem>>, vector<160x160xbf16>
    %127 = arith.truncf %92 : vector<2x160xf32> to vector<2x160xbf16>
    %cst_76 = arith.constant dense<0.000000e+00> : vector<2x160xf32>
    %128 = tpu.matmul %127, %126, %cst_76 {dimension_numbers = #tpu.dot_dimension_numbers<[1], [0], [0], [1], [0, 0, 1, 1], [], []>} : vector<2x160xbf16>, vector<160x160xbf16>, vector<2x160xf32> -> vector<2x160xf32>
    %c4_77 = arith.constant 4 : index
    %c0_78 = arith.constant 0 : index
    %129 = vector.load %arg11[%c4_77, %c0_78] : memref<10x160xf32, #tpu.memory_space<vmem>>, vector<1x160xf32>
    %130 = vector.broadcast %129 : vector<1x160xf32> to vector<2x160xf32>
    %131 = arith.addf %128, %130 : vector<2x160xf32>
    %132 = arith.addf %86, %125 : vector<8x160xf32>
    %cst_79 = arith.constant dense<0.000000e+00> : vector<8x160xf32>
    %133 = tpu.matmul %4, %131, %cst_79 {dimension_numbers = #tpu.dot_dimension_numbers<[1], [0], [0], [1], [0, 0, 1, 1], [], []>} : vector<8x2xf32>, vector<2x160xf32>, vector<8x160xf32> -> vector<8x160xf32>
    %134 = arith.addf %132, %133 : vector<8x160xf32>
    %c0_80 = arith.constant 0 : index
    %c0_81 = arith.constant 0 : index
    %135 = vector.load %arg7[%c0_80, %c0_81] : memref<960x80xbf16, #tpu.memory_space<vmem>>, vector<160x80xbf16>
    %136 = arith.truncf %134 : vector<8x160xf32> to vector<8x160xbf16>
    %cst_82 = arith.constant dense<0.000000e+00> : vector<8x80xf32>
    %137 = tpu.matmul %136, %135, %cst_82 {dimension_numbers = #tpu.dot_dimension_numbers<[1], [0], [0], [1], [0, 0, 1, 1], [], []>} : vector<8x160xbf16>, vector<160x80xbf16>, vector<8x80xf32> -> vector<8x80xf32>
    %c0_83 = arith.constant 0 : index
    %c0_84 = arith.constant 0 : index
    %138 = vector.load %arg12[%c0_83, %c0_84] : memref<10x80xf32, #tpu.memory_space<vmem>>, vector<1x80xf32>
    %139 = vector.broadcast %138 : vector<1x80xf32> to vector<8x80xf32>
    %140 = arith.addf %137, %139 : vector<8x80xf32>
    %c160 = arith.constant 160 : index
    %c0_85 = arith.constant 0 : index
    %141 = vector.load %arg7[%c160, %c0_85] : memref<960x80xbf16, #tpu.memory_space<vmem>>, vector<160x80xbf16>
    %142 = arith.truncf %92 : vector<2x160xf32> to vector<2x160xbf16>
    %cst_86 = arith.constant dense<0.000000e+00> : vector<2x80xf32>
    %143 = tpu.matmul %142, %141, %cst_86 {dimension_numbers = #tpu.dot_dimension_numbers<[1], [0], [0], [1], [0, 0, 1, 1], [], []>} : vector<2x160xbf16>, vector<160x80xbf16>, vector<2x80xf32> -> vector<2x80xf32>
    %c1_87 = arith.constant 1 : index
    %c0_88 = arith.constant 0 : index
    %144 = vector.load %arg12[%c1_87, %c0_88] : memref<10x80xf32, #tpu.memory_space<vmem>>, vector<1x80xf32>
    %145 = vector.broadcast %144 : vector<1x80xf32> to vector<2x80xf32>
    %146 = arith.addf %143, %145 : vector<2x80xf32>
    %cst_89 = arith.constant dense<0.000000e+00> : vector<8x80xf32>
    %147 = tpu.matmul %140, %38, %cst_89 {dimension_numbers = #tpu.dot_dimension_numbers<[1], [0], [0], [1], [0, 0, 1, 1], [], []>} : vector<8x80xf32>, vector<80x80xf32>, vector<8x80xf32> -> vector<8x80xf32>
    %148 = arith.subf %140, %147 : vector<8x80xf32>
    %149 = arith.mulf %148, %148 : vector<8x80xf32>
    %cst_90 = arith.constant dense<0.000000e+00> : vector<8x80xf32>
    %150 = tpu.matmul %149, %38, %cst_90 {dimension_numbers = #tpu.dot_dimension_numbers<[1], [0], [0], [1], [0, 0, 1, 1], [], []>} : vector<8x80xf32>, vector<80x80xf32>, vector<8x80xf32> -> vector<8x80xf32>
    %cst_91 = arith.constant 9.99999974E-6 : f32
    %151 = vector.broadcast %cst_91 : f32 to vector<8x80xf32>
    %152 = arith.addf %150, %151 : vector<8x80xf32>
    %153 = math.rsqrt %152 : vector<8x80xf32>
    %154 = arith.mulf %148, %153 : vector<8x80xf32>
    %c320_92 = arith.constant 320 : index
    %c0_93 = arith.constant 0 : index
    %155 = vector.load %arg7[%c320_92, %c0_93] : memref<960x80xbf16, #tpu.memory_space<vmem>>, vector<80x80xbf16>
    %156 = arith.truncf %154 : vector<8x80xf32> to vector<8x80xbf16>
    %cst_94 = arith.constant dense<0.000000e+00> : vector<8x80xf32>
    %157 = tpu.matmul %156, %155, %cst_94 {dimension_numbers = #tpu.dot_dimension_numbers<[1], [0], [0], [1], [0, 0, 1, 1], [], []>} : vector<8x80xbf16>, vector<80x80xbf16>, vector<8x80xf32> -> vector<8x80xf32>
    %c2_95 = arith.constant 2 : index
    %c0_96 = arith.constant 0 : index
    %158 = vector.load %arg12[%c2_95, %c0_96] : memref<10x80xf32, #tpu.memory_space<vmem>>, vector<1x80xf32>
    %159 = vector.broadcast %158 : vector<1x80xf32> to vector<8x80xf32>
    %160 = arith.addf %157, %159 : vector<8x80xf32>
    %161 = arith.mulf %160, %160 : vector<8x80xf32>
    %162 = arith.mulf %160, %161 : vector<8x80xf32>
    %cst_97 = arith.constant 4.471500e-02 : f32
    %163 = vector.broadcast %cst_97 : f32 to vector<8x80xf32>
    %164 = arith.mulf %163, %162 : vector<8x80xf32>
    %165 = arith.addf %160, %164 : vector<8x80xf32>
    %cst_98 = arith.constant 0.797884583 : f32
    %166 = vector.broadcast %cst_98 : f32 to vector<8x80xf32>
    %167 = arith.mulf %166, %165 : vector<8x80xf32>
    %168 = math.tanh %167 : vector<8x80xf32>
    %cst_99 = arith.constant 1.000000e+00 : f32
    %169 = vector.broadcast %cst_99 : f32 to vector<8x80xf32>
    %170 = arith.addf %169, %168 : vector<8x80xf32>
    %cst_100 = arith.constant 5.000000e-01 : f32
    %171 = vector.broadcast %cst_100 : f32 to vector<8x80xf32>
    %172 = arith.mulf %171, %170 : vector<8x80xf32>
    %173 = arith.mulf %160, %172 : vector<8x80xf32>
    %c400 = arith.constant 400 : index
    %c0_101 = arith.constant 0 : index
    %174 = vector.load %arg7[%c400, %c0_101] : memref<960x80xbf16, #tpu.memory_space<vmem>>, vector<80x80xbf16>
    %175 = arith.truncf %173 : vector<8x80xf32> to vector<8x80xbf16>
    %cst_102 = arith.constant dense<0.000000e+00> : vector<8x80xf32>
    %176 = tpu.matmul %175, %174, %cst_102 {dimension_numbers = #tpu.dot_dimension_numbers<[1], [0], [0], [1], [0, 0, 1, 1], [], []>} : vector<8x80xbf16>, vector<80x80xbf16>, vector<8x80xf32> -> vector<8x80xf32>
    %c3_103 = arith.constant 3 : index
    %c0_104 = arith.constant 0 : index
    %177 = vector.load %arg12[%c3_103, %c0_104] : memref<10x80xf32, #tpu.memory_space<vmem>>, vector<1x80xf32>
    %178 = vector.broadcast %177 : vector<1x80xf32> to vector<8x80xf32>
    %179 = arith.addf %176, %178 : vector<8x80xf32>
    %c480 = arith.constant 480 : index
    %c0_105 = arith.constant 0 : index
    %180 = vector.load %arg7[%c480, %c0_105] : memref<960x80xbf16, #tpu.memory_space<vmem>>, vector<80x80xbf16>
    %181 = arith.truncf %146 : vector<2x80xf32> to vector<2x80xbf16>
    %cst_106 = arith.constant dense<0.000000e+00> : vector<2x80xf32>
    %182 = tpu.matmul %181, %180, %cst_106 {dimension_numbers = #tpu.dot_dimension_numbers<[1], [0], [0], [1], [0, 0, 1, 1], [], []>} : vector<2x80xbf16>, vector<80x80xbf16>, vector<2x80xf32> -> vector<2x80xf32>
    %c4_107 = arith.constant 4 : index
    %c0_108 = arith.constant 0 : index
    %183 = vector.load %arg12[%c4_107, %c0_108] : memref<10x80xf32, #tpu.memory_space<vmem>>, vector<1x80xf32>
    %184 = vector.broadcast %183 : vector<1x80xf32> to vector<2x80xf32>
    %185 = arith.addf %182, %184 : vector<2x80xf32>
    %186 = arith.addf %140, %179 : vector<8x80xf32>
    %cst_109 = arith.constant dense<0.000000e+00> : vector<8x80xf32>
    %187 = tpu.matmul %4, %185, %cst_109 {dimension_numbers = #tpu.dot_dimension_numbers<[1], [0], [0], [1], [0, 0, 1, 1], [], []>} : vector<8x2xf32>, vector<2x80xf32>, vector<8x80xf32> -> vector<8x80xf32>
    %188 = arith.addf %186, %187 : vector<8x80xf32>
    %c800_110 = arith.constant 800 : index
    %c0_111 = arith.constant 0 : index
    %189 = vector.load %arg7[%c800_110, %c0_111] : memref<960x80xbf16, #tpu.memory_space<vmem>>, vector<80x80xbf16>
    %190 = arith.truncf %188 : vector<8x80xf32> to vector<8x80xbf16>
    %cst_112 = arith.constant dense<0.000000e+00> : vector<8x80xf32>
    %191 = tpu.matmul %190, %189, %cst_112 {dimension_numbers = #tpu.dot_dimension_numbers<[1], [0], [0], [1], [0, 0, 1, 1], [], []>} : vector<8x80xbf16>, vector<80x80xbf16>, vector<8x80xf32> -> vector<8x80xf32>
    %c8 = arith.constant 8 : index
    %c0_113 = arith.constant 0 : index
    %192 = vector.load %arg12[%c8, %c0_113] : memref<10x80xf32, #tpu.memory_space<vmem>>, vector<1x80xf32>
    %193 = vector.broadcast %192 : vector<1x80xf32> to vector<8x80xf32>
    %194 = arith.addf %191, %193 : vector<8x80xf32>
    %c880_114 = arith.constant 880 : index
    %c0_115 = arith.constant 0 : index
    %195 = vector.load %arg7[%c880_114, %c0_115] : memref<960x80xbf16, #tpu.memory_space<vmem>>, vector<80x80xbf16>
    %196 = arith.truncf %188 : vector<8x80xf32> to vector<8x80xbf16>
    %cst_116 = arith.constant dense<0.000000e+00> : vector<8x80xf32>
    %197 = tpu.matmul %196, %195, %cst_116 {dimension_numbers = #tpu.dot_dimension_numbers<[1], [0], [0], [1], [0, 0, 1, 1], [], []>} : vector<8x80xbf16>, vector<80x80xbf16>, vector<8x80xf32> -> vector<8x80xf32>
    %c9 = arith.constant 9 : index
    %c0_117 = arith.constant 0 : index
    %198 = vector.load %arg12[%c9, %c0_117] : memref<10x80xf32, #tpu.memory_space<vmem>>, vector<1x80xf32>
    %199 = vector.broadcast %198 : vector<1x80xf32> to vector<8x80xf32>
    %200 = arith.addf %197, %199 : vector<8x80xf32>
    %cst_118 = arith.constant 5.000000e-01 : f32
    %201 = vector.broadcast %cst_118 : f32 to vector<8x80xf32>
    %202 = arith.mulf %201, %200 : vector<8x80xf32>
    %203 = math.exp %202 : vector<8x80xf32>
    %204 = arith.mulf %3, %203 : vector<8x80xf32>
    %205 = arith.addf %194, %204 : vector<8x80xf32>
    %cst_119 = arith.constant dense<0.000000e+00> : vector<8x80xf32>
    %206 = tpu.matmul %205, %38, %cst_119 {dimension_numbers = #tpu.dot_dimension_numbers<[1], [0], [0], [1], [0, 0, 1, 1], [], []>} : vector<8x80xf32>, vector<80x80xf32>, vector<8x80xf32> -> vector<8x80xf32>
    %207 = arith.subf %205, %206 : vector<8x80xf32>
    %208 = arith.mulf %207, %207 : vector<8x80xf32>
    %cst_120 = arith.constant dense<0.000000e+00> : vector<8x80xf32>
    %209 = tpu.matmul %208, %38, %cst_120 {dimension_numbers = #tpu.dot_dimension_numbers<[1], [0], [0], [1], [0, 0, 1, 1], [], []>} : vector<8x80xf32>, vector<80x80xf32>, vector<8x80xf32> -> vector<8x80xf32>
    %cst_121 = arith.constant 9.99999974E-6 : f32
    %210 = vector.broadcast %cst_121 : f32 to vector<8x80xf32>
    %211 = arith.addf %209, %210 : vector<8x80xf32>
    %212 = math.rsqrt %211 : vector<8x80xf32>
    %213 = arith.mulf %207, %212 : vector<8x80xf32>
    %c560_122 = arith.constant 560 : index
    %c0_123 = arith.constant 0 : index
    %214 = vector.load %arg7[%c560_122, %c0_123] : memref<960x80xbf16, #tpu.memory_space<vmem>>, vector<80x80xbf16>
    %215 = arith.truncf %213 : vector<8x80xf32> to vector<8x80xbf16>
    %cst_124 = arith.constant dense<0.000000e+00> : vector<8x80xf32>
    %216 = tpu.matmul %215, %214, %cst_124 {dimension_numbers = #tpu.dot_dimension_numbers<[1], [0], [0], [1], [0, 0, 1, 1], [], []>} : vector<8x80xbf16>, vector<80x80xbf16>, vector<8x80xf32> -> vector<8x80xf32>
    %c5 = arith.constant 5 : index
    %c0_125 = arith.constant 0 : index
    %217 = vector.load %arg12[%c5, %c0_125] : memref<10x80xf32, #tpu.memory_space<vmem>>, vector<1x80xf32>
    %218 = vector.broadcast %217 : vector<1x80xf32> to vector<8x80xf32>
    %219 = arith.addf %216, %218 : vector<8x80xf32>
    %220 = arith.mulf %219, %219 : vector<8x80xf32>
    %221 = arith.mulf %219, %220 : vector<8x80xf32>
    %cst_126 = arith.constant 4.471500e-02 : f32
    %222 = vector.broadcast %cst_126 : f32 to vector<8x80xf32>
    %223 = arith.mulf %222, %221 : vector<8x80xf32>
    %224 = arith.addf %219, %223 : vector<8x80xf32>
    %cst_127 = arith.constant 0.797884583 : f32
    %225 = vector.broadcast %cst_127 : f32 to vector<8x80xf32>
    %226 = arith.mulf %225, %224 : vector<8x80xf32>
    %227 = math.tanh %226 : vector<8x80xf32>
    %cst_128 = arith.constant 1.000000e+00 : f32
    %228 = vector.broadcast %cst_128 : f32 to vector<8x80xf32>
    %229 = arith.addf %228, %227 : vector<8x80xf32>
    %cst_129 = arith.constant 5.000000e-01 : f32
    %230 = vector.broadcast %cst_129 : f32 to vector<8x80xf32>
    %231 = arith.mulf %230, %229 : vector<8x80xf32>
    %232 = arith.mulf %219, %231 : vector<8x80xf32>
    %c640_130 = arith.constant 640 : index
    %c0_131 = arith.constant 0 : index
    %233 = vector.load %arg7[%c640_130, %c0_131] : memref<960x80xbf16, #tpu.memory_space<vmem>>, vector<80x80xbf16>
    %234 = arith.truncf %232 : vector<8x80xf32> to vector<8x80xbf16>
    %cst_132 = arith.constant dense<0.000000e+00> : vector<8x80xf32>
    %235 = tpu.matmul %234, %233, %cst_132 {dimension_numbers = #tpu.dot_dimension_numbers<[1], [0], [0], [1], [0, 0, 1, 1], [], []>} : vector<8x80xbf16>, vector<80x80xbf16>, vector<8x80xf32> -> vector<8x80xf32>
    %c6 = arith.constant 6 : index
    %c0_133 = arith.constant 0 : index
    %236 = vector.load %arg12[%c6, %c0_133] : memref<10x80xf32, #tpu.memory_space<vmem>>, vector<1x80xf32>
    %237 = vector.broadcast %236 : vector<1x80xf32> to vector<8x80xf32>
    %238 = arith.addf %235, %237 : vector<8x80xf32>
    %c720 = arith.constant 720 : index
    %c0_134 = arith.constant 0 : index
    %239 = vector.load %arg7[%c720, %c0_134] : memref<960x80xbf16, #tpu.memory_space<vmem>>, vector<80x80xbf16>
    %240 = arith.truncf %146 : vector<2x80xf32> to vector<2x80xbf16>
    %cst_135 = arith.constant dense<0.000000e+00> : vector<2x80xf32>
    %241 = tpu.matmul %240, %239, %cst_135 {dimension_numbers = #tpu.dot_dimension_numbers<[1], [0], [0], [1], [0, 0, 1, 1], [], []>} : vector<2x80xbf16>, vector<80x80xbf16>, vector<2x80xf32> -> vector<2x80xf32>
    %c7 = arith.constant 7 : index
    %c0_136 = arith.constant 0 : index
    %242 = vector.load %arg12[%c7, %c0_136] : memref<10x80xf32, #tpu.memory_space<vmem>>, vector<1x80xf32>
    %243 = vector.broadcast %242 : vector<1x80xf32> to vector<2x80xf32>
    %244 = arith.addf %241, %243 : vector<2x80xf32>
    %245 = arith.addf %205, %238 : vector<8x80xf32>
    %cst_137 = arith.constant dense<0.000000e+00> : vector<8x80xf32>
    %246 = tpu.matmul %4, %244, %cst_137 {dimension_numbers = #tpu.dot_dimension_numbers<[1], [0], [0], [1], [0, 0, 1, 1], [], []>} : vector<8x2xf32>, vector<2x80xf32>, vector<8x80xf32> -> vector<8x80xf32>
    %247 = arith.addf %245, %246 : vector<8x80xf32>
    %c1600 = arith.constant 1600 : index
    %c0_138 = arith.constant 0 : index
    %248 = vector.load %arg6[%c1600, %c0_138] : memref<1760x160xbf16, #tpu.memory_space<vmem>>, vector<80x160xbf16>
    %249 = arith.truncf %247 : vector<8x80xf32> to vector<8x80xbf16>
    %cst_139 = arith.constant dense<0.000000e+00> : vector<8x160xf32>
    %250 = tpu.matmul %249, %248, %cst_139 {dimension_numbers = #tpu.dot_dimension_numbers<[1], [0], [0], [1], [0, 0, 1, 1], [], []>} : vector<8x80xbf16>, vector<80x160xbf16>, vector<8x160xf32> -> vector<8x160xf32>
    %c8_140 = arith.constant 8 : index
    %c0_141 = arith.constant 0 : index
    %251 = vector.load %arg11[%c8_140, %c0_141] : memref<10x160xf32, #tpu.memory_space<vmem>>, vector<1x160xf32>
    %252 = vector.broadcast %251 : vector<1x160xf32> to vector<8x160xf32>
    %253 = arith.addf %250, %252 : vector<8x160xf32>
    %c1680 = arith.constant 1680 : index
    %c0_142 = arith.constant 0 : index
    %254 = vector.load %arg6[%c1680, %c0_142] : memref<1760x160xbf16, #tpu.memory_space<vmem>>, vector<80x160xbf16>
    %255 = arith.truncf %146 : vector<2x80xf32> to vector<2x80xbf16>
    %cst_143 = arith.constant dense<0.000000e+00> : vector<2x160xf32>
    %256 = tpu.matmul %255, %254, %cst_143 {dimension_numbers = #tpu.dot_dimension_numbers<[1], [0], [0], [1], [0, 0, 1, 1], [], []>} : vector<2x80xbf16>, vector<80x160xbf16>, vector<2x160xf32> -> vector<2x160xf32>
    %c9_144 = arith.constant 9 : index
    %c0_145 = arith.constant 0 : index
    %257 = vector.load %arg11[%c9_144, %c0_145] : memref<10x160xf32, #tpu.memory_space<vmem>>, vector<1x160xf32>
    %258 = vector.broadcast %257 : vector<1x160xf32> to vector<2x160xf32>
    %259 = arith.addf %256, %258 : vector<2x160xf32>
    %cst_146 = arith.constant dense<0.000000e+00> : vector<8x160xf32>
    %260 = tpu.matmul %253, %37, %cst_146 {dimension_numbers = #tpu.dot_dimension_numbers<[1], [0], [0], [1], [0, 0, 1, 1], [], []>} : vector<8x160xf32>, vector<160x160xf32>, vector<8x160xf32> -> vector<8x160xf32>
    %261 = arith.subf %253, %260 : vector<8x160xf32>
    %262 = arith.mulf %261, %261 : vector<8x160xf32>
    %cst_147 = arith.constant dense<0.000000e+00> : vector<8x160xf32>
    %263 = tpu.matmul %262, %37, %cst_147 {dimension_numbers = #tpu.dot_dimension_numbers<[1], [0], [0], [1], [0, 0, 1, 1], [], []>} : vector<8x160xf32>, vector<160x160xf32>, vector<8x160xf32> -> vector<8x160xf32>
    %cst_148 = arith.constant 9.99999974E-6 : f32
    %264 = vector.broadcast %cst_148 : f32 to vector<8x160xf32>
    %265 = arith.addf %263, %264 : vector<8x160xf32>
    %266 = math.rsqrt %265 : vector<8x160xf32>
    %267 = arith.mulf %261, %266 : vector<8x160xf32>
    %c1120 = arith.constant 1120 : index
    %c0_149 = arith.constant 0 : index
    %268 = vector.load %arg6[%c1120, %c0_149] : memref<1760x160xbf16, #tpu.memory_space<vmem>>, vector<160x160xbf16>
    %269 = arith.truncf %267 : vector<8x160xf32> to vector<8x160xbf16>
    %cst_150 = arith.constant dense<0.000000e+00> : vector<8x160xf32>
    %270 = tpu.matmul %269, %268, %cst_150 {dimension_numbers = #tpu.dot_dimension_numbers<[1], [0], [0], [1], [0, 0, 1, 1], [], []>} : vector<8x160xbf16>, vector<160x160xbf16>, vector<8x160xf32> -> vector<8x160xf32>
    %c5_151 = arith.constant 5 : index
    %c0_152 = arith.constant 0 : index
    %271 = vector.load %arg11[%c5_151, %c0_152] : memref<10x160xf32, #tpu.memory_space<vmem>>, vector<1x160xf32>
    %272 = vector.broadcast %271 : vector<1x160xf32> to vector<8x160xf32>
    %273 = arith.addf %270, %272 : vector<8x160xf32>
    %274 = arith.mulf %273, %273 : vector<8x160xf32>
    %275 = arith.mulf %273, %274 : vector<8x160xf32>
    %cst_153 = arith.constant 4.471500e-02 : f32
    %276 = vector.broadcast %cst_153 : f32 to vector<8x160xf32>
    %277 = arith.mulf %276, %275 : vector<8x160xf32>
    %278 = arith.addf %273, %277 : vector<8x160xf32>
    %cst_154 = arith.constant 0.797884583 : f32
    %279 = vector.broadcast %cst_154 : f32 to vector<8x160xf32>
    %280 = arith.mulf %279, %278 : vector<8x160xf32>
    %281 = math.tanh %280 : vector<8x160xf32>
    %cst_155 = arith.constant 1.000000e+00 : f32
    %282 = vector.broadcast %cst_155 : f32 to vector<8x160xf32>
    %283 = arith.addf %282, %281 : vector<8x160xf32>
    %cst_156 = arith.constant 5.000000e-01 : f32
    %284 = vector.broadcast %cst_156 : f32 to vector<8x160xf32>
    %285 = arith.mulf %284, %283 : vector<8x160xf32>
    %286 = arith.mulf %273, %285 : vector<8x160xf32>
    %c1280 = arith.constant 1280 : index
    %c0_157 = arith.constant 0 : index
    %287 = vector.load %arg6[%c1280, %c0_157] : memref<1760x160xbf16, #tpu.memory_space<vmem>>, vector<160x160xbf16>
    %288 = arith.truncf %286 : vector<8x160xf32> to vector<8x160xbf16>
    %cst_158 = arith.constant dense<0.000000e+00> : vector<8x160xf32>
    %289 = tpu.matmul %288, %287, %cst_158 {dimension_numbers = #tpu.dot_dimension_numbers<[1], [0], [0], [1], [0, 0, 1, 1], [], []>} : vector<8x160xbf16>, vector<160x160xbf16>, vector<8x160xf32> -> vector<8x160xf32>
    %c6_159 = arith.constant 6 : index
    %c0_160 = arith.constant 0 : index
    %290 = vector.load %arg11[%c6_159, %c0_160] : memref<10x160xf32, #tpu.memory_space<vmem>>, vector<1x160xf32>
    %291 = vector.broadcast %290 : vector<1x160xf32> to vector<8x160xf32>
    %292 = arith.addf %289, %291 : vector<8x160xf32>
    %c1440 = arith.constant 1440 : index
    %c0_161 = arith.constant 0 : index
    %293 = vector.load %arg6[%c1440, %c0_161] : memref<1760x160xbf16, #tpu.memory_space<vmem>>, vector<160x160xbf16>
    %294 = arith.truncf %259 : vector<2x160xf32> to vector<2x160xbf16>
    %cst_162 = arith.constant dense<0.000000e+00> : vector<2x160xf32>
    %295 = tpu.matmul %294, %293, %cst_162 {dimension_numbers = #tpu.dot_dimension_numbers<[1], [0], [0], [1], [0, 0, 1, 1], [], []>} : vector<2x160xbf16>, vector<160x160xbf16>, vector<2x160xf32> -> vector<2x160xf32>
    %c7_163 = arith.constant 7 : index
    %c0_164 = arith.constant 0 : index
    %296 = vector.load %arg11[%c7_163, %c0_164] : memref<10x160xf32, #tpu.memory_space<vmem>>, vector<1x160xf32>
    %297 = vector.broadcast %296 : vector<1x160xf32> to vector<2x160xf32>
    %298 = arith.addf %295, %297 : vector<2x160xf32>
    %299 = arith.addf %253, %292 : vector<8x160xf32>
    %cst_165 = arith.constant dense<0.000000e+00> : vector<8x160xf32>
    %300 = tpu.matmul %4, %298, %cst_165 {dimension_numbers = #tpu.dot_dimension_numbers<[1], [0], [0], [1], [0, 0, 1, 1], [], []>} : vector<8x2xf32>, vector<2x160xf32>, vector<8x160xf32> -> vector<8x160xf32>
    %301 = arith.addf %299, %300 : vector<8x160xf32>
    %c2480 = arith.constant 2480 : index
    %c0_166 = arith.constant 0 : index
    %302 = vector.load %arg5[%c2480, %c0_166] : memref<2800x320xbf16, #tpu.memory_space<vmem>>, vector<160x320xbf16>
    %303 = arith.truncf %301 : vector<8x160xf32> to vector<8x160xbf16>
    %cst_167 = arith.constant dense<0.000000e+00> : vector<8x320xf32>
    %304 = tpu.matmul %303, %302, %cst_167 {dimension_numbers = #tpu.dot_dimension_numbers<[1], [0], [0], [1], [0, 0, 1, 1], [], []>} : vector<8x160xbf16>, vector<160x320xbf16>, vector<8x320xf32> -> vector<8x320xf32>
    %c8_168 = arith.constant 8 : index
    %c0_169 = arith.constant 0 : index
    %305 = vector.load %arg10[%c8_168, %c0_169] : memref<10x320xf32, #tpu.memory_space<vmem>>, vector<1x320xf32>
    %306 = vector.broadcast %305 : vector<1x320xf32> to vector<8x320xf32>
    %307 = arith.addf %304, %306 : vector<8x320xf32>
    %c2640 = arith.constant 2640 : index
    %c0_170 = arith.constant 0 : index
    %308 = vector.load %arg5[%c2640, %c0_170] : memref<2800x320xbf16, #tpu.memory_space<vmem>>, vector<160x320xbf16>
    %309 = arith.truncf %259 : vector<2x160xf32> to vector<2x160xbf16>
    %cst_171 = arith.constant dense<0.000000e+00> : vector<2x320xf32>
    %310 = tpu.matmul %309, %308, %cst_171 {dimension_numbers = #tpu.dot_dimension_numbers<[1], [0], [0], [1], [0, 0, 1, 1], [], []>} : vector<2x160xbf16>, vector<160x320xbf16>, vector<2x320xf32> -> vector<2x320xf32>
    %c9_172 = arith.constant 9 : index
    %c0_173 = arith.constant 0 : index
    %311 = vector.load %arg10[%c9_172, %c0_173] : memref<10x320xf32, #tpu.memory_space<vmem>>, vector<1x320xf32>
    %312 = vector.broadcast %311 : vector<1x320xf32> to vector<2x320xf32>
    %313 = arith.addf %310, %312 : vector<2x320xf32>
    %cst_174 = arith.constant dense<0.000000e+00> : vector<8x320xf32>
    %314 = tpu.matmul %307, %36, %cst_174 {dimension_numbers = #tpu.dot_dimension_numbers<[1], [0], [0], [1], [0, 0, 1, 1], [], []>} : vector<8x320xf32>, vector<320x320xf32>, vector<8x320xf32> -> vector<8x320xf32>
    %315 = arith.subf %307, %314 : vector<8x320xf32>
    %316 = arith.mulf %315, %315 : vector<8x320xf32>
    %cst_175 = arith.constant dense<0.000000e+00> : vector<8x320xf32>
    %317 = tpu.matmul %316, %36, %cst_175 {dimension_numbers = #tpu.dot_dimension_numbers<[1], [0], [0], [1], [0, 0, 1, 1], [], []>} : vector<8x320xf32>, vector<320x320xf32>, vector<8x320xf32> -> vector<8x320xf32>
    %cst_176 = arith.constant 9.99999974E-6 : f32
    %318 = vector.broadcast %cst_176 : f32 to vector<8x320xf32>
    %319 = arith.addf %317, %318 : vector<8x320xf32>
    %320 = math.rsqrt %319 : vector<8x320xf32>
    %321 = arith.mulf %315, %320 : vector<8x320xf32>
    %c1520 = arith.constant 1520 : index
    %c0_177 = arith.constant 0 : index
    %322 = vector.load %arg5[%c1520, %c0_177] : memref<2800x320xbf16, #tpu.memory_space<vmem>>, vector<320x320xbf16>
    %323 = arith.truncf %321 : vector<8x320xf32> to vector<8x320xbf16>
    %cst_178 = arith.constant dense<0.000000e+00> : vector<8x320xf32>
    %324 = tpu.matmul %323, %322, %cst_178 {dimension_numbers = #tpu.dot_dimension_numbers<[1], [0], [0], [1], [0, 0, 1, 1], [], []>} : vector<8x320xbf16>, vector<320x320xbf16>, vector<8x320xf32> -> vector<8x320xf32>
    %c5_179 = arith.constant 5 : index
    %c0_180 = arith.constant 0 : index
    %325 = vector.load %arg10[%c5_179, %c0_180] : memref<10x320xf32, #tpu.memory_space<vmem>>, vector<1x320xf32>
    %326 = vector.broadcast %325 : vector<1x320xf32> to vector<8x320xf32>
    %327 = arith.addf %324, %326 : vector<8x320xf32>
    %328 = arith.mulf %327, %327 : vector<8x320xf32>
    %329 = arith.mulf %327, %328 : vector<8x320xf32>
    %cst_181 = arith.constant 4.471500e-02 : f32
    %330 = vector.broadcast %cst_181 : f32 to vector<8x320xf32>
    %331 = arith.mulf %330, %329 : vector<8x320xf32>
    %332 = arith.addf %327, %331 : vector<8x320xf32>
    %cst_182 = arith.constant 0.797884583 : f32
    %333 = vector.broadcast %cst_182 : f32 to vector<8x320xf32>
    %334 = arith.mulf %333, %332 : vector<8x320xf32>
    %335 = math.tanh %334 : vector<8x320xf32>
    %cst_183 = arith.constant 1.000000e+00 : f32
    %336 = vector.broadcast %cst_183 : f32 to vector<8x320xf32>
    %337 = arith.addf %336, %335 : vector<8x320xf32>
    %cst_184 = arith.constant 5.000000e-01 : f32
    %338 = vector.broadcast %cst_184 : f32 to vector<8x320xf32>
    %339 = arith.mulf %338, %337 : vector<8x320xf32>
    %340 = arith.mulf %327, %339 : vector<8x320xf32>
    %c1840 = arith.constant 1840 : index
    %c0_185 = arith.constant 0 : index
    %341 = vector.load %arg5[%c1840, %c0_185] : memref<2800x320xbf16, #tpu.memory_space<vmem>>, vector<320x320xbf16>
    %342 = arith.truncf %340 : vector<8x320xf32> to vector<8x320xbf16>
    %cst_186 = arith.constant dense<0.000000e+00> : vector<8x320xf32>
    %343 = tpu.matmul %342, %341, %cst_186 {dimension_numbers = #tpu.dot_dimension_numbers<[1], [0], [0], [1], [0, 0, 1, 1], [], []>} : vector<8x320xbf16>, vector<320x320xbf16>, vector<8x320xf32> -> vector<8x320xf32>
    %c6_187 = arith.constant 6 : index
    %c0_188 = arith.constant 0 : index
    %344 = vector.load %arg10[%c6_187, %c0_188] : memref<10x320xf32, #tpu.memory_space<vmem>>, vector<1x320xf32>
    %345 = vector.broadcast %344 : vector<1x320xf32> to vector<8x320xf32>
    %346 = arith.addf %343, %345 : vector<8x320xf32>
    %c2160 = arith.constant 2160 : index
    %c0_189 = arith.constant 0 : index
    %347 = vector.load %arg5[%c2160, %c0_189] : memref<2800x320xbf16, #tpu.memory_space<vmem>>, vector<320x320xbf16>
    %348 = arith.truncf %313 : vector<2x320xf32> to vector<2x320xbf16>
    %cst_190 = arith.constant dense<0.000000e+00> : vector<2x320xf32>
    %349 = tpu.matmul %348, %347, %cst_190 {dimension_numbers = #tpu.dot_dimension_numbers<[1], [0], [0], [1], [0, 0, 1, 1], [], []>} : vector<2x320xbf16>, vector<320x320xbf16>, vector<2x320xf32> -> vector<2x320xf32>
    %c7_191 = arith.constant 7 : index
    %c0_192 = arith.constant 0 : index
    %350 = vector.load %arg10[%c7_191, %c0_192] : memref<10x320xf32, #tpu.memory_space<vmem>>, vector<1x320xf32>
    %351 = vector.broadcast %350 : vector<1x320xf32> to vector<2x320xf32>
    %352 = arith.addf %349, %351 : vector<2x320xf32>
    %353 = arith.addf %307, %346 : vector<8x320xf32>
    %cst_193 = arith.constant dense<0.000000e+00> : vector<8x320xf32>
    %354 = tpu.matmul %4, %352, %cst_193 {dimension_numbers = #tpu.dot_dimension_numbers<[1], [0], [0], [1], [0, 0, 1, 1], [], []>} : vector<8x2xf32>, vector<2x320xf32>, vector<8x320xf32> -> vector<8x320xf32>
    %355 = arith.addf %353, %354 : vector<8x320xf32>
    %356 = vector.extract_strided_slice %355 {offsets = [0, 0], sizes = [8, 128], strides = [1, 1]} : vector<8x320xf32> to vector<8x128xf32>
    %357 = vector.extract_strided_slice %355 {offsets = [0, 128], sizes = [8, 192], strides = [1, 1]} : vector<8x320xf32> to vector<8x192xf32>
    %c0_194 = arith.constant 0 : index
    %c0_195 = arith.constant 0 : index
    %358 = vector.load %arg9[%c0_194, %c0_195] : memref<128x2048xbf16, #tpu.memory_space<vmem>>, vector<128x2048xbf16>
    %359 = arith.truncf %356 : vector<8x128xf32> to vector<8x128xbf16>
    %cst_196 = arith.constant dense<0.000000e+00> : vector<8x2048xf32>
    %360 = tpu.matmul %359, %358, %cst_196 {dimension_numbers = #tpu.dot_dimension_numbers<[1], [0], [0], [1], [0, 0, 1, 1], [], []>} : vector<8x128xbf16>, vector<128x2048xbf16>, vector<8x2048xf32> -> vector<8x2048xf32>
    %c0_197 = arith.constant 0 : index
    %c0_198 = arith.constant 0 : index
    %361 = vector.load %arg14[%c0_197, %c0_198] : memref<1x2048xf32, #tpu.memory_space<vmem>>, vector<1x2048xf32>
    %362 = vector.broadcast %361 : vector<1x2048xf32> to vector<8x2048xf32>
    %363 = arith.addf %360, %362 : vector<8x2048xf32>
    %c0_199 = arith.constant 0 : index
    %c0_200 = arith.constant 0 : index
    %364 = vector.load %arg22[%c0_199, %c0_200] : memref<8x2048xf32, #tpu.memory_space<vmem>>, vector<8x2048xf32>
    tpu.vector_store %arg22[%c0_199, %c0_200], %363 {strides = array<i32>} : memref<8x2048xf32, #tpu.memory_space<vmem>>, vector<8x2048xf32>,
    %c0_201 = arith.constant 0 : index
    %c0_202 = arith.constant 0 : index
    %365 = vector.load %arg8[%c0_201, %c0_202] : memref<192x48xbf16, #tpu.memory_space<vmem>>, vector<192x48xbf16>
    %366 = arith.truncf %357 : vector<8x192xf32> to vector<8x192xbf16>
    %cst_203 = arith.constant dense<0.000000e+00> : vector<8x48xf32>
    %367 = tpu.matmul %366, %365, %cst_203 {dimension_numbers = #tpu.dot_dimension_numbers<[1], [0], [0], [1], [0, 0, 1, 1], [], []>} : vector<8x192xbf16>, vector<192x48xbf16>, vector<8x48xf32> -> vector<8x48xf32>
    %c0_204 = arith.constant 0 : index
    %c0_205 = arith.constant 0 : index
    %368 = vector.load %arg13[%c0_204, %c0_205] : memref<1x48xf32, #tpu.memory_space<vmem>>, vector<1x48xf32>
    %369 = vector.broadcast %368 : vector<1x48xf32> to vector<8x48xf32>
    %370 = arith.addf %367, %369 : vector<8x48xf32>
    %371 = arith.mulf %370, %18 : vector<8x48xf32>
    %372 = arith.addf %371, %8 : vector<8x48xf32>
    %cst_206 = arith.constant 0.000000e+00 : f32
    %373 = vector.broadcast %cst_206 : f32 to vector<8x48xf32>
    %374 = tpu.concatenate %194, %200, %372, %373 in 1 : vector<8x80xf32>, vector<8x80xf32>, vector<8x48xf32>, vector<8x48xf32> -> vector<8x256xf32>
    %c0_207 = arith.constant 0 : index
    %c0_208 = arith.constant 0 : index
    %375 = vector.load %arg21[%c0_207, %c0_208] : memref<8x256xf32, #tpu.memory_space<vmem>>, vector<8x256xf32>
    tpu.vector_store %arg21[%c0_207, %c0_208], %374 {strides = array<i32>} : memref<8x256xf32, #tpu.memory_space<vmem>>, vector<8x256xf32>,
    return
  }
  func.func @transform_0(%arg0: i32) -> (i32, i32) {
    %c0_i32 = arith.constant 0 : i32
    %c0_i32_0 = arith.constant 0 : i32
    %c0_i32_1 = arith.constant 0 : i32
    return %c0_i32, %c0_i32_0 : i32, i32
  }
  func.func @transform_1(%arg0: i32) -> (i32, i32) {
    %c0_i32 = arith.constant 0 : i32
    %c0_i32_0 = arith.constant 0 : i32
    %c0_i32_1 = arith.constant 0 : i32
    return %c0_i32, %c0_i32_0 : i32, i32
  }
  func.func @transform_2(%arg0: i32) -> (i32, i32) {
    %c0_i32 = arith.constant 0 : i32
    %c0_i32_0 = arith.constant 0 : i32
    %c0_i32_1 = arith.constant 0 : i32
    return %c0_i32, %c0_i32_0 : i32, i32
  }
  func.func @transform_3(%arg0: i32) -> (i32, i32) {
    %c0_i32 = arith.constant 0 : i32
    %c0_i32_0 = arith.constant 0 : i32
    %c0_i32_1 = arith.constant 0 : i32
    return %c0_i32, %c0_i32_0 : i32, i32
  }
  func.func @transform_4(%arg0: i32) -> (i32, i32) {
    %c0_i32 = arith.constant 0 : i32
    %c0_i32_0 = arith.constant 0 : i32
    %c0_i32_1 = arith.constant 0 : i32
    return %c0_i32, %c0_i32_0 : i32, i32
  }
  func.func @transform_5(%arg0: i32) -> (i32, i32) {
    %c0_i32 = arith.constant 0 : i32
    %c0_i32_0 = arith.constant 0 : i32
    %c0_i32_1 = arith.constant 0 : i32
    return %c0_i32, %c0_i32_0 : i32, i32
  }
  func.func @transform_6(%arg0: i32) -> (i32, i32) {
    %c0_i32 = arith.constant 0 : i32
    %c0_i32_0 = arith.constant 0 : i32
    %c0_i32_1 = arith.constant 0 : i32
    return %c0_i32, %c0_i32_0 : i32, i32
  }
  func.func @transform_7(%arg0: i32) -> (i32, i32) {
    %c0_i32 = arith.constant 0 : i32
    %c0_i32_0 = arith.constant 0 : i32
    %c0_i32_1 = arith.constant 0 : i32
    return %c0_i32, %c0_i32_0 : i32, i32
  }
  func.func @transform_8(%arg0: i32) -> (i32, i32) {
    %c0_i32 = arith.constant 0 : i32
    %c0_i32_0 = arith.constant 0 : i32
    %c0_i32_1 = arith.constant 0 : i32
    return %c0_i32, %c0_i32_0 : i32, i32
  }
  func.func @transform_9(%arg0: i32) -> (i32, i32) {
    %c0_i32 = arith.constant 0 : i32
    %c0_i32_0 = arith.constant 0 : i32
    %c0_i32_1 = arith.constant 0 : i32
    return %c0_i32, %c0_i32_0 : i32, i32
  }
  func.func @transform_10(%arg0: i32) -> (i32, i32) {
    %c0_i32 = arith.constant 0 : i32
    %c0_i32_0 = arith.constant 0 : i32
    %c0_i32_1 = arith.constant 0 : i32
    return %c0_i32, %c0_i32_0 : i32, i32
  }
  func.func @transform_11(%arg0: i32) -> (i32, i32) {
    %c0_i32 = arith.constant 0 : i32
    %c0_i32_0 = arith.constant 0 : i32
    %c0_i32_1 = arith.constant 0 : i32
    return %c0_i32, %c0_i32_0 : i32, i32
  }
  func.func @transform_12(%arg0: i32) -> (i32, i32) {
    %c0_i32 = arith.constant 0 : i32
    %c0_i32_0 = arith.constant 0 : i32
    %c0_i32_1 = arith.constant 0 : i32
    return %c0_i32, %c0_i32_0 : i32, i32
  }
  func.func @transform_13(%arg0: i32) -> (i32, i32) {
    %c0_i32 = arith.constant 0 : i32
    %c0_i32_0 = arith.constant 0 : i32
    %c0_i32_1 = arith.constant 0 : i32
    return %c0_i32, %c0_i32_0 : i32, i32
  }
  func.func @transform_14(%arg0: i32) -> (i32, i32) {
    %c0_i32 = arith.constant 0 : i32
    %c0_i32_0 = arith.constant 0 : i32
    %c0_i32_1 = arith.constant 0 : i32
    return %c0_i32, %c0_i32_0 : i32, i32
  }
  func.func @transform_15(%arg0: i32) -> (i32, i32) {
    %c0_i32 = arith.constant 0 : i32
    %c0_i32_0 = arith.constant 0 : i32
    %c0_i32_1 = arith.constant 0 : i32
    return %c0_i32, %c0_i32_0 : i32, i32
  }
  func.func @transform_16(%arg0: i32) -> (i32, i32) {
    %c0_i32 = arith.constant 0 : i32
    %c0_i32_0 = arith.constant 0 : i32
    %c0_i32_1 = arith.constant 0 : i32
    return %c0_i32, %c0_i32_0 : i32, i32
  }
  func.func @transform_17(%arg0: i32) -> (i32, i32) {
    %c0_i32 = arith.constant 0 : i32
    %c0_i32_0 = arith.constant 0 : i32
    %c0_i32_1 = arith.constant 0 : i32
    return %c0_i32, %c0_i32_0 : i32, i32
  }
  func.func @transform_18(%arg0: i32) -> (i32, i32) {
    %c0_i32 = arith.constant 0 : i32
    %c0_i32_0 = arith.constant 0 : i32
    %c0_i32_1 = arith.constant 0 : i32
    return %c0_i32, %c0_i32_0 : i32, i32
  }
  func.func @transform_19(%arg0: i32) -> (i32, i32) {
    %c0_i32 = arith.constant 0 : i32
    %c0_i32_0 = arith.constant 0 : i32
    %c0_i32_1 = arith.constant 0 : i32
    return %c0_i32, %c0_i32_0 : i32, i32
  }
  func.func @transform_20(%arg0: i32) -> (i32, i32) {
    %c0_i32 = arith.constant 0 : i32
    %c0_i32_0 = arith.constant 0 : i32
    %c0_i32_1 = arith.constant 0 : i32
    return %c0_i32, %c0_i32_0 : i32, i32
  }
  func.func @transform_21(%arg0: i32) -> (i32, i32) {
    %c0_i32 = arith.constant 0 : i32
    %c0_i32_0 = arith.constant 0 : i32
    %c0_i32_1 = arith.constant 0 : i32
    return %c0_i32, %c0_i32_0 : i32, i32
  }
}

</mosaic_0001>

<llo_original>
// kernel: forward.1
$region0: #{forward.1}
  #allocation0 [shape = 'u32[]', space=smem, size = 0x4, offset = 0x4, fixed_abs, tag = 'smem constant byte address 0x4 - core index']
  #allocation1 [shape = 'u32[144,128]{1,0:T(1,128)}', space=vmem, size = 0x12000, scoped, tag = 'internal scratch']
  %s0 = inlined_call_operand.vmem [shape: f32[8,48], index: 0, kind: input, shape index: {}]
  %s1 = inlined_call_operand.vmem [shape: f32[8,256], index: 1, kind: input, shape index: {}]
  %s2 = inlined_call_operand.vmem [shape: f32[2,256], index: 2, kind: input, shape index: {}]
  %s3 = inlined_call_operand.vmem [shape: f32[8,80], index: 3, kind: input, shape index: {}]
  %s4 = inlined_call_operand.vmem [shape: bf16[2800,320], index: 4, kind: input, shape index: {}]
  %s5 = inlined_call_operand.vmem [shape: bf16[1760,160], index: 5, kind: input, shape index: {}]
  %s6 = inlined_call_operand.vmem [shape: bf16[960,80], index: 6, kind: input, shape index: {}]
  %s7 = inlined_call_operand.vmem [shape: bf16[192,48], index: 7, kind: input, shape index: {}]
  %s8 = inlined_call_operand.vmem [shape: bf16[128,2048], index: 8, kind: input, shape index: {}]
  %s9 = inlined_call_operand.vmem [shape: f32[10,320], index: 9, kind: input, shape index: {}]
  %s10 = inlined_call_operand.vmem [shape: f32[10,160], index: 10, kind: input, shape index: {}]
  %s11 = inlined_call_operand.vmem [shape: f32[10,80], index: 11, kind: input, shape index: {}]
  %s12 = inlined_call_operand.vmem [shape: f32[1,48], index: 12, kind: input, shape index: {}]
  %s13 = inlined_call_operand.vmem [shape: f32[1,2048], index: 13, kind: input, shape index: {}]
  %s14 = inlined_call_operand.vmem [shape: f32[48,48], index: 14, kind: input, shape index: {}]
  %s15 = inlined_call_operand.vmem [shape: f32[320,320], index: 15, kind: input, shape index: {}]
  %s16 = inlined_call_operand.vmem [shape: f32[160,160], index: 16, kind: input, shape index: {}]
  %s17 = inlined_call_operand.vmem [shape: f32[80,80], index: 17, kind: input, shape index: {}]
  %s18 = inlined_call_operand.vmem [shape: f32[8,2], index: 18, kind: input, shape index: {}]
  %s19 = inlined_call_operand.vmem [shape: f32[8,8], index: 19, kind: input, shape index: {}]
  %s20 = inlined_call_operand.vmem [shape: f32[8,256], index: 20, kind: output, shape index: {0}]
  %s21 = inlined_call_operand.vmem [shape: f32[8,2048], index: 21, kind: output, shape index: {1}]
  %22 = xla_tuple %s20, %s21
  %s23 = sld [smem:[#allocation0]]
  $region98: #{forward.1} parent=0
    _
  %s25 = ssub.s32 1, %s23
  %s26 = scalar_select 0, %s25, %s23
  // Predicated region
  $region2: #{forward.1} parent=0 // pred_check
    _
  $region3: #{forward.1} parent=0 // pred_check_branch
    %28 = sbr.rel (0) target = $region5
  $region4: #{forward.1} parent=0 // pred_region
    _
  $region5: #{forward.1} parent=0 // pred_fallthru
    _
  // Predicated region
  $region6: #{forward.1} parent=0 // pred_check
    _
  $region7: #{forward.1} parent=0 // pred_check_branch
    %30 = sbr.rel (0) target = $region9
  $region8: #{forward.1} parent=0 // pred_region
    _
  $region9: #{forward.1} parent=0 // pred_fallthru
    _
  // Predicated region
  $region10: #{forward.1} parent=0 // pred_check
    _
  $region11: #{forward.1} parent=0 // pred_check_branch
    %32 = sbr.rel (0) target = $region13
  $region12: #{forward.1} parent=0 // pred_region
    _
  $region13: #{forward.1} parent=0 // pred_fallthru
    _
  // Predicated region
  $region14: #{forward.1} parent=0 // pred_check
    _
  $region15: #{forward.1} parent=0 // pred_check_branch
    %34 = sbr.rel (0) target = $region17
  $region16: #{forward.1} parent=0 // pred_region
    _
  $region17: #{forward.1} parent=0 // pred_fallthru
    _
  // Predicated region
  $region18: #{forward.1} parent=0 // pred_check
    _
  $region19: #{forward.1} parent=0 // pred_check_branch
    %36 = sbr.rel (0) target = $region21
  $region20: #{forward.1} parent=0 // pred_region
    _
  $region21: #{forward.1} parent=0 // pred_fallthru
    _
  // Predicated region
  $region22: #{forward.1} parent=0 // pred_check
    _
  $region23: #{forward.1} parent=0 // pred_check_branch
    %38 = sbr.rel (0) target = $region25
  $region24: #{forward.1} parent=0 // pred_region
    _
  $region25: #{forward.1} parent=0 // pred_fallthru
    _
  // Predicated region
  $region26: #{forward.1} parent=0 // pred_check
    _
  $region27: #{forward.1} parent=0 // pred_check_branch
    %40 = sbr.rel (0) target = $region29
  $region28: #{forward.1} parent=0 // pred_region
    _
  $region29: #{forward.1} parent=0 // pred_fallthru
    _
  // Predicated region
  $region30: #{forward.1} parent=0 // pred_check
    _
  $region31: #{forward.1} parent=0 // pred_check_branch
    %42 = sbr.rel (0) target = $region33
  $region32: #{forward.1} parent=0 // pred_region
    _
  $region33: #{forward.1} parent=0 // pred_fallthru
    _
  // Predicated region
  $region34: #{forward.1} parent=0 // pred_check
    _
  $region35: #{forward.1} parent=0 // pred_check_branch
    %44 = sbr.rel (0) target = $region37
  $region36: #{forward.1} parent=0 // pred_region
    _
  $region37: #{forward.1} parent=0 // pred_fallthru
    _
  // Predicated region
  $region38: #{forward.1} parent=0 // pred_check
    _
  $region39: #{forward.1} parent=0 // pred_check_branch
    %46 = sbr.rel (0) target = $region41
  $region40: #{forward.1} parent=0 // pred_region
    _
  $region41: #{forward.1} parent=0 // pred_fallthru
    _
  // Predicated region
  $region42: #{forward.1} parent=0 // pred_check
    _
  $region43: #{forward.1} parent=0 // pred_check_branch
    %48 = sbr.rel (0) target = $region45
  $region44: #{forward.1} parent=0 // pred_region
    _
  $region45: #{forward.1} parent=0 // pred_fallthru
    _
  // Predicated region
  $region46: #{forward.1} parent=0 // pred_check
    _
  $region47: #{forward.1} parent=0 // pred_check_branch
    %50 = sbr.rel (0) target = $region49
  $region48: #{forward.1} parent=0 // pred_region
    _
  $region49: #{forward.1} parent=0 // pred_fallthru
    _
  // Predicated region
  $region50: #{forward.1} parent=0 // pred_check
    _
  $region51: #{forward.1} parent=0 // pred_check_branch
    %52 = sbr.rel (0) target = $region53
  $region52: #{forward.1} parent=0 // pred_region
    _
  $region53: #{forward.1} parent=0 // pred_fallthru
    _
  // Predicated region
  $region54: #{forward.1} parent=0 // pred_check
    _
  $region55: #{forward.1} parent=0 // pred_check_branch
    %54 = sbr.rel (0) target = $region57
  $region56: #{forward.1} parent=0 // pred_region
    _
  $region57: #{forward.1} parent=0 // pred_fallthru
    _
  // Predicated region
  $region58: #{forward.1} parent=0 // pred_check
    _
  $region59: #{forward.1} parent=0 // pred_check_branch
    %56 = sbr.rel (0) target = $region61
  $region60: #{forward.1} parent=0 // pred_region
    _
  $region61: #{forward.1} parent=0 // pred_fallthru
    _
  // Predicated region
  $region62: #{forward.1} parent=0 // pred_check
    _
  $region63: #{forward.1} parent=0 // pred_check_branch
    %58 = sbr.rel (0) target = $region65
  $region64: #{forward.1} parent=0 // pred_region
    _
  $region65: #{forward.1} parent=0 // pred_fallthru
    _
  // Predicated region
  $region66: #{forward.1} parent=0 // pred_check
    _
  $region67: #{forward.1} parent=0 // pred_check_branch
    %60 = sbr.rel (0) target = $region69
  $region68: #{forward.1} parent=0 // pred_region
    _
  $region69: #{forward.1} parent=0 // pred_fallthru
    _
  // Predicated region
  $region70: #{forward.1} parent=0 // pred_check
    _
  $region71: #{forward.1} parent=0 // pred_check_branch
    %62 = sbr.rel (0) target = $region73
  $region72: #{forward.1} parent=0 // pred_region
    _
  $region73: #{forward.1} parent=0 // pred_fallthru
    _
  // Predicated region
  $region74: #{forward.1} parent=0 // pred_check
    _
  $region75: #{forward.1} parent=0 // pred_check_branch
    %64 = sbr.rel (0) target = $region77
  $region76: #{forward.1} parent=0 // pred_region
    _
  $region77: #{forward.1} parent=0 // pred_fallthru
    _
  // Predicated region
  $region78: #{forward.1} parent=0 // pred_check
    _
  $region79: #{forward.1} parent=0 // pred_check_branch
    %66 = sbr.rel (0) target = $region81
  $region80: #{forward.1} parent=0 // pred_region
    _
  $region81: #{forward.1} parent=0 // pred_fallthru
    _
  %v68 = vld [vmem:[%s0] sm:$0xff]
  %v69 = vld [vmem:[%s1] sm:$0xff]
  %v70 = vld [vmem:[%s1 + $0x8] sm:$0xff]
  %v71 = vld [vmem:[%s2] sm:$0xf]
  %v72 = vld [vmem:[%s3] sm:$0xff]
  %v73 = vld [vmem:[%s18] sm:$0xff]
  %v74 = vld [vmem:[%s19] sm:$0xff]
  %v75 = vld [vmem:[%s14] sm:$0xff]
  %v76 = vld [vmem:[%s14 + $0x8] sm:$0xff]
  %v77 = vld [vmem:[%s14 + $0x10] sm:$0xff]
  %v78 = vld [vmem:[%s14 + $0x18] sm:$0xff]
  %v79 = vld [vmem:[%s14 + $0x20] sm:$0xff]
  %v80 = vld [vmem:[%s14 + $0x28] sm:$0xff]
  %vm81 = vcmask 392192
  %v83 = vsel %vm81, %v68, 0
  %85 = vmatprep.subr.mxu0 0.0
  %86 = vmatpush1.msra.mxu0 0.0
  %87 = vmatprep.subr.mxu0 0.0
  %88 = vmatpush1.msra.mxu0 0.0
  %89 = vmatprep.subr.mxu0 0.0
  %90 = vmatpush1.msra.mxu0 0.0
  %91 = vmatprep.subr.mxu0 0.0
  %92 = vmatpush1.msra.mxu0 0.0
  %93 = vmatprep.subr.mxu0 0.0
  %94 = vmatpush1.msra.mxu0 0.0
  %95 = vmatprep.subr.mxu0 0.0
  %96 = vmatpush1.msra.mxu0 0.0
  %97 = vmatprep.subr.mxu0 0.0
  %98 = vmatpush1.msra.mxu0 0.0
  %99 = vmatprep.subr.mxu0 0.0
  %100 = vmatpush1.msra.mxu0 0.0
  %101 = vmatprep.subr.mxu0 0.0
  %102 = vmatpush1.msra.mxu0 0.0
  %103 = vmatprep.subr.mxu0 0.0
  %104 = vmatpush1.msra.mxu0 0.0
  %105 = vmatprep.subr.mxu0 0.0
  %106 = vmatpush1.msra.mxu0 %v80
  %107 = vmatprep.subr.mxu0 0.0
  %108 = vmatpush1.msra.mxu0 %v79
  %109 = vmatprep.subr.mxu0 0.0
  %110 = vmatpush1.msra.mxu0 %v78
  %111 = vmatprep.subr.mxu0 0.0
  %112 = vmatpush1.msra.mxu0 %v77
  %113 = vmatprep.subr.mxu0 0.0
  %114 = vmatpush1.msra.mxu0 %v76
  %115 = vmatprep.subr.mxu0 0.0
  %116 = vmatpush1.msra.mxu0 %v75
  %117 = vmatprep.subr.mxu0 0.0
  %118 = vmatpush2.msra.mxu0 0.0
  %119 = vmatprep.subr.mxu0 0.0
  %120 = vmatpush2.msra.mxu0 0.0
  %121 = vmatprep.subr.mxu0 0.0
  %122 = vmatpush2.msra.mxu0 0.0
  %123 = vmatprep.subr.mxu0 0.0
  %124 = vmatpush2.msra.mxu0 0.0
  %125 = vmatprep.subr.mxu0 0.0
  %126 = vmatpush2.msra.mxu0 0.0
  %127 = vmatprep.subr.mxu0 0.0
  %128 = vmatpush2.msra.mxu0 0.0
  %129 = vmatprep.subr.mxu0 0.0
  %130 = vmatpush2.msra.mxu0 0.0
  %131 = vmatprep.subr.mxu0 0.0
  %132 = vmatpush2.msra.mxu0 0.0
  %133 = vmatprep.subr.mxu0 0.0
  %134 = vmatpush2.msra.mxu0 0.0
  %135 = vmatprep.subr.mxu0 0.0
  %136 = vmatpush2.msra.mxu0 0.0
  %137 = vmatprep.subr.mxu0 0.0
  %138 = vmatpush2.msra.mxu0 0.0
  %139 = vmatprep.subr.mxu0 0.0
  %140 = vmatpush2.msra.mxu0 0.0
  %141 = vmatprep.subr.mxu0 0.0
  %142 = vmatpush2.msra.mxu0 0.0
  %143 = vmatprep.subr.mxu0 0.0
  %144 = vmatpush2.msra.mxu0 0.0
  %145 = vmatprep.subr.mxu0 0.0
  %146 = vmatpush2.msra.mxu0 0.0
  %147 = vmatprep.subr.mxu0 0.0
  %148 = vmatpush2.msra.mxu0 0.0
  %149 = vmatprep.mubr.f32.mxu0 0.0
  %150 = vmatmul.mubr.f32.gmra.mxu0 %v83
  %v151 = vpop.f32.mrf.mxu0
  %v152 = vadd.f32 0.0, %v151
  %v153 = vpop.f32.mrf.mxu0
  %154 = vdwg.mxu0
  %vm155 = vcmask 64512
  %v157 = vsel %vm155, %v74, 0
  %159 = vmatprep.subr.mxu0 0.0
  %160 = vmatpush1.msra.mxu0 0.0
  %161 = vmatprep.subr.mxu0 0.0
  %162 = vmatpush1.msra.mxu0 0.0
  %163 = vmatprep.subr.mxu0 0.0
  %164 = vmatpush1.msra.mxu0 0.0
  %165 = vmatprep.subr.mxu0 0.0
  %166 = vmatpush1.msra.mxu0 0.0
  %167 = vmatprep.subr.mxu0 0.0
  %168 = vmatpush1.msra.mxu0 0.0
  %169 = vmatprep.subr.mxu0 0.0
  %170 = vmatpush1.msra.mxu0 0.0
  %171 = vmatprep.subr.mxu0 0.0
  %172 = vmatpush1.msra.mxu0 0.0
  %173 = vmatprep.subr.mxu0 0.0
  %174 = vmatpush1.msra.mxu0 0.0
  %175 = vmatprep.subr.mxu0 0.0
  %176 = vmatpush1.msra.mxu0 0.0
  %177 = vmatprep.subr.mxu0 0.0
  %178 = vmatpush1.msra.mxu0 0.0
  %179 = vmatprep.subr.mxu0 0.0
  %180 = vmatpush1.msra.mxu0 0.0
  %181 = vmatprep.subr.mxu0 0.0
  %182 = vmatpush1.msra.mxu0 0.0
  %183 = vmatprep.subr.mxu0 0.0
  %184 = vmatpush1.msra.mxu0 0.0
  %185 = vmatprep.subr.mxu0 0.0
  %186 = vmatpush1.msra.mxu0 0.0
  %187 = vmatprep.subr.mxu0 0.0
  %188 = vmatpush1.msra.mxu0 0.0
  %189 = vmatprep.subr.mxu0 0.0
  %190 = vmatpush1.msra.mxu0 %v152
  %191 = vmatprep.subr.mxu0 0.0
  %192 = vmatpush2.msra.mxu0 0.0
  %193 = vmatprep.subr.mxu0 0.0
  %194 = vmatpush2.msra.mxu0 0.0
  %195 = vmatprep.subr.mxu0 0.0
  %196 = vmatpush2.msra.mxu0 0.0
  %197 = vmatprep.subr.mxu0 0.0
  %198 = vmatpush2.msra.mxu0 0.0
  %199 = vmatprep.subr.mxu0 0.0
  %200 = vmatpush2.msra.mxu0 0.0
  %201 = vmatprep.subr.mxu0 0.0
  %202 = vmatpush2.msra.mxu0 0.0
  %203 = vmatprep.subr.mxu0 0.0
  %204 = vmatpush2.msra.mxu0 0.0
  %205 = vmatprep.subr.mxu0 0.0
  %206 = vmatpush2.msra.mxu0 0.0
  %207 = vmatprep.subr.mxu0 0.0
  %208 = vmatpush2.msra.mxu0 0.0
  %209 = vmatprep.subr.mxu0 0.0
  %210 = vmatpush2.msra.mxu0 0.0
  %211 = vmatprep.subr.mxu0 0.0
  %212 = vmatpush2.msra.mxu0 0.0
  %213 = vmatprep.subr.mxu0 0.0
  %214 = vmatpush2.msra.mxu0 0.0
  %215 = vmatprep.subr.mxu0 0.0
  %216 = vmatpush2.msra.mxu0 0.0
  %217 = vmatprep.subr.mxu0 0.0
  %218 = vmatpush2.msra.mxu0 0.0
  %219 = vmatprep.subr.mxu0 0.0
  %220 = vmatpush2.msra.mxu0 0.0
  %221 = vmatprep.subr.mxu0 0.0
  %222 = vmatpush2.msra.mxu0 0.0
  %223 = vmatprep.mubr.f32.mxu0 0.0
  %224 = vmatmul.mubr.f32.gmra.mxu0 %v157
  %v225 = vpop.f32.mrf.mxu0
  %v226 = vadd.f32 0.0, %v225
  %v227 = vpop.f32.mrf.mxu0
  %228 = vdwg.mxu0
  %v229 = vsub.f32 %v68, %v226
  %v230 = vmul.f32 %v229, %v229
  %v232 = vsel %vm81, %v230, 0
  %234 = vmatprep.subr.mxu0 0.0
  %235 = vmatpush1.msra.mxu0 0.0
  %236 = vmatprep.subr.mxu0 0.0
  %237 = vmatpush1.msra.mxu0 0.0
  %238 = vmatprep.subr.mxu0 0.0
  %239 = vmatpush1.msra.mxu0 0.0
  %240 = vmatprep.subr.mxu0 0.0
  %241 = vmatpush1.msra.mxu0 0.0
  %242 = vmatprep.subr.mxu0 0.0
  %243 = vmatpush1.msra.mxu0 0.0
  %244 = vmatprep.subr.mxu0 0.0
  %245 = vmatpush1.msra.mxu0 0.0
  %246 = vmatprep.subr.mxu0 0.0
  %247 = vmatpush1.msra.mxu0 0.0
  %248 = vmatprep.subr.mxu0 0.0
  %249 = vmatpush1.msra.mxu0 0.0
  %250 = vmatprep.subr.mxu0 0.0
  %251 = vmatpush1.msra.mxu0 0.0
  %252 = vmatprep.subr.mxu0 0.0
  %253 = vmatpush1.msra.mxu0 0.0
  %254 = vmatprep.subr.mxu0 0.0
  %255 = vmatpush1.msra.mxu0 %v80
  %256 = vmatprep.subr.mxu0 0.0
  %257 = vmatpush1.msra.mxu0 %v79
  %258 = vmatprep.subr.mxu0 0.0
  %259 = vmatpush1.msra.mxu0 %v78
  %260 = vmatprep.subr.mxu0 0.0
  %261 = vmatpush1.msra.mxu0 %v77
  %262 = vmatprep.subr.mxu0 0.0
  %263 = vmatpush1.msra.mxu0 %v76
  %264 = vmatprep.subr.mxu0 0.0
  %265 = vmatpush1.msra.mxu0 %v75
  %266 = vmatprep.subr.mxu0 0.0
  %267 = vmatpush2.msra.mxu0 0.0
  %268 = vmatprep.subr.mxu0 0.0
  %269 = vmatpush2.msra.mxu0 0.0
  %270 = vmatprep.subr.mxu0 0.0
  %271 = vmatpush2.msra.mxu0 0.0
  %272 = vmatprep.subr.mxu0 0.0
  %273 = vmatpush2.msra.mxu0 0.0
  %274 = vmatprep.subr.mxu0 0.0
  %275 = vmatpush2.msra.mxu0 0.0
  %276 = vmatprep.subr.mxu0 0.0
  %277 = vmatpush2.msra.mxu0 0.0
  %278 = vmatprep.subr.mxu0 0.0
  %279 = vmatpush2.msra.mxu0 0.0
  %280 = vmatprep.subr.mxu0 0.0
  %281 = vmatpush2.msra.mxu0 0.0
  %282 = vmatprep.subr.mxu0 0.0
  %283 = vmatpush2.msra.mxu0 0.0
  %284 = vmatprep.subr.mxu0 0.0
  %285 = vmatpush2.msra.mxu0 0.0
  %286 = vmatprep.subr.mxu0 0.0
  %287 = vmatpush2.msra.mxu0 0.0
  %288 = vmatprep.subr.mxu0 0.0
  %289 = vmatpush2.msra.mxu0 0.0
  %290 = vmatprep.subr.mxu0 0.0
  %291 = vmatpush2.msra.mxu0 0.0
  %292 = vmatprep.subr.mxu0 0.0
  %293 = vmatpush2.msra.mxu0 0.0
  %294 = vmatprep.subr.mxu0 0.0
  %295 = vmatpush2.msra.mxu0 0.0
  %296 = vmatprep.subr.mxu0 0.0
  %297 = vmatpush2.msra.mxu0 0.0
  %298 = vmatprep.mubr.f32.mxu0 0.0
  %299 = vmatmul.mubr.f32.gmra.mxu0 %v232
  %v300 = vpop.f32.mrf.mxu0
  %v301 = vadd.f32 0.0, %v300
  %v302 = vpop.f32.mrf.mxu0
  %303 = vdwg.mxu0
  %304 = vmatprep.subr.mxu0 0.0
  %305 = vmatpush1.msra.mxu0 0.0
  %306 = vmatprep.subr.mxu0 0.0
  %307 = vmatpush1.msra.mxu0 0.0
  %308 = vmatprep.subr.mxu0 0.0
  %309 = vmatpush1.msra.mxu0 0.0
  %310 = vmatprep.subr.mxu0 0.0
  %311 = vmatpush1.msra.mxu0 0.0
  %312 = vmatprep.subr.mxu0 0.0
  %313 = vmatpush1.msra.mxu0 0.0
  %314 = vmatprep.subr.mxu0 0.0
  %315 = vmatpush1.msra.mxu0 0.0
  %316 = vmatprep.subr.mxu0 0.0
  %317 = vmatpush1.msra.mxu0 0.0
  %318 = vmatprep.subr.mxu0 0.0
  %319 = vmatpush1.msra.mxu0 0.0
  %320 = vmatprep.subr.mxu0 0.0
  %321 = vmatpush1.msra.mxu0 0.0
  %322 = vmatprep.subr.mxu0 0.0
  %323 = vmatpush1.msra.mxu0 0.0
  %324 = vmatprep.subr.mxu0 0.0
  %325 = vmatpush1.msra.mxu0 0.0
  %326 = vmatprep.subr.mxu0 0.0
  %327 = vmatpush1.msra.mxu0 0.0
  %328 = vmatprep.subr.mxu0 0.0
  %329 = vmatpush1.msra.mxu0 0.0
  %330 = vmatprep.subr.mxu0 0.0
  %331 = vmatpush1.msra.mxu0 0.0
  %332 = vmatprep.subr.mxu0 0.0
  %333 = vmatpush1.msra.mxu0 0.0
  %334 = vmatprep.subr.mxu0 0.0
  %335 = vmatpush1.msra.mxu0 %v301
  %336 = vmatprep.subr.mxu0 0.0
  %337 = vmatpush2.msra.mxu0 0.0
  %338 = vmatprep.subr.mxu0 0.0
  %339 = vmatpush2.msra.mxu0 0.0
  %340 = vmatprep.subr.mxu0 0.0
  %341 = vmatpush2.msra.mxu0 0.0
  %342 = vmatprep.subr.mxu0 0.0
  %343 = vmatpush2.msra.mxu0 0.0
  %344 = vmatprep.subr.mxu0 0.0
  %345 = vmatpush2.msra.mxu0 0.0
  %346 = vmatprep.subr.mxu0 0.0
  %347 = vmatpush2.msra.mxu0 0.0
  %348 = vmatprep.subr.mxu0 0.0
  %349 = vmatpush2.msra.mxu0 0.0
  %350 = vmatprep.subr.mxu0 0.0
  %351 = vmatpush2.msra.mxu0 0.0
  %352 = vmatprep.subr.mxu0 0.0
  %353 = vmatpush2.msra.mxu0 0.0
  %354 = vmatprep.subr.mxu0 0.0
  %355 = vmatpush2.msra.mxu0 0.0
  %356 = vmatprep.subr.mxu0 0.0
  %357 = vmatpush2.msra.mxu0 0.0
  %358 = vmatprep.subr.mxu0 0.0
  %359 = vmatpush2.msra.mxu0 0.0
  %360 = vmatprep.subr.mxu0 0.0
  %361 = vmatpush2.msra.mxu0 0.0
  %362 = vmatprep.subr.mxu0 0.0
  %363 = vmatpush2.msra.mxu0 0.0
  %364 = vmatprep.subr.mxu0 0.0
  %365 = vmatpush2.msra.mxu0 0.0
  %366 = vmatprep.subr.mxu0 0.0
  %367 = vmatpush2.msra.mxu0 0.0
  %368 = vmatprep.mubr.f32.mxu0 0.0
  %369 = vmatmul.mubr.f32.gmra.mxu0 %v157
  %v370 = vpop.f32.mrf.mxu0
  %v371 = vadd.f32 1e-05, %v370
  %v372 = vpop.f32.mrf.mxu0
  %373 = vdwg.mxu0
  %v374 = vrsqrt.pop %v371
  %v375 = vrsqrt.pop %v371
  %v376 = vmul.f32 %v371, %v375
  %vm377 = vcmp.eq.f32.partialorder %v371, inf
  %v378 = vsel %vm377, %v371, %v376
  %vm379 = vcmp.eq.f32.partialorder %v371, 0.0
  %v380 = vand.u32 %v371, 2147483648
  %v381 = vsel %vm379, %v380, %v378
  %v382 = vmul.f32 %v229, %v374
  %v383 = vld [vmem:[%s4] sm:$0xff]
  %v384 = vld [vmem:[%s4 + $0x8] sm:$0xf]
  %v385 = vld [vmem:[%s4 + $0xc] sm:$0xff]
  %v386 = vld [vmem:[%s4 + $0x14] sm:$0xf]
  %v387 = vld [vmem:[%s4 + $0x18] sm:$0xff]
  %v388 = vld [vmem:[%s4 + $0x20] sm:$0xf]
  %v389 = vld [vmem:[%s4 + $0x24] sm:$0xff]
  %v390 = vld [vmem:[%s4 + $0x2c] sm:$0xf]
  %v391 = vld [vmem:[%s4 + $0x30] sm:$0xff]
  %v392 = vld [vmem:[%s4 + $0x38] sm:$0xf]
  %v393 = vld [vmem:[%s4 + $0x3c] sm:$0xff]
  %v394 = vld [vmem:[%s4 + $0x44] sm:$0xf]
  %v395 = vpack.c.bf16 %v382, %v382
  %v396 = vld [vmem:[%s4 + $0x48] sm:$0xff]
  %v397 = vld [vmem:[%s4 + $0x50] sm:$0xf]
  %v398 = vld [vmem:[%s4 + $0x54] sm:$0xff]
  %v399 = vld [vmem:[%s4 + $0x5c] sm:$0xf]
  %v400 = vld [vmem:[%s4 + $0x60] sm:$0xff]
  %v401 = vld [vmem:[%s4 + $0x68] sm:$0xf]
  %v402 = vld [vmem:[%s4 + $0x6c] sm:$0xff]
  %v403 = vld [vmem:[%s4 + $0x74] sm:$0xf]
  %v404 = vld [vmem:[%s4 + $0x78] sm:$0xff]
  %v405 = vld [vmem:[%s4 + $0x80] sm:$0xf]
  %v406 = vld [vmem:[%s4 + $0x84] sm:$0xff]
  %v407 = vld [vmem:[%s4 + $0x8c] sm:$0xf]
  %v408 = vld [vmem:[%s4 + $0x90] sm:$0xff]
  %v409 = vld [vmem:[%s4 + $0x98] sm:$0xf]
  %v410 = vld [vmem:[%s4 + $0x9c] sm:$0xff]
  %v411 = vld [vmem:[%s4 + $0xa4] sm:$0xf]
  %v412 = vld [vmem:[%s4 + $0xa8] sm:$0xff]
  %v413 = vld [vmem:[%s4 + $0xb0] sm:$0xf]
  %v414 = vld [vmem:[%s4 + $0xb4] sm:$0xff]
  %v415 = vld [vmem:[%s4 + $0xbc] sm:$0xf]
  %v416 = vld [vmem:[%s4 + $0xc0] sm:$0xff]
  %v417 = vld [vmem:[%s4 + $0xc8] sm:$0xf]
  %v418 = vld [vmem:[%s4 + $0xcc] sm:$0xff]
  %v419 = vld [vmem:[%s4 + $0xd4] sm:$0xf]
  %v420 = vld [vmem:[%s4 + $0xd8] sm:$0xff]
  %v421 = vld [vmem:[%s4 + $0xe0] sm:$0xf]
  %v422 = vld [vmem:[%s4 + $0xe4] sm:$0xff]
  %v423 = vld [vmem:[%s4 + $0xec] sm:$0xf]
  %v424 = vld [vmem:[%s4 + $0xf0] sm:$0xff]
  %v425 = vld [vmem:[%s4 + $0xf8] sm:$0xf]
  %v426 = vld [vmem:[%s4 + $0xfc] sm:$0xff]
  %v427 = vld [vmem:[%s4 + $0x104] sm:$0xf]
  %v428 = vld [vmem:[%s4 + $0x108] sm:$0xff]
  %v429 = vld [vmem:[%s4 + $0x110] sm:$0xf]
  %v430 = vld [vmem:[%s4 + $0x114] sm:$0xff]
  %v431 = vld [vmem:[%s4 + $0x11c] sm:$0xf]
  %v432 = vld [vmem:[%s4 + $0x120] sm:$0xff]
  %v433 = vld [vmem:[%s4 + $0x128] sm:$0xf]
  %v434 = vld [vmem:[%s4 + $0x12c] sm:$0xff]
  %v435 = vld [vmem:[%s4 + $0x134] sm:$0xf]
  %v436 = vld [vmem:[%s4 + $0x138] sm:$0xff]
  %v437 = vld [vmem:[%s4 + $0x140] sm:$0xf]
  %v438 = vld [vmem:[%s4 + $0x144] sm:$0xff]
  %v439 = vld [vmem:[%s4 + $0x14c] sm:$0xf]
  %v440 = vld [vmem:[%s4 + $0x150] sm:$0xff]
  %v441 = vld [vmem:[%s4 + $0x158] sm:$0xf]
  %v442 = vld [vmem:[%s4 + $0x15c] sm:$0xff]
  %v443 = vld [vmem:[%s4 + $0x164] sm:$0xf]
  %v444 = vld [vmem:[%s4 + $0x168] sm:$0xff]
  %v445 = vld [vmem:[%s4 + $0x170] sm:$0xf]
  %v446 = vld [vmem:[%s4 + $0x174] sm:$0xff]
  %v447 = vld [vmem:[%s4 + $0x17c] sm:$0xf]
  %v448 = vld [vmem:[%s4 + $0x180] sm:$0xff]
  %v449 = vld [vmem:[%s4 + $0x188] sm:$0xf]
  %v450 = vld [vmem:[%s4 + $0x18c] sm:$0xff]
  %v451 = vld [vmem:[%s4 + $0x194] sm:$0xf]
  %v452 = vld [vmem:[%s4 + $0x198] sm:$0xff]
  %v453 = vld [vmem:[%s4 + $0x1a0] sm:$0xf]
  %v454 = vld [vmem:[%s4 + $0x1a4] sm:$0xff]
  %v455 = vld [vmem:[%s4 + $0x1ac] sm:$0xf]
  %v456 = vld [vmem:[%s4 + $0x1b0] sm:$0xff]
  %v457 = vld [vmem:[%s4 + $0x1b8] sm:$0xf]
  %v458 = vld [vmem:[%s4 + $0x1bc] sm:$0xff]
  %v459 = vld [vmem:[%s4 + $0x1c4] sm:$0xf]
  %v460 = vpack.c.bf16 %v69, %v69
  %v461 = vpack.c.bf16 %v70, %v70
  %v526 = vunpack.c.l.b16 %v396
  %v527 = vunpack.c.h.b16 %v396
  %v528 = vunpack.c.l.b16 %v397
  %v529 = vunpack.c.l.b16 %v398
  %v530 = vunpack.c.h.b16 %v398
  %v531 = vunpack.c.l.b16 %v399
  %v532 = vunpack.c.l.b16 %v400
  %v533 = vunpack.c.h.b16 %v400
  %v534 = vunpack.c.l.b16 %v401
  %v535 = vunpack.c.l.b16 %v402
  %v536 = vunpack.c.h.b16 %v402
  %v537 = vunpack.c.l.b16 %v403
  %v538 = vunpack.c.l.b16 %v404
  %v539 = vunpack.c.h.b16 %v404
  %v540 = vunpack.c.l.b16 %v405
  %v541 = vunpack.c.l.b16 %v406
  %v542 = vunpack.c.h.b16 %v406
  %v543 = vunpack.c.l.b16 %v407
  %v544 = vunpack.c.l.b16 %v408
  %v545 = vunpack.c.h.b16 %v408
  %v546 = vunpack.c.l.b16 %v409
  %v547 = vunpack.c.l.b16 %v410
  %v548 = vunpack.c.h.b16 %v410
  %v549 = vunpack.c.l.b16 %v411
  %v550 = vunpack.c.l.b16 %v412
  %v551 = vunpack.c.h.b16 %v412
  %v552 = vunpack.c.l.b16 %v413
  %v553 = vunpack.c.l.b16 %v414
  %v554 = vunpack.c.h.b16 %v414
  %v555 = vunpack.c.l.b16 %v415
  %v556 = vunpack.c.l.b16 %v416
  %v557 = vunpack.c.h.b16 %v416
  %v558 = vunpack.c.l.b16 %v417
  %v559 = vunpack.c.l.b16 %v418
  %v560 = vunpack.c.h.b16 %v418
  %v561 = vunpack.c.l.b16 %v419
  %v562 = vunpack.c.l.b16 %v420
  %v563 = vunpack.c.h.b16 %v420
  %v564 = vunpack.c.l.b16 %v421
  %v565 = vunpack.c.l.b16 %v422
  %v566 = vunpack.c.h.b16 %v422
  %v567 = vunpack.c.l.b16 %v423
  %v568 = vunpack.c.l.b16 %v424
  %v569 = vunpack.c.h.b16 %v424
  %v570 = vunpack.c.l.b16 %v425
  %v571 = vunpack.c.l.b16 %v426
  %v572 = vunpack.c.h.b16 %v426
  %v573 = vunpack.c.l.b16 %v427
  %v574 = vunpack.c.l.b16 %v428
  %v575 = vunpack.c.h.b16 %v428
  %v576 = vunpack.c.l.b16 %v429
  %v577 = vunpack.c.l.b16 %v430
  %v578 = vunpack.c.h.b16 %v430
  %v579 = vunpack.c.l.b16 %v431
  %v580 = vunpack.c.l.b16 %v432
  %v581 = vunpack.c.h.b16 %v432
  %v582 = vunpack.c.l.b16 %v433
  %v583 = vunpack.c.l.b16 %v434
  %v584 = vunpack.c.h.b16 %v434
  %v585 = vunpack.c.l.b16 %v435
  %v586 = vunpack.c.l.b16 %v436
  %v587 = vunpack.c.h.b16 %v436
  %v588 = vunpack.c.l.b16 %v437
  %v589 = vunpack.c.l.b16 %v438
  %v590 = vunpack.c.h.b16 %v438
  %v591 = vunpack.c.l.b16 %v439
  %v592 = vunpack.c.l.b16 %v440
  %v593 = vunpack.c.h.b16 %v440
  %v594 = vunpack.c.l.b16 %v441
  %v595 = vunpack.c.l.b16 %v442
  %v596 = vunpack.c.h.b16 %v442
  %v597 = vunpack.c.l.b16 %v443
  %v598 = vunpack.c.l.b16 %v444
  %v599 = vunpack.c.h.b16 %v444
  %v600 = vunpack.c.l.b16 %v445
  %v601 = vunpack.c.l.b16 %v446
  %v602 = vunpack.c.h.b16 %v446
  %v603 = vunpack.c.l.b16 %v447
  %v604 = vunpack.c.l.b16 %v448
  %v605 = vunpack.c.h.b16 %v448
  %v606 = vunpack.c.l.b16 %v449
  %v607 = vunpack.c.l.b16 %v450
  %v608 = vunpack.c.h.b16 %v450
  %v609 = vunpack.c.l.b16 %v451
  %v610 = vunpack.c.l.b16 %v452
  %v611 = vunpack.c.h.b16 %v452
  %v612 = vunpack.c.l.b16 %v453
  %v613 = vunpack.c.l.b16 %v454
  %v614 = vunpack.c.h.b16 %v454
  %v615 = vunpack.c.l.b16 %v455
  %v616 = vunpack.c.l.b16 %v456
  %v617 = vunpack.c.h.b16 %v456
  %v618 = vunpack.c.l.b16 %v457
  %v619 = vunpack.c.l.b16 %v458
  %v620 = vunpack.c.h.b16 %v458
  %v621 = vunpack.c.l.b16 %v459
  %v622 = vpack.c.b16 %v529, %v526
  %v623 = vpack.c.b16 %v530, %v527
  %v624 = vpack.c.b16 %v531, %v528
  %v625 = vpack.c.b16 %v535, %v532
  %v626 = vpack.c.b16 %v536, %v533
  %v627 = vpack.c.b16 %v537, %v534
  %v628 = vpack.c.b16 %v541, %v538
  %v629 = vpack.c.b16 %v542, %v539
  %v630 = vpack.c.b16 %v543, %v540
  %v631 = vpack.c.b16 %v547, %v544
  %v632 = vpack.c.b16 %v548, %v545
  %v633 = vpack.c.b16 %v549, %v546
  %v634 = vpack.c.b16 %v553, %v550
  %v635 = vpack.c.b16 %v554, %v551
  %v636 = vpack.c.b16 %v555, %v552
  %v637 = vpack.c.b16 %v559, %v556
  %v638 = vpack.c.b16 %v560, %v557
  %v639 = vpack.c.b16 %v561, %v558
  %v640 = vpack.c.b16 %v565, %v562
  %v641 = vpack.c.b16 %v566, %v563
  %v642 = vpack.c.b16 %v567, %v564
  %v643 = vpack.c.b16 %v571, %v568
  %v644 = vpack.c.b16 %v572, %v569
  %v645 = vpack.c.b16 %v573, %v570
  %v646 = vpack.c.b16 %v577, %v574
  %v647 = vpack.c.b16 %v578, %v575
  %v648 = vpack.c.b16 %v579, %v576
  %v649 = vpack.c.b16 %v583, %v580
  %v650 = vpack.c.b16 %v584, %v581
  %v651 = vpack.c.b16 %v585, %v582
  %v652 = vpack.c.b16 %v589, %v586
  %v653 = vpack.c.b16 %v590, %v587
  %v654 = vpack.c.b16 %v591, %v588
  %v655 = vpack.c.b16 %v595, %v592
  %v656 = vpack.c.b16 %v596, %v593
  %v657 = vpack.c.b16 %v597, %v594
  %v658 = vpack.c.b16 %v601, %v598
  %v659 = vpack.c.b16 %v602, %v599
  %v660 = vpack.c.b16 %v603, %v600
  %v661 = vpack.c.b16 %v607, %v604
  %v662 = vpack.c.b16 %v608, %v605
  %v663 = vpack.c.b16 %v609, %v606
  %v664 = vpack.c.b16 %v613, %v610
  %v665 = vpack.c.b16 %v614, %v611
  %v666 = vpack.c.b16 %v615, %v612
  %v667 = vpack.c.b16 %v619, %v616
  %v668 = vpack.c.b16 %v620, %v617
  %v669 = vpack.c.b16 %v621, %v618
  %718 = vmatprep.subr.bf16.mxu0 %v644
  %719 = vmatpush1.bf16.msra.mxu0 %v643
  %720 = vmatprep.subr.bf16.mxu0 %v641
  %721 = vmatpush1.bf16.msra.mxu0 %v640
  %722 = vmatprep.subr.bf16.mxu0 %v638
  %723 = vmatpush1.bf16.msra.mxu0 %v637
  %724 = vmatprep.subr.bf16.mxu0 %v635
  %725 = vmatpush1.bf16.msra.mxu0 %v634
  %726 = vmatprep.subr.bf16.mxu0 %v632
  %727 = vmatpush1.bf16.msra.mxu0 %v631
  %728 = vmatprep.subr.bf16.mxu0 %v629
  %729 = vmatpush1.bf16.msra.mxu0 %v628
  %730 = vmatprep.subr.bf16.mxu0 %v626
  %731 = vmatpush1.bf16.msra.mxu0 %v625
  %732 = vmatprep.subr.bf16.mxu0 %v623
  %733 = vmatpush1.bf16.msra.mxu0 %v622
  %734 = vmatprep.subr.bf16.mxu0 %v668
  %735 = vmatpush2.bf16.msra.mxu0 %v667
  %736 = vmatprep.subr.bf16.mxu0 %v665
  %737 = vmatpush2.bf16.msra.mxu0 %v664
  %738 = vmatprep.subr.bf16.mxu0 %v662
  %739 = vmatpush2.bf16.msra.mxu0 %v661
  %740 = vmatprep.subr.bf16.mxu0 %v659
  %741 = vmatpush2.bf16.msra.mxu0 %v658
  %742 = vmatprep.subr.bf16.mxu0 %v656
  %743 = vmatpush2.bf16.msra.mxu0 %v655
  %744 = vmatprep.subr.bf16.mxu0 %v653
  %745 = vmatpush2.bf16.msra.mxu0 %v652
  %746 = vmatprep.subr.bf16.mxu0 %v650
  %747 = vmatpush2.bf16.msra.mxu0 %v649
  %748 = vmatprep.subr.bf16.mxu0 %v647
  %749 = vmatpush2.bf16.msra.mxu0 %v646
  %750 = vmatprep.mubr.bf16.mxu0 %v461
  %751 = vmatmul.mubr.bf16.gmra.mxu0 %v460
  %v752 = vpop.f32.mrf.mxu0
  %v753 = vadd.f32 0.0, %v752
  %v754 = vpop.f32.mrf.mxu0
  %v755 = vadd.f32 0.0, %v754
  %v756 = vpop.f32.mrf.mxu0
  %v757 = vpop.f32.mrf.mxu0
  %758 = vdwg.mxu0
  %759 = vmatprep.subr.bf16.mxu0 0
  %760 = vmatpush1.bf16.msra.mxu0 %v645
  %761 = vmatprep.subr.bf16.mxu0 0
  %762 = vmatpush1.bf16.msra.mxu0 %v642
  %763 = vmatprep.subr.bf16.mxu0 0
  %764 = vmatpush1.bf16.msra.mxu0 %v639
  %765 = vmatprep.subr.bf16.mxu0 0
  %766 = vmatpush1.bf16.msra.mxu0 %v636
  %767 = vmatprep.subr.bf16.mxu0 0
  %768 = vmatpush1.bf16.msra.mxu0 %v633
  %769 = vmatprep.subr.bf16.mxu0 0
  %770 = vmatpush1.bf16.msra.mxu0 %v630
  %771 = vmatprep.subr.bf16.mxu0 0
  %772 = vmatpush1.bf16.msra.mxu0 %v627
  %773 = vmatprep.subr.bf16.mxu0 0
  %774 = vmatpush1.bf16.msra.mxu0 %v624
  %775 = vmatprep.subr.bf16.mxu0 0
  %776 = vmatpush2.bf16.msra.mxu0 %v669
  %777 = vmatprep.subr.bf16.mxu0 0
  %778 = vmatpush2.bf16.msra.mxu0 %v666
  %779 = vmatprep.subr.bf16.mxu0 0
  %780 = vmatpush2.bf16.msra.mxu0 %v663
  %781 = vmatprep.subr.bf16.mxu0 0
  %782 = vmatpush2.bf16.msra.mxu0 %v660
  %783 = vmatprep.subr.bf16.mxu0 0
  %784 = vmatpush2.bf16.msra.mxu0 %v657
  %785 = vmatprep.subr.bf16.mxu0 0
  %786 = vmatpush2.bf16.msra.mxu0 %v654
  %787 = vmatprep.subr.bf16.mxu0 0
  %788 = vmatpush2.bf16.msra.mxu0 %v651
  %789 = vmatprep.subr.bf16.mxu0 0
  %790 = vmatpush2.bf16.msra.mxu0 %v648
  %791 = vmatprep.mubr.bf16.mxu0 %v461
  %792 = vmatmul.mubr.bf16.gmra.mxu0 %v460
  %v793 = vpop.f32.mrf.mxu0
  %v794 = vadd.f32 0.0, %v793
  %v795 = vpop.f32.mrf.mxu0
  %v796 = vpop.f32.mrf.mxu0
  %v797 = vpop.f32.mrf.mxu0
  %798 = vdwg.mxu0
  %v811 = vunpack.c.l.b16 %v383
  %v812 = vunpack.c.h.b16 %v383
  %v813 = vunpack.c.l.b16 %v384
  %v814 = vunpack.c.l.b16 %v385
  %v815 = vunpack.c.h.b16 %v385
  %v816 = vunpack.c.l.b16 %v386
  %v817 = vunpack.c.l.b16 %v387
  %v818 = vunpack.c.h.b16 %v387
  %v819 = vunpack.c.l.b16 %v388
  %v820 = vunpack.c.l.b16 %v389
  %v821 = vunpack.c.h.b16 %v389
  %v822 = vunpack.c.l.b16 %v390
  %v823 = vunpack.c.l.b16 %v391
  %v824 = vunpack.c.h.b16 %v391
  %v825 = vunpack.c.l.b16 %v392
  %v826 = vunpack.c.l.b16 %v393
  %v827 = vunpack.c.h.b16 %v393
  %v828 = vunpack.c.l.b16 %v394
  %v829 = vpack.c.b16 %v814, %v811
  %v830 = vpack.c.b16 %v815, %v812
  %v831 = vpack.c.b16 %v816, %v813
  %v832 = vpack.c.b16 %v820, %v817
  %v833 = vpack.c.b16 %v821, %v818
  %v834 = vpack.c.b16 %v822, %v819
  %v835 = vpack.c.b16 %v826, %v823
  %v836 = vpack.c.b16 %v827, %v824
  %v837 = vpack.c.b16 %v828, %v825
  %v848 = vsel %vm81, %v395, 0
  %850 = vmatprep.subr.bf16.mxu0 0
  %851 = vmatpush1.bf16.msra.mxu0 0
  %852 = vmatprep.subr.bf16.mxu0 0
  %853 = vmatpush1.bf16.msra.mxu0 0
  %854 = vmatprep.subr.bf16.mxu0 0
  %855 = vmatpush1.bf16.msra.mxu0 0
  %856 = vmatprep.subr.bf16.mxu0 0
  %857 = vmatpush1.bf16.msra.mxu0 0
  %858 = vmatprep.subr.bf16.mxu0 0
  %859 = vmatpush1.bf16.msra.mxu0 0
  %860 = vmatprep.subr.bf16.mxu0 %v836
  %861 = vmatpush1.bf16.msra.mxu0 %v835
  %862 = vmatprep.subr.bf16.mxu0 %v833
  %863 = vmatpush1.bf16.msra.mxu0 %v832
  %864 = vmatprep.subr.bf16.mxu0 %v830
  %865 = vmatpush1.bf16.msra.mxu0 %v829
  %866 = vmatprep.subr.bf16.mxu0 0
  %867 = vmatpush2.bf16.msra.mxu0 0
  %868 = vmatprep.subr.bf16.mxu0 0
  %869 = vmatpush2.bf16.msra.mxu0 0
  %870 = vmatprep.subr.bf16.mxu0 0
  %871 = vmatpush2.bf16.msra.mxu0 0
  %872 = vmatprep.subr.bf16.mxu0 0
  %873 = vmatpush2.bf16.msra.mxu0 0
  %874 = vmatprep.subr.bf16.mxu0 0
  %875 = vmatpush2.bf16.msra.mxu0 0
  %876 = vmatprep.subr.bf16.mxu0 0
  %877 = vmatpush2.bf16.msra.mxu0 0
  %878 = vmatprep.subr.bf16.mxu0 0
  %879 = vmatpush2.bf16.msra.mxu0 0
  %880 = vmatprep.subr.bf16.mxu0 0
  %881 = vmatpush2.bf16.msra.mxu0 0
  %882 = vmatprep.mubr.bf16.mxu0 0
  %883 = vmatmul.mubr.bf16.gmra.mxu0 %v848
  %v884 = vpop.f32.mrf.mxu0
  %v885 = vadd.f32 %v753, %v884
  %v886 = vpop.f32.mrf.mxu0
  %v887 = vadd.f32 %v755, %v886
  %v888 = vpop.f32.mrf.mxu0
  %v889 = vpop.f32.mrf.mxu0
  %890 = vdwg.mxu0
  %891 = vmatprep.subr.bf16.mxu0 0
  %892 = vmatpush1.bf16.msra.mxu0 0
  %893 = vmatprep.subr.bf16.mxu0 0
  %894 = vmatpush1.bf16.msra.mxu0 0
  %895 = vmatprep.subr.bf16.mxu0 0
  %896 = vmatpush1.bf16.msra.mxu0 0
  %897 = vmatprep.subr.bf16.mxu0 0
  %898 = vmatpush1.bf16.msra.mxu0 0
  %899 = vmatprep.subr.bf16.mxu0 0
  %900 = vmatpush1.bf16.msra.mxu0 0
  %901 = vmatprep.subr.bf16.mxu0 0
  %902 = vmatpush1.bf16.msra.mxu0 %v837
  %903 = vmatprep.subr.bf16.mxu0 0
  %904 = vmatpush1.bf16.msra.mxu0 %v834
  %905 = vmatprep.subr.bf16.mxu0 0
  %906 = vmatpush1.bf16.msra.mxu0 %v831
  %907 = vmatprep.subr.bf16.mxu0 0
  %908 = vmatpush2.bf16.msra.mxu0 0
  %909 = vmatprep.subr.bf16.mxu0 0
  %910 = vmatpush2.bf16.msra.mxu0 0
  %911 = vmatprep.subr.bf16.mxu0 0
  %912 = vmatpush2.bf16.msra.mxu0 0
  %913 = vmatprep.subr.bf16.mxu0 0
  %914 = vmatpush2.bf16.msra.mxu0 0
  %915 = vmatprep.subr.bf16.mxu0 0
  %916 = vmatpush2.bf16.msra.mxu0 0
  %917 = vmatprep.subr.bf16.mxu0 0
  %918 = vmatpush2.bf16.msra.mxu0 0
  %919 = vmatprep.subr.bf16.mxu0 0
  %920 = vmatpush2.bf16.msra.mxu0 0
  %921 = vmatprep.subr.bf16.mxu0 0
  %922 = vmatpush2.bf16.msra.mxu0 0
  %923 = vmatprep.mubr.bf16.mxu0 0
  %924 = vmatmul.mubr.bf16.gmra.mxu0 %v848
  %v925 = vpop.f32.mrf.mxu0
  %v926 = vadd.f32 %v794, %v925
  %v927 = vpop.f32.mrf.mxu0
  %v928 = vpop.f32.mrf.mxu0
  %v929 = vpop.f32.mrf.mxu0
  %930 = vdwg.mxu0
  %v931 = vld [vmem:[%s9] ss:$8 sm:$0x7]
  %v933 = vlaneseq
  %v934 = vshrl.u32 %v933, 7
  %v935 = vsub.s32 0, %v934
  %v936 = vrot.slane %v931, %v935
  %v937 = vlaneseq
  %v938 = vshrl.u32 %v937, 7
  %v939 = vsub.s32 1, %v938
  %v940 = vrot.slane %v931, %v939
  %v941 = vlaneseq
  %v942 = vshrl.u32 %v941, 7
  %v943 = vsub.s32 2, %v942
  %v944 = vrot.slane %v931, %v943
  %v948 = vadd.f32 %v885, %v936
  %v949 = vadd.f32 %v887, %v940
  %v950 = vadd.f32 %v926, %v944
  %v951 = vld [vmem:[%s4 + $0x1c8] sm:$0xff]
  %v952 = vld [vmem:[%s4 + $0x1d0] sm:$0xf]
  %v953 = vld [vmem:[%s4 + $0x1d4] sm:$0xff]
  %v954 = vld [vmem:[%s4 + $0x1dc] sm:$0xf]
  %v955 = vld [vmem:[%s4 + $0x1e0] sm:$0xff]
  %v956 = vld [vmem:[%s4 + $0x1e8] sm:$0xf]
  %v957 = vld [vmem:[%s4 + $0x1ec] sm:$0xff]
  %v958 = vld [vmem:[%s4 + $0x1f4] sm:$0xf]
  %v959 = vld [vmem:[%s4 + $0x1f8] sm:$0xff]
  %v960 = vld [vmem:[%s4 + $0x200] sm:$0xf]
  %v961 = vld [vmem:[%s4 + $0x204] sm:$0xff]
  %v962 = vld [vmem:[%s4 + $0x20c] sm:$0xf]
  %v963 = vld [vmem:[%s4 + $0x210] sm:$0xff]
  %v964 = vld [vmem:[%s4 + $0x218] sm:$0xf]
  %v965 = vld [vmem:[%s4 + $0x21c] sm:$0xff]
  %v966 = vld [vmem:[%s4 + $0x224] sm:$0xf]
  %v967 = vld [vmem:[%s4 + $0x228] sm:$0xff]
  %v968 = vld [vmem:[%s4 + $0x230] sm:$0xf]
  %v969 = vld [vmem:[%s4 + $0x234] sm:$0xff]
  %v970 = vld [vmem:[%s4 + $0x23c] sm:$0xf]
  %v971 = vld [vmem:[%s4 + $0x240] sm:$0xff]
  %v972 = vld [vmem:[%s4 + $0x248] sm:$0xf]
  %v973 = vld [vmem:[%s4 + $0x24c] sm:$0xff]
  %v974 = vld [vmem:[%s4 + $0x254] sm:$0xf]
  %v975 = vld [vmem:[%s4 + $0x258] sm:$0xff]
  %v976 = vld [vmem:[%s4 + $0x260] sm:$0xf]
  %v977 = vld [vmem:[%s4 + $0x264] sm:$0xff]
  %v978 = vld [vmem:[%s4 + $0x26c] sm:$0xf]
  %v979 = vld [vmem:[%s4 + $0x270] sm:$0xff]
  %v980 = vld [vmem:[%s4 + $0x278] sm:$0xf]
  %v981 = vld [vmem:[%s4 + $0x27c] sm:$0xff]
  %v982 = vld [vmem:[%s4 + $0x284] sm:$0xf]
  %v983 = vld [vmem:[%s4 + $0x288] sm:$0xff]
  %v984 = vld [vmem:[%s4 + $0x290] sm:$0xf]
  %v985 = vld [vmem:[%s4 + $0x294] sm:$0xff]
  %v986 = vld [vmem:[%s4 + $0x29c] sm:$0xf]
  %v987 = vld [vmem:[%s4 + $0x2a0] sm:$0xff]
  %v988 = vld [vmem:[%s4 + $0x2a8] sm:$0xf]
  %v989 = vld [vmem:[%s4 + $0x2ac] sm:$0xff]
  %v990 = vld [vmem:[%s4 + $0x2b4] sm:$0xf]
  %v991 = vld [vmem:[%s4 + $0x2b8] sm:$0xff]
  %v992 = vld [vmem:[%s4 + $0x2c0] sm:$0xf]
  %v993 = vld [vmem:[%s4 + $0x2c4] sm:$0xff]
  %v994 = vld [vmem:[%s4 + $0x2cc] sm:$0xf]
  %v995 = vld [vmem:[%s4 + $0x2d0] sm:$0xff]
  %v996 = vld [vmem:[%s4 + $0x2d8] sm:$0xf]
  %v997 = vld [vmem:[%s4 + $0x2dc] sm:$0xff]
  %v998 = vld [vmem:[%s4 + $0x2e4] sm:$0xf]
  %v999 = vld [vmem:[%s4 + $0x2e8] sm:$0xff]
  %v1000 = vld [vmem:[%s4 + $0x2f0] sm:$0xf]
  %v1001 = vld [vmem:[%s4 + $0x2f4] sm:$0xff]
  %v1002 = vld [vmem:[%s4 + $0x2fc] sm:$0xf]
  %v1003 = vld [vmem:[%s4 + $0x300] sm:$0xff]
  %v1004 = vld [vmem:[%s4 + $0x308] sm:$0xf]
  %v1005 = vld [vmem:[%s4 + $0x30c] sm:$0xff]
  %v1006 = vld [vmem:[%s4 + $0x314] sm:$0xf]
  %v1007 = vld [vmem:[%s4 + $0x318] sm:$0xff]
  %v1008 = vld [vmem:[%s4 + $0x320] sm:$0xf]
  %v1009 = vld [vmem:[%s4 + $0x324] sm:$0xff]
  %v1010 = vld [vmem:[%s4 + $0x32c] sm:$0xf]
  %v1011 = vld [vmem:[%s4 + $0x330] sm:$0xff]
  %v1012 = vld [vmem:[%s4 + $0x338] sm:$0xf]
  %v1013 = vld [vmem:[%s4 + $0x33c] sm:$0xff]
  %v1014 = vld [vmem:[%s4 + $0x344] sm:$0xf]
  %v1017 = vunpack.c.l.s4 1983009808
  %v1018 = vunpack.c.0.s8 %v1017
  %v1019 = vlaneseq
  %v1020 = vshrl.u32 %v1019, 7
  %v1021 = vsub.s32 %v1018, %v1020
  %v1022 = vrot.slane %v71, %v1021
  %v1023 = vcombine.high %v1022, %v1022
  %v1026 = vpack.c.bf16 %v1022, %v1022
  %v1027 = vpack.c.bf16 %v1023, %v1023
  %s1028 = scalar_lea.vmem %s9, 1
  %v1029 = vld [vmem:[%s1028] ss:$8 sm:$0x7]
  %v1031 = vlaneseq
  %v1032 = vshrl.u32 %v1031, 7
  %v1033 = vsub.s32 0, %v1032
  %v1034 = vrot.slane %v1029, %v1033
  %v1035 = vlaneseq
  %v1036 = vshrl.u32 %v1035, 7
  %v1037 = vsub.s32 1, %v1036
  %v1038 = vrot.slane %v1029, %v1037
  %v1039 = vlaneseq
  %v1040 = vshrl.u32 %v1039, 7
  %v1041 = vsub.s32 2, %v1040
  %v1042 = vrot.slane %v1029, %v1041
  %v1110 = vunpack.c.l.b16 %v951
  %v1111 = vunpack.c.h.b16 %v951
  %v1112 = vunpack.c.l.b16 %v952
  %v1113 = vunpack.c.l.b16 %v953
  %v1114 = vunpack.c.h.b16 %v953
  %v1115 = vunpack.c.l.b16 %v954
  %v1116 = vunpack.c.l.b16 %v955
  %v1117 = vunpack.c.h.b16 %v955
  %v1118 = vunpack.c.l.b16 %v956
  %v1119 = vunpack.c.l.b16 %v957
  %v1120 = vunpack.c.h.b16 %v957
  %v1121 = vunpack.c.l.b16 %v958
  %v1122 = vunpack.c.l.b16 %v959
  %v1123 = vunpack.c.h.b16 %v959
  %v1124 = vunpack.c.l.b16 %v960
  %v1125 = vunpack.c.l.b16 %v961
  %v1126 = vunpack.c.h.b16 %v961
  %v1127 = vunpack.c.l.b16 %v962
  %v1128 = vunpack.c.l.b16 %v963
  %v1129 = vunpack.c.h.b16 %v963
  %v1130 = vunpack.c.l.b16 %v964
  %v1131 = vunpack.c.l.b16 %v965
  %v1132 = vunpack.c.h.b16 %v965
  %v1133 = vunpack.c.l.b16 %v966
  %v1134 = vunpack.c.l.b16 %v967
  %v1135 = vunpack.c.h.b16 %v967
  %v1136 = vunpack.c.l.b16 %v968
  %v1137 = vunpack.c.l.b16 %v969
  %v1138 = vunpack.c.h.b16 %v969
  %v1139 = vunpack.c.l.b16 %v970
  %v1140 = vunpack.c.l.b16 %v971
  %v1141 = vunpack.c.h.b16 %v971
  %v1142 = vunpack.c.l.b16 %v972
  %v1143 = vunpack.c.l.b16 %v973
  %v1144 = vunpack.c.h.b16 %v973
  %v1145 = vunpack.c.l.b16 %v974
  %v1146 = vunpack.c.l.b16 %v975
  %v1147 = vunpack.c.h.b16 %v975
  %v1148 = vunpack.c.l.b16 %v976
  %v1149 = vunpack.c.l.b16 %v977
  %v1150 = vunpack.c.h.b16 %v977
  %v1151 = vunpack.c.l.b16 %v978
  %v1152 = vunpack.c.l.b16 %v979
  %v1153 = vunpack.c.h.b16 %v979
  %v1154 = vunpack.c.l.b16 %v980
  %v1155 = vunpack.c.l.b16 %v981
  %v1156 = vunpack.c.h.b16 %v981
  %v1157 = vunpack.c.l.b16 %v982
  %v1158 = vunpack.c.l.b16 %v983
  %v1159 = vunpack.c.h.b16 %v983
  %v1160 = vunpack.c.l.b16 %v984
  %v1161 = vunpack.c.l.b16 %v985
  %v1162 = vunpack.c.h.b16 %v985
  %v1163 = vunpack.c.l.b16 %v986
  %v1164 = vunpack.c.l.b16 %v987
  %v1165 = vunpack.c.h.b16 %v987
  %v1166 = vunpack.c.l.b16 %v988
  %v1167 = vunpack.c.l.b16 %v989
  %v1168 = vunpack.c.h.b16 %v989
  %v1169 = vunpack.c.l.b16 %v990
  %v1170 = vunpack.c.l.b16 %v991
  %v1171 = vunpack.c.h.b16 %v991
  %v1172 = vunpack.c.l.b16 %v992
  %v1173 = vunpack.c.l.b16 %v993
  %v1174 = vunpack.c.h.b16 %v993
  %v1175 = vunpack.c.l.b16 %v994
  %v1176 = vunpack.c.l.b16 %v995
  %v1177 = vunpack.c.h.b16 %v995
  %v1178 = vunpack.c.l.b16 %v996
  %v1179 = vunpack.c.l.b16 %v997
  %v1180 = vunpack.c.h.b16 %v997
  %v1181 = vunpack.c.l.b16 %v998
  %v1182 = vunpack.c.l.b16 %v999
  %v1183 = vunpack.c.h.b16 %v999
  %v1184 = vunpack.c.l.b16 %v1000
  %v1185 = vunpack.c.l.b16 %v1001
  %v1186 = vunpack.c.h.b16 %v1001
  %v1187 = vunpack.c.l.b16 %v1002
  %v1188 = vunpack.c.l.b16 %v1003
  %v1189 = vunpack.c.h.b16 %v1003
  %v1190 = vunpack.c.l.b16 %v1004
  %v1191 = vunpack.c.l.b16 %v1005
  %v1192 = vunpack.c.h.b16 %v1005
  %v1193 = vunpack.c.l.b16 %v1006
  %v1194 = vunpack.c.l.b16 %v1007
  %v1195 = vunpack.c.h.b16 %v1007
  %v1196 = vunpack.c.l.b16 %v1008
  %v1197 = vunpack.c.l.b16 %v1009
  %v1198 = vunpack.c.h.b16 %v1009
  %v1199 = vunpack.c.l.b16 %v1010
  %v1200 = vunpack.c.l.b16 %v1011
  %v1201 = vunpack.c.h.b16 %v1011
  %v1202 = vunpack.c.l.b16 %v1012
  %v1203 = vunpack.c.l.b16 %v1013
  %v1204 = vunpack.c.h.b16 %v1013
  %v1205 = vunpack.c.l.b16 %v1014
  %v1206 = vpack.c.b16 %v1113, %v1110
  %v1207 = vpack.c.b16 %v1114, %v1111
  %v1208 = vpack.c.b16 %v1115, %v1112
  %v1209 = vpack.c.b16 %v1119, %v1116
  %v1210 = vpack.c.b16 %v1120, %v1117
  %v1211 = vpack.c.b16 %v1121, %v1118
  %v1212 = vpack.c.b16 %v1125, %v1122
  %v1213 = vpack.c.b16 %v1126, %v1123
  %v1214 = vpack.c.b16 %v1127, %v1124
  %v1215 = vpack.c.b16 %v1131, %v1128
  %v1216 = vpack.c.b16 %v1132, %v1129
  %v1217 = vpack.c.b16 %v1133, %v1130
  %v1218 = vpack.c.b16 %v1137, %v1134
  %v1219 = vpack.c.b16 %v1138, %v1135
  %v1220 = vpack.c.b16 %v1139, %v1136
  %v1221 = vpack.c.b16 %v1143, %v1140
  %v1222 = vpack.c.b16 %v1144, %v1141
  %v1223 = vpack.c.b16 %v1145, %v1142
  %v1224 = vpack.c.b16 %v1149, %v1146
  %v1225 = vpack.c.b16 %v1150, %v1147
  %v1226 = vpack.c.b16 %v1151, %v1148
  %v1227 = vpack.c.b16 %v1155, %v1152
  %v1228 = vpack.c.b16 %v1156, %v1153
  %v1229 = vpack.c.b16 %v1157, %v1154
  %v1230 = vpack.c.b16 %v1161, %v1158
  %v1231 = vpack.c.b16 %v1162, %v1159
  %v1232 = vpack.c.b16 %v1163, %v1160
  %v1233 = vpack.c.b16 %v1167, %v1164
  %v1234 = vpack.c.b16 %v1168, %v1165
  %v1235 = vpack.c.b16 %v1169, %v1166
  %v1236 = vpack.c.b16 %v1173, %v1170
  %v1237 = vpack.c.b16 %v1174, %v1171
  %v1238 = vpack.c.b16 %v1175, %v1172
  %v1239 = vpack.c.b16 %v1179, %v1176
  %v1240 = vpack.c.b16 %v1180, %v1177
  %v1241 = vpack.c.b16 %v1181, %v1178
  %v1242 = vpack.c.b16 %v1185, %v1182
  %v1243 = vpack.c.b16 %v1186, %v1183
  %v1244 = vpack.c.b16 %v1187, %v1184
  %v1245 = vpack.c.b16 %v1191, %v1188
  %v1246 = vpack.c.b16 %v1192, %v1189
  %v1247 = vpack.c.b16 %v1193, %v1190
  %v1248 = vpack.c.b16 %v1197, %v1194
  %v1249 = vpack.c.b16 %v1198, %v1195
  %v1250 = vpack.c.b16 %v1199, %v1196
  %v1251 = vpack.c.b16 %v1203, %v1200
  %v1252 = vpack.c.b16 %v1204, %v1201
  %v1253 = vpack.c.b16 %v1205, %v1202
  %1302 = vmatprep.subr.bf16.mxu0 %v1228
  %1303 = vmatpush1.bf16.msra.mxu0 %v1227
  %1304 = vmatprep.subr.bf16.mxu0 %v1225
  %1305 = vmatpush1.bf16.msra.mxu0 %v1224
  %1306 = vmatprep.subr.bf16.mxu0 %v1222
  %1307 = vmatpush1.bf16.msra.mxu0 %v1221
  %1308 = vmatprep.subr.bf16.mxu0 %v1219
  %1309 = vmatpush1.bf16.msra.mxu0 %v1218
  %1310 = vmatprep.subr.bf16.mxu0 %v1216
  %1311 = vmatpush1.bf16.msra.mxu0 %v1215
  %1312 = vmatprep.subr.bf16.mxu0 %v1213
  %1313 = vmatpush1.bf16.msra.mxu0 %v1212
  %1314 = vmatprep.subr.bf16.mxu0 %v1210
  %1315 = vmatpush1.bf16.msra.mxu0 %v1209
  %1316 = vmatprep.subr.bf16.mxu0 %v1207
  %1317 = vmatpush1.bf16.msra.mxu0 %v1206
  %1318 = vmatprep.subr.bf16.mxu0 %v1252
  %1319 = vmatpush2.bf16.msra.mxu0 %v1251
  %1320 = vmatprep.subr.bf16.mxu0 %v1249
  %1321 = vmatpush2.bf16.msra.mxu0 %v1248
  %1322 = vmatprep.subr.bf16.mxu0 %v1246
  %1323 = vmatpush2.bf16.msra.mxu0 %v1245
  %1324 = vmatprep.subr.bf16.mxu0 %v1243
  %1325 = vmatpush2.bf16.msra.mxu0 %v1242
  %1326 = vmatprep.subr.bf16.mxu0 %v1240
  %1327 = vmatpush2.bf16.msra.mxu0 %v1239
  %1328 = vmatprep.subr.bf16.mxu0 %v1237
  %1329 = vmatpush2.bf16.msra.mxu0 %v1236
  %1330 = vmatprep.subr.bf16.mxu0 %v1234
  %1331 = vmatpush2.bf16.msra.mxu0 %v1233
  %1332 = vmatprep.subr.bf16.mxu0 %v1231
  %1333 = vmatpush2.bf16.msra.mxu0 %v1230
  %1334 = vmatprep.mubr.bf16.mxu0 %v1027
  %1335 = vmatmul.mubr.bf16.gmra.mxu0 %v1026
  %v1336 = vpop.f32.mrf.mxu0
  %v1337 = vadd.f32 %v1034, %v1336
  %v1338 = vpop.f32.mrf.mxu0
  %v1339 = vadd.f32 %v1038, %v1338
  %v1340 = vpop.f32.mrf.mxu0
  %v1341 = vpop.f32.mrf.mxu0
  %1342 = vdwg.mxu0
  %1343 = vmatprep.subr.bf16.mxu0 0
  %1344 = vmatpush1.bf16.msra.mxu0 %v1229
  %1345 = vmatprep.subr.bf16.mxu0 0
  %1346 = vmatpush1.bf16.msra.mxu0 %v1226
  %1347 = vmatprep.subr.bf16.mxu0 0
  %1348 = vmatpush1.bf16.msra.mxu0 %v1223
  %1349 = vmatprep.subr.bf16.mxu0 0
  %1350 = vmatpush1.bf16.msra.mxu0 %v1220
  %1351 = vmatprep.subr.bf16.mxu0 0
  %1352 = vmatpush1.bf16.msra.mxu0 %v1217
  %1353 = vmatprep.subr.bf16.mxu0 0
  %1354 = vmatpush1.bf16.msra.mxu0 %v1214
  %1355 = vmatprep.subr.bf16.mxu0 0
  %1356 = vmatpush1.bf16.msra.mxu0 %v1211
  %1357 = vmatprep.subr.bf16.mxu0 0
  %1358 = vmatpush1.bf16.msra.mxu0 %v1208
  %1359 = vmatprep.subr.bf16.mxu0 0
  %1360 = vmatpush2.bf16.msra.mxu0 %v1253
  %1361 = vmatprep.subr.bf16.mxu0 0
  %1362 = vmatpush2.bf16.msra.mxu0 %v1250
  %1363 = vmatprep.subr.bf16.mxu0 0
  %1364 = vmatpush2.bf16.msra.mxu0 %v1247
  %1365 = vmatprep.subr.bf16.mxu0 0
  %1366 = vmatpush2.bf16.msra.mxu0 %v1244
  %1367 = vmatprep.subr.bf16.mxu0 0
  %1368 = vmatpush2.bf16.msra.mxu0 %v1241
  %1369 = vmatprep.subr.bf16.mxu0 0
  %1370 = vmatpush2.bf16.msra.mxu0 %v1238
  %1371 = vmatprep.subr.bf16.mxu0 0
  %1372 = vmatpush2.bf16.msra.mxu0 %v1235
  %1373 = vmatprep.subr.bf16.mxu0 0
  %1374 = vmatpush2.bf16.msra.mxu0 %v1232
  %1375 = vmatprep.mubr.bf16.mxu0 %v1027
  %1376 = vmatmul.mubr.bf16.gmra.mxu0 %v1026
  %v1377 = vpop.f32.mrf.mxu0
  %v1378 = vadd.f32 %v1042, %v1377
  %v1379 = vpop.f32.mrf.mxu0
  %v1380 = vpop.f32.mrf.mxu0
  %v1381 = vpop.f32.mrf.mxu0
  %1382 = vdwg.mxu0
  %v1383 = vld [vmem:[%s15] sm:$0xff]
  %v1384 = vld [vmem:[%s15 + $0x8] sm:$0xff]
  %v1385 = vld [vmem:[%s15 + $0x10] sm:$0xff]
  %v1386 = vld [vmem:[%s15 + $0x18] sm:$0xff]
  %v1387 = vld [vmem:[%s15 + $0x20] sm:$0xff]
  %v1388 = vld [vmem:[%s15 + $0x28] sm:$0xff]
  %v1389 = vld [vmem:[%s15 + $0x30] sm:$0xff]
  %v1390 = vld [vmem:[%s15 + $0x38] sm:$0xff]
  %v1391 = vld [vmem:[%s15 + $0x40] sm:$0xff]
  %v1392 = vld [vmem:[%s15 + $0x48] sm:$0xff]
  %v1393 = vld [vmem:[%s15 + $0x50] sm:$0xff]
  %v1394 = vld [vmem:[%s15 + $0x58] sm:$0xff]
  %v1395 = vld [vmem:[%s15 + $0x60] sm:$0xff]
  %v1396 = vld [vmem:[%s15 + $0x68] sm:$0xff]
  %v1397 = vld [vmem:[%s15 + $0x70] sm:$0xff]
  %v1398 = vld [vmem:[%s15 + $0x78] sm:$0xff]
  %v1399 = vld [vmem:[%s15 + $0x80] sm:$0xff]
  %v1400 = vld [vmem:[%s15 + $0x88] sm:$0xff]
  %v1401 = vld [vmem:[%s15 + $0x90] sm:$0xff]
  %v1402 = vld [vmem:[%s15 + $0x98] sm:$0xff]
  %v1403 = vld [vmem:[%s15 + $0xa0] sm:$0xff]
  %v1404 = vld [vmem:[%s15 + $0xa8] sm:$0xff]
  %v1405 = vld [vmem:[%s15 + $0xb0] sm:$0xff]
  %v1406 = vld [vmem:[%s15 + $0xb8] sm:$0xff]
  %v1407 = vld [vmem:[%s15 + $0xc0] sm:$0xff]
  %v1408 = vld [vmem:[%s15 + $0xc8] sm:$0xff]
  %v1409 = vld [vmem:[%s15 + $0xd0] sm:$0xff]
  %v1410 = vld [vmem:[%s15 + $0xd8] sm:$0xff]
  %v1411 = vld [vmem:[%s15 + $0xe0] sm:$0xff]
  %v1412 = vld [vmem:[%s15 + $0xe8] sm:$0xff]
  %v1413 = vld [vmem:[%s15 + $0xf0] sm:$0xff]
  %v1414 = vld [vmem:[%s15 + $0xf8] sm:$0xff]
  %v1415 = vld [vmem:[%s15 + $0x100] sm:$0xff]
  %v1416 = vld [vmem:[%s15 + $0x108] sm:$0xff]
  %v1417 = vld [vmem:[%s15 + $0x110] sm:$0xff]
  %v1418 = vld [vmem:[%s15 + $0x118] sm:$0xff]
  %v1419 = vld [vmem:[%s15 + $0x120] sm:$0xff]
  %v1420 = vld [vmem:[%s15 + $0x128] sm:$0xff]
  %v1421 = vld [vmem:[%s15 + $0x130] sm:$0xff]
  %v1422 = vld [vmem:[%s15 + $0x138] sm:$0xff]
  %v1423 = vld [vmem:[%s15 + $0x140] sm:$0xff]
  %v1424 = vld [vmem:[%s15 + $0x148] sm:$0xff]
  %v1425 = vld [vmem:[%s15 + $0x150] sm:$0xff]
  %v1426 = vld [vmem:[%s15 + $0x158] sm:$0xff]
  %v1427 = vld [vmem:[%s15 + $0x160] sm:$0xff]
  %v1428 = vld [vmem:[%s15 + $0x168] sm:$0xff]
  %v1429 = vld [vmem:[%s15 + $0x170] sm:$0xff]
  %v1430 = vld [vmem:[%s15 + $0x178] sm:$0xff]
  %v1431 = vld [vmem:[%s15 + $0x180] sm:$0xff]
  %v1432 = vld [vmem:[%s15 + $0x188] sm:$0xff]
  %v1433 = vld [vmem:[%s15 + $0x190] sm:$0xff]
  %v1434 = vld [vmem:[%s15 + $0x198] sm:$0xff]
  %v1435 = vld [vmem:[%s15 + $0x1a0] sm:$0xff]
  %v1436 = vld [vmem:[%s15 + $0x1a8] sm:$0xff]
  %v1437 = vld [vmem:[%s15 + $0x1b0] sm:$0xff]
  %v1438 = vld [vmem:[%s15 + $0x1b8] sm:$0xff]
  %v1439 = vld [vmem:[%s15 + $0x1c0] sm:$0xff]
  %v1440 = vld [vmem:[%s15 + $0x1c8] sm:$0xff]
  %v1441 = vld [vmem:[%s15 + $0x1d0] sm:$0xff]
  %v1442 = vld [vmem:[%s15 + $0x1d8] sm:$0xff]
  %v1443 = vld [vmem:[%s15 + $0x1e0] sm:$0xff]
  %v1444 = vld [vmem:[%s15 + $0x1e8] sm:$0xff]
  %v1445 = vld [vmem:[%s15 + $0x1f0] sm:$0xff]
  %v1446 = vld [vmem:[%s15 + $0x1f8] sm:$0xff]
  %v1447 = vld [vmem:[%s15 + $0x200] sm:$0xff]
  %v1448 = vld [vmem:[%s15 + $0x208] sm:$0xff]
  %v1449 = vld [vmem:[%s15 + $0x210] sm:$0xff]
  %v1450 = vld [vmem:[%s15 + $0x218] sm:$0xff]
  %v1451 = vld [vmem:[%s15 + $0x220] sm:$0xff]
  %v1452 = vld [vmem:[%s15 + $0x228] sm:$0xff]
  %v1453 = vld [vmem:[%s15 + $0x230] sm:$0xff]
  %v1454 = vld [vmem:[%s15 + $0x238] sm:$0xff]
  %v1455 = vld [vmem:[%s15 + $0x240] sm:$0xff]
  %v1456 = vld [vmem:[%s15 + $0x248] sm:$0xff]
  %v1457 = vld [vmem:[%s15 + $0x250] sm:$0xff]
  %v1458 = vld [vmem:[%s15 + $0x258] sm:$0xff]
  %v1459 = vld [vmem:[%s15 + $0x260] sm:$0xff]
  %v1460 = vld [vmem:[%s15 + $0x268] sm:$0xff]
  %v1461 = vld [vmem:[%s15 + $0x270] sm:$0xff]
  %v1462 = vld [vmem:[%s15 + $0x278] sm:$0xff]
  %v1463 = vld [vmem:[%s15 + $0x280] sm:$0xff]
  %v1464 = vld [vmem:[%s15 + $0x288] sm:$0xff]
  %v1465 = vld [vmem:[%s15 + $0x290] sm:$0xff]
  %v1466 = vld [vmem:[%s15 + $0x298] sm:$0xff]
  %v1467 = vld [vmem:[%s15 + $0x2a0] sm:$0xff]
  %v1468 = vld [vmem:[%s15 + $0x2a8] sm:$0xff]
  %v1469 = vld [vmem:[%s15 + $0x2b0] sm:$0xff]
  %v1470 = vld [vmem:[%s15 + $0x2b8] sm:$0xff]
  %v1471 = vld [vmem:[%s15 + $0x2c0] sm:$0xff]
  %v1472 = vld [vmem:[%s15 + $0x2c8] sm:$0xff]
  %v1473 = vld [vmem:[%s15 + $0x2d0] sm:$0xff]
  %v1474 = vld [vmem:[%s15 + $0x2d8] sm:$0xff]
  %v1475 = vld [vmem:[%s15 + $0x2e0] sm:$0xff]
  %v1476 = vld [vmem:[%s15 + $0x2e8] sm:$0xff]
  %v1477 = vld [vmem:[%s15 + $0x2f0] sm:$0xff]
  %v1478 = vld [vmem:[%s15 + $0x2f8] sm:$0xff]
  %v1479 = vld [vmem:[%s15 + $0x300] sm:$0xff]
  %v1480 = vld [vmem:[%s15 + $0x308] sm:$0xff]
  %v1481 = vld [vmem:[%s15 + $0x310] sm:$0xff]
  %v1482 = vld [vmem:[%s15 + $0x318] sm:$0xff]
  %v1483 = vld [vmem:[%s15 + $0x320] sm:$0xff]
  %v1484 = vld [vmem:[%s15 + $0x328] sm:$0xff]
  %v1485 = vld [vmem:[%s15 + $0x330] sm:$0xff]
  %v1486 = vld [vmem:[%s15 + $0x338] sm:$0xff]
  %v1487 = vld [vmem:[%s15 + $0x340] sm:$0xff]
  %v1488 = vld [vmem:[%s15 + $0x348] sm:$0xff]
  %v1489 = vld [vmem:[%s15 + $0x350] sm:$0xff]
  %v1490 = vld [vmem:[%s15 + $0x358] sm:$0xff]
  %v1491 = vld [vmem:[%s15 + $0x360] sm:$0xff]
  %v1492 = vld [vmem:[%s15 + $0x368] sm:$0xff]
  %v1493 = vld [vmem:[%s15 + $0x370] sm:$0xff]
  %v1494 = vld [vmem:[%s15 + $0x378] sm:$0xff]
  %v1495 = vld [vmem:[%s15 + $0x380] sm:$0xff]
  %v1496 = vld [vmem:[%s15 + $0x388] sm:$0xff]
  %v1497 = vld [vmem:[%s15 + $0x390] sm:$0xff]
  %v1498 = vld [vmem:[%s15 + $0x398] sm:$0xff]
  %v1499 = vld [vmem:[%s15 + $0x3a0] sm:$0xff]
  %v1500 = vld [vmem:[%s15 + $0x3a8] sm:$0xff]
  %v1501 = vld [vmem:[%s15 + $0x3b0] sm:$0xff]
  %v1502 = vld [vmem:[%s15 + $0x3b8] sm:$0xff]
  %v1503 = vld [vmem:[%s16] sm:$0xff]
  %v1504 = vld [vmem:[%s16 + $0x8] sm:$0xff]
  %v1505 = vld [vmem:[%s16 + $0x10] sm:$0xff]
  %v1506 = vld [vmem:[%s16 + $0x18] sm:$0xff]
  %v1507 = vld [vmem:[%s16 + $0x20] sm:$0xff]
  %v1508 = vld [vmem:[%s16 + $0x28] sm:$0xff]
  %v1509 = vld [vmem:[%s16 + $0x30] sm:$0xff]
  %v1510 = vld [vmem:[%s16 + $0x38] sm:$0xff]
  %v1511 = vld [vmem:[%s16 + $0x40] sm:$0xff]
  %v1512 = vld [vmem:[%s16 + $0x48] sm:$0xff]
  %v1513 = vld [vmem:[%s16 + $0x50] sm:$0xff]
  %v1514 = vld [vmem:[%s16 + $0x58] sm:$0xff]
  %v1515 = vld [vmem:[%s16 + $0x60] sm:$0xff]
  %v1516 = vld [vmem:[%s16 + $0x68] sm:$0xff]
  %v1517 = vld [vmem:[%s16 + $0x70] sm:$0xff]
  %v1518 = vld [vmem:[%s16 + $0x78] sm:$0xff]
  %v1519 = vld [vmem:[%s16 + $0x80] sm:$0xff]
  %v1520 = vld [vmem:[%s16 + $0x88] sm:$0xff]
  %v1521 = vld [vmem:[%s16 + $0x90] sm:$0xff]
  %v1522 = vld [vmem:[%s16 + $0x98] sm:$0xff]
  %v1523 = vld [vmem:[%s16 + $0xa0] sm:$0xff]
  %v1524 = vld [vmem:[%s16 + $0xa8] sm:$0xff]
  %v1525 = vld [vmem:[%s16 + $0xb0] sm:$0xff]
  %v1526 = vld [vmem:[%s16 + $0xb8] sm:$0xff]
  %v1527 = vld [vmem:[%s16 + $0xc0] sm:$0xff]
  %v1528 = vld [vmem:[%s16 + $0xc8] sm:$0xff]
  %v1529 = vld [vmem:[%s16 + $0xd0] sm:$0xff]
  %v1530 = vld [vmem:[%s16 + $0xd8] sm:$0xff]
  %v1531 = vld [vmem:[%s16 + $0xe0] sm:$0xff]
  %v1532 = vld [vmem:[%s16 + $0xe8] sm:$0xff]
  %v1533 = vld [vmem:[%s16 + $0xf0] sm:$0xff]
  %v1534 = vld [vmem:[%s16 + $0xf8] sm:$0xff]
  %v1535 = vld [vmem:[%s16 + $0x100] sm:$0xff]
  %v1536 = vld [vmem:[%s16 + $0x108] sm:$0xff]
  %v1537 = vld [vmem:[%s16 + $0x110] sm:$0xff]
  %v1538 = vld [vmem:[%s16 + $0x118] sm:$0xff]
  %v1539 = vld [vmem:[%s16 + $0x120] sm:$0xff]
  %v1540 = vld [vmem:[%s16 + $0x128] sm:$0xff]
  %v1541 = vld [vmem:[%s16 + $0x130] sm:$0xff]
  %v1542 = vld [vmem:[%s16 + $0x138] sm:$0xff]
  %v1543 = vld [vmem:[%s17] sm:$0xff]
  %v1544 = vld [vmem:[%s17 + $0x8] sm:$0xff]
  %v1545 = vld [vmem:[%s17 + $0x10] sm:$0xff]
  %v1546 = vld [vmem:[%s17 + $0x18] sm:$0xff]
  %v1547 = vld [vmem:[%s17 + $0x20] sm:$0xff]
  %v1548 = vld [vmem:[%s17 + $0x28] sm:$0xff]
  %v1549 = vld [vmem:[%s17 + $0x30] sm:$0xff]
  %v1550 = vld [vmem:[%s17 + $0x38] sm:$0xff]
  %v1551 = vld [vmem:[%s17 + $0x40] sm:$0xff]
  %v1552 = vld [vmem:[%s17 + $0x48] sm:$0xff]
  %vm1553 = vcmask 523264
  %v1555 = vsel %vm1553, %v950, 0
  %1557 = vmatprep.subr.mxu0 %v1429
  %1558 = vmatpush1.msra.mxu0 %v1428
  %1559 = vmatprep.subr.mxu0 %v1426
  %1560 = vmatpush1.msra.mxu0 %v1425
  %1561 = vmatprep.subr.mxu0 %v1423
  %1562 = vmatpush1.msra.mxu0 %v1422
  %1563 = vmatprep.subr.mxu0 %v1420
  %1564 = vmatpush1.msra.mxu0 %v1419
  %1565 = vmatprep.subr.mxu0 %v1417
  %1566 = vmatpush1.msra.mxu0 %v1416
  %1567 = vmatprep.subr.mxu0 %v1414
  %1568 = vmatpush1.msra.mxu0 %v1413
  %1569 = vmatprep.subr.mxu0 %v1411
  %1570 = vmatpush1.msra.mxu0 %v1410
  %1571 = vmatprep.subr.mxu0 %v1408
  %1572 = vmatpush1.msra.mxu0 %v1407
  %1573 = vmatprep.subr.mxu0 %v1405
  %1574 = vmatpush1.msra.mxu0 %v1404
  %1575 = vmatprep.subr.mxu0 %v1402
  %1576 = vmatpush1.msra.mxu0 %v1401
  %1577 = vmatprep.subr.mxu0 %v1399
  %1578 = vmatpush1.msra.mxu0 %v1398
  %1579 = vmatprep.subr.mxu0 %v1396
  %1580 = vmatpush1.msra.mxu0 %v1395
  %1581 = vmatprep.subr.mxu0 %v1393
  %1582 = vmatpush1.msra.mxu0 %v1392
  %1583 = vmatprep.subr.mxu0 %v1390
  %1584 = vmatpush1.msra.mxu0 %v1389
  %1585 = vmatprep.subr.mxu0 %v1387
  %1586 = vmatpush1.msra.mxu0 %v1386
  %1587 = vmatprep.subr.mxu0 %v1384
  %1588 = vmatpush1.msra.mxu0 %v1383
  %1589 = vmatprep.subr.mxu0 %v1477
  %1590 = vmatpush2.msra.mxu0 %v1476
  %1591 = vmatprep.subr.mxu0 %v1474
  %1592 = vmatpush2.msra.mxu0 %v1473
  %1593 = vmatprep.subr.mxu0 %v1471
  %1594 = vmatpush2.msra.mxu0 %v1470
  %1595 = vmatprep.subr.mxu0 %v1468
  %1596 = vmatpush2.msra.mxu0 %v1467
  %1597 = vmatprep.subr.mxu0 %v1465
  %1598 = vmatpush2.msra.mxu0 %v1464
  %1599 = vmatprep.subr.mxu0 %v1462
  %1600 = vmatpush2.msra.mxu0 %v1461
  %1601 = vmatprep.subr.mxu0 %v1459
  %1602 = vmatpush2.msra.mxu0 %v1458
  %1603 = vmatprep.subr.mxu0 %v1456
  %1604 = vmatpush2.msra.mxu0 %v1455
  %1605 = vmatprep.subr.mxu0 %v1453
  %1606 = vmatpush2.msra.mxu0 %v1452
  %1607 = vmatprep.subr.mxu0 %v1450
  %1608 = vmatpush2.msra.mxu0 %v1449
  %1609 = vmatprep.subr.mxu0 %v1447
  %1610 = vmatpush2.msra.mxu0 %v1446
  %1611 = vmatprep.subr.mxu0 %v1444
  %1612 = vmatpush2.msra.mxu0 %v1443
  %1613 = vmatprep.subr.mxu0 %v1441
  %1614 = vmatpush2.msra.mxu0 %v1440
  %1615 = vmatprep.subr.mxu0 %v1438
  %1616 = vmatpush2.msra.mxu0 %v1437
  %1617 = vmatprep.subr.mxu0 %v1435
  %1618 = vmatpush2.msra.mxu0 %v1434
  %1619 = vmatprep.subr.mxu0 %v1432
  %1620 = vmatpush2.msra.mxu0 %v1431
  %1621 = vmatprep.mubr.f32.mxu0 %v949
  %1622 = vmatmul.mubr.f32.gmra.mxu0 %v948
  %v1623 = vpop.f32.mrf.mxu0
  %v1624 = vadd.f32 0.0, %v1623
  %v1625 = vpop.f32.mrf.mxu0
  %v1626 = vadd.f32 0.0, %v1625
  %1627 = vdwg.mxu0
  %1628 = vmatprep.subr.mxu0 0.0
  %1629 = vmatpush1.msra.mxu0 0.0
  %1630 = vmatprep.subr.mxu0 0.0
  %1631 = vmatpush1.msra.mxu0 0.0
  %1632 = vmatprep.subr.mxu0 0.0
  %1633 = vmatpush1.msra.mxu0 0.0
  %1634 = vmatprep.subr.mxu0 0.0
  %1635 = vmatpush1.msra.mxu0 0.0
  %1636 = vmatprep.subr.mxu0 0.0
  %1637 = vmatpush1.msra.mxu0 0.0
  %1638 = vmatprep.subr.mxu0 0.0
  %1639 = vmatpush1.msra.mxu0 0.0
  %1640 = vmatprep.subr.mxu0 0.0
  %1641 = vmatpush1.msra.mxu0 0.0
  %1642 = vmatprep.subr.mxu0 0.0
  %1643 = vmatpush1.msra.mxu0 0.0
  %1644 = vmatprep.subr.mxu0 %v1501
  %1645 = vmatpush1.msra.mxu0 %v1500
  %1646 = vmatprep.subr.mxu0 %v1498
  %1647 = vmatpush1.msra.mxu0 %v1497
  %1648 = vmatprep.subr.mxu0 %v1495
  %1649 = vmatpush1.msra.mxu0 %v1494
  %1650 = vmatprep.subr.mxu0 %v1492
  %1651 = vmatpush1.msra.mxu0 %v1491
  %1652 = vmatprep.subr.mxu0 %v1489
  %1653 = vmatpush1.msra.mxu0 %v1488
  %1654 = vmatprep.subr.mxu0 %v1486
  %1655 = vmatpush1.msra.mxu0 %v1485
  %1656 = vmatprep.subr.mxu0 %v1483
  %1657 = vmatpush1.msra.mxu0 %v1482
  %1658 = vmatprep.subr.mxu0 %v1480
  %1659 = vmatpush1.msra.mxu0 %v1479
  %1660 = vmatprep.subr.mxu0 0.0
  %1661 = vmatpush2.msra.mxu0 0.0
  %1662 = vmatprep.subr.mxu0 0.0
  %1663 = vmatpush2.msra.mxu0 0.0
  %1664 = vmatprep.subr.mxu0 0.0
  %1665 = vmatpush2.msra.mxu0 0.0
  %1666 = vmatprep.subr.mxu0 0.0
  %1667 = vmatpush2.msra.mxu0 0.0
  %1668 = vmatprep.subr.mxu0 0.0
  %1669 = vmatpush2.msra.mxu0 0.0
  %1670 = vmatprep.subr.mxu0 0.0
  %1671 = vmatpush2.msra.mxu0 0.0
  %1672 = vmatprep.subr.mxu0 0.0
  %1673 = vmatpush2.msra.mxu0 0.0
  %1674 = vmatprep.subr.mxu0 0.0
  %1675 = vmatpush2.msra.mxu0 0.0
  %1676 = vmatprep.subr.mxu0 0.0
  %1677 = vmatpush2.msra.mxu0 0.0
  %1678 = vmatprep.subr.mxu0 0.0
  %1679 = vmatpush2.msra.mxu0 0.0
  %1680 = vmatprep.subr.mxu0 0.0
  %1681 = vmatpush2.msra.mxu0 0.0
  %1682 = vmatprep.subr.mxu0 0.0
  %1683 = vmatpush2.msra.mxu0 0.0
  %1684 = vmatprep.subr.mxu0 0.0
  %1685 = vmatpush2.msra.mxu0 0.0
  %1686 = vmatprep.subr.mxu0 0.0
  %1687 = vmatpush2.msra.mxu0 0.0
  %1688 = vmatprep.subr.mxu0 0.0
  %1689 = vmatpush2.msra.mxu0 0.0
  %1690 = vmatprep.subr.mxu0 0.0
  %1691 = vmatpush2.msra.mxu0 0.0
  %1692 = vmatprep.mubr.f32.mxu0 0.0
  %1693 = vmatmul.mubr.f32.gmra.mxu0 %v1555
  %v1694 = vpop.f32.mrf.mxu0
  %v1695 = vadd.f32 %v1624, %v1694
  %v1696 = vpop.f32.mrf.mxu0
  %v1697 = vadd.f32 %v1626, %v1696
  %1698 = vdwg.mxu0
  %1699 = vmatprep.subr.mxu0 0.0
  %1700 = vmatpush1.msra.mxu0 %v1430
  %1701 = vmatprep.subr.mxu0 0.0
  %1702 = vmatpush1.msra.mxu0 %v1427
  %1703 = vmatprep.subr.mxu0 0.0
  %1704 = vmatpush1.msra.mxu0 %v1424
  %1705 = vmatprep.subr.mxu0 0.0
  %1706 = vmatpush1.msra.mxu0 %v1421
  %1707 = vmatprep.subr.mxu0 0.0
  %1708 = vmatpush1.msra.mxu0 %v1418
  %1709 = vmatprep.subr.mxu0 0.0
  %1710 = vmatpush1.msra.mxu0 %v1415
  %1711 = vmatprep.subr.mxu0 0.0
  %1712 = vmatpush1.msra.mxu0 %v1412
  %1713 = vmatprep.subr.mxu0 0.0
  %1714 = vmatpush1.msra.mxu0 %v1409
  %1715 = vmatprep.subr.mxu0 0.0
  %1716 = vmatpush1.msra.mxu0 %v1406
  %1717 = vmatprep.subr.mxu0 0.0
  %1718 = vmatpush1.msra.mxu0 %v1403
  %1719 = vmatprep.subr.mxu0 0.0
  %1720 = vmatpush1.msra.mxu0 %v1400
  %1721 = vmatprep.subr.mxu0 0.0
  %1722 = vmatpush1.msra.mxu0 %v1397
  %1723 = vmatprep.subr.mxu0 0.0
  %1724 = vmatpush1.msra.mxu0 %v1394
  %1725 = vmatprep.subr.mxu0 0.0
  %1726 = vmatpush1.msra.mxu0 %v1391
  %1727 = vmatprep.subr.mxu0 0.0
  %1728 = vmatpush1.msra.mxu0 %v1388
  %1729 = vmatprep.subr.mxu0 0.0
  %1730 = vmatpush1.msra.mxu0 %v1385
  %1731 = vmatprep.subr.mxu0 0.0
  %1732 = vmatpush2.msra.mxu0 %v1478
  %1733 = vmatprep.subr.mxu0 0.0
  %1734 = vmatpush2.msra.mxu0 %v1475
  %1735 = vmatprep.subr.mxu0 0.0
  %1736 = vmatpush2.msra.mxu0 %v1472
  %1737 = vmatprep.subr.mxu0 0.0
  %1738 = vmatpush2.msra.mxu0 %v1469
  %1739 = vmatprep.subr.mxu0 0.0
  %1740 = vmatpush2.msra.mxu0 %v1466
  %1741 = vmatprep.subr.mxu0 0.0
  %1742 = vmatpush2.msra.mxu0 %v1463
  %1743 = vmatprep.subr.mxu0 0.0
  %1744 = vmatpush2.msra.mxu0 %v1460
  %1745 = vmatprep.subr.mxu0 0.0
  %1746 = vmatpush2.msra.mxu0 %v1457
  %1747 = vmatprep.subr.mxu0 0.0
  %1748 = vmatpush2.msra.mxu0 %v1454
  %1749 = vmatprep.subr.mxu0 0.0
  %1750 = vmatpush2.msra.mxu0 %v1451
  %1751 = vmatprep.subr.mxu0 0.0
  %1752 = vmatpush2.msra.mxu0 %v1448
  %1753 = vmatprep.subr.mxu0 0.0
  %1754 = vmatpush2.msra.mxu0 %v1445
  %1755 = vmatprep.subr.mxu0 0.0
  %1756 = vmatpush2.msra.mxu0 %v1442
  %1757 = vmatprep.subr.mxu0 0.0
  %1758 = vmatpush2.msra.mxu0 %v1439
  %1759 = vmatprep.subr.mxu0 0.0
  %1760 = vmatpush2.msra.mxu0 %v1436
  %1761 = vmatprep.subr.mxu0 0.0
  %1762 = vmatpush2.msra.mxu0 %v1433
  %1763 = vmatprep.mubr.f32.mxu0 %v949
  %1764 = vmatmul.mubr.f32.gmra.mxu0 %v948
  %v1765 = vpop.f32.mrf.mxu0
  %v1766 = vadd.f32 0.0, %v1765
  %v1767 = vpop.f32.mrf.mxu0
  %1768 = vdwg.mxu0
  %1769 = vmatprep.subr.mxu0 0.0
  %1770 = vmatpush1.msra.mxu0 0.0
  %1771 = vmatprep.subr.mxu0 0.0
  %1772 = vmatpush1.msra.mxu0 0.0
  %1773 = vmatprep.subr.mxu0 0.0
  %1774 = vmatpush1.msra.mxu0 0.0
  %1775 = vmatprep.subr.mxu0 0.0
  %1776 = vmatpush1.msra.mxu0 0.0
  %1777 = vmatprep.subr.mxu0 0.0
  %1778 = vmatpush1.msra.mxu0 0.0
  %1779 = vmatprep.subr.mxu0 0.0
  %1780 = vmatpush1.msra.mxu0 0.0
  %1781 = vmatprep.subr.mxu0 0.0
  %1782 = vmatpush1.msra.mxu0 0.0
  %1783 = vmatprep.subr.mxu0 0.0
  %1784 = vmatpush1.msra.mxu0 0.0
  %1785 = vmatprep.subr.mxu0 0.0
  %1786 = vmatpush1.msra.mxu0 %v1502
  %1787 = vmatprep.subr.mxu0 0.0
  %1788 = vmatpush1.msra.mxu0 %v1499
  %1789 = vmatprep.subr.mxu0 0.0
  %1790 = vmatpush1.msra.mxu0 %v1496
  %1791 = vmatprep.subr.mxu0 0.0
  %1792 = vmatpush1.msra.mxu0 %v1493
  %1793 = vmatprep.subr.mxu0 0.0
  %1794 = vmatpush1.msra.mxu0 %v1490
  %1795 = vmatprep.subr.mxu0 0.0
  %1796 = vmatpush1.msra.mxu0 %v1487
  %1797 = vmatprep.subr.mxu0 0.0
  %1798 = vmatpush1.msra.mxu0 %v1484
  %1799 = vmatprep.subr.mxu0 0.0
  %1800 = vmatpush1.msra.mxu0 %v1481
  %1801 = vmatprep.subr.mxu0 0.0
  %1802 = vmatpush2.msra.mxu0 0.0
  %1803 = vmatprep.subr.mxu0 0.0
  %1804 = vmatpush2.msra.mxu0 0.0
  %1805 = vmatprep.subr.mxu0 0.0
  %1806 = vmatpush2.msra.mxu0 0.0
  %1807 = vmatprep.subr.mxu0 0.0
  %1808 = vmatpush2.msra.mxu0 0.0
  %1809 = vmatprep.subr.mxu0 0.0
  %1810 = vmatpush2.msra.mxu0 0.0
  %1811 = vmatprep.subr.mxu0 0.0
  %1812 = vmatpush2.msra.mxu0 0.0
  %1813 = vmatprep.subr.mxu0 0.0
  %1814 = vmatpush2.msra.mxu0 0.0
  %1815 = vmatprep.subr.mxu0 0.0
  %1816 = vmatpush2.msra.mxu0 0.0
  %1817 = vmatprep.subr.mxu0 0.0
  %1818 = vmatpush2.msra.mxu0 0.0
  %1819 = vmatprep.subr.mxu0 0.0
  %1820 = vmatpush2.msra.mxu0 0.0
  %1821 = vmatprep.subr.mxu0 0.0
  %1822 = vmatpush2.msra.mxu0 0.0
  %1823 = vmatprep.subr.mxu0 0.0
  %1824 = vmatpush2.msra.mxu0 0.0
  %1825 = vmatprep.subr.mxu0 0.0
  %1826 = vmatpush2.msra.mxu0 0.0
  %1827 = vmatprep.subr.mxu0 0.0
  %1828 = vmatpush2.msra.mxu0 0.0
  %1829 = vmatprep.subr.mxu0 0.0
  %1830 = vmatpush2.msra.mxu0 0.0
  %1831 = vmatprep.subr.mxu0 0.0
  %1832 = vmatpush2.msra.mxu0 0.0
  %1833 = vmatprep.mubr.f32.mxu0 0.0
  %1834 = vmatmul.mubr.f32.gmra.mxu0 %v1555
  %v1835 = vpop.f32.mrf.mxu0
  %v1836 = vadd.f32 %v1766, %v1835
  %v1837 = vpop.f32.mrf.mxu0
  %1838 = vdwg.mxu0
  %v1839 = vsub.f32 %v948, %v1695
  %v1840 = vsub.f32 %v949, %v1697
  %v1841 = vsub.f32 %v950, %v1836
  %v1842 = vmul.f32 %v1839, %v1839
  %v1843 = vmul.f32 %v1840, %v1840
  %v1844 = vmul.f32 %v1841, %v1841
  %v1846 = vsel %vm1553, %v1844, 0
  %1848 = vmatprep.subr.mxu0 %v1429
  %1849 = vmatpush1.msra.mxu0 %v1428
  %1850 = vmatprep.subr.mxu0 %v1426
  %1851 = vmatpush1.msra.mxu0 %v1425
  %1852 = vmatprep.subr.mxu0 %v1423
  %1853 = vmatpush1.msra.mxu0 %v1422
  %1854 = vmatprep.subr.mxu0 %v1420
  %1855 = vmatpush1.msra.mxu0 %v1419
  %1856 = vmatprep.subr.mxu0 %v1417
  %1857 = vmatpush1.msra.mxu0 %v1416
  %1858 = vmatprep.subr.mxu0 %v1414
  %1859 = vmatpush1.msra.mxu0 %v1413
  %1860 = vmatprep.subr.mxu0 %v1411
  %1861 = vmatpush1.msra.mxu0 %v1410
  %1862 = vmatprep.subr.mxu0 %v1408
  %1863 = vmatpush1.msra.mxu0 %v1407
  %1864 = vmatprep.subr.mxu0 %v1405
  %1865 = vmatpush1.msra.mxu0 %v1404
  %1866 = vmatprep.subr.mxu0 %v1402
  %1867 = vmatpush1.msra.mxu0 %v1401
  %1868 = vmatprep.subr.mxu0 %v1399
  %1869 = vmatpush1.msra.mxu0 %v1398
  %1870 = vmatprep.subr.mxu0 %v1396
  %1871 = vmatpush1.msra.mxu0 %v1395
  %1872 = vmatprep.subr.mxu0 %v1393
  %1873 = vmatpush1.msra.mxu0 %v1392
  %1874 = vmatprep.subr.mxu0 %v1390
  %1875 = vmatpush1.msra.mxu0 %v1389
  %1876 = vmatprep.subr.mxu0 %v1387
  %1877 = vmatpush1.msra.mxu0 %v1386
  %1878 = vmatprep.subr.mxu0 %v1384
  %1879 = vmatpush1.msra.mxu0 %v1383
  %1880 = vmatprep.subr.mxu0 %v1477
  %1881 = vmatpush2.msra.mxu0 %v1476
  %1882 = vmatprep.subr.mxu0 %v1474
  %1883 = vmatpush2.msra.mxu0 %v1473
  %1884 = vmatprep.subr.mxu0 %v1471
  %1885 = vmatpush2.msra.mxu0 %v1470
  %1886 = vmatprep.subr.mxu0 %v1468
  %1887 = vmatpush2.msra.mxu0 %v1467
  %1888 = vmatprep.subr.mxu0 %v1465
  %1889 = vmatpush2.msra.mxu0 %v1464
  %1890 = vmatprep.subr.mxu0 %v1462
  %1891 = vmatpush2.msra.mxu0 %v1461
  %1892 = vmatprep.subr.mxu0 %v1459
  %1893 = vmatpush2.msra.mxu0 %v1458
  %1894 = vmatprep.subr.mxu0 %v1456
  %1895 = vmatpush2.msra.mxu0 %v1455
  %1896 = vmatprep.subr.mxu0 %v1453
  %1897 = vmatpush2.msra.mxu0 %v1452
  %1898 = vmatprep.subr.mxu0 %v1450
  %1899 = vmatpush2.msra.mxu0 %v1449
  %1900 = vmatprep.subr.mxu0 %v1447
  %1901 = vmatpush2.msra.mxu0 %v1446
  %1902 = vmatprep.subr.mxu0 %v1444
  %1903 = vmatpush2.msra.mxu0 %v1443
  %1904 = vmatprep.subr.mxu0 %v1441
  %1905 = vmatpush2.msra.mxu0 %v1440
  %1906 = vmatprep.subr.mxu0 %v1438
  %1907 = vmatpush2.msra.mxu0 %v1437
  %1908 = vmatprep.subr.mxu0 %v1435
  %1909 = vmatpush2.msra.mxu0 %v1434
  %1910 = vmatprep.subr.mxu0 %v1432
  %1911 = vmatpush2.msra.mxu0 %v1431
  %1912 = vmatprep.mubr.f32.mxu0 %v1843
  %1913 = vmatmul.mubr.f32.gmra.mxu0 %v1842
  %v1914 = vpop.f32.mrf.mxu0
  %v1915 = vadd.f32 1e-05, %v1914
  %v1916 = vpop.f32.mrf.mxu0
  %v1917 = vadd.f32 1e-05, %v1916
  %1918 = vdwg.mxu0
  %1919 = vmatprep.subr.mxu0 0.0
  %1920 = vmatpush1.msra.mxu0 0.0
  %1921 = vmatprep.subr.mxu0 0.0
  %1922 = vmatpush1.msra.mxu0 0.0
  %1923 = vmatprep.subr.mxu0 0.0
  %1924 = vmatpush1.msra.mxu0 0.0
  %1925 = vmatprep.subr.mxu0 0.0
  %1926 = vmatpush1.msra.mxu0 0.0
  %1927 = vmatprep.subr.mxu0 0.0
  %1928 = vmatpush1.msra.mxu0 0.0
  %1929 = vmatprep.subr.mxu0 0.0
  %1930 = vmatpush1.msra.mxu0 0.0
  %1931 = vmatprep.subr.mxu0 0.0
  %1932 = vmatpush1.msra.mxu0 0.0
  %1933 = vmatprep.subr.mxu0 0.0
  %1934 = vmatpush1.msra.mxu0 0.0
  %1935 = vmatprep.subr.mxu0 %v1501
  %1936 = vmatpush1.msra.mxu0 %v1500
  %1937 = vmatprep.subr.mxu0 %v1498
  %1938 = vmatpush1.msra.mxu0 %v1497
  %1939 = vmatprep.subr.mxu0 %v1495
  %1940 = vmatpush1.msra.mxu0 %v1494
  %1941 = vmatprep.subr.mxu0 %v1492
  %1942 = vmatpush1.msra.mxu0 %v1491
  %1943 = vmatprep.subr.mxu0 %v1489
  %1944 = vmatpush1.msra.mxu0 %v1488
  %1945 = vmatprep.subr.mxu0 %v1486
  %1946 = vmatpush1.msra.mxu0 %v1485
  %1947 = vmatprep.subr.mxu0 %v1483
  %1948 = vmatpush1.msra.mxu0 %v1482
  %1949 = vmatprep.subr.mxu0 %v1480
  %1950 = vmatpush1.msra.mxu0 %v1479
  %1951 = vmatprep.subr.mxu0 0.0
  %1952 = vmatpush2.msra.mxu0 0.0
  %1953 = vmatprep.subr.mxu0 0.0
  %1954 = vmatpush2.msra.mxu0 0.0
  %1955 = vmatprep.subr.mxu0 0.0
  %1956 = vmatpush2.msra.mxu0 0.0
  %1957 = vmatprep.subr.mxu0 0.0
  %1958 = vmatpush2.msra.mxu0 0.0
  %1959 = vmatprep.subr.mxu0 0.0
  %1960 = vmatpush2.msra.mxu0 0.0
  %1961 = vmatprep.subr.mxu0 0.0
  %1962 = vmatpush2.msra.mxu0 0.0
  %1963 = vmatprep.subr.mxu0 0.0
  %1964 = vmatpush2.msra.mxu0 0.0
  %1965 = vmatprep.subr.mxu0 0.0
  %1966 = vmatpush2.msra.mxu0 0.0
  %1967 = vmatprep.subr.mxu0 0.0
  %1968 = vmatpush2.msra.mxu0 0.0
  %1969 = vmatprep.subr.mxu0 0.0
  %1970 = vmatpush2.msra.mxu0 0.0
  %1971 = vmatprep.subr.mxu0 0.0
  %1972 = vmatpush2.msra.mxu0 0.0
  %1973 = vmatprep.subr.mxu0 0.0
  %1974 = vmatpush2.msra.mxu0 0.0
  %1975 = vmatprep.subr.mxu0 0.0
  %1976 = vmatpush2.msra.mxu0 0.0
  %1977 = vmatprep.subr.mxu0 0.0
  %1978 = vmatpush2.msra.mxu0 0.0
  %1979 = vmatprep.subr.mxu0 0.0
  %1980 = vmatpush2.msra.mxu0 0.0
  %1981 = vmatprep.subr.mxu0 0.0
  %1982 = vmatpush2.msra.mxu0 0.0
  %1983 = vmatprep.mubr.f32.mxu0 0.0
  %1984 = vmatmul.mubr.f32.gmra.mxu0 %v1846
  %v1985 = vpop.f32.mrf.mxu0
  %v1986 = vadd.f32 %v1915, %v1985
  %v1987 = vpop.f32.mrf.mxu0
  %v1988 = vadd.f32 %v1917, %v1987
  %1989 = vdwg.mxu0
  %1990 = vmatprep.subr.mxu0 0.0
  %1991 = vmatpush1.msra.mxu0 %v1430
  %1992 = vmatprep.subr.mxu0 0.0
  %1993 = vmatpush1.msra.mxu0 %v1427
  %1994 = vmatprep.subr.mxu0 0.0
  %1995 = vmatpush1.msra.mxu0 %v1424
  %1996 = vmatprep.subr.mxu0 0.0
  %1997 = vmatpush1.msra.mxu0 %v1421
  %1998 = vmatprep.subr.mxu0 0.0
  %1999 = vmatpush1.msra.mxu0 %v1418
  %2000 = vmatprep.subr.mxu0 0.0
  %2001 = vmatpush1.msra.mxu0 %v1415
  %2002 = vmatprep.subr.mxu0 0.0
  %2003 = vmatpush1.msra.mxu0 %v1412
  %2004 = vmatprep.subr.mxu0 0.0
  %2005 = vmatpush1.msra.mxu0 %v1409
  %2006 = vmatprep.subr.mxu0 0.0
  %2007 = vmatpush1.msra.mxu0 %v1406
  %2008 = vmatprep.subr.mxu0 0.0
  %2009 = vmatpush1.msra.mxu0 %v1403
  %2010 = vmatprep.subr.mxu0 0.0
  %2011 = vmatpush1.msra.mxu0 %v1400
  %2012 = vmatprep.subr.mxu0 0.0
  %2013 = vmatpush1.msra.mxu0 %v1397
  %2014 = vmatprep.subr.mxu0 0.0
  %2015 = vmatpush1.msra.mxu0 %v1394
  %2016 = vmatprep.subr.mxu0 0.0
  %2017 = vmatpush1.msra.mxu0 %v1391
  %2018 = vmatprep.subr.mxu0 0.0
  %2019 = vmatpush1.msra.mxu0 %v1388
  %2020 = vmatprep.subr.mxu0 0.0
  %2021 = vmatpush1.msra.mxu0 %v1385
  %2022 = vmatprep.subr.mxu0 0.0
  %2023 = vmatpush2.msra.mxu0 %v1478
  %2024 = vmatprep.subr.mxu0 0.0
  %2025 = vmatpush2.msra.mxu0 %v1475
  %2026 = vmatprep.subr.mxu0 0.0
  %2027 = vmatpush2.msra.mxu0 %v1472
  %2028 = vmatprep.subr.mxu0 0.0
  %2029 = vmatpush2.msra.mxu0 %v1469
  %2030 = vmatprep.subr.mxu0 0.0
  %2031 = vmatpush2.msra.mxu0 %v1466
  %2032 = vmatprep.subr.mxu0 0.0
  %2033 = vmatpush2.msra.mxu0 %v1463
  %2034 = vmatprep.subr.mxu0 0.0
  %2035 = vmatpush2.msra.mxu0 %v1460
  %2036 = vmatprep.subr.mxu0 0.0
  %2037 = vmatpush2.msra.mxu0 %v1457
  %2038 = vmatprep.subr.mxu0 0.0
  %2039 = vmatpush2.msra.mxu0 %v1454
  %2040 = vmatprep.subr.mxu0 0.0
  %2041 = vmatpush2.msra.mxu0 %v1451
  %2042 = vmatprep.subr.mxu0 0.0
  %2043 = vmatpush2.msra.mxu0 %v1448
  %2044 = vmatprep.subr.mxu0 0.0
  %2045 = vmatpush2.msra.mxu0 %v1445
  %2046 = vmatprep.subr.mxu0 0.0
  %2047 = vmatpush2.msra.mxu0 %v1442
  %2048 = vmatprep.subr.mxu0 0.0
  %2049 = vmatpush2.msra.mxu0 %v1439
  %2050 = vmatprep.subr.mxu0 0.0
  %2051 = vmatpush2.msra.mxu0 %v1436
  %2052 = vmatprep.subr.mxu0 0.0
  %2053 = vmatpush2.msra.mxu0 %v1433
  %2054 = vmatprep.mubr.f32.mxu0 %v1843
  %2055 = vmatmul.mubr.f32.gmra.mxu0 %v1842
  %v2056 = vpop.f32.mrf.mxu0
  %v2057 = vadd.f32 1e-05, %v2056
  %v2058 = vpop.f32.mrf.mxu0
  %2059 = vdwg.mxu0
  %2060 = vmatprep.subr.mxu0 0.0
  %2061 = vmatpush1.msra.mxu0 0.0
  %2062 = vmatprep.subr.mxu0 0.0
  %2063 = vmatpush1.msra.mxu0 0.0
  %2064 = vmatprep.subr.mxu0 0.0
  %2065 = vmatpush1.msra.mxu0 0.0
  %2066 = vmatprep.subr.mxu0 0.0
  %2067 = vmatpush1.msra.mxu0 0.0
  %2068 = vmatprep.subr.mxu0 0.0
  %2069 = vmatpush1.msra.mxu0 0.0
  %2070 = vmatprep.subr.mxu0 0.0
  %2071 = vmatpush1.msra.mxu0 0.0
  %2072 = vmatprep.subr.mxu0 0.0
  %2073 = vmatpush1.msra.mxu0 0.0
  %2074 = vmatprep.subr.mxu0 0.0
  %2075 = vmatpush1.msra.mxu0 0.0
  %2076 = vmatprep.subr.mxu0 0.0
  %2077 = vmatpush1.msra.mxu0 %v1502
  %2078 = vmatprep.subr.mxu0 0.0
  %2079 = vmatpush1.msra.mxu0 %v1499
  %2080 = vmatprep.subr.mxu0 0.0
  %2081 = vmatpush1.msra.mxu0 %v1496
  %2082 = vmatprep.subr.mxu0 0.0
  %2083 = vmatpush1.msra.mxu0 %v1493
  %2084 = vmatprep.subr.mxu0 0.0
  %2085 = vmatpush1.msra.mxu0 %v1490
  %2086 = vmatprep.subr.mxu0 0.0
  %2087 = vmatpush1.msra.mxu0 %v1487
  %2088 = vmatprep.subr.mxu0 0.0
  %2089 = vmatpush1.msra.mxu0 %v1484
  %2090 = vmatprep.subr.mxu0 0.0
  %2091 = vmatpush1.msra.mxu0 %v1481
  %2092 = vmatprep.subr.mxu0 0.0
  %2093 = vmatpush2.msra.mxu0 0.0
  %2094 = vmatprep.subr.mxu0 0.0
  %2095 = vmatpush2.msra.mxu0 0.0
  %2096 = vmatprep.subr.mxu0 0.0
  %2097 = vmatpush2.msra.mxu0 0.0
  %2098 = vmatprep.subr.mxu0 0.0
  %2099 = vmatpush2.msra.mxu0 0.0
  %2100 = vmatprep.subr.mxu0 0.0
  %2101 = vmatpush2.msra.mxu0 0.0
  %2102 = vmatprep.subr.mxu0 0.0
  %2103 = vmatpush2.msra.mxu0 0.0
  %2104 = vmatprep.subr.mxu0 0.0
  %2105 = vmatpush2.msra.mxu0 0.0
  %2106 = vmatprep.subr.mxu0 0.0
  %2107 = vmatpush2.msra.mxu0 0.0
  %2108 = vmatprep.subr.mxu0 0.0
  %2109 = vmatpush2.msra.mxu0 0.0
  %2110 = vmatprep.subr.mxu0 0.0
  %2111 = vmatpush2.msra.mxu0 0.0
  %2112 = vmatprep.subr.mxu0 0.0
  %2113 = vmatpush2.msra.mxu0 0.0
  %2114 = vmatprep.subr.mxu0 0.0
  %2115 = vmatpush2.msra.mxu0 0.0
  %2116 = vmatprep.subr.mxu0 0.0
  %2117 = vmatpush2.msra.mxu0 0.0
  %2118 = vmatprep.subr.mxu0 0.0
  %2119 = vmatpush2.msra.mxu0 0.0
  %2120 = vmatprep.subr.mxu0 0.0
  %2121 = vmatpush2.msra.mxu0 0.0
  %2122 = vmatprep.subr.mxu0 0.0
  %2123 = vmatpush2.msra.mxu0 0.0
  %2124 = vmatprep.mubr.f32.mxu0 0.0
  %2125 = vmatmul.mubr.f32.gmra.mxu0 %v1846
  %v2126 = vpop.f32.mrf.mxu0
  %v2127 = vadd.f32 %v2057, %v2126
  %v2128 = vpop.f32.mrf.mxu0
  %2129 = vdwg.mxu0
  %v2130 = vrsqrt.pop %v1986
  %v2131 = vrsqrt.pop %v1988
  %v2132 = vrsqrt.pop %v2127
  %v2133 = vmul.f32 %v1839, %v2130
  %v2134 = vmul.f32 %v1840, %v2131
  %v2135 = vmul.f32 %v1841, %v2132
  %v2136 = vld [vmem:[%s4 + $0x348] sm:$0xff]
  %v2137 = vld [vmem:[%s4 + $0x350] sm:$0xf]
  %v2138 = vld [vmem:[%s4 + $0x354] sm:$0xff]
  %v2139 = vld [vmem:[%s4 + $0x35c] sm:$0xf]
  %v2140 = vld [vmem:[%s4 + $0x360] sm:$0xff]
  %v2141 = vld [vmem:[%s4 + $0x368] sm:$0xf]
  %v2142 = vld [vmem:[%s4 + $0x36c] sm:$0xff]
  %v2143 = vld [vmem:[%s4 + $0x374] sm:$0xf]
  %v2144 = vld [vmem:[%s4 + $0x378] sm:$0xff]
  %v2145 = vld [vmem:[%s4 + $0x380] sm:$0xf]
  %v2146 = vld [vmem:[%s4 + $0x384] sm:$0xff]
  %v2147 = vld [vmem:[%s4 + $0x38c] sm:$0xf]
  %v2148 = vld [vmem:[%s4 + $0x390] sm:$0xff]
  %v2149 = vld [vmem:[%s4 + $0x398] sm:$0xf]
  %v2150 = vld [vmem:[%s4 + $0x39c] sm:$0xff]
  %v2151 = vld [vmem:[%s4 + $0x3a4] sm:$0xf]
  %v2152 = vld [vmem:[%s4 + $0x3a8] sm:$0xff]
  %v2153 = vld [vmem:[%s4 + $0x3b0] sm:$0xf]
  %v2154 = vld [vmem:[%s4 + $0x3b4] sm:$0xff]
  %v2155 = vld [vmem:[%s4 + $0x3bc] sm:$0xf]
  %v2156 = vld [vmem:[%s4 + $0x3c0] sm:$0xff]
  %v2157 = vld [vmem:[%s4 + $0x3c8] sm:$0xf]
  %v2158 = vld [vmem:[%s4 + $0x3cc] sm:$0xff]
  %v2159 = vld [vmem:[%s4 + $0x3d4] sm:$0xf]
  %v2160 = vld [vmem:[%s4 + $0x3d8] sm:$0xff]
  %v2161 = vld [vmem:[%s4 + $0x3e0] sm:$0xf]
  %v2162 = vld [vmem:[%s4 + $0x3e4] sm:$0xff]
  %v2163 = vld [vmem:[%s4 + $0x3ec] sm:$0xf]
  %v2164 = vld [vmem:[%s4 + $0x3f0] sm:$0xff]
  %v2165 = vld [vmem:[%s4 + $0x3f8] sm:$0xf]
  %v2166 = vld [vmem:[%s4 + $0x3fc] sm:$0xff]
  %v2167 = vld [vmem:[%s4 + $0x404] sm:$0xf]
  %v2168 = vld [vmem:[%s4 + $0x408] sm:$0xff]
  %v2169 = vld [vmem:[%s4 + $0x410] sm:$0xf]
  %v2170 = vld [vmem:[%s4 + $0x414] sm:$0xff]
  %v2171 = vld [vmem:[%s4 + $0x41c] sm:$0xf]
  %v2172 = vld [vmem:[%s4 + $0x420] sm:$0xff]
  %v2173 = vld [vmem:[%s4 + $0x428] sm:$0xf]
  %v2174 = vld [vmem:[%s4 + $0x42c] sm:$0xff]
  %v2175 = vld [vmem:[%s4 + $0x434] sm:$0xf]
  %v2176 = vld [vmem:[%s4 + $0x438] sm:$0xff]
  %v2177 = vld [vmem:[%s4 + $0x440] sm:$0xf]
  %v2178 = vld [vmem:[%s4 + $0x444] sm:$0xff]
  %v2179 = vld [vmem:[%s4 + $0x44c] sm:$0xf]
  %v2180 = vld [vmem:[%s4 + $0x450] sm:$0xff]
  %v2181 = vld [vmem:[%s4 + $0x458] sm:$0xf]
  %v2182 = vld [vmem:[%s4 + $0x45c] sm:$0xff]
  %v2183 = vld [vmem:[%s4 + $0x464] sm:$0xf]
  %v2184 = vld [vmem:[%s4 + $0x468] sm:$0xff]
  %v2185 = vld [vmem:[%s4 + $0x470] sm:$0xf]
  %v2186 = vld [vmem:[%s4 + $0x474] sm:$0xff]
  %v2187 = vld [vmem:[%s4 + $0x47c] sm:$0xf]
  %v2188 = vld [vmem:[%s4 + $0x480] sm:$0xff]
  %v2189 = vld [vmem:[%s4 + $0x488] sm:$0xf]
  %v2190 = vld [vmem:[%s4 + $0x48c] sm:$0xff]
  %v2191 = vld [vmem:[%s4 + $0x494] sm:$0xf]
  %v2192 = vld [vmem:[%s4 + $0x498] sm:$0xff]
  %v2193 = vld [vmem:[%s4 + $0x4a0] sm:$0xf]
  %v2194 = vld [vmem:[%s4 + $0x4a4] sm:$0xff]
  %v2195 = vld [vmem:[%s4 + $0x4ac] sm:$0xf]
  %v2196 = vld [vmem:[%s4 + $0x4b0] sm:$0xff]
  %v2197 = vld [vmem:[%s4 + $0x4b8] sm:$0xf]
  %v2198 = vld [vmem:[%s4 + $0x4bc] sm:$0xff]
  %v2199 = vld [vmem:[%s4 + $0x4c4] sm:$0xf]
  %v2200 = vld [vmem:[%s4 + $0x4c8] sm:$0xff]
  %v2201 = vld [vmem:[%s4 + $0x4d0] sm:$0xf]
  %v2202 = vld [vmem:[%s4 + $0x4d4] sm:$0xff]
  %v2203 = vld [vmem:[%s4 + $0x4dc] sm:$0xf]
  %v2204 = vld [vmem:[%s4 + $0x4e0] sm:$0xff]
  %v2205 = vld [vmem:[%s4 + $0x4e8] sm:$0xf]
  %v2206 = vld [vmem:[%s4 + $0x4ec] sm:$0xff]
  %v2207 = vld [vmem:[%s4 + $0x4f4] sm:$0xf]
  %v2208 = vld [vmem:[%s4 + $0x4f8] sm:$0xff]
  %v2209 = vld [vmem:[%s4 + $0x500] sm:$0xf]
  %v2210 = vld [vmem:[%s4 + $0x504] sm:$0xff]
  %v2211 = vld [vmem:[%s4 + $0x50c] sm:$0xf]
  %v2212 = vld [vmem:[%s4 + $0x510] sm:$0xff]
  %v2213 = vld [vmem:[%s4 + $0x518] sm:$0xf]
  %v2214 = vld [vmem:[%s4 + $0x51c] sm:$0xff]
  %v2215 = vld [vmem:[%s4 + $0x524] sm:$0xf]
  %v2216 = vpack.c.bf16 %v2133, %v2133
  %v2217 = vpack.c.bf16 %v2134, %v2134
  %v2218 = vpack.c.bf16 %v2135, %v2135
  %s2219 = scalar_lea.vmem %s9, 2
  %v2220 = vld [vmem:[%s2219] ss:$8 sm:$0x7]
  %v2222 = vlaneseq
  %v2223 = vshrl.u32 %v2222, 7
  %v2224 = vsub.s32 0, %v2223
  %v2225 = vrot.slane %v2220, %v2224
  %v2226 = vlaneseq
  %v2227 = vshrl.u32 %v2226, 7
  %v2228 = vsub.s32 1, %v2227
  %v2229 = vrot.slane %v2220, %v2228
  %v2230 = vlaneseq
  %v2231 = vshrl.u32 %v2230, 7
  %v2232 = vsub.s32 2, %v2231
  %v2233 = vrot.slane %v2220, %v2232
  %v2317 = vunpack.c.l.b16 %v2136
  %v2318 = vunpack.c.h.b16 %v2136
  %v2319 = vunpack.c.l.b16 %v2137
  %v2320 = vunpack.c.l.b16 %v2138
  %v2321 = vunpack.c.h.b16 %v2138
  %v2322 = vunpack.c.l.b16 %v2139
  %v2323 = vunpack.c.l.b16 %v2140
  %v2324 = vunpack.c.h.b16 %v2140
  %v2325 = vunpack.c.l.b16 %v2141
  %v2326 = vunpack.c.l.b16 %v2142
  %v2327 = vunpack.c.h.b16 %v2142
  %v2328 = vunpack.c.l.b16 %v2143
  %v2329 = vunpack.c.l.b16 %v2144
  %v2330 = vunpack.c.h.b16 %v2144
  %v2331 = vunpack.c.l.b16 %v2145
  %v2332 = vunpack.c.l.b16 %v2146
  %v2333 = vunpack.c.h.b16 %v2146
  %v2334 = vunpack.c.l.b16 %v2147
  %v2335 = vunpack.c.l.b16 %v2148
  %v2336 = vunpack.c.h.b16 %v2148
  %v2337 = vunpack.c.l.b16 %v2149
  %v2338 = vunpack.c.l.b16 %v2150
  %v2339 = vunpack.c.h.b16 %v2150
  %v2340 = vunpack.c.l.b16 %v2151
  %v2341 = vunpack.c.l.b16 %v2152
  %v2342 = vunpack.c.h.b16 %v2152
  %v2343 = vunpack.c.l.b16 %v2153
  %v2344 = vunpack.c.l.b16 %v2154
  %v2345 = vunpack.c.h.b16 %v2154
  %v2346 = vunpack.c.l.b16 %v2155
  %v2347 = vunpack.c.l.b16 %v2156
  %v2348 = vunpack.c.h.b16 %v2156
  %v2349 = vunpack.c.l.b16 %v2157
  %v2350 = vunpack.c.l.b16 %v2158
  %v2351 = vunpack.c.h.b16 %v2158
  %v2352 = vunpack.c.l.b16 %v2159
  %v2353 = vunpack.c.l.b16 %v2160
  %v2354 = vunpack.c.h.b16 %v2160
  %v2355 = vunpack.c.l.b16 %v2161
  %v2356 = vunpack.c.l.b16 %v2162
  %v2357 = vunpack.c.h.b16 %v2162
  %v2358 = vunpack.c.l.b16 %v2163
  %v2359 = vunpack.c.l.b16 %v2164
  %v2360 = vunpack.c.h.b16 %v2164
  %v2361 = vunpack.c.l.b16 %v2165
  %v2362 = vunpack.c.l.b16 %v2166
  %v2363 = vunpack.c.h.b16 %v2166
  %v2364 = vunpack.c.l.b16 %v2167
  %v2365 = vunpack.c.l.b16 %v2168
  %v2366 = vunpack.c.h.b16 %v2168
  %v2367 = vunpack.c.l.b16 %v2169
  %v2368 = vunpack.c.l.b16 %v2170
  %v2369 = vunpack.c.h.b16 %v2170
  %v2370 = vunpack.c.l.b16 %v2171
  %v2371 = vunpack.c.l.b16 %v2172
  %v2372 = vunpack.c.h.b16 %v2172
  %v2373 = vunpack.c.l.b16 %v2173
  %v2374 = vunpack.c.l.b16 %v2174
  %v2375 = vunpack.c.h.b16 %v2174
  %v2376 = vunpack.c.l.b16 %v2175
  %v2377 = vunpack.c.l.b16 %v2176
  %v2378 = vunpack.c.h.b16 %v2176
  %v2379 = vunpack.c.l.b16 %v2177
  %v2380 = vunpack.c.l.b16 %v2178
  %v2381 = vunpack.c.h.b16 %v2178
  %v2382 = vunpack.c.l.b16 %v2179
  %v2383 = vunpack.c.l.b16 %v2180
  %v2384 = vunpack.c.h.b16 %v2180
  %v2385 = vunpack.c.l.b16 %v2181
  %v2386 = vunpack.c.l.b16 %v2182
  %v2387 = vunpack.c.h.b16 %v2182
  %v2388 = vunpack.c.l.b16 %v2183
  %v2389 = vunpack.c.l.b16 %v2184
  %v2390 = vunpack.c.h.b16 %v2184
  %v2391 = vunpack.c.l.b16 %v2185
  %v2392 = vunpack.c.l.b16 %v2186
  %v2393 = vunpack.c.h.b16 %v2186
  %v2394 = vunpack.c.l.b16 %v2187
  %v2395 = vunpack.c.l.b16 %v2188
  %v2396 = vunpack.c.h.b16 %v2188
  %v2397 = vunpack.c.l.b16 %v2189
  %v2398 = vunpack.c.l.b16 %v2190
  %v2399 = vunpack.c.h.b16 %v2190
  %v2400 = vunpack.c.l.b16 %v2191
  %v2401 = vunpack.c.l.b16 %v2192
  %v2402 = vunpack.c.h.b16 %v2192
  %v2403 = vunpack.c.l.b16 %v2193
  %v2404 = vunpack.c.l.b16 %v2194
  %v2405 = vunpack.c.h.b16 %v2194
  %v2406 = vunpack.c.l.b16 %v2195
  %v2407 = vunpack.c.l.b16 %v2196
  %v2408 = vunpack.c.h.b16 %v2196
  %v2409 = vunpack.c.l.b16 %v2197
  %v2410 = vunpack.c.l.b16 %v2198
  %v2411 = vunpack.c.h.b16 %v2198
  %v2412 = vunpack.c.l.b16 %v2199
  %v2413 = vunpack.c.l.b16 %v2200
  %v2414 = vunpack.c.h.b16 %v2200
  %v2415 = vunpack.c.l.b16 %v2201
  %v2416 = vunpack.c.l.b16 %v2202
  %v2417 = vunpack.c.h.b16 %v2202
  %v2418 = vunpack.c.l.b16 %v2203
  %v2419 = vunpack.c.l.b16 %v2204
  %v2420 = vunpack.c.h.b16 %v2204
  %v2421 = vunpack.c.l.b16 %v2205
  %v2422 = vunpack.c.l.b16 %v2206
  %v2423 = vunpack.c.h.b16 %v2206
  %v2424 = vunpack.c.l.b16 %v2207
  %v2425 = vunpack.c.l.b16 %v2208
  %v2426 = vunpack.c.h.b16 %v2208
  %v2427 = vunpack.c.l.b16 %v2209
  %v2428 = vunpack.c.l.b16 %v2210
  %v2429 = vunpack.c.h.b16 %v2210
  %v2430 = vunpack.c.l.b16 %v2211
  %v2431 = vunpack.c.l.b16 %v2212
  %v2432 = vunpack.c.h.b16 %v2212
  %v2433 = vunpack.c.l.b16 %v2213
  %v2434 = vunpack.c.l.b16 %v2214
  %v2435 = vunpack.c.h.b16 %v2214
  %v2436 = vunpack.c.l.b16 %v2215
  %v2437 = vpack.c.b16 %v2320, %v2317
  %v2438 = vpack.c.b16 %v2321, %v2318
  %v2439 = vpack.c.b16 %v2322, %v2319
  %v2440 = vpack.c.b16 %v2326, %v2323
  %v2441 = vpack.c.b16 %v2327, %v2324
  %v2442 = vpack.c.b16 %v2328, %v2325
  %v2443 = vpack.c.b16 %v2332, %v2329
  %v2444 = vpack.c.b16 %v2333, %v2330
  %v2445 = vpack.c.b16 %v2334, %v2331
  %v2446 = vpack.c.b16 %v2338, %v2335
  %v2447 = vpack.c.b16 %v2339, %v2336
  %v2448 = vpack.c.b16 %v2340, %v2337
  %v2449 = vpack.c.b16 %v2344, %v2341
  %v2450 = vpack.c.b16 %v2345, %v2342
  %v2451 = vpack.c.b16 %v2346, %v2343
  %v2452 = vpack.c.b16 %v2350, %v2347
  %v2453 = vpack.c.b16 %v2351, %v2348
  %v2454 = vpack.c.b16 %v2352, %v2349
  %v2455 = vpack.c.b16 %v2356, %v2353
  %v2456 = vpack.c.b16 %v2357, %v2354
  %v2457 = vpack.c.b16 %v2358, %v2355
  %v2458 = vpack.c.b16 %v2362, %v2359
  %v2459 = vpack.c.b16 %v2363, %v2360
  %v2460 = vpack.c.b16 %v2364, %v2361
  %v2461 = vpack.c.b16 %v2368, %v2365
  %v2462 = vpack.c.b16 %v2369, %v2366
  %v2463 = vpack.c.b16 %v2370, %v2367
  %v2464 = vpack.c.b16 %v2374, %v2371
  %v2465 = vpack.c.b16 %v2375, %v2372
  %v2466 = vpack.c.b16 %v2376, %v2373
  %v2467 = vpack.c.b16 %v2380, %v2377
  %v2468 = vpack.c.b16 %v2381, %v2378
  %v2469 = vpack.c.b16 %v2382, %v2379
  %v2470 = vpack.c.b16 %v2386, %v2383
  %v2471 = vpack.c.b16 %v2387, %v2384
  %v2472 = vpack.c.b16 %v2388, %v2385
  %v2473 = vpack.c.b16 %v2392, %v2389
  %v2474 = vpack.c.b16 %v2393, %v2390
  %v2475 = vpack.c.b16 %v2394, %v2391
  %v2476 = vpack.c.b16 %v2398, %v2395
  %v2477 = vpack.c.b16 %v2399, %v2396
  %v2478 = vpack.c.b16 %v2400, %v2397
  %v2479 = vpack.c.b16 %v2404, %v2401
  %v2480 = vpack.c.b16 %v2405, %v2402
  %v2481 = vpack.c.b16 %v2406, %v2403
  %v2482 = vpack.c.b16 %v2410, %v2407
  %v2483 = vpack.c.b16 %v2411, %v2408
  %v2484 = vpack.c.b16 %v2412, %v2409
  %v2485 = vpack.c.b16 %v2416, %v2413
  %v2486 = vpack.c.b16 %v2417, %v2414
  %v2487 = vpack.c.b16 %v2418, %v2415
  %v2488 = vpack.c.b16 %v2422, %v2419
  %v2489 = vpack.c.b16 %v2423, %v2420
  %v2490 = vpack.c.b16 %v2424, %v2421
  %v2491 = vpack.c.b16 %v2428, %v2425
  %v2492 = vpack.c.b16 %v2429, %v2426
  %v2493 = vpack.c.b16 %v2430, %v2427
  %v2494 = vpack.c.b16 %v2434, %v2431
  %v2495 = vpack.c.b16 %v2435, %v2432
  %v2496 = vpack.c.b16 %v2436, %v2433
  %v2558 = vsel %vm1553, %v2218, 0
  %2560 = vmatprep.subr.bf16.mxu0 %v2459
  %2561 = vmatpush1.bf16.msra.mxu0 %v2458
  %2562 = vmatprep.subr.bf16.mxu0 %v2456
  %2563 = vmatpush1.bf16.msra.mxu0 %v2455
  %2564 = vmatprep.subr.bf16.mxu0 %v2453
  %2565 = vmatpush1.bf16.msra.mxu0 %v2452
  %2566 = vmatprep.subr.bf16.mxu0 %v2450
  %2567 = vmatpush1.bf16.msra.mxu0 %v2449
  %2568 = vmatprep.subr.bf16.mxu0 %v2447
  %2569 = vmatpush1.bf16.msra.mxu0 %v2446
  %2570 = vmatprep.subr.bf16.mxu0 %v2444
  %2571 = vmatpush1.bf16.msra.mxu0 %v2443
  %2572 = vmatprep.subr.bf16.mxu0 %v2441
  %2573 = vmatpush1.bf16.msra.mxu0 %v2440
  %2574 = vmatprep.subr.bf16.mxu0 %v2438
  %2575 = vmatpush1.bf16.msra.mxu0 %v2437
  %2576 = vmatprep.subr.bf16.mxu0 %v2483
  %2577 = vmatpush2.bf16.msra.mxu0 %v2482
  %2578 = vmatprep.subr.bf16.mxu0 %v2480
  %2579 = vmatpush2.bf16.msra.mxu0 %v2479
  %2580 = vmatprep.subr.bf16.mxu0 %v2477
  %2581 = vmatpush2.bf16.msra.mxu0 %v2476
  %2582 = vmatprep.subr.bf16.mxu0 %v2474
  %2583 = vmatpush2.bf16.msra.mxu0 %v2473
  %2584 = vmatprep.subr.bf16.mxu0 %v2471
  %2585 = vmatpush2.bf16.msra.mxu0 %v2470
  %2586 = vmatprep.subr.bf16.mxu0 %v2468
  %2587 = vmatpush2.bf16.msra.mxu0 %v2467
  %2588 = vmatprep.subr.bf16.mxu0 %v2465
  %2589 = vmatpush2.bf16.msra.mxu0 %v2464
  %2590 = vmatprep.subr.bf16.mxu0 %v2462
  %2591 = vmatpush2.bf16.msra.mxu0 %v2461
  %2592 = vmatprep.mubr.bf16.mxu0 %v2217
  %2593 = vmatmul.mubr.bf16.gmra.mxu0 %v2216
  %v2594 = vpop.f32.mrf.mxu0
  %v2595 = vadd.f32 %v2225, %v2594
  %v2596 = vpop.f32.mrf.mxu0
  %v2597 = vadd.f32 %v2229, %v2596
  %v2598 = vpop.f32.mrf.mxu0
  %v2599 = vpop.f32.mrf.mxu0
  %2600 = vdwg.mxu0
  %2601 = vmatprep.subr.bf16.mxu0 0
  %2602 = vmatpush1.bf16.msra.mxu0 0
  %2603 = vmatprep.subr.bf16.mxu0 0
  %2604 = vmatpush1.bf16.msra.mxu0 0
  %2605 = vmatprep.subr.bf16.mxu0 0
  %2606 = vmatpush1.bf16.msra.mxu0 0
  %2607 = vmatprep.subr.bf16.mxu0 0
  %2608 = vmatpush1.bf16.msra.mxu0 0
  %2609 = vmatprep.subr.bf16.mxu0 %v2495
  %2610 = vmatpush1.bf16.msra.mxu0 %v2494
  %2611 = vmatprep.subr.bf16.mxu0 %v2492
  %2612 = vmatpush1.bf16.msra.mxu0 %v2491
  %2613 = vmatprep.subr.bf16.mxu0 %v2489
  %2614 = vmatpush1.bf16.msra.mxu0 %v2488
  %2615 = vmatprep.subr.bf16.mxu0 %v2486
  %2616 = vmatpush1.bf16.msra.mxu0 %v2485
  %2617 = vmatprep.subr.bf16.mxu0 0
  %2618 = vmatpush2.bf16.msra.mxu0 0
  %2619 = vmatprep.subr.bf16.mxu0 0
  %2620 = vmatpush2.bf16.msra.mxu0 0
  %2621 = vmatprep.subr.bf16.mxu0 0
  %2622 = vmatpush2.bf16.msra.mxu0 0
  %2623 = vmatprep.subr.bf16.mxu0 0
  %2624 = vmatpush2.bf16.msra.mxu0 0
  %2625 = vmatprep.subr.bf16.mxu0 0
  %2626 = vmatpush2.bf16.msra.mxu0 0
  %2627 = vmatprep.subr.bf16.mxu0 0
  %2628 = vmatpush2.bf16.msra.mxu0 0
  %2629 = vmatprep.subr.bf16.mxu0 0
  %2630 = vmatpush2.bf16.msra.mxu0 0
  %2631 = vmatprep.subr.bf16.mxu0 0
  %2632 = vmatpush2.bf16.msra.mxu0 0
  %2633 = vmatprep.mubr.bf16.mxu0 0
  %2634 = vmatmul.mubr.bf16.gmra.mxu0 %v2558
  %v2635 = vpop.f32.mrf.mxu0
  %v2636 = vadd.f32 %v2595, %v2635
  %v2637 = vpop.f32.mrf.mxu0
  %v2638 = vadd.f32 %v2597, %v2637
  %v2639 = vpop.f32.mrf.mxu0
  %v2640 = vpop.f32.mrf.mxu0
  %2641 = vdwg.mxu0
  %2642 = vmatprep.subr.bf16.mxu0 0
  %2643 = vmatpush1.bf16.msra.mxu0 %v2460
  %2644 = vmatprep.subr.bf16.mxu0 0
  %2645 = vmatpush1.bf16.msra.mxu0 %v2457
  %2646 = vmatprep.subr.bf16.mxu0 0
  %2647 = vmatpush1.bf16.msra.mxu0 %v2454
  %2648 = vmatprep.subr.bf16.mxu0 0
  %2649 = vmatpush1.bf16.msra.mxu0 %v2451
  %2650 = vmatprep.subr.bf16.mxu0 0
  %2651 = vmatpush1.bf16.msra.mxu0 %v2448
  %2652 = vmatprep.subr.bf16.mxu0 0
  %2653 = vmatpush1.bf16.msra.mxu0 %v2445
  %2654 = vmatprep.subr.bf16.mxu0 0
  %2655 = vmatpush1.bf16.msra.mxu0 %v2442
  %2656 = vmatprep.subr.bf16.mxu0 0
  %2657 = vmatpush1.bf16.msra.mxu0 %v2439
  %2658 = vmatprep.subr.bf16.mxu0 0
  %2659 = vmatpush2.bf16.msra.mxu0 %v2484
  %2660 = vmatprep.subr.bf16.mxu0 0
  %2661 = vmatpush2.bf16.msra.mxu0 %v2481
  %2662 = vmatprep.subr.bf16.mxu0 0
  %2663 = vmatpush2.bf16.msra.mxu0 %v2478
  %2664 = vmatprep.subr.bf16.mxu0 0
  %2665 = vmatpush2.bf16.msra.mxu0 %v2475
  %2666 = vmatprep.subr.bf16.mxu0 0
  %2667 = vmatpush2.bf16.msra.mxu0 %v2472
  %2668 = vmatprep.subr.bf16.mxu0 0
  %2669 = vmatpush2.bf16.msra.mxu0 %v2469
  %2670 = vmatprep.subr.bf16.mxu0 0
  %2671 = vmatpush2.bf16.msra.mxu0 %v2466
  %2672 = vmatprep.subr.bf16.mxu0 0
  %2673 = vmatpush2.bf16.msra.mxu0 %v2463
  %2674 = vmatprep.mubr.bf16.mxu0 %v2217
  %2675 = vmatmul.mubr.bf16.gmra.mxu0 %v2216
  %v2676 = vpop.f32.mrf.mxu0
  %v2677 = vadd.f32 %v2233, %v2676
  %v2678 = vpop.f32.mrf.mxu0
  %v2679 = vpop.f32.mrf.mxu0
  %v2680 = vpop.f32.mrf.mxu0
  %2681 = vdwg.mxu0
  %2682 = vmatprep.subr.bf16.mxu0 0
  %2683 = vmatpush1.bf16.msra.mxu0 0
  %2684 = vmatprep.subr.bf16.mxu0 0
  %2685 = vmatpush1.bf16.msra.mxu0 0
  %2686 = vmatprep.subr.bf16.mxu0 0
  %2687 = vmatpush1.bf16.msra.mxu0 0
  %2688 = vmatprep.subr.bf16.mxu0 0
  %2689 = vmatpush1.bf16.msra.mxu0 0
  %2690 = vmatprep.subr.bf16.mxu0 0
  %2691 = vmatpush1.bf16.msra.mxu0 %v2496
  %2692 = vmatprep.subr.bf16.mxu0 0
  %2693 = vmatpush1.bf16.msra.mxu0 %v2493
  %2694 = vmatprep.subr.bf16.mxu0 0
  %2695 = vmatpush1.bf16.msra.mxu0 %v2490
  %2696 = vmatprep.subr.bf16.mxu0 0
  %2697 = vmatpush1.bf16.msra.mxu0 %v2487
  %2698 = vmatprep.subr.bf16.mxu0 0
  %2699 = vmatpush2.bf16.msra.mxu0 0
  %2700 = vmatprep.subr.bf16.mxu0 0
  %2701 = vmatpush2.bf16.msra.mxu0 0
  %2702 = vmatprep.subr.bf16.mxu0 0
  %2703 = vmatpush2.bf16.msra.mxu0 0
  %2704 = vmatprep.subr.bf16.mxu0 0
  %2705 = vmatpush2.bf16.msra.mxu0 0
  %2706 = vmatprep.subr.bf16.mxu0 0
  %2707 = vmatpush2.bf16.msra.mxu0 0
  %2708 = vmatprep.subr.bf16.mxu0 0
  %2709 = vmatpush2.bf16.msra.mxu0 0
  %2710 = vmatprep.subr.bf16.mxu0 0
  %2711 = vmatpush2.bf16.msra.mxu0 0
  %2712 = vmatprep.subr.bf16.mxu0 0
  %2713 = vmatpush2.bf16.msra.mxu0 0
  %2714 = vmatprep.mubr.bf16.mxu0 0
  %2715 = vmatmul.mubr.bf16.gmra.mxu0 %v2558
  %v2716 = vpop.f32.mrf.mxu0
  %v2717 = vadd.f32 %v2677, %v2716
  %v2718 = vpop.f32.mrf.mxu0
  %v2719 = vpop.f32.mrf.mxu0
  %v2720 = vpop.f32.mrf.mxu0
  %2721 = vdwg.mxu0
  %v2722 = vmul.f32 %v2636, %v2636
  %v2723 = vmul.f32 %v2638, %v2638
  %v2724 = vmul.f32 %v2717, %v2717
  %v2725 = vmul.f32 %v2636, %v2722
  %v2726 = vmul.f32 %v2638, %v2723
  %v2727 = vmul.f32 %v2717, %v2724
  %v2728 = vmul.f32 %v2725, 0.044715
  %v2729 = vmul.f32 %v2726, 0.044715
  %v2730 = vmul.f32 %v2727, 0.044715
  %v2731 = vadd.f32 %v2636, %v2728
  %v2732 = vadd.f32 %v2638, %v2729
  %v2733 = vadd.f32 %v2717, %v2730
  %v2734 = vmul.f32 %v2731, 0.7978846
  %v2735 = vmul.f32 %v2732, 0.7978846
  %v2736 = vmul.f32 %v2733, 0.7978846
  %v2737 = vtanh.pop %v2734
  %v2738 = vtanh.pop %v2735
  %v2739 = vtanh.pop %v2736
  %v2740 = vadd.f32 %v2737, 1.0
  %v2741 = vadd.f32 %v2738, 1.0
  %v2742 = vadd.f32 %v2739, 1.0
  %v2743 = vmul.f32 %v2740, 0.5
  %v2744 = vmul.f32 %v2741, 0.5
  %v2745 = vmul.f32 %v2742, 0.5
  %v2746 = vmul.f32 %v2636, %v2743
  %v2747 = vmul.f32 %v2638, %v2744
  %v2748 = vmul.f32 %v2717, %v2745
  %v2749 = vld [vmem:[%s4 + $0x528] sm:$0xff]
  %v2750 = vld [vmem:[%s4 + $0x530] sm:$0xf]
  %v2751 = vld [vmem:[%s4 + $0x534] sm:$0xff]
  %v2752 = vld [vmem:[%s4 + $0x53c] sm:$0xf]
  %v2753 = vld [vmem:[%s4 + $0x540] sm:$0xff]
  %v2754 = vld [vmem:[%s4 + $0x548] sm:$0xf]
  %v2755 = vld [vmem:[%s4 + $0x54c] sm:$0xff]
  %v2756 = vld [vmem:[%s4 + $0x554] sm:$0xf]
  %v2757 = vld [vmem:[%s4 + $0x558] sm:$0xff]
  %v2758 = vld [vmem:[%s4 + $0x560] sm:$0xf]
  %v2759 = vld [vmem:[%s4 + $0x564] sm:$0xff]
  %v2760 = vld [vmem:[%s4 + $0x56c] sm:$0xf]
  %v2761 = vld [vmem:[%s4 + $0x570] sm:$0xff]
  %v2762 = vld [vmem:[%s4 + $0x578] sm:$0xf]
  %v2763 = vld [vmem:[%s4 + $0x57c] sm:$0xff]
  %v2764 = vld [vmem:[%s4 + $0x584] sm:$0xf]
  %v2765 = vld [vmem:[%s4 + $0x588] sm:$0xff]
  %v2766 = vld [vmem:[%s4 + $0x590] sm:$0xf]
  %v2767 = vld [vmem:[%s4 + $0x594] sm:$0xff]
  %v2768 = vld [vmem:[%s4 + $0x59c] sm:$0xf]
  %v2769 = vld [vmem:[%s4 + $0x5a0] sm:$0xff]
  %v2770 = vld [vmem:[%s4 + $0x5a8] sm:$0xf]
  %v2771 = vld [vmem:[%s4 + $0x5ac] sm:$0xff]
  %v2772 = vld [vmem:[%s4 + $0x5b4] sm:$0xf]
  %v2773 = vld [vmem:[%s4 + $0x5b8] sm:$0xff]
  %v2774 = vld [vmem:[%s4 + $0x5c0] sm:$0xf]
  %v2775 = vld [vmem:[%s4 + $0x5c4] sm:$0xff]
  %v2776 = vld [vmem:[%s4 + $0x5cc] sm:$0xf]
  %v2777 = vld [vmem:[%s4 + $0x5d0] sm:$0xff]
  %v2778 = vld [vmem:[%s4 + $0x5d8] sm:$0xf]
  %v2779 = vld [vmem:[%s4 + $0x5dc] sm:$0xff]
  %v2780 = vld [vmem:[%s4 + $0x5e4] sm:$0xf]
  %v2781 = vld [vmem:[%s4 + $0x5e8] sm:$0xff]
  %v2782 = vld [vmem:[%s4 + $0x5f0] sm:$0xf]
  %v2783 = vld [vmem:[%s4 + $0x5f4] sm:$0xff]
  %v2784 = vld [vmem:[%s4 + $0x5fc] sm:$0xf]
  %v2785 = vld [vmem:[%s4 + $0x600] sm:$0xff]
  %v2786 = vld [vmem:[%s4 + $0x608] sm:$0xf]
  %v2787 = vld [vmem:[%s4 + $0x60c] sm:$0xff]
  %v2788 = vld [vmem:[%s4 + $0x614] sm:$0xf]
  %v2789 = vld [vmem:[%s4 + $0x618] sm:$0xff]
  %v2790 = vld [vmem:[%s4 + $0x620] sm:$0xf]
  %v2791 = vld [vmem:[%s4 + $0x624] sm:$0xff]
  %v2792 = vld [vmem:[%s4 + $0x62c] sm:$0xf]
  %v2793 = vld [vmem:[%s4 + $0x630] sm:$0xff]
  %v2794 = vld [vmem:[%s4 + $0x638] sm:$0xf]
  %v2795 = vld [vmem:[%s4 + $0x63c] sm:$0xff]
  %v2796 = vld [vmem:[%s4 + $0x644] sm:$0xf]
  %v2797 = vld [vmem:[%s4 + $0x648] sm:$0xff]
  %v2798 = vld [vmem:[%s4 + $0x650] sm:$0xf]
  %v2799 = vld [vmem:[%s4 + $0x654] sm:$0xff]
  %v2800 = vld [vmem:[%s4 + $0x65c] sm:$0xf]
  %v2801 = vld [vmem:[%s4 + $0x660] sm:$0xff]
  %v2802 = vld [vmem:[%s4 + $0x668] sm:$0xf]
  %v2803 = vld [vmem:[%s4 + $0x66c] sm:$0xff]
  %v2804 = vld [vmem:[%s4 + $0x674] sm:$0xf]
  %v2805 = vld [vmem:[%s4 + $0x678] sm:$0xff]
  %v2806 = vld [vmem:[%s4 + $0x680] sm:$0xf]
  %v2807 = vld [vmem:[%s4 + $0x684] sm:$0xff]
  %v2808 = vld [vmem:[%s4 + $0x68c] sm:$0xf]
  %v2809 = vld [vmem:[%s4 + $0x690] sm:$0xff]
  %v2810 = vld [vmem:[%s4 + $0x698] sm:$0xf]
  %v2811 = vld [vmem:[%s4 + $0x69c] sm:$0xff]
  %v2812 = vld [vmem:[%s4 + $0x6a4] sm:$0xf]
  %v2813 = vld [vmem:[%s4 + $0x6a8] sm:$0xff]
  %v2814 = vld [vmem:[%s4 + $0x6b0] sm:$0xf]
  %v2815 = vld [vmem:[%s4 + $0x6b4] sm:$0xff]
  %v2816 = vld [vmem:[%s4 + $0x6bc] sm:$0xf]
  %v2817 = vld [vmem:[%s4 + $0x6c0] sm:$0xff]
  %v2818 = vld [vmem:[%s4 + $0x6c8] sm:$0xf]
  %v2819 = vld [vmem:[%s4 + $0x6cc] sm:$0xff]
  %v2820 = vld [vmem:[%s4 + $0x6d4] sm:$0xf]
  %v2821 = vld [vmem:[%s4 + $0x6d8] sm:$0xff]
  %v2822 = vld [vmem:[%s4 + $0x6e0] sm:$0xf]
  %v2823 = vld [vmem:[%s4 + $0x6e4] sm:$0xff]
  %v2824 = vld [vmem:[%s4 + $0x6ec] sm:$0xf]
  %v2825 = vld [vmem:[%s4 + $0x6f0] sm:$0xff]
  %v2826 = vld [vmem:[%s4 + $0x6f8] sm:$0xf]
  %v2827 = vld [vmem:[%s4 + $0x6fc] sm:$0xff]
  %v2828 = vld [vmem:[%s4 + $0x704] sm:$0xf]
  %v2829 = vpack.c.bf16 %v2746, %v2746
  %v2830 = vpack.c.bf16 %v2747, %v2747
  %v2831 = vpack.c.bf16 %v2748, %v2748
  %s2832 = scalar_lea.vmem %s9, 3
  %v2833 = vld [vmem:[%s2832] ss:$8 sm:$0x7]
  %v2835 = vlaneseq
  %v2836 = vshrl.u32 %v2835, 7
  %v2837 = vsub.s32 0, %v2836
  %v2838 = vrot.slane %v2833, %v2837
  %v2839 = vlaneseq
  %v2840 = vshrl.u32 %v2839, 7
  %v2841 = vsub.s32 1, %v2840
  %v2842 = vrot.slane %v2833, %v2841
  %v2843 = vlaneseq
  %v2844 = vshrl.u32 %v2843, 7
  %v2845 = vsub.s32 2, %v2844
  %v2846 = vrot.slane %v2833, %v2845
  %v2930 = vunpack.c.l.b16 %v2749
  %v2931 = vunpack.c.h.b16 %v2749
  %v2932 = vunpack.c.l.b16 %v2750
  %v2933 = vunpack.c.l.b16 %v2751
  %v2934 = vunpack.c.h.b16 %v2751
  %v2935 = vunpack.c.l.b16 %v2752
  %v2936 = vunpack.c.l.b16 %v2753
  %v2937 = vunpack.c.h.b16 %v2753
  %v2938 = vunpack.c.l.b16 %v2754
  %v2939 = vunpack.c.l.b16 %v2755
  %v2940 = vunpack.c.h.b16 %v2755
  %v2941 = vunpack.c.l.b16 %v2756
  %v2942 = vunpack.c.l.b16 %v2757
  %v2943 = vunpack.c.h.b16 %v2757
  %v2944 = vunpack.c.l.b16 %v2758
  %v2945 = vunpack.c.l.b16 %v2759
  %v2946 = vunpack.c.h.b16 %v2759
  %v2947 = vunpack.c.l.b16 %v2760
  %v2948 = vunpack.c.l.b16 %v2761
  %v2949 = vunpack.c.h.b16 %v2761
  %v2950 = vunpack.c.l.b16 %v2762
  %v2951 = vunpack.c.l.b16 %v2763
  %v2952 = vunpack.c.h.b16 %v2763
  %v2953 = vunpack.c.l.b16 %v2764
  %v2954 = vunpack.c.l.b16 %v2765
  %v2955 = vunpack.c.h.b16 %v2765
  %v2956 = vunpack.c.l.b16 %v2766
  %v2957 = vunpack.c.l.b16 %v2767
  %v2958 = vunpack.c.h.b16 %v2767
  %v2959 = vunpack.c.l.b16 %v2768
  %v2960 = vunpack.c.l.b16 %v2769
  %v2961 = vunpack.c.h.b16 %v2769
  %v2962 = vunpack.c.l.b16 %v2770
  %v2963 = vunpack.c.l.b16 %v2771
  %v2964 = vunpack.c.h.b16 %v2771
  %v2965 = vunpack.c.l.b16 %v2772
  %v2966 = vunpack.c.l.b16 %v2773
  %v2967 = vunpack.c.h.b16 %v2773
  %v2968 = vunpack.c.l.b16 %v2774
  %v2969 = vunpack.c.l.b16 %v2775
  %v2970 = vunpack.c.h.b16 %v2775
  %v2971 = vunpack.c.l.b16 %v2776
  %v2972 = vunpack.c.l.b16 %v2777
  %v2973 = vunpack.c.h.b16 %v2777
  %v2974 = vunpack.c.l.b16 %v2778
  %v2975 = vunpack.c.l.b16 %v2779
  %v2976 = vunpack.c.h.b16 %v2779
  %v2977 = vunpack.c.l.b16 %v2780
  %v2978 = vunpack.c.l.b16 %v2781
  %v2979 = vunpack.c.h.b16 %v2781
  %v2980 = vunpack.c.l.b16 %v2782
  %v2981 = vunpack.c.l.b16 %v2783
  %v2982 = vunpack.c.h.b16 %v2783
  %v2983 = vunpack.c.l.b16 %v2784
  %v2984 = vunpack.c.l.b16 %v2785
  %v2985 = vunpack.c.h.b16 %v2785
  %v2986 = vunpack.c.l.b16 %v2786
  %v2987 = vunpack.c.l.b16 %v2787
  %v2988 = vunpack.c.h.b16 %v2787
  %v2989 = vunpack.c.l.b16 %v2788
  %v2990 = vunpack.c.l.b16 %v2789
  %v2991 = vunpack.c.h.b16 %v2789
  %v2992 = vunpack.c.l.b16 %v2790
  %v2993 = vunpack.c.l.b16 %v2791
  %v2994 = vunpack.c.h.b16 %v2791
  %v2995 = vunpack.c.l.b16 %v2792
  %v2996 = vunpack.c.l.b16 %v2793
  %v2997 = vunpack.c.h.b16 %v2793
  %v2998 = vunpack.c.l.b16 %v2794
  %v2999 = vunpack.c.l.b16 %v2795
  %v3000 = vunpack.c.h.b16 %v2795
  %v3001 = vunpack.c.l.b16 %v2796
  %v3002 = vunpack.c.l.b16 %v2797
  %v3003 = vunpack.c.h.b16 %v2797
  %v3004 = vunpack.c.l.b16 %v2798
  %v3005 = vunpack.c.l.b16 %v2799
  %v3006 = vunpack.c.h.b16 %v2799
  %v3007 = vunpack.c.l.b16 %v2800
  %v3008 = vunpack.c.l.b16 %v2801
  %v3009 = vunpack.c.h.b16 %v2801
  %v3010 = vunpack.c.l.b16 %v2802
  %v3011 = vunpack.c.l.b16 %v2803
  %v3012 = vunpack.c.h.b16 %v2803
  %v3013 = vunpack.c.l.b16 %v2804
  %v3014 = vunpack.c.l.b16 %v2805
  %v3015 = vunpack.c.h.b16 %v2805
  %v3016 = vunpack.c.l.b16 %v2806
  %v3017 = vunpack.c.l.b16 %v2807
  %v3018 = vunpack.c.h.b16 %v2807
  %v3019 = vunpack.c.l.b16 %v2808
  %v3020 = vunpack.c.l.b16 %v2809
  %v3021 = vunpack.c.h.b16 %v2809
  %v3022 = vunpack.c.l.b16 %v2810
  %v3023 = vunpack.c.l.b16 %v2811
  %v3024 = vunpack.c.h.b16 %v2811
  %v3025 = vunpack.c.l.b16 %v2812
  %v3026 = vunpack.c.l.b16 %v2813
  %v3027 = vunpack.c.h.b16 %v2813
  %v3028 = vunpack.c.l.b16 %v2814
  %v3029 = vunpack.c.l.b16 %v2815
  %v3030 = vunpack.c.h.b16 %v2815
  %v3031 = vunpack.c.l.b16 %v2816
  %v3032 = vunpack.c.l.b16 %v2817
  %v3033 = vunpack.c.h.b16 %v2817
  %v3034 = vunpack.c.l.b16 %v2818
  %v3035 = vunpack.c.l.b16 %v2819
  %v3036 = vunpack.c.h.b16 %v2819
  %v3037 = vunpack.c.l.b16 %v2820
  %v3038 = vunpack.c.l.b16 %v2821
  %v3039 = vunpack.c.h.b16 %v2821
  %v3040 = vunpack.c.l.b16 %v2822
  %v3041 = vunpack.c.l.b16 %v2823
  %v3042 = vunpack.c.h.b16 %v2823
  %v3043 = vunpack.c.l.b16 %v2824
  %v3044 = vunpack.c.l.b16 %v2825
  %v3045 = vunpack.c.h.b16 %v2825
  %v3046 = vunpack.c.l.b16 %v2826
  %v3047 = vunpack.c.l.b16 %v2827
  %v3048 = vunpack.c.h.b16 %v2827
  %v3049 = vunpack.c.l.b16 %v2828
  %v3050 = vpack.c.b16 %v2933, %v2930
  %v3051 = vpack.c.b16 %v2934, %v2931
  %v3052 = vpack.c.b16 %v2935, %v2932
  %v3053 = vpack.c.b16 %v2939, %v2936
  %v3054 = vpack.c.b16 %v2940, %v2937
  %v3055 = vpack.c.b16 %v2941, %v2938
  %v3056 = vpack.c.b16 %v2945, %v2942
  %v3057 = vpack.c.b16 %v2946, %v2943
  %v3058 = vpack.c.b16 %v2947, %v2944
  %v3059 = vpack.c.b16 %v2951, %v2948
  %v3060 = vpack.c.b16 %v2952, %v2949
  %v3061 = vpack.c.b16 %v2953, %v2950
  %v3062 = vpack.c.b16 %v2957, %v2954
  %v3063 = vpack.c.b16 %v2958, %v2955
  %v3064 = vpack.c.b16 %v2959, %v2956
  %v3065 = vpack.c.b16 %v2963, %v2960
  %v3066 = vpack.c.b16 %v2964, %v2961
  %v3067 = vpack.c.b16 %v2965, %v2962
  %v3068 = vpack.c.b16 %v2969, %v2966
  %v3069 = vpack.c.b16 %v2970, %v2967
  %v3070 = vpack.c.b16 %v2971, %v2968
  %v3071 = vpack.c.b16 %v2975, %v2972
  %v3072 = vpack.c.b16 %v2976, %v2973
  %v3073 = vpack.c.b16 %v2977, %v2974
  %v3074 = vpack.c.b16 %v2981, %v2978
  %v3075 = vpack.c.b16 %v2982, %v2979
  %v3076 = vpack.c.b16 %v2983, %v2980
  %v3077 = vpack.c.b16 %v2987, %v2984
  %v3078 = vpack.c.b16 %v2988, %v2985
  %v3079 = vpack.c.b16 %v2989, %v2986
  %v3080 = vpack.c.b16 %v2993, %v2990
  %v3081 = vpack.c.b16 %v2994, %v2991
  %v3082 = vpack.c.b16 %v2995, %v2992
  %v3083 = vpack.c.b16 %v2999, %v2996
  %v3084 = vpack.c.b16 %v3000, %v2997
  %v3085 = vpack.c.b16 %v3001, %v2998
  %v3086 = vpack.c.b16 %v3005, %v3002
  %v3087 = vpack.c.b16 %v3006, %v3003
  %v3088 = vpack.c.b16 %v3007, %v3004
  %v3089 = vpack.c.b16 %v3011, %v3008
  %v3090 = vpack.c.b16 %v3012, %v3009
  %v3091 = vpack.c.b16 %v3013, %v3010
  %v3092 = vpack.c.b16 %v3017, %v3014
  %v3093 = vpack.c.b16 %v3018, %v3015
  %v3094 = vpack.c.b16 %v3019, %v3016
  %v3095 = vpack.c.b16 %v3023, %v3020
  %v3096 = vpack.c.b16 %v3024, %v3021
  %v3097 = vpack.c.b16 %v3025, %v3022
  %v3098 = vpack.c.b16 %v3029, %v3026
  %v3099 = vpack.c.b16 %v3030, %v3027
  %v3100 = vpack.c.b16 %v3031, %v3028
  %v3101 = vpack.c.b16 %v3035, %v3032
  %v3102 = vpack.c.b16 %v3036, %v3033
  %v3103 = vpack.c.b16 %v3037, %v3034
  %v3104 = vpack.c.b16 %v3041, %v3038
  %v3105 = vpack.c.b16 %v3042, %v3039
  %v3106 = vpack.c.b16 %v3043, %v3040
  %v3107 = vpack.c.b16 %v3047, %v3044
  %v3108 = vpack.c.b16 %v3048, %v3045
  %v3109 = vpack.c.b16 %v3049, %v3046
  %v3171 = vsel %vm1553, %v2831, 0
  %3173 = vmatprep.subr.bf16.mxu0 %v3072
  %3174 = vmatpush1.bf16.msra.mxu0 %v3071
  %3175 = vmatprep.subr.bf16.mxu0 %v3069
  %3176 = vmatpush1.bf16.msra.mxu0 %v3068
  %3177 = vmatprep.subr.bf16.mxu0 %v3066
  %3178 = vmatpush1.bf16.msra.mxu0 %v3065
  %3179 = vmatprep.subr.bf16.mxu0 %v3063
  %3180 = vmatpush1.bf16.msra.mxu0 %v3062
  %3181 = vmatprep.subr.bf16.mxu0 %v3060
  %3182 = vmatpush1.bf16.msra.mxu0 %v3059
  %3183 = vmatprep.subr.bf16.mxu0 %v3057
  %3184 = vmatpush1.bf16.msra.mxu0 %v3056
  %3185 = vmatprep.subr.bf16.mxu0 %v3054
  %3186 = vmatpush1.bf16.msra.mxu0 %v3053
  %3187 = vmatprep.subr.bf16.mxu0 %v3051
  %3188 = vmatpush1.bf16.msra.mxu0 %v3050
  %3189 = vmatprep.subr.bf16.mxu0 %v3096
  %3190 = vmatpush2.bf16.msra.mxu0 %v3095
  %3191 = vmatprep.subr.bf16.mxu0 %v3093
  %3192 = vmatpush2.bf16.msra.mxu0 %v3092
  %3193 = vmatprep.subr.bf16.mxu0 %v3090
  %3194 = vmatpush2.bf16.msra.mxu0 %v3089
  %3195 = vmatprep.subr.bf16.mxu0 %v3087
  %3196 = vmatpush2.bf16.msra.mxu0 %v3086
  %3197 = vmatprep.subr.bf16.mxu0 %v3084
  %3198 = vmatpush2.bf16.msra.mxu0 %v3083
  %3199 = vmatprep.subr.bf16.mxu0 %v3081
  %3200 = vmatpush2.bf16.msra.mxu0 %v3080
  %3201 = vmatprep.subr.bf16.mxu0 %v3078
  %3202 = vmatpush2.bf16.msra.mxu0 %v3077
  %3203 = vmatprep.subr.bf16.mxu0 %v3075
  %3204 = vmatpush2.bf16.msra.mxu0 %v3074
  %3205 = vmatprep.mubr.bf16.mxu0 %v2830
  %3206 = vmatmul.mubr.bf16.gmra.mxu0 %v2829
  %v3207 = vpop.f32.mrf.mxu0
  %v3208 = vadd.f32 %v2838, %v3207
  %v3209 = vpop.f32.mrf.mxu0
  %v3210 = vadd.f32 %v2842, %v3209
  %v3211 = vpop.f32.mrf.mxu0
  %v3212 = vpop.f32.mrf.mxu0
  %3213 = vdwg.mxu0
  %3214 = vmatprep.subr.bf16.mxu0 0
  %3215 = vmatpush1.bf16.msra.mxu0 0
  %3216 = vmatprep.subr.bf16.mxu0 0
  %3217 = vmatpush1.bf16.msra.mxu0 0
  %3218 = vmatprep.subr.bf16.mxu0 0
  %3219 = vmatpush1.bf16.msra.mxu0 0
  %3220 = vmatprep.subr.bf16.mxu0 0
  %3221 = vmatpush1.bf16.msra.mxu0 0
  %3222 = vmatprep.subr.bf16.mxu0 %v3108
  %3223 = vmatpush1.bf16.msra.mxu0 %v3107
  %3224 = vmatprep.subr.bf16.mxu0 %v3105
  %3225 = vmatpush1.bf16.msra.mxu0 %v3104
  %3226 = vmatprep.subr.bf16.mxu0 %v3102
  %3227 = vmatpush1.bf16.msra.mxu0 %v3101
  %3228 = vmatprep.subr.bf16.mxu0 %v3099
  %3229 = vmatpush1.bf16.msra.mxu0 %v3098
  %3230 = vmatprep.subr.bf16.mxu0 0
  %3231 = vmatpush2.bf16.msra.mxu0 0
  %3232 = vmatprep.subr.bf16.mxu0 0
  %3233 = vmatpush2.bf16.msra.mxu0 0
  %3234 = vmatprep.subr.bf16.mxu0 0
  %3235 = vmatpush2.bf16.msra.mxu0 0
  %3236 = vmatprep.subr.bf16.mxu0 0
  %3237 = vmatpush2.bf16.msra.mxu0 0
  %3238 = vmatprep.subr.bf16.mxu0 0
  %3239 = vmatpush2.bf16.msra.mxu0 0
  %3240 = vmatprep.subr.bf16.mxu0 0
  %3241 = vmatpush2.bf16.msra.mxu0 0
  %3242 = vmatprep.subr.bf16.mxu0 0
  %3243 = vmatpush2.bf16.msra.mxu0 0
  %3244 = vmatprep.subr.bf16.mxu0 0
  %3245 = vmatpush2.bf16.msra.mxu0 0
  %3246 = vmatprep.mubr.bf16.mxu0 0
  %3247 = vmatmul.mubr.bf16.gmra.mxu0 %v3171
  %v3248 = vpop.f32.mrf.mxu0
  %v3249 = vadd.f32 %v3208, %v3248
  %v3250 = vpop.f32.mrf.mxu0
  %v3251 = vadd.f32 %v3210, %v3250
  %v3252 = vpop.f32.mrf.mxu0
  %v3253 = vpop.f32.mrf.mxu0
  %3254 = vdwg.mxu0
  %3255 = vmatprep.subr.bf16.mxu0 0
  %3256 = vmatpush1.bf16.msra.mxu0 %v3073
  %3257 = vmatprep.subr.bf16.mxu0 0
  %3258 = vmatpush1.bf16.msra.mxu0 %v3070
  %3259 = vmatprep.subr.bf16.mxu0 0
  %3260 = vmatpush1.bf16.msra.mxu0 %v3067
  %3261 = vmatprep.subr.bf16.mxu0 0
  %3262 = vmatpush1.bf16.msra.mxu0 %v3064
  %3263 = vmatprep.subr.bf16.mxu0 0
  %3264 = vmatpush1.bf16.msra.mxu0 %v3061
  %3265 = vmatprep.subr.bf16.mxu0 0
  %3266 = vmatpush1.bf16.msra.mxu0 %v3058
  %3267 = vmatprep.subr.bf16.mxu0 0
  %3268 = vmatpush1.bf16.msra.mxu0 %v3055
  %3269 = vmatprep.subr.bf16.mxu0 0
  %3270 = vmatpush1.bf16.msra.mxu0 %v3052
  %3271 = vmatprep.subr.bf16.mxu0 0
  %3272 = vmatpush2.bf16.msra.mxu0 %v3097
  %3273 = vmatprep.subr.bf16.mxu0 0
  %3274 = vmatpush2.bf16.msra.mxu0 %v3094
  %3275 = vmatprep.subr.bf16.mxu0 0
  %3276 = vmatpush2.bf16.msra.mxu0 %v3091
  %3277 = vmatprep.subr.bf16.mxu0 0
  %3278 = vmatpush2.bf16.msra.mxu0 %v3088
  %3279 = vmatprep.subr.bf16.mxu0 0
  %3280 = vmatpush2.bf16.msra.mxu0 %v3085
  %3281 = vmatprep.subr.bf16.mxu0 0
  %3282 = vmatpush2.bf16.msra.mxu0 %v3082
  %3283 = vmatprep.subr.bf16.mxu0 0
  %3284 = vmatpush2.bf16.msra.mxu0 %v3079
  %3285 = vmatprep.subr.bf16.mxu0 0
  %3286 = vmatpush2.bf16.msra.mxu0 %v3076
  %3287 = vmatprep.mubr.bf16.mxu0 %v2830
  %3288 = vmatmul.mubr.bf16.gmra.mxu0 %v2829
  %v3289 = vpop.f32.mrf.mxu0
  %v3290 = vadd.f32 %v2846, %v3289
  %v3291 = vpop.f32.mrf.mxu0
  %v3292 = vpop.f32.mrf.mxu0
  %v3293 = vpop.f32.mrf.mxu0
  %3294 = vdwg.mxu0
  %3295 = vmatprep.subr.bf16.mxu0 0
  %3296 = vmatpush1.bf16.msra.mxu0 0
  %3297 = vmatprep.subr.bf16.mxu0 0
  %3298 = vmatpush1.bf16.msra.mxu0 0
  %3299 = vmatprep.subr.bf16.mxu0 0
  %3300 = vmatpush1.bf16.msra.mxu0 0
  %3301 = vmatprep.subr.bf16.mxu0 0
  %3302 = vmatpush1.bf16.msra.mxu0 0
  %3303 = vmatprep.subr.bf16.mxu0 0
  %3304 = vmatpush1.bf16.msra.mxu0 %v3109
  %3305 = vmatprep.subr.bf16.mxu0 0
  %3306 = vmatpush1.bf16.msra.mxu0 %v3106
  %3307 = vmatprep.subr.bf16.mxu0 0
  %3308 = vmatpush1.bf16.msra.mxu0 %v3103
  %3309 = vmatprep.subr.bf16.mxu0 0
  %3310 = vmatpush1.bf16.msra.mxu0 %v3100
  %3311 = vmatprep.subr.bf16.mxu0 0
  %3312 = vmatpush2.bf16.msra.mxu0 0
  %3313 = vmatprep.subr.bf16.mxu0 0
  %3314 = vmatpush2.bf16.msra.mxu0 0
  %3315 = vmatprep.subr.bf16.mxu0 0
  %3316 = vmatpush2.bf16.msra.mxu0 0
  %3317 = vmatprep.subr.bf16.mxu0 0
  %3318 = vmatpush2.bf16.msra.mxu0 0
  %3319 = vmatprep.subr.bf16.mxu0 0
  %3320 = vmatpush2.bf16.msra.mxu0 0
  %3321 = vmatprep.subr.bf16.mxu0 0
  %3322 = vmatpush2.bf16.msra.mxu0 0
  %3323 = vmatprep.subr.bf16.mxu0 0
  %3324 = vmatpush2.bf16.msra.mxu0 0
  %3325 = vmatprep.subr.bf16.mxu0 0
  %3326 = vmatpush2.bf16.msra.mxu0 0
  %3327 = vmatprep.mubr.bf16.mxu0 0
  %3328 = vmatmul.mubr.bf16.gmra.mxu0 %v3171
  %v3329 = vpop.f32.mrf.mxu0
  %v3330 = vadd.f32 %v3290, %v3329
  %v3331 = vpop.f32.mrf.mxu0
  %v3332 = vpop.f32.mrf.mxu0
  %v3333 = vpop.f32.mrf.mxu0
  %3334 = vdwg.mxu0
  %v3335 = vld [vmem:[%s4 + $0x708] sm:$0xff]
  %v3336 = vld [vmem:[%s4 + $0x710] sm:$0xf]
  %v3337 = vld [vmem:[%s4 + $0x714] sm:$0xff]
  %v3338 = vld [vmem:[%s4 + $0x71c] sm:$0xf]
  %v3339 = vld [vmem:[%s4 + $0x720] sm:$0xff]
  %v3340 = vld [vmem:[%s4 + $0x728] sm:$0xf]
  %v3341 = vld [vmem:[%s4 + $0x72c] sm:$0xff]
  %v3342 = vld [vmem:[%s4 + $0x734] sm:$0xf]
  %v3343 = vld [vmem:[%s4 + $0x738] sm:$0xff]
  %v3344 = vld [vmem:[%s4 + $0x740] sm:$0xf]
  %v3345 = vld [vmem:[%s4 + $0x744] sm:$0xff]
  %v3346 = vld [vmem:[%s4 + $0x74c] sm:$0xf]
  %v3347 = vld [vmem:[%s4 + $0x750] sm:$0xff]
  %v3348 = vld [vmem:[%s4 + $0x758] sm:$0xf]
  %v3349 = vld [vmem:[%s4 + $0x75c] sm:$0xff]
  %v3350 = vld [vmem:[%s4 + $0x764] sm:$0xf]
  %v3351 = vld [vmem:[%s4 + $0x768] sm:$0xff]
  %v3352 = vld [vmem:[%s4 + $0x770] sm:$0xf]
  %v3353 = vld [vmem:[%s4 + $0x774] sm:$0xff]
  %v3354 = vld [vmem:[%s4 + $0x77c] sm:$0xf]
  %v3355 = vld [vmem:[%s4 + $0x780] sm:$0xff]
  %v3356 = vld [vmem:[%s4 + $0x788] sm:$0xf]
  %v3357 = vld [vmem:[%s4 + $0x78c] sm:$0xff]
  %v3358 = vld [vmem:[%s4 + $0x794] sm:$0xf]
  %v3359 = vld [vmem:[%s4 + $0x798] sm:$0xff]
  %v3360 = vld [vmem:[%s4 + $0x7a0] sm:$0xf]
  %v3361 = vld [vmem:[%s4 + $0x7a4] sm:$0xff]
  %v3362 = vld [vmem:[%s4 + $0x7ac] sm:$0xf]
  %v3363 = vld [vmem:[%s4 + $0x7b0] sm:$0xff]
  %v3364 = vld [vmem:[%s4 + $0x7b8] sm:$0xf]
  %v3365 = vld [vmem:[%s4 + $0x7bc] sm:$0xff]
  %v3366 = vld [vmem:[%s4 + $0x7c4] sm:$0xf]
  %v3367 = vld [vmem:[%s4 + $0x7c8] sm:$0xff]
  %v3368 = vld [vmem:[%s4 + $0x7d0] sm:$0xf]
  %v3369 = vld [vmem:[%s4 + $0x7d4] sm:$0xff]
  %v3370 = vld [vmem:[%s4 + $0x7dc] sm:$0xf]
  %v3371 = vld [vmem:[%s4 + $0x7e0] sm:$0xff]
  %v3372 = vld [vmem:[%s4 + $0x7e8] sm:$0xf]
  %v3373 = vld [vmem:[%s4 + $0x7ec] sm:$0xff]
  %v3374 = vld [vmem:[%s4 + $0x7f4] sm:$0xf]
  %v3375 = vld [vmem:[%s4 + $0x7f8] sm:$0xff]
  %v3376 = vld [vmem:[%s4 + $0x800] sm:$0xf]
  %v3377 = vld [vmem:[%s4 + $0x804] sm:$0xff]
  %v3378 = vld [vmem:[%s4 + $0x80c] sm:$0xf]
  %v3379 = vld [vmem:[%s4 + $0x810] sm:$0xff]
  %v3380 = vld [vmem:[%s4 + $0x818] sm:$0xf]
  %v3381 = vld [vmem:[%s4 + $0x81c] sm:$0xff]
  %v3382 = vld [vmem:[%s4 + $0x824] sm:$0xf]
  %v3383 = vld [vmem:[%s4 + $0x828] sm:$0xff]
  %v3384 = vld [vmem:[%s4 + $0x830] sm:$0xf]
  %v3385 = vld [vmem:[%s4 + $0x834] sm:$0xff]
  %v3386 = vld [vmem:[%s4 + $0x83c] sm:$0xf]
  %v3387 = vld [vmem:[%s4 + $0x840] sm:$0xff]
  %v3388 = vld [vmem:[%s4 + $0x848] sm:$0xf]
  %v3389 = vld [vmem:[%s4 + $0x84c] sm:$0xff]
  %v3390 = vld [vmem:[%s4 + $0x854] sm:$0xf]
  %v3391 = vld [vmem:[%s4 + $0x858] sm:$0xff]
  %v3392 = vld [vmem:[%s4 + $0x860] sm:$0xf]
  %v3393 = vld [vmem:[%s4 + $0x864] sm:$0xff]
  %v3394 = vld [vmem:[%s4 + $0x86c] sm:$0xf]
  %v3395 = vld [vmem:[%s4 + $0x870] sm:$0xff]
  %v3396 = vld [vmem:[%s4 + $0x878] sm:$0xf]
  %v3397 = vld [vmem:[%s4 + $0x87c] sm:$0xff]
  %v3398 = vld [vmem:[%s4 + $0x884] sm:$0xf]
  %v3399 = vld [vmem:[%s4 + $0x888] sm:$0xff]
  %v3400 = vld [vmem:[%s4 + $0x890] sm:$0xf]
  %v3401 = vld [vmem:[%s4 + $0x894] sm:$0xff]
  %v3402 = vld [vmem:[%s4 + $0x89c] sm:$0xf]
  %v3403 = vld [vmem:[%s4 + $0x8a0] sm:$0xff]
  %v3404 = vld [vmem:[%s4 + $0x8a8] sm:$0xf]
  %v3405 = vld [vmem:[%s4 + $0x8ac] sm:$0xff]
  %v3406 = vld [vmem:[%s4 + $0x8b4] sm:$0xf]
  %v3407 = vld [vmem:[%s4 + $0x8b8] sm:$0xff]
  %v3408 = vld [vmem:[%s4 + $0x8c0] sm:$0xf]
  %v3409 = vld [vmem:[%s4 + $0x8c4] sm:$0xff]
  %v3410 = vld [vmem:[%s4 + $0x8cc] sm:$0xf]
  %v3411 = vld [vmem:[%s4 + $0x8d0] sm:$0xff]
  %v3412 = vld [vmem:[%s4 + $0x8d8] sm:$0xf]
  %v3413 = vld [vmem:[%s4 + $0x8dc] sm:$0xff]
  %v3414 = vld [vmem:[%s4 + $0x8e4] sm:$0xf]
  %v3415 = vpack.c.bf16 %v1337, %v1337
  %v3416 = vpack.c.bf16 %v1339, %v1339
  %v3417 = vpack.c.bf16 %v1378, %v1378
  %s3418 = scalar_lea.vmem %s9, 4
  %v3419 = vld [vmem:[%s3418] ss:$8 sm:$0x7]
  %v3421 = vlaneseq
  %v3422 = vshrl.u32 %v3421, 7
  %v3423 = vsub.s32 0, %v3422
  %v3424 = vrot.slane %v3419, %v3423
  %v3425 = vlaneseq
  %v3426 = vshrl.u32 %v3425, 7
  %v3427 = vsub.s32 1, %v3426
  %v3428 = vrot.slane %v3419, %v3427
  %v3429 = vlaneseq
  %v3430 = vshrl.u32 %v3429, 7
  %v3431 = vsub.s32 2, %v3430
  %v3432 = vrot.slane %v3419, %v3431
  %v3516 = vunpack.c.l.b16 %v3335
  %v3517 = vunpack.c.h.b16 %v3335
  %v3518 = vunpack.c.l.b16 %v3336
  %v3519 = vunpack.c.l.b16 %v3337
  %v3520 = vunpack.c.h.b16 %v3337
  %v3521 = vunpack.c.l.b16 %v3338
  %v3522 = vunpack.c.l.b16 %v3339
  %v3523 = vunpack.c.h.b16 %v3339
  %v3524 = vunpack.c.l.b16 %v3340
  %v3525 = vunpack.c.l.b16 %v3341
  %v3526 = vunpack.c.h.b16 %v3341
  %v3527 = vunpack.c.l.b16 %v3342
  %v3528 = vunpack.c.l.b16 %v3343
  %v3529 = vunpack.c.h.b16 %v3343
  %v3530 = vunpack.c.l.b16 %v3344
  %v3531 = vunpack.c.l.b16 %v3345
  %v3532 = vunpack.c.h.b16 %v3345
  %v3533 = vunpack.c.l.b16 %v3346
  %v3534 = vunpack.c.l.b16 %v3347
  %v3535 = vunpack.c.h.b16 %v3347
  %v3536 = vunpack.c.l.b16 %v3348
  %v3537 = vunpack.c.l.b16 %v3349
  %v3538 = vunpack.c.h.b16 %v3349
  %v3539 = vunpack.c.l.b16 %v3350
  %v3540 = vunpack.c.l.b16 %v3351
  %v3541 = vunpack.c.h.b16 %v3351
  %v3542 = vunpack.c.l.b16 %v3352
  %v3543 = vunpack.c.l.b16 %v3353
  %v3544 = vunpack.c.h.b16 %v3353
  %v3545 = vunpack.c.l.b16 %v3354
  %v3546 = vunpack.c.l.b16 %v3355
  %v3547 = vunpack.c.h.b16 %v3355
  %v3548 = vunpack.c.l.b16 %v3356
  %v3549 = vunpack.c.l.b16 %v3357
  %v3550 = vunpack.c.h.b16 %v3357
  %v3551 = vunpack.c.l.b16 %v3358
  %v3552 = vunpack.c.l.b16 %v3359
  %v3553 = vunpack.c.h.b16 %v3359
  %v3554 = vunpack.c.l.b16 %v3360
  %v3555 = vunpack.c.l.b16 %v3361
  %v3556 = vunpack.c.h.b16 %v3361
  %v3557 = vunpack.c.l.b16 %v3362
  %v3558 = vunpack.c.l.b16 %v3363
  %v3559 = vunpack.c.h.b16 %v3363
  %v3560 = vunpack.c.l.b16 %v3364
  %v3561 = vunpack.c.l.b16 %v3365
  %v3562 = vunpack.c.h.b16 %v3365
  %v3563 = vunpack.c.l.b16 %v3366
  %v3564 = vunpack.c.l.b16 %v3367
  %v3565 = vunpack.c.h.b16 %v3367
  %v3566 = vunpack.c.l.b16 %v3368
  %v3567 = vunpack.c.l.b16 %v3369
  %v3568 = vunpack.c.h.b16 %v3369
  %v3569 = vunpack.c.l.b16 %v3370
  %v3570 = vunpack.c.l.b16 %v3371
  %v3571 = vunpack.c.h.b16 %v3371
  %v3572 = vunpack.c.l.b16 %v3372
  %v3573 = vunpack.c.l.b16 %v3373
  %v3574 = vunpack.c.h.b16 %v3373
  %v3575 = vunpack.c.l.b16 %v3374
  %v3576 = vunpack.c.l.b16 %v3375
  %v3577 = vunpack.c.h.b16 %v3375
  %v3578 = vunpack.c.l.b16 %v3376
  %v3579 = vunpack.c.l.b16 %v3377
  %v3580 = vunpack.c.h.b16 %v3377
  %v3581 = vunpack.c.l.b16 %v3378
  %v3582 = vunpack.c.l.b16 %v3379
  %v3583 = vunpack.c.h.b16 %v3379
  %v3584 = vunpack.c.l.b16 %v3380
  %v3585 = vunpack.c.l.b16 %v3381
  %v3586 = vunpack.c.h.b16 %v3381
  %v3587 = vunpack.c.l.b16 %v3382
  %v3588 = vunpack.c.l.b16 %v3383
  %v3589 = vunpack.c.h.b16 %v3383
  %v3590 = vunpack.c.l.b16 %v3384
  %v3591 = vunpack.c.l.b16 %v3385
  %v3592 = vunpack.c.h.b16 %v3385
  %v3593 = vunpack.c.l.b16 %v3386
  %v3594 = vunpack.c.l.b16 %v3387
  %v3595 = vunpack.c.h.b16 %v3387
  %v3596 = vunpack.c.l.b16 %v3388
  %v3597 = vunpack.c.l.b16 %v3389
  %v3598 = vunpack.c.h.b16 %v3389
  %v3599 = vunpack.c.l.b16 %v3390
  %v3600 = vunpack.c.l.b16 %v3391
  %v3601 = vunpack.c.h.b16 %v3391
  %v3602 = vunpack.c.l.b16 %v3392
  %v3603 = vunpack.c.l.b16 %v3393
  %v3604 = vunpack.c.h.b16 %v3393
  %v3605 = vunpack.c.l.b16 %v3394
  %v3606 = vunpack.c.l.b16 %v3395
  %v3607 = vunpack.c.h.b16 %v3395
  %v3608 = vunpack.c.l.b16 %v3396
  %v3609 = vunpack.c.l.b16 %v3397
  %v3610 = vunpack.c.h.b16 %v3397
  %v3611 = vunpack.c.l.b16 %v3398
  %v3612 = vunpack.c.l.b16 %v3399
  %v3613 = vunpack.c.h.b16 %v3399
  %v3614 = vunpack.c.l.b16 %v3400
  %v3615 = vunpack.c.l.b16 %v3401
  %v3616 = vunpack.c.h.b16 %v3401
  %v3617 = vunpack.c.l.b16 %v3402
  %v3618 = vunpack.c.l.b16 %v3403
  %v3619 = vunpack.c.h.b16 %v3403
  %v3620 = vunpack.c.l.b16 %v3404
  %v3621 = vunpack.c.l.b16 %v3405
  %v3622 = vunpack.c.h.b16 %v3405
  %v3623 = vunpack.c.l.b16 %v3406
  %v3624 = vunpack.c.l.b16 %v3407
  %v3625 = vunpack.c.h.b16 %v3407
  %v3626 = vunpack.c.l.b16 %v3408
  %v3627 = vunpack.c.l.b16 %v3409
  %v3628 = vunpack.c.h.b16 %v3409
  %v3629 = vunpack.c.l.b16 %v3410
  %v3630 = vunpack.c.l.b16 %v3411
  %v3631 = vunpack.c.h.b16 %v3411
  %v3632 = vunpack.c.l.b16 %v3412
  %v3633 = vunpack.c.l.b16 %v3413
  %v3634 = vunpack.c.h.b16 %v3413
  %v3635 = vunpack.c.l.b16 %v3414
  %v3636 = vpack.c.b16 %v3519, %v3516
  %v3637 = vpack.c.b16 %v3520, %v3517
  %v3638 = vpack.c.b16 %v3521, %v3518
  %v3639 = vpack.c.b16 %v3525, %v3522
  %v3640 = vpack.c.b16 %v3526, %v3523
  %v3641 = vpack.c.b16 %v3527, %v3524
  %v3642 = vpack.c.b16 %v3531, %v3528
  %v3643 = vpack.c.b16 %v3532, %v3529
  %v3644 = vpack.c.b16 %v3533, %v3530
  %v3645 = vpack.c.b16 %v3537, %v3534
  %v3646 = vpack.c.b16 %v3538, %v3535
  %v3647 = vpack.c.b16 %v3539, %v3536
  %v3648 = vpack.c.b16 %v3543, %v3540
  %v3649 = vpack.c.b16 %v3544, %v3541
  %v3650 = vpack.c.b16 %v3545, %v3542
  %v3651 = vpack.c.b16 %v3549, %v3546
  %v3652 = vpack.c.b16 %v3550, %v3547
  %v3653 = vpack.c.b16 %v3551, %v3548
  %v3654 = vpack.c.b16 %v3555, %v3552
  %v3655 = vpack.c.b16 %v3556, %v3553
  %v3656 = vpack.c.b16 %v3557, %v3554
  %v3657 = vpack.c.b16 %v3561, %v3558
  %v3658 = vpack.c.b16 %v3562, %v3559
  %v3659 = vpack.c.b16 %v3563, %v3560
  %v3660 = vpack.c.b16 %v3567, %v3564
  %v3661 = vpack.c.b16 %v3568, %v3565
  %v3662 = vpack.c.b16 %v3569, %v3566
  %v3663 = vpack.c.b16 %v3573, %v3570
  %v3664 = vpack.c.b16 %v3574, %v3571
  %v3665 = vpack.c.b16 %v3575, %v3572
  %v3666 = vpack.c.b16 %v3579, %v3576
  %v3667 = vpack.c.b16 %v3580, %v3577
  %v3668 = vpack.c.b16 %v3581, %v3578
  %v3669 = vpack.c.b16 %v3585, %v3582
  %v3670 = vpack.c.b16 %v3586, %v3583
  %v3671 = vpack.c.b16 %v3587, %v3584
  %v3672 = vpack.c.b16 %v3591, %v3588
  %v3673 = vpack.c.b16 %v3592, %v3589
  %v3674 = vpack.c.b16 %v3593, %v3590
  %v3675 = vpack.c.b16 %v3597, %v3594
  %v3676 = vpack.c.b16 %v3598, %v3595
  %v3677 = vpack.c.b16 %v3599, %v3596
  %v3678 = vpack.c.b16 %v3603, %v3600
  %v3679 = vpack.c.b16 %v3604, %v3601
  %v3680 = vpack.c.b16 %v3605, %v3602
  %v3681 = vpack.c.b16 %v3609, %v3606
  %v3682 = vpack.c.b16 %v3610, %v3607
  %v3683 = vpack.c.b16 %v3611, %v3608
  %v3684 = vpack.c.b16 %v3615, %v3612
  %v3685 = vpack.c.b16 %v3616, %v3613
  %v3686 = vpack.c.b16 %v3617, %v3614
  %v3687 = vpack.c.b16 %v3621, %v3618
  %v3688 = vpack.c.b16 %v3622, %v3619
  %v3689 = vpack.c.b16 %v3623, %v3620
  %v3690 = vpack.c.b16 %v3627, %v3624
  %v3691 = vpack.c.b16 %v3628, %v3625
  %v3692 = vpack.c.b16 %v3629, %v3626
  %v3693 = vpack.c.b16 %v3633, %v3630
  %v3694 = vpack.c.b16 %v3634, %v3631
  %v3695 = vpack.c.b16 %v3635, %v3632
  %v3757 = vsel %vm1553, %v3417, 0
  %3759 = vmatprep.subr.bf16.mxu0 %v3658
  %3760 = vmatpush1.bf16.msra.mxu0 %v3657
  %3761 = vmatprep.subr.bf16.mxu0 %v3655
  %3762 = vmatpush1.bf16.msra.mxu0 %v3654
  %3763 = vmatprep.subr.bf16.mxu0 %v3652
  %3764 = vmatpush1.bf16.msra.mxu0 %v3651
  %3765 = vmatprep.subr.bf16.mxu0 %v3649
  %3766 = vmatpush1.bf16.msra.mxu0 %v3648
  %3767 = vmatprep.subr.bf16.mxu0 %v3646
  %3768 = vmatpush1.bf16.msra.mxu0 %v3645
  %3769 = vmatprep.subr.bf16.mxu0 %v3643
  %3770 = vmatpush1.bf16.msra.mxu0 %v3642
  %3771 = vmatprep.subr.bf16.mxu0 %v3640
  %3772 = vmatpush1.bf16.msra.mxu0 %v3639
  %3773 = vmatprep.subr.bf16.mxu0 %v3637
  %3774 = vmatpush1.bf16.msra.mxu0 %v3636
  %3775 = vmatprep.subr.bf16.mxu0 %v3682
  %3776 = vmatpush2.bf16.msra.mxu0 %v3681
  %3777 = vmatprep.subr.bf16.mxu0 %v3679
  %3778 = vmatpush2.bf16.msra.mxu0 %v3678
  %3779 = vmatprep.subr.bf16.mxu0 %v3676
  %3780 = vmatpush2.bf16.msra.mxu0 %v3675
  %3781 = vmatprep.subr.bf16.mxu0 %v3673
  %3782 = vmatpush2.bf16.msra.mxu0 %v3672
  %3783 = vmatprep.subr.bf16.mxu0 %v3670
  %3784 = vmatpush2.bf16.msra.mxu0 %v3669
  %3785 = vmatprep.subr.bf16.mxu0 %v3667
  %3786 = vmatpush2.bf16.msra.mxu0 %v3666
  %3787 = vmatprep.subr.bf16.mxu0 %v3664
  %3788 = vmatpush2.bf16.msra.mxu0 %v3663
  %3789 = vmatprep.subr.bf16.mxu0 %v3661
  %3790 = vmatpush2.bf16.msra.mxu0 %v3660
  %3791 = vmatprep.mubr.bf16.mxu0 %v3416
  %3792 = vmatmul.mubr.bf16.gmra.mxu0 %v3415
  %v3793 = vpop.f32.mrf.mxu0
  %v3794 = vadd.f32 %v3424, %v3793
  %v3795 = vpop.f32.mrf.mxu0
  %v3796 = vadd.f32 %v3428, %v3795
  %v3797 = vpop.f32.mrf.mxu0
  %v3798 = vpop.f32.mrf.mxu0
  %3799 = vdwg.mxu0
  %3800 = vmatprep.subr.bf16.mxu0 0
  %3801 = vmatpush1.bf16.msra.mxu0 0
  %3802 = vmatprep.subr.bf16.mxu0 0
  %3803 = vmatpush1.bf16.msra.mxu0 0
  %3804 = vmatprep.subr.bf16.mxu0 0
  %3805 = vmatpush1.bf16.msra.mxu0 0
  %3806 = vmatprep.subr.bf16.mxu0 0
  %3807 = vmatpush1.bf16.msra.mxu0 0
  %3808 = vmatprep.subr.bf16.mxu0 %v3694
  %3809 = vmatpush1.bf16.msra.mxu0 %v3693
  %3810 = vmatprep.subr.bf16.mxu0 %v3691
  %3811 = vmatpush1.bf16.msra.mxu0 %v3690
  %3812 = vmatprep.subr.bf16.mxu0 %v3688
  %3813 = vmatpush1.bf16.msra.mxu0 %v3687
  %3814 = vmatprep.subr.bf16.mxu0 %v3685
  %3815 = vmatpush1.bf16.msra.mxu0 %v3684
  %3816 = vmatprep.subr.bf16.mxu0 0
  %3817 = vmatpush2.bf16.msra.mxu0 0
  %3818 = vmatprep.subr.bf16.mxu0 0
  %3819 = vmatpush2.bf16.msra.mxu0 0
  %3820 = vmatprep.subr.bf16.mxu0 0
  %3821 = vmatpush2.bf16.msra.mxu0 0
  %3822 = vmatprep.subr.bf16.mxu0 0
  %3823 = vmatpush2.bf16.msra.mxu0 0
  %3824 = vmatprep.subr.bf16.mxu0 0
  %3825 = vmatpush2.bf16.msra.mxu0 0
  %3826 = vmatprep.subr.bf16.mxu0 0
  %3827 = vmatpush2.bf16.msra.mxu0 0
  %3828 = vmatprep.subr.bf16.mxu0 0
  %3829 = vmatpush2.bf16.msra.mxu0 0
  %3830 = vmatprep.subr.bf16.mxu0 0
  %3831 = vmatpush2.bf16.msra.mxu0 0
  %3832 = vmatprep.mubr.bf16.mxu0 0
  %3833 = vmatmul.mubr.bf16.gmra.mxu0 %v3757
  %v3834 = vpop.f32.mrf.mxu0
  %v3835 = vadd.f32 %v3794, %v3834
  %v3836 = vpop.f32.mrf.mxu0
  %v3837 = vadd.f32 %v3796, %v3836
  %v3838 = vpop.f32.mrf.mxu0
  %v3839 = vpop.f32.mrf.mxu0
  %3840 = vdwg.mxu0
  %3841 = vmatprep.subr.bf16.mxu0 0
  %3842 = vmatpush1.bf16.msra.mxu0 %v3659
  %3843 = vmatprep.subr.bf16.mxu0 0
  %3844 = vmatpush1.bf16.msra.mxu0 %v3656
  %3845 = vmatprep.subr.bf16.mxu0 0
  %3846 = vmatpush1.bf16.msra.mxu0 %v3653
  %3847 = vmatprep.subr.bf16.mxu0 0
  %3848 = vmatpush1.bf16.msra.mxu0 %v3650
  %3849 = vmatprep.subr.bf16.mxu0 0
  %3850 = vmatpush1.bf16.msra.mxu0 %v3647
  %3851 = vmatprep.subr.bf16.mxu0 0
  %3852 = vmatpush1.bf16.msra.mxu0 %v3644
  %3853 = vmatprep.subr.bf16.mxu0 0
  %3854 = vmatpush1.bf16.msra.mxu0 %v3641
  %3855 = vmatprep.subr.bf16.mxu0 0
  %3856 = vmatpush1.bf16.msra.mxu0 %v3638
  %3857 = vmatprep.subr.bf16.mxu0 0
  %3858 = vmatpush2.bf16.msra.mxu0 %v3683
  %3859 = vmatprep.subr.bf16.mxu0 0
  %3860 = vmatpush2.bf16.msra.mxu0 %v3680
  %3861 = vmatprep.subr.bf16.mxu0 0
  %3862 = vmatpush2.bf16.msra.mxu0 %v3677
  %3863 = vmatprep.subr.bf16.mxu0 0
  %3864 = vmatpush2.bf16.msra.mxu0 %v3674
  %3865 = vmatprep.subr.bf16.mxu0 0
  %3866 = vmatpush2.bf16.msra.mxu0 %v3671
  %3867 = vmatprep.subr.bf16.mxu0 0
  %3868 = vmatpush2.bf16.msra.mxu0 %v3668
  %3869 = vmatprep.subr.bf16.mxu0 0
  %3870 = vmatpush2.bf16.msra.mxu0 %v3665
  %3871 = vmatprep.subr.bf16.mxu0 0
  %3872 = vmatpush2.bf16.msra.mxu0 %v3662
  %3873 = vmatprep.mubr.bf16.mxu0 %v3416
  %3874 = vmatmul.mubr.bf16.gmra.mxu0 %v3415
  %v3875 = vpop.f32.mrf.mxu0
  %v3876 = vadd.f32 %v3432, %v3875
  %v3877 = vpop.f32.mrf.mxu0
  %v3878 = vpop.f32.mrf.mxu0
  %v3879 = vpop.f32.mrf.mxu0
  %3880 = vdwg.mxu0
  %3881 = vmatprep.subr.bf16.mxu0 0
  %3882 = vmatpush1.bf16.msra.mxu0 0
  %3883 = vmatprep.subr.bf16.mxu0 0
  %3884 = vmatpush1.bf16.msra.mxu0 0
  %3885 = vmatprep.subr.bf16.mxu0 0
  %3886 = vmatpush1.bf16.msra.mxu0 0
  %3887 = vmatprep.subr.bf16.mxu0 0
  %3888 = vmatpush1.bf16.msra.mxu0 0
  %3889 = vmatprep.subr.bf16.mxu0 0
  %3890 = vmatpush1.bf16.msra.mxu0 %v3695
  %3891 = vmatprep.subr.bf16.mxu0 0
  %3892 = vmatpush1.bf16.msra.mxu0 %v3692
  %3893 = vmatprep.subr.bf16.mxu0 0
  %3894 = vmatpush1.bf16.msra.mxu0 %v3689
  %3895 = vmatprep.subr.bf16.mxu0 0
  %3896 = vmatpush1.bf16.msra.mxu0 %v3686
  %3897 = vmatprep.subr.bf16.mxu0 0
  %3898 = vmatpush2.bf16.msra.mxu0 0
  %3899 = vmatprep.subr.bf16.mxu0 0
  %3900 = vmatpush2.bf16.msra.mxu0 0
  %3901 = vmatprep.subr.bf16.mxu0 0
  %3902 = vmatpush2.bf16.msra.mxu0 0
  %3903 = vmatprep.subr.bf16.mxu0 0
  %3904 = vmatpush2.bf16.msra.mxu0 0
  %3905 = vmatprep.subr.bf16.mxu0 0
  %3906 = vmatpush2.bf16.msra.mxu0 0
  %3907 = vmatprep.subr.bf16.mxu0 0
  %3908 = vmatpush2.bf16.msra.mxu0 0
  %3909 = vmatprep.subr.bf16.mxu0 0
  %3910 = vmatpush2.bf16.msra.mxu0 0
  %3911 = vmatprep.subr.bf16.mxu0 0
  %3912 = vmatpush2.bf16.msra.mxu0 0
  %3913 = vmatprep.mubr.bf16.mxu0 0
  %3914 = vmatmul.mubr.bf16.gmra.mxu0 %v3757
  %v3915 = vpop.f32.mrf.mxu0
  %v3916 = vadd.f32 %v3876, %v3915
  %v3917 = vpop.f32.mrf.mxu0
  %v3918 = vpop.f32.mrf.mxu0
  %v3919 = vpop.f32.mrf.mxu0
  %3920 = vdwg.mxu0
  %v3921 = vadd.f32 %v948, %v3249
  %v3922 = vadd.f32 %v949, %v3251
  %v3923 = vadd.f32 %v950, %v3330
  %vm3924 = vcmask 15360
  %v3926 = vsel %vm3924, %v73, 0
  %vm3928 = vcmask 1041408
  %v3930 = vsel %vm3928, %v3835, 0
  %v3933 = vsel %vm3928, %v3837, 0
  %v3936 = vsel %vm3928, %v3916, 0
  %3938 = vmatprep.subr.mxu0 0.0
  %3939 = vmatpush1.msra.mxu0 0.0
  %3940 = vmatprep.subr.mxu0 0.0
  %3941 = vmatpush1.msra.mxu0 0.0
  %3942 = vmatprep.subr.mxu0 0.0
  %3943 = vmatpush1.msra.mxu0 0.0
  %3944 = vmatprep.subr.mxu0 0.0
  %3945 = vmatpush1.msra.mxu0 0.0
  %3946 = vmatprep.subr.mxu0 0.0
  %3947 = vmatpush1.msra.mxu0 0.0
  %3948 = vmatprep.subr.mxu0 0.0
  %3949 = vmatpush1.msra.mxu0 0.0
  %3950 = vmatprep.subr.mxu0 0.0
  %3951 = vmatpush1.msra.mxu0 0.0
  %3952 = vmatprep.subr.mxu0 0.0
  %3953 = vmatpush1.msra.mxu0 0.0
  %3954 = vmatprep.subr.mxu0 0.0
  %3955 = vmatpush1.msra.mxu0 0.0
  %3956 = vmatprep.subr.mxu0 0.0
  %3957 = vmatpush1.msra.mxu0 0.0
  %3958 = vmatprep.subr.mxu0 0.0
  %3959 = vmatpush1.msra.mxu0 0.0
  %3960 = vmatprep.subr.mxu0 0.0
  %3961 = vmatpush1.msra.mxu0 0.0
  %3962 = vmatprep.subr.mxu0 0.0
  %3963 = vmatpush1.msra.mxu0 0.0
  %3964 = vmatprep.subr.mxu0 0.0
  %3965 = vmatpush1.msra.mxu0 0.0
  %3966 = vmatprep.subr.mxu0 0.0
  %3967 = vmatpush1.msra.mxu0 0.0
  %3968 = vmatprep.subr.mxu0 %v3933
  %3969 = vmatpush1.msra.mxu0 %v3930
  %3970 = vmatprep.subr.mxu0 0.0
  %3971 = vmatpush2.msra.mxu0 0.0
  %3972 = vmatprep.subr.mxu0 0.0
  %3973 = vmatpush2.msra.mxu0 0.0
  %3974 = vmatprep.subr.mxu0 0.0
  %3975 = vmatpush2.msra.mxu0 0.0
  %3976 = vmatprep.subr.mxu0 0.0
  %3977 = vmatpush2.msra.mxu0 0.0
  %3978 = vmatprep.subr.mxu0 0.0
  %3979 = vmatpush2.msra.mxu0 0.0
  %3980 = vmatprep.subr.mxu0 0.0
  %3981 = vmatpush2.msra.mxu0 0.0
  %3982 = vmatprep.subr.mxu0 0.0
  %3983 = vmatpush2.msra.mxu0 0.0
  %3984 = vmatprep.subr.mxu0 0.0
  %3985 = vmatpush2.msra.mxu0 0.0
  %3986 = vmatprep.subr.mxu0 0.0
  %3987 = vmatpush2.msra.mxu0 0.0
  %3988 = vmatprep.subr.mxu0 0.0
  %3989 = vmatpush2.msra.mxu0 0.0
  %3990 = vmatprep.subr.mxu0 0.0
  %3991 = vmatpush2.msra.mxu0 0.0
  %3992 = vmatprep.subr.mxu0 0.0
  %3993 = vmatpush2.msra.mxu0 0.0
  %3994 = vmatprep.subr.mxu0 0.0
  %3995 = vmatpush2.msra.mxu0 0.0
  %3996 = vmatprep.subr.mxu0 0.0
  %3997 = vmatpush2.msra.mxu0 0.0
  %3998 = vmatprep.subr.mxu0 0.0
  %3999 = vmatpush2.msra.mxu0 0.0
  %4000 = vmatprep.subr.mxu0 0.0
  %4001 = vmatpush2.msra.mxu0 0.0
  %4002 = vmatprep.mubr.f32.mxu0 0.0
  %4003 = vmatmul.mubr.f32.gmra.mxu0 %v3926
  %v4004 = vpop.f32.mrf.mxu0
  %v4005 = vadd.f32 0.0, %v4004
  %v4006 = vpop.f32.mrf.mxu0
  %v4007 = vadd.f32 0.0, %v4006
  %4008 = vdwg.mxu0
  %4009 = vmatprep.subr.mxu0 0.0
  %4010 = vmatpush1.msra.mxu0 0.0
  %4011 = vmatprep.subr.mxu0 0.0
  %4012 = vmatpush1.msra.mxu0 0.0
  %4013 = vmatprep.subr.mxu0 0.0
  %4014 = vmatpush1.msra.mxu0 0.0
  %4015 = vmatprep.subr.mxu0 0.0
  %4016 = vmatpush1.msra.mxu0 0.0
  %4017 = vmatprep.subr.mxu0 0.0
  %4018 = vmatpush1.msra.mxu0 0.0
  %4019 = vmatprep.subr.mxu0 0.0
  %4020 = vmatpush1.msra.mxu0 0.0
  %4021 = vmatprep.subr.mxu0 0.0
  %4022 = vmatpush1.msra.mxu0 0.0
  %4023 = vmatprep.subr.mxu0 0.0
  %4024 = vmatpush1.msra.mxu0 0.0
  %4025 = vmatprep.subr.mxu0 0.0
  %4026 = vmatpush1.msra.mxu0 0.0
  %4027 = vmatprep.subr.mxu0 0.0
  %4028 = vmatpush1.msra.mxu0 0.0
  %4029 = vmatprep.subr.mxu0 0.0
  %4030 = vmatpush1.msra.mxu0 0.0
  %4031 = vmatprep.subr.mxu0 0.0
  %4032 = vmatpush1.msra.mxu0 0.0
  %4033 = vmatprep.subr.mxu0 0.0
  %4034 = vmatpush1.msra.mxu0 0.0
  %4035 = vmatprep.subr.mxu0 0.0
  %4036 = vmatpush1.msra.mxu0 0.0
  %4037 = vmatprep.subr.mxu0 0.0
  %4038 = vmatpush1.msra.mxu0 0.0
  %4039 = vmatprep.subr.mxu0 0.0
  %4040 = vmatpush1.msra.mxu0 %v3936
  %4041 = vmatprep.subr.mxu0 0.0
  %4042 = vmatpush2.msra.mxu0 0.0
  %4043 = vmatprep.subr.mxu0 0.0
  %4044 = vmatpush2.msra.mxu0 0.0
  %4045 = vmatprep.subr.mxu0 0.0
  %4046 = vmatpush2.msra.mxu0 0.0
  %4047 = vmatprep.subr.mxu0 0.0
  %4048 = vmatpush2.msra.mxu0 0.0
  %4049 = vmatprep.subr.mxu0 0.0
  %4050 = vmatpush2.msra.mxu0 0.0
  %4051 = vmatprep.subr.mxu0 0.0
  %4052 = vmatpush2.msra.mxu0 0.0
  %4053 = vmatprep.subr.mxu0 0.0
  %4054 = vmatpush2.msra.mxu0 0.0
  %4055 = vmatprep.subr.mxu0 0.0
  %4056 = vmatpush2.msra.mxu0 0.0
  %4057 = vmatprep.subr.mxu0 0.0
  %4058 = vmatpush2.msra.mxu0 0.0
  %4059 = vmatprep.subr.mxu0 0.0
  %4060 = vmatpush2.msra.mxu0 0.0
  %4061 = vmatprep.subr.mxu0 0.0
  %4062 = vmatpush2.msra.mxu0 0.0
  %4063 = vmatprep.subr.mxu0 0.0
  %4064 = vmatpush2.msra.mxu0 0.0
  %4065 = vmatprep.subr.mxu0 0.0
  %4066 = vmatpush2.msra.mxu0 0.0
  %4067 = vmatprep.subr.mxu0 0.0
  %4068 = vmatpush2.msra.mxu0 0.0
  %4069 = vmatprep.subr.mxu0 0.0
  %4070 = vmatpush2.msra.mxu0 0.0
  %4071 = vmatprep.subr.mxu0 0.0
  %4072 = vmatpush2.msra.mxu0 0.0
  %4073 = vmatprep.mubr.f32.mxu0 0.0
  %4074 = vmatmul.mubr.f32.gmra.mxu0 %v3926
  %v4075 = vpop.f32.mrf.mxu0
  %v4076 = vadd.f32 0.0, %v4075
  %v4077 = vpop.f32.mrf.mxu0
  %4078 = vdwg.mxu0
  %v4079 = vadd.f32 %v3921, %v4005
  %v4080 = vadd.f32 %v3922, %v4007
  %v4081 = vadd.f32 %v3923, %v4076
  %v4082 = vld [vmem:[%s5] sm:$0xff]
  %v4083 = vld [vmem:[%s5 + $0x8] sm:$0xff]
  %v4084 = vld [vmem:[%s5 + $0x10] sm:$0xff]
  %v4085 = vld [vmem:[%s5 + $0x18] sm:$0xff]
  %v4086 = vld [vmem:[%s5 + $0x20] sm:$0xff]
  %v4087 = vld [vmem:[%s5 + $0x28] sm:$0xff]
  %v4088 = vld [vmem:[%s5 + $0x30] sm:$0xff]
  %v4089 = vld [vmem:[%s5 + $0x38] sm:$0xff]
  %v4090 = vld [vmem:[%s5 + $0x40] sm:$0xff]
  %v4091 = vld [vmem:[%s5 + $0x48] sm:$0xff]
  %v4092 = vld [vmem:[%s5 + $0x50] sm:$0xff]
  %v4093 = vld [vmem:[%s5 + $0x58] sm:$0xff]
  %v4094 = vld [vmem:[%s5 + $0x60] sm:$0xff]
  %v4095 = vld [vmem:[%s5 + $0x68] sm:$0xff]
  %v4096 = vld [vmem:[%s5 + $0x70] sm:$0xff]
  %v4097 = vld [vmem:[%s5 + $0x78] sm:$0xff]
  %v4098 = vld [vmem:[%s5 + $0x80] sm:$0xff]
  %v4099 = vld [vmem:[%s5 + $0x88] sm:$0xff]
  %v4100 = vld [vmem:[%s5 + $0x90] sm:$0xff]
  %v4101 = vld [vmem:[%s5 + $0x98] sm:$0xff]
  %v4102 = vld [vmem:[%s5 + $0xa0] sm:$0xff]
  %v4103 = vld [vmem:[%s5 + $0xa8] sm:$0xff]
  %v4104 = vld [vmem:[%s5 + $0xb0] sm:$0xff]
  %v4105 = vld [vmem:[%s5 + $0xb8] sm:$0xff]
  %v4106 = vld [vmem:[%s5 + $0xc0] sm:$0xff]
  %v4107 = vld [vmem:[%s5 + $0xc8] sm:$0xff]
  %v4108 = vld [vmem:[%s5 + $0xd0] sm:$0xff]
  %v4109 = vld [vmem:[%s5 + $0xd8] sm:$0xff]
  %v4110 = vld [vmem:[%s5 + $0xe0] sm:$0xff]
  %v4111 = vld [vmem:[%s5 + $0xe8] sm:$0xff]
  %v4112 = vld [vmem:[%s5 + $0xf0] sm:$0xff]
  %v4113 = vld [vmem:[%s5 + $0xf8] sm:$0xff]
  %v4114 = vld [vmem:[%s5 + $0x100] sm:$0xff]
  %v4115 = vld [vmem:[%s5 + $0x108] sm:$0xff]
  %v4116 = vld [vmem:[%s5 + $0x110] sm:$0xff]
  %v4117 = vld [vmem:[%s5 + $0x118] sm:$0xff]
  %v4118 = vld [vmem:[%s5 + $0x120] sm:$0xff]
  %v4119 = vld [vmem:[%s5 + $0x128] sm:$0xff]
  %v4120 = vld [vmem:[%s5 + $0x130] sm:$0xff]
  %v4121 = vld [vmem:[%s5 + $0x138] sm:$0xff]
  %v4122 = vpack.c.bf16 %v4079, %v4079
  %v4123 = vpack.c.bf16 %v4080, %v4080
  %v4124 = vpack.c.bf16 %v4081, %v4081
  %v4125 = vld [vmem:[%s10] ss:$8 sm:$0x3]
  %v4127 = vlaneseq
  %v4128 = vshrl.u32 %v4127, 7
  %v4129 = vsub.s32 0, %v4128
  %v4130 = vrot.slane %v4125, %v4129
  %v4131 = vlaneseq
  %v4132 = vshrl.u32 %v4131, 7
  %v4133 = vsub.s32 1, %v4132
  %v4134 = vrot.slane %v4125, %v4133
  %v4177 = vunpack.c.l.b16 %v4082
  %v4178 = vunpack.c.h.b16 %v4082
  %v4179 = vunpack.c.l.b16 %v4083
  %v4180 = vunpack.c.h.b16 %v4083
  %v4181 = vunpack.c.l.b16 %v4084
  %v4182 = vunpack.c.h.b16 %v4084
  %v4183 = vunpack.c.l.b16 %v4085
  %v4184 = vunpack.c.h.b16 %v4085
  %v4185 = vunpack.c.l.b16 %v4086
  %v4186 = vunpack.c.h.b16 %v4086
  %v4187 = vunpack.c.l.b16 %v4087
  %v4188 = vunpack.c.h.b16 %v4087
  %v4189 = vunpack.c.l.b16 %v4088
  %v4190 = vunpack.c.h.b16 %v4088
  %v4191 = vunpack.c.l.b16 %v4089
  %v4192 = vunpack.c.h.b16 %v4089
  %v4193 = vunpack.c.l.b16 %v4090
  %v4194 = vunpack.c.h.b16 %v4090
  %v4195 = vunpack.c.l.b16 %v4091
  %v4196 = vunpack.c.h.b16 %v4091
  %v4197 = vunpack.c.l.b16 %v4092
  %v4198 = vunpack.c.h.b16 %v4092
  %v4199 = vunpack.c.l.b16 %v4093
  %v4200 = vunpack.c.h.b16 %v4093
  %v4201 = vunpack.c.l.b16 %v4094
  %v4202 = vunpack.c.h.b16 %v4094
  %v4203 = vunpack.c.l.b16 %v4095
  %v4204 = vunpack.c.h.b16 %v4095
  %v4205 = vunpack.c.l.b16 %v4096
  %v4206 = vunpack.c.h.b16 %v4096
  %v4207 = vunpack.c.l.b16 %v4097
  %v4208 = vunpack.c.h.b16 %v4097
  %v4209 = vunpack.c.l.b16 %v4098
  %v4210 = vunpack.c.h.b16 %v4098
  %v4211 = vunpack.c.l.b16 %v4099
  %v4212 = vunpack.c.h.b16 %v4099
  %v4213 = vunpack.c.l.b16 %v4100
  %v4214 = vunpack.c.h.b16 %v4100
  %v4215 = vunpack.c.l.b16 %v4101
  %v4216 = vunpack.c.h.b16 %v4101
  %v4217 = vunpack.c.l.b16 %v4102
  %v4218 = vunpack.c.h.b16 %v4102
  %v4219 = vunpack.c.l.b16 %v4103
  %v4220 = vunpack.c.h.b16 %v4103
  %v4221 = vunpack.c.l.b16 %v4104
  %v4222 = vunpack.c.h.b16 %v4104
  %v4223 = vunpack.c.l.b16 %v4105
  %v4224 = vunpack.c.h.b16 %v4105
  %v4225 = vunpack.c.l.b16 %v4106
  %v4226 = vunpack.c.h.b16 %v4106
  %v4227 = vunpack.c.l.b16 %v4107
  %v4228 = vunpack.c.h.b16 %v4107
  %v4229 = vunpack.c.l.b16 %v4108
  %v4230 = vunpack.c.h.b16 %v4108
  %v4231 = vunpack.c.l.b16 %v4109
  %v4232 = vunpack.c.h.b16 %v4109
  %v4233 = vunpack.c.l.b16 %v4110
  %v4234 = vunpack.c.h.b16 %v4110
  %v4235 = vunpack.c.l.b16 %v4111
  %v4236 = vunpack.c.h.b16 %v4111
  %v4237 = vunpack.c.l.b16 %v4112
  %v4238 = vunpack.c.h.b16 %v4112
  %v4239 = vunpack.c.l.b16 %v4113
  %v4240 = vunpack.c.h.b16 %v4113
  %v4241 = vunpack.c.l.b16 %v4114
  %v4242 = vunpack.c.h.b16 %v4114
  %v4243 = vunpack.c.l.b16 %v4115
  %v4244 = vunpack.c.h.b16 %v4115
  %v4245 = vunpack.c.l.b16 %v4116
  %v4246 = vunpack.c.h.b16 %v4116
  %v4247 = vunpack.c.l.b16 %v4117
  %v4248 = vunpack.c.h.b16 %v4117
  %v4249 = vunpack.c.l.b16 %v4118
  %v4250 = vunpack.c.h.b16 %v4118
  %v4251 = vunpack.c.l.b16 %v4119
  %v4252 = vunpack.c.h.b16 %v4119
  %v4253 = vunpack.c.l.b16 %v4120
  %v4254 = vunpack.c.h.b16 %v4120
  %v4255 = vunpack.c.l.b16 %v4121
  %v4256 = vunpack.c.h.b16 %v4121
  %v4257 = vpack.c.b16 %v4179, %v4177
  %v4258 = vpack.c.b16 %v4180, %v4178
  %v4259 = vpack.c.b16 %v4183, %v4181
  %v4260 = vpack.c.b16 %v4184, %v4182
  %v4261 = vpack.c.b16 %v4187, %v4185
  %v4262 = vpack.c.b16 %v4188, %v4186
  %v4263 = vpack.c.b16 %v4191, %v4189
  %v4264 = vpack.c.b16 %v4192, %v4190
  %v4265 = vpack.c.b16 %v4195, %v4193
  %v4266 = vpack.c.b16 %v4196, %v4194
  %v4267 = vpack.c.b16 %v4199, %v4197
  %v4268 = vpack.c.b16 %v4200, %v4198
  %v4269 = vpack.c.b16 %v4203, %v4201
  %v4270 = vpack.c.b16 %v4204, %v4202
  %v4271 = vpack.c.b16 %v4207, %v4205
  %v4272 = vpack.c.b16 %v4208, %v4206
  %v4273 = vpack.c.b16 %v4211, %v4209
  %v4274 = vpack.c.b16 %v4212, %v4210
  %v4275 = vpack.c.b16 %v4215, %v4213
  %v4276 = vpack.c.b16 %v4216, %v4214
  %v4277 = vpack.c.b16 %v4219, %v4217
  %v4278 = vpack.c.b16 %v4220, %v4218
  %v4279 = vpack.c.b16 %v4223, %v4221
  %v4280 = vpack.c.b16 %v4224, %v4222
  %v4281 = vpack.c.b16 %v4227, %v4225
  %v4282 = vpack.c.b16 %v4228, %v4226
  %v4283 = vpack.c.b16 %v4231, %v4229
  %v4284 = vpack.c.b16 %v4232, %v4230
  %v4285 = vpack.c.b16 %v4235, %v4233
  %v4286 = vpack.c.b16 %v4236, %v4234
  %v4287 = vpack.c.b16 %v4239, %v4237
  %v4288 = vpack.c.b16 %v4240, %v4238
  %v4289 = vpack.c.b16 %v4243, %v4241
  %v4290 = vpack.c.b16 %v4244, %v4242
  %v4291 = vpack.c.b16 %v4247, %v4245
  %v4292 = vpack.c.b16 %v4248, %v4246
  %v4293 = vpack.c.b16 %v4251, %v4249
  %v4294 = vpack.c.b16 %v4252, %v4250
  %v4295 = vpack.c.b16 %v4255, %v4253
  %v4296 = vpack.c.b16 %v4256, %v4254
  %v4338 = vsel %vm1553, %v4124, 0
  %4340 = vmatprep.subr.bf16.mxu0 %v4272
  %4341 = vmatpush1.bf16.msra.mxu0 %v4271
  %4342 = vmatprep.subr.bf16.mxu0 %v4270
  %4343 = vmatpush1.bf16.msra.mxu0 %v4269
  %4344 = vmatprep.subr.bf16.mxu0 %v4268
  %4345 = vmatpush1.bf16.msra.mxu0 %v4267
  %4346 = vmatprep.subr.bf16.mxu0 %v4266
  %4347 = vmatpush1.bf16.msra.mxu0 %v4265
  %4348 = vmatprep.subr.bf16.mxu0 %v4264
  %4349 = vmatpush1.bf16.msra.mxu0 %v4263
  %4350 = vmatprep.subr.bf16.mxu0 %v4262
  %4351 = vmatpush1.bf16.msra.mxu0 %v4261
  %4352 = vmatprep.subr.bf16.mxu0 %v4260
  %4353 = vmatpush1.bf16.msra.mxu0 %v4259
  %4354 = vmatprep.subr.bf16.mxu0 %v4258
  %4355 = vmatpush1.bf16.msra.mxu0 %v4257
  %4356 = vmatprep.subr.bf16.mxu0 %v4288
  %4357 = vmatpush2.bf16.msra.mxu0 %v4287
  %4358 = vmatprep.subr.bf16.mxu0 %v4286
  %4359 = vmatpush2.bf16.msra.mxu0 %v4285
  %4360 = vmatprep.subr.bf16.mxu0 %v4284
  %4361 = vmatpush2.bf16.msra.mxu0 %v4283
  %4362 = vmatprep.subr.bf16.mxu0 %v4282
  %4363 = vmatpush2.bf16.msra.mxu0 %v4281
  %4364 = vmatprep.subr.bf16.mxu0 %v4280
  %4365 = vmatpush2.bf16.msra.mxu0 %v4279
  %4366 = vmatprep.subr.bf16.mxu0 %v4278
  %4367 = vmatpush2.bf16.msra.mxu0 %v4277
  %4368 = vmatprep.subr.bf16.mxu0 %v4276
  %4369 = vmatpush2.bf16.msra.mxu0 %v4275
  %4370 = vmatprep.subr.bf16.mxu0 %v4274
  %4371 = vmatpush2.bf16.msra.mxu0 %v4273
  %4372 = vmatprep.mubr.bf16.mxu0 %v4123
  %4373 = vmatmul.mubr.bf16.gmra.mxu0 %v4122
  %v4374 = vpop.f32.mrf.mxu0
  %v4375 = vadd.f32 %v4130, %v4374
  %v4376 = vpop.f32.mrf.mxu0
  %v4377 = vadd.f32 %v4134, %v4376
  %v4378 = vpop.f32.mrf.mxu0
  %v4379 = vpop.f32.mrf.mxu0
  %4380 = vdwg.mxu0
  %4381 = vmatprep.subr.bf16.mxu0 0
  %4382 = vmatpush1.bf16.msra.mxu0 0
  %4383 = vmatprep.subr.bf16.mxu0 0
  %4384 = vmatpush1.bf16.msra.mxu0 0
  %4385 = vmatprep.subr.bf16.mxu0 0
  %4386 = vmatpush1.bf16.msra.mxu0 0
  %4387 = vmatprep.subr.bf16.mxu0 0
  %4388 = vmatpush1.bf16.msra.mxu0 0
  %4389 = vmatprep.subr.bf16.mxu0 %v4296
  %4390 = vmatpush1.bf16.msra.mxu0 %v4295
  %4391 = vmatprep.subr.bf16.mxu0 %v4294
  %4392 = vmatpush1.bf16.msra.mxu0 %v4293
  %4393 = vmatprep.subr.bf16.mxu0 %v4292
  %4394 = vmatpush1.bf16.msra.mxu0 %v4291
  %4395 = vmatprep.subr.bf16.mxu0 %v4290
  %4396 = vmatpush1.bf16.msra.mxu0 %v4289
  %4397 = vmatprep.subr.bf16.mxu0 0
  %4398 = vmatpush2.bf16.msra.mxu0 0
  %4399 = vmatprep.subr.bf16.mxu0 0
  %4400 = vmatpush2.bf16.msra.mxu0 0
  %4401 = vmatprep.subr.bf16.mxu0 0
  %4402 = vmatpush2.bf16.msra.mxu0 0
  %4403 = vmatprep.subr.bf16.mxu0 0
  %4404 = vmatpush2.bf16.msra.mxu0 0
  %4405 = vmatprep.subr.bf16.mxu0 0
  %4406 = vmatpush2.bf16.msra.mxu0 0
  %4407 = vmatprep.subr.bf16.mxu0 0
  %4408 = vmatpush2.bf16.msra.mxu0 0
  %4409 = vmatprep.subr.bf16.mxu0 0
  %4410 = vmatpush2.bf16.msra.mxu0 0
  %4411 = vmatprep.subr.bf16.mxu0 0
  %4412 = vmatpush2.bf16.msra.mxu0 0
  %4413 = vmatprep.mubr.bf16.mxu0 0
  %4414 = vmatmul.mubr.bf16.gmra.mxu0 %v4338
  %v4415 = vpop.f32.mrf.mxu0
  %v4416 = vadd.f32 %v4375, %v4415
  %v4417 = vpop.f32.mrf.mxu0
  %v4418 = vadd.f32 %v4377, %v4417
  %v4419 = vpop.f32.mrf.mxu0
  %v4420 = vpop.f32.mrf.mxu0
  %4421 = vdwg.mxu0
  %v4422 = vld [vmem:[%s5 + $0x140] sm:$0xff]
  %v4423 = vld [vmem:[%s5 + $0x148] sm:$0xff]
  %v4424 = vld [vmem:[%s5 + $0x150] sm:$0xff]
  %v4425 = vld [vmem:[%s5 + $0x158] sm:$0xff]
  %v4426 = vld [vmem:[%s5 + $0x160] sm:$0xff]
  %v4427 = vld [vmem:[%s5 + $0x168] sm:$0xff]
  %v4428 = vld [vmem:[%s5 + $0x170] sm:$0xff]
  %v4429 = vld [vmem:[%s5 + $0x178] sm:$0xff]
  %v4430 = vld [vmem:[%s5 + $0x180] sm:$0xff]
  %v4431 = vld [vmem:[%s5 + $0x188] sm:$0xff]
  %v4432 = vld [vmem:[%s5 + $0x190] sm:$0xff]
  %v4433 = vld [vmem:[%s5 + $0x198] sm:$0xff]
  %v4434 = vld [vmem:[%s5 + $0x1a0] sm:$0xff]
  %v4435 = vld [vmem:[%s5 + $0x1a8] sm:$0xff]
  %v4436 = vld [vmem:[%s5 + $0x1b0] sm:$0xff]
  %v4437 = vld [vmem:[%s5 + $0x1b8] sm:$0xff]
  %v4438 = vld [vmem:[%s5 + $0x1c0] sm:$0xff]
  %v4439 = vld [vmem:[%s5 + $0x1c8] sm:$0xff]
  %v4440 = vld [vmem:[%s5 + $0x1d0] sm:$0xff]
  %v4441 = vld [vmem:[%s5 + $0x1d8] sm:$0xff]
  %v4442 = vld [vmem:[%s5 + $0x1e0] sm:$0xff]
  %v4443 = vld [vmem:[%s5 + $0x1e8] sm:$0xff]
  %v4444 = vld [vmem:[%s5 + $0x1f0] sm:$0xff]
  %v4445 = vld [vmem:[%s5 + $0x1f8] sm:$0xff]
  %v4446 = vld [vmem:[%s5 + $0x200] sm:$0xff]
  %v4447 = vld [vmem:[%s5 + $0x208] sm:$0xff]
  %v4448 = vld [vmem:[%s5 + $0x210] sm:$0xff]
  %v4449 = vld [vmem:[%s5 + $0x218] sm:$0xff]
  %v4450 = vld [vmem:[%s5 + $0x220] sm:$0xff]
  %v4451 = vld [vmem:[%s5 + $0x228] sm:$0xff]
  %v4452 = vld [vmem:[%s5 + $0x230] sm:$0xff]
  %v4453 = vld [vmem:[%s5 + $0x238] sm:$0xff]
  %v4454 = vld [vmem:[%s5 + $0x240] sm:$0xff]
  %v4455 = vld [vmem:[%s5 + $0x248] sm:$0xff]
  %v4456 = vld [vmem:[%s5 + $0x250] sm:$0xff]
  %v4457 = vld [vmem:[%s5 + $0x258] sm:$0xff]
  %v4458 = vld [vmem:[%s5 + $0x260] sm:$0xff]
  %v4459 = vld [vmem:[%s5 + $0x268] sm:$0xff]
  %v4460 = vld [vmem:[%s5 + $0x270] sm:$0xff]
  %v4461 = vld [vmem:[%s5 + $0x278] sm:$0xff]
  %s4462 = scalar_lea.vmem %s10, 1
  %v4463 = vld [vmem:[%s4462] ss:$8 sm:$0x3]
  %v4465 = vlaneseq
  %v4466 = vshrl.u32 %v4465, 7
  %v4467 = vsub.s32 0, %v4466
  %v4468 = vrot.slane %v4463, %v4467
  %v4469 = vlaneseq
  %v4470 = vshrl.u32 %v4469, 7
  %v4471 = vsub.s32 1, %v4470
  %v4472 = vrot.slane %v4463, %v4471
  %v4515 = vunpack.c.l.b16 %v4422
  %v4516 = vunpack.c.h.b16 %v4422
  %v4517 = vunpack.c.l.b16 %v4423
  %v4518 = vunpack.c.h.b16 %v4423
  %v4519 = vunpack.c.l.b16 %v4424
  %v4520 = vunpack.c.h.b16 %v4424
  %v4521 = vunpack.c.l.b16 %v4425
  %v4522 = vunpack.c.h.b16 %v4425
  %v4523 = vunpack.c.l.b16 %v4426
  %v4524 = vunpack.c.h.b16 %v4426
  %v4525 = vunpack.c.l.b16 %v4427
  %v4526 = vunpack.c.h.b16 %v4427
  %v4527 = vunpack.c.l.b16 %v4428
  %v4528 = vunpack.c.h.b16 %v4428
  %v4529 = vunpack.c.l.b16 %v4429
  %v4530 = vunpack.c.h.b16 %v4429
  %v4531 = vunpack.c.l.b16 %v4430
  %v4532 = vunpack.c.h.b16 %v4430
  %v4533 = vunpack.c.l.b16 %v4431
  %v4534 = vunpack.c.h.b16 %v4431
  %v4535 = vunpack.c.l.b16 %v4432
  %v4536 = vunpack.c.h.b16 %v4432
  %v4537 = vunpack.c.l.b16 %v4433
  %v4538 = vunpack.c.h.b16 %v4433
  %v4539 = vunpack.c.l.b16 %v4434
  %v4540 = vunpack.c.h.b16 %v4434
  %v4541 = vunpack.c.l.b16 %v4435
  %v4542 = vunpack.c.h.b16 %v4435
  %v4543 = vunpack.c.l.b16 %v4436
  %v4544 = vunpack.c.h.b16 %v4436
  %v4545 = vunpack.c.l.b16 %v4437
  %v4546 = vunpack.c.h.b16 %v4437
  %v4547 = vunpack.c.l.b16 %v4438
  %v4548 = vunpack.c.h.b16 %v4438
  %v4549 = vunpack.c.l.b16 %v4439
  %v4550 = vunpack.c.h.b16 %v4439
  %v4551 = vunpack.c.l.b16 %v4440
  %v4552 = vunpack.c.h.b16 %v4440
  %v4553 = vunpack.c.l.b16 %v4441
  %v4554 = vunpack.c.h.b16 %v4441
  %v4555 = vunpack.c.l.b16 %v4442
  %v4556 = vunpack.c.h.b16 %v4442
  %v4557 = vunpack.c.l.b16 %v4443
  %v4558 = vunpack.c.h.b16 %v4443
  %v4559 = vunpack.c.l.b16 %v4444
  %v4560 = vunpack.c.h.b16 %v4444
  %v4561 = vunpack.c.l.b16 %v4445
  %v4562 = vunpack.c.h.b16 %v4445
  %v4563 = vunpack.c.l.b16 %v4446
  %v4564 = vunpack.c.h.b16 %v4446
  %v4565 = vunpack.c.l.b16 %v4447
  %v4566 = vunpack.c.h.b16 %v4447
  %v4567 = vunpack.c.l.b16 %v4448
  %v4568 = vunpack.c.h.b16 %v4448
  %v4569 = vunpack.c.l.b16 %v4449
  %v4570 = vunpack.c.h.b16 %v4449
  %v4571 = vunpack.c.l.b16 %v4450
  %v4572 = vunpack.c.h.b16 %v4450
  %v4573 = vunpack.c.l.b16 %v4451
  %v4574 = vunpack.c.h.b16 %v4451
  %v4575 = vunpack.c.l.b16 %v4452
  %v4576 = vunpack.c.h.b16 %v4452
  %v4577 = vunpack.c.l.b16 %v4453
  %v4578 = vunpack.c.h.b16 %v4453
  %v4579 = vunpack.c.l.b16 %v4454
  %v4580 = vunpack.c.h.b16 %v4454
  %v4581 = vunpack.c.l.b16 %v4455
  %v4582 = vunpack.c.h.b16 %v4455
  %v4583 = vunpack.c.l.b16 %v4456
  %v4584 = vunpack.c.h.b16 %v4456
  %v4585 = vunpack.c.l.b16 %v4457
  %v4586 = vunpack.c.h.b16 %v4457
  %v4587 = vunpack.c.l.b16 %v4458
  %v4588 = vunpack.c.h.b16 %v4458
  %v4589 = vunpack.c.l.b16 %v4459
  %v4590 = vunpack.c.h.b16 %v4459
  %v4591 = vunpack.c.l.b16 %v4460
  %v4592 = vunpack.c.h.b16 %v4460
  %v4593 = vunpack.c.l.b16 %v4461
  %v4594 = vunpack.c.h.b16 %v4461
  %v4595 = vpack.c.b16 %v4517, %v4515
  %v4596 = vpack.c.b16 %v4518, %v4516
  %v4597 = vpack.c.b16 %v4521, %v4519
  %v4598 = vpack.c.b16 %v4522, %v4520
  %v4599 = vpack.c.b16 %v4525, %v4523
  %v4600 = vpack.c.b16 %v4526, %v4524
  %v4601 = vpack.c.b16 %v4529, %v4527
  %v4602 = vpack.c.b16 %v4530, %v4528
  %v4603 = vpack.c.b16 %v4533, %v4531
  %v4604 = vpack.c.b16 %v4534, %v4532
  %v4605 = vpack.c.b16 %v4537, %v4535
  %v4606 = vpack.c.b16 %v4538, %v4536
  %v4607 = vpack.c.b16 %v4541, %v4539
  %v4608 = vpack.c.b16 %v4542, %v4540
  %v4609 = vpack.c.b16 %v4545, %v4543
  %v4610 = vpack.c.b16 %v4546, %v4544
  %v4611 = vpack.c.b16 %v4549, %v4547
  %v4612 = vpack.c.b16 %v4550, %v4548
  %v4613 = vpack.c.b16 %v4553, %v4551
  %v4614 = vpack.c.b16 %v4554, %v4552
  %v4615 = vpack.c.b16 %v4557, %v4555
  %v4616 = vpack.c.b16 %v4558, %v4556
  %v4617 = vpack.c.b16 %v4561, %v4559
  %v4618 = vpack.c.b16 %v4562, %v4560
  %v4619 = vpack.c.b16 %v4565, %v4563
  %v4620 = vpack.c.b16 %v4566, %v4564
  %v4621 = vpack.c.b16 %v4569, %v4567
  %v4622 = vpack.c.b16 %v4570, %v4568
  %v4623 = vpack.c.b16 %v4573, %v4571
  %v4624 = vpack.c.b16 %v4574, %v4572
  %v4625 = vpack.c.b16 %v4577, %v4575
  %v4626 = vpack.c.b16 %v4578, %v4576
  %v4627 = vpack.c.b16 %v4581, %v4579
  %v4628 = vpack.c.b16 %v4582, %v4580
  %v4629 = vpack.c.b16 %v4585, %v4583
  %v4630 = vpack.c.b16 %v4586, %v4584
  %v4631 = vpack.c.b16 %v4589, %v4587
  %v4632 = vpack.c.b16 %v4590, %v4588
  %v4633 = vpack.c.b16 %v4593, %v4591
  %v4634 = vpack.c.b16 %v4594, %v4592
  %4675 = vmatprep.subr.bf16.mxu0 %v4610
  %4676 = vmatpush1.bf16.msra.mxu0 %v4609
  %4677 = vmatprep.subr.bf16.mxu0 %v4608
  %4678 = vmatpush1.bf16.msra.mxu0 %v4607
  %4679 = vmatprep.subr.bf16.mxu0 %v4606
  %4680 = vmatpush1.bf16.msra.mxu0 %v4605
  %4681 = vmatprep.subr.bf16.mxu0 %v4604
  %4682 = vmatpush1.bf16.msra.mxu0 %v4603
  %4683 = vmatprep.subr.bf16.mxu0 %v4602
  %4684 = vmatpush1.bf16.msra.mxu0 %v4601
  %4685 = vmatprep.subr.bf16.mxu0 %v4600
  %4686 = vmatpush1.bf16.msra.mxu0 %v4599
  %4687 = vmatprep.subr.bf16.mxu0 %v4598
  %4688 = vmatpush1.bf16.msra.mxu0 %v4597
  %4689 = vmatprep.subr.bf16.mxu0 %v4596
  %4690 = vmatpush1.bf16.msra.mxu0 %v4595
  %4691 = vmatprep.subr.bf16.mxu0 %v4626
  %4692 = vmatpush2.bf16.msra.mxu0 %v4625
  %4693 = vmatprep.subr.bf16.mxu0 %v4624
  %4694 = vmatpush2.bf16.msra.mxu0 %v4623
  %4695 = vmatprep.subr.bf16.mxu0 %v4622
  %4696 = vmatpush2.bf16.msra.mxu0 %v4621
  %4697 = vmatprep.subr.bf16.mxu0 %v4620
  %4698 = vmatpush2.bf16.msra.mxu0 %v4619
  %4699 = vmatprep.subr.bf16.mxu0 %v4618
  %4700 = vmatpush2.bf16.msra.mxu0 %v4617
  %4701 = vmatprep.subr.bf16.mxu0 %v4616
  %4702 = vmatpush2.bf16.msra.mxu0 %v4615
  %4703 = vmatprep.subr.bf16.mxu0 %v4614
  %4704 = vmatpush2.bf16.msra.mxu0 %v4613
  %4705 = vmatprep.subr.bf16.mxu0 %v4612
  %4706 = vmatpush2.bf16.msra.mxu0 %v4611
  %4707 = vmatprep.mubr.bf16.mxu0 %v3416
  %4708 = vmatmul.mubr.bf16.gmra.mxu0 %v3415
  %v4709 = vpop.f32.mrf.mxu0
  %v4710 = vadd.f32 %v4468, %v4709
  %v4711 = vpop.f32.mrf.mxu0
  %v4712 = vadd.f32 %v4472, %v4711
  %v4713 = vpop.f32.mrf.mxu0
  %v4714 = vpop.f32.mrf.mxu0
  %4715 = vdwg.mxu0
  %4716 = vmatprep.subr.bf16.mxu0 0
  %4717 = vmatpush1.bf16.msra.mxu0 0
  %4718 = vmatprep.subr.bf16.mxu0 0
  %4719 = vmatpush1.bf16.msra.mxu0 0
  %4720 = vmatprep.subr.bf16.mxu0 0
  %4721 = vmatpush1.bf16.msra.mxu0 0
  %4722 = vmatprep.subr.bf16.mxu0 0
  %4723 = vmatpush1.bf16.msra.mxu0 0
  %4724 = vmatprep.subr.bf16.mxu0 %v4634
  %4725 = vmatpush1.bf16.msra.mxu0 %v4633
  %4726 = vmatprep.subr.bf16.mxu0 %v4632
  %4727 = vmatpush1.bf16.msra.mxu0 %v4631
  %4728 = vmatprep.subr.bf16.mxu0 %v4630
  %4729 = vmatpush1.bf16.msra.mxu0 %v4629
  %4730 = vmatprep.subr.bf16.mxu0 %v4628
  %4731 = vmatpush1.bf16.msra.mxu0 %v4627
  %4732 = vmatprep.subr.bf16.mxu0 0
  %4733 = vmatpush2.bf16.msra.mxu0 0
  %4734 = vmatprep.subr.bf16.mxu0 0
  %4735 = vmatpush2.bf16.msra.mxu0 0
  %4736 = vmatprep.subr.bf16.mxu0 0
  %4737 = vmatpush2.bf16.msra.mxu0 0
  %4738 = vmatprep.subr.bf16.mxu0 0
  %4739 = vmatpush2.bf16.msra.mxu0 0
  %4740 = vmatprep.subr.bf16.mxu0 0
  %4741 = vmatpush2.bf16.msra.mxu0 0
  %4742 = vmatprep.subr.bf16.mxu0 0
  %4743 = vmatpush2.bf16.msra.mxu0 0
  %4744 = vmatprep.subr.bf16.mxu0 0
  %4745 = vmatpush2.bf16.msra.mxu0 0
  %4746 = vmatprep.subr.bf16.mxu0 0
  %4747 = vmatpush2.bf16.msra.mxu0 0
  %4748 = vmatprep.mubr.bf16.mxu0 0
  %4749 = vmatmul.mubr.bf16.gmra.mxu0 %v3757
  %v4750 = vpop.f32.mrf.mxu0
  %v4751 = vadd.f32 %v4710, %v4750
  %v4752 = vpop.f32.mrf.mxu0
  %v4753 = vadd.f32 %v4712, %v4752
  %v4754 = vpop.f32.mrf.mxu0
  %v4755 = vpop.f32.mrf.mxu0
  %4756 = vdwg.mxu0
  %vm4757 = vcmask 261120
  %v4759 = vsel %vm4757, %v4418, 0
  %4761 = vmatprep.subr.mxu0 %v1534
  %4762 = vmatpush1.msra.mxu0 %v1533
  %4763 = vmatprep.subr.mxu0 %v1532
  %4764 = vmatpush1.msra.mxu0 %v1531
  %4765 = vmatprep.subr.mxu0 %v1530
  %4766 = vmatpush1.msra.mxu0 %v1529
  %4767 = vmatprep.subr.mxu0 %v1528
  %4768 = vmatpush1.msra.mxu0 %v1527
  %4769 = vmatprep.subr.mxu0 %v1526
  %4770 = vmatpush1.msra.mxu0 %v1525
  %4771 = vmatprep.subr.mxu0 %v1524
  %4772 = vmatpush1.msra.mxu0 %v1523
  %4773 = vmatprep.subr.mxu0 %v1522
  %4774 = vmatpush1.msra.mxu0 %v1521
  %4775 = vmatprep.subr.mxu0 %v1520
  %4776 = vmatpush1.msra.mxu0 %v1519
  %4777 = vmatprep.subr.mxu0 %v1518
  %4778 = vmatpush1.msra.mxu0 %v1517
  %4779 = vmatprep.subr.mxu0 %v1516
  %4780 = vmatpush1.msra.mxu0 %v1515
  %4781 = vmatprep.subr.mxu0 %v1514
  %4782 = vmatpush1.msra.mxu0 %v1513
  %4783 = vmatprep.subr.mxu0 %v1512
  %4784 = vmatpush1.msra.mxu0 %v1511
  %4785 = vmatprep.subr.mxu0 %v1510
  %4786 = vmatpush1.msra.mxu0 %v1509
  %4787 = vmatprep.subr.mxu0 %v1508
  %4788 = vmatpush1.msra.mxu0 %v1507
  %4789 = vmatprep.subr.mxu0 %v1506
  %4790 = vmatpush1.msra.mxu0 %v1505
  %4791 = vmatprep.subr.mxu0 %v1504
  %4792 = vmatpush1.msra.mxu0 %v1503
  %4793 = vmatprep.subr.mxu0 0.0
  %4794 = vmatpush2.msra.mxu0 0.0
  %4795 = vmatprep.subr.mxu0 0.0
  %4796 = vmatpush2.msra.mxu0 0.0
  %4797 = vmatprep.subr.mxu0 0.0
  %4798 = vmatpush2.msra.mxu0 0.0
  %4799 = vmatprep.subr.mxu0 0.0
  %4800 = vmatpush2.msra.mxu0 0.0
  %4801 = vmatprep.subr.mxu0 0.0
  %4802 = vmatpush2.msra.mxu0 0.0
  %4803 = vmatprep.subr.mxu0 0.0
  %4804 = vmatpush2.msra.mxu0 0.0
  %4805 = vmatprep.subr.mxu0 0.0
  %4806 = vmatpush2.msra.mxu0 0.0
  %4807 = vmatprep.subr.mxu0 0.0
  %4808 = vmatpush2.msra.mxu0 0.0
  %4809 = vmatprep.subr.mxu0 0.0
  %4810 = vmatpush2.msra.mxu0 0.0
  %4811 = vmatprep.subr.mxu0 0.0
  %4812 = vmatpush2.msra.mxu0 0.0
  %4813 = vmatprep.subr.mxu0 0.0
  %4814 = vmatpush2.msra.mxu0 0.0
  %4815 = vmatprep.subr.mxu0 0.0
  %4816 = vmatpush2.msra.mxu0 0.0
  %4817 = vmatprep.subr.mxu0 %v1542
  %4818 = vmatpush2.msra.mxu0 %v1541
  %4819 = vmatprep.subr.mxu0 %v1540
  %4820 = vmatpush2.msra.mxu0 %v1539
  %4821 = vmatprep.subr.mxu0 %v1538
  %4822 = vmatpush2.msra.mxu0 %v1537
  %4823 = vmatprep.subr.mxu0 %v1536
  %4824 = vmatpush2.msra.mxu0 %v1535
  %4825 = vmatprep.mubr.f32.mxu0 %v4759
  %4826 = vmatmul.mubr.f32.gmra.mxu0 %v4416
  %v4827 = vpop.f32.mrf.mxu0
  %v4828 = vadd.f32 0.0, %v4827
  %v4829 = vpop.f32.mrf.mxu0
  %v4830 = vadd.f32 0.0, %v4829
  %4831 = vdwg.mxu0
  %v4832 = vsub.f32 %v4416, %v4828
  %v4833 = vsub.f32 %v4418, %v4830
  %v4834 = vmul.f32 %v4832, %v4832
  %v4835 = vmul.f32 %v4833, %v4833
  %v4837 = vsel %vm4757, %v4835, 0
  %4839 = vmatprep.subr.mxu0 %v1534
  %4840 = vmatpush1.msra.mxu0 %v1533
  %4841 = vmatprep.subr.mxu0 %v1532
  %4842 = vmatpush1.msra.mxu0 %v1531
  %4843 = vmatprep.subr.mxu0 %v1530
  %4844 = vmatpush1.msra.mxu0 %v1529
  %4845 = vmatprep.subr.mxu0 %v1528
  %4846 = vmatpush1.msra.mxu0 %v1527
  %4847 = vmatprep.subr.mxu0 %v1526
  %4848 = vmatpush1.msra.mxu0 %v1525
  %4849 = vmatprep.subr.mxu0 %v1524
  %4850 = vmatpush1.msra.mxu0 %v1523
  %4851 = vmatprep.subr.mxu0 %v1522
  %4852 = vmatpush1.msra.mxu0 %v1521
  %4853 = vmatprep.subr.mxu0 %v1520
  %4854 = vmatpush1.msra.mxu0 %v1519
  %4855 = vmatprep.subr.mxu0 %v1518
  %4856 = vmatpush1.msra.mxu0 %v1517
  %4857 = vmatprep.subr.mxu0 %v1516
  %4858 = vmatpush1.msra.mxu0 %v1515
  %4859 = vmatprep.subr.mxu0 %v1514
  %4860 = vmatpush1.msra.mxu0 %v1513
  %4861 = vmatprep.subr.mxu0 %v1512
  %4862 = vmatpush1.msra.mxu0 %v1511
  %4863 = vmatprep.subr.mxu0 %v1510
  %4864 = vmatpush1.msra.mxu0 %v1509
  %4865 = vmatprep.subr.mxu0 %v1508
  %4866 = vmatpush1.msra.mxu0 %v1507
  %4867 = vmatprep.subr.mxu0 %v1506
  %4868 = vmatpush1.msra.mxu0 %v1505
  %4869 = vmatprep.subr.mxu0 %v1504
  %4870 = vmatpush1.msra.mxu0 %v1503
  %4871 = vmatprep.subr.mxu0 0.0
  %4872 = vmatpush2.msra.mxu0 0.0
  %4873 = vmatprep.subr.mxu0 0.0
  %4874 = vmatpush2.msra.mxu0 0.0
  %4875 = vmatprep.subr.mxu0 0.0
  %4876 = vmatpush2.msra.mxu0 0.0
  %4877 = vmatprep.subr.mxu0 0.0
  %4878 = vmatpush2.msra.mxu0 0.0
  %4879 = vmatprep.subr.mxu0 0.0
  %4880 = vmatpush2.msra.mxu0 0.0
  %4881 = vmatprep.subr.mxu0 0.0
  %4882 = vmatpush2.msra.mxu0 0.0
  %4883 = vmatprep.subr.mxu0 0.0
  %4884 = vmatpush2.msra.mxu0 0.0
  %4885 = vmatprep.subr.mxu0 0.0
  %4886 = vmatpush2.msra.mxu0 0.0
  %4887 = vmatprep.subr.mxu0 0.0
  %4888 = vmatpush2.msra.mxu0 0.0
  %4889 = vmatprep.subr.mxu0 0.0
  %4890 = vmatpush2.msra.mxu0 0.0
  %4891 = vmatprep.subr.mxu0 0.0
  %4892 = vmatpush2.msra.mxu0 0.0
  %4893 = vmatprep.subr.mxu0 0.0
  %4894 = vmatpush2.msra.mxu0 0.0
  %4895 = vmatprep.subr.mxu0 %v1542
  %4896 = vmatpush2.msra.mxu0 %v1541
  %4897 = vmatprep.subr.mxu0 %v1540
  %4898 = vmatpush2.msra.mxu0 %v1539
  %4899 = vmatprep.subr.mxu0 %v1538
  %4900 = vmatpush2.msra.mxu0 %v1537
  %4901 = vmatprep.subr.mxu0 %v1536
  %4902 = vmatpush2.msra.mxu0 %v1535
  %4903 = vmatprep.mubr.f32.mxu0 %v4837
  %4904 = vmatmul.mubr.f32.gmra.mxu0 %v4834
  %v4905 = vpop.f32.mrf.mxu0
  %v4906 = vadd.f32 1e-05, %v4905
  %v4907 = vpop.f32.mrf.mxu0
  %v4908 = vadd.f32 1e-05, %v4907
  %4909 = vdwg.mxu0
  %v4910 = vrsqrt.pop %v4906
  %v4911 = vrsqrt.pop %v4908
  %v4912 = vmul.f32 %v4832, %v4910
  %v4913 = vmul.f32 %v4833, %v4911
  %v4914 = vld [vmem:[%s5 + $0x280] sm:$0xff]
  %v4915 = vld [vmem:[%s5 + $0x288] sm:$0xff]
  %v4916 = vld [vmem:[%s5 + $0x290] sm:$0xff]
  %v4917 = vld [vmem:[%s5 + $0x298] sm:$0xff]
  %v4918 = vld [vmem:[%s5 + $0x2a0] sm:$0xff]
  %v4919 = vld [vmem:[%s5 + $0x2a8] sm:$0xff]
  %v4920 = vld [vmem:[%s5 + $0x2b0] sm:$0xff]
  %v4921 = vld [vmem:[%s5 + $0x2b8] sm:$0xff]
  %v4922 = vld [vmem:[%s5 + $0x2c0] sm:$0xff]
  %v4923 = vld [vmem:[%s5 + $0x2c8] sm:$0xff]
  %v4924 = vld [vmem:[%s5 + $0x2d0] sm:$0xff]
  %v4925 = vld [vmem:[%s5 + $0x2d8] sm:$0xff]
  %v4926 = vld [vmem:[%s5 + $0x2e0] sm:$0xff]
  %v4927 = vld [vmem:[%s5 + $0x2e8] sm:$0xff]
  %v4928 = vld [vmem:[%s5 + $0x2f0] sm:$0xff]
  %v4929 = vld [vmem:[%s5 + $0x2f8] sm:$0xff]
  %v4930 = vld [vmem:[%s5 + $0x300] sm:$0xff]
  %v4931 = vld [vmem:[%s5 + $0x308] sm:$0xff]
  %v4932 = vld [vmem:[%s5 + $0x310] sm:$0xff]
  %v4933 = vld [vmem:[%s5 + $0x318] sm:$0xff]
  %v4934 = vpack.c.bf16 %v4912, %v4912
  %v4935 = vpack.c.bf16 %v4913, %v4913
  %s4936 = scalar_lea.vmem %s10, 2
  %v4937 = vld [vmem:[%s4936] ss:$8 sm:$0x3]
  %v4939 = vlaneseq
  %v4940 = vshrl.u32 %v4939, 7
  %v4941 = vsub.s32 0, %v4940
  %v4942 = vrot.slane %v4937, %v4941
  %v4943 = vlaneseq
  %v4944 = vshrl.u32 %v4943, 7
  %v4945 = vsub.s32 1, %v4944
  %v4946 = vrot.slane %v4937, %v4945
  %v4969 = vunpack.c.l.b16 %v4914
  %v4970 = vunpack.c.h.b16 %v4914
  %v4971 = vunpack.c.l.b16 %v4915
  %v4972 = vunpack.c.h.b16 %v4915
  %v4973 = vunpack.c.l.b16 %v4916
  %v4974 = vunpack.c.h.b16 %v4916
  %v4975 = vunpack.c.l.b16 %v4917
  %v4976 = vunpack.c.h.b16 %v4917
  %v4977 = vunpack.c.l.b16 %v4918
  %v4978 = vunpack.c.h.b16 %v4918
  %v4979 = vunpack.c.l.b16 %v4919
  %v4980 = vunpack.c.h.b16 %v4919
  %v4981 = vunpack.c.l.b16 %v4920
  %v4982 = vunpack.c.h.b16 %v4920
  %v4983 = vunpack.c.l.b16 %v4921
  %v4984 = vunpack.c.h.b16 %v4921
  %v4985 = vunpack.c.l.b16 %v4922
  %v4986 = vunpack.c.h.b16 %v4922
  %v4987 = vunpack.c.l.b16 %v4923
  %v4988 = vunpack.c.h.b16 %v4923
  %v4989 = vunpack.c.l.b16 %v4924
  %v4990 = vunpack.c.h.b16 %v4924
  %v4991 = vunpack.c.l.b16 %v4925
  %v4992 = vunpack.c.h.b16 %v4925
  %v4993 = vunpack.c.l.b16 %v4926
  %v4994 = vunpack.c.h.b16 %v4926
  %v4995 = vunpack.c.l.b16 %v4927
  %v4996 = vunpack.c.h.b16 %v4927
  %v4997 = vunpack.c.l.b16 %v4928
  %v4998 = vunpack.c.h.b16 %v4928
  %v4999 = vunpack.c.l.b16 %v4929
  %v5000 = vunpack.c.h.b16 %v4929
  %v5001 = vunpack.c.l.b16 %v4930
  %v5002 = vunpack.c.h.b16 %v4930
  %v5003 = vunpack.c.l.b16 %v4931
  %v5004 = vunpack.c.h.b16 %v4931
  %v5005 = vunpack.c.l.b16 %v4932
  %v5006 = vunpack.c.h.b16 %v4932
  %v5007 = vunpack.c.l.b16 %v4933
  %v5008 = vunpack.c.h.b16 %v4933
  %v5009 = vpack.c.b16 %v4971, %v4969
  %v5010 = vpack.c.b16 %v4972, %v4970
  %v5011 = vpack.c.b16 %v4975, %v4973
  %v5012 = vpack.c.b16 %v4976, %v4974
  %v5013 = vpack.c.b16 %v4979, %v4977
  %v5014 = vpack.c.b16 %v4980, %v4978
  %v5015 = vpack.c.b16 %v4983, %v4981
  %v5016 = vpack.c.b16 %v4984, %v4982
  %v5017 = vpack.c.b16 %v4987, %v4985
  %v5018 = vpack.c.b16 %v4988, %v4986
  %v5019 = vpack.c.b16 %v4991, %v4989
  %v5020 = vpack.c.b16 %v4992, %v4990
  %v5021 = vpack.c.b16 %v4995, %v4993
  %v5022 = vpack.c.b16 %v4996, %v4994
  %v5023 = vpack.c.b16 %v4999, %v4997
  %v5024 = vpack.c.b16 %v5000, %v4998
  %v5025 = vpack.c.b16 %v5003, %v5001
  %v5026 = vpack.c.b16 %v5004, %v5002
  %v5027 = vpack.c.b16 %v5007, %v5005
  %v5028 = vpack.c.b16 %v5008, %v5006
  %v5050 = vsel %vm4757, %v4935, 0
  %5052 = vmatprep.subr.bf16.mxu0 %v5024
  %5053 = vmatpush1.bf16.msra.mxu0 %v5023
  %5054 = vmatprep.subr.bf16.mxu0 %v5022
  %5055 = vmatpush1.bf16.msra.mxu0 %v5021
  %5056 = vmatprep.subr.bf16.mxu0 %v5020
  %5057 = vmatpush1.bf16.msra.mxu0 %v5019
  %5058 = vmatprep.subr.bf16.mxu0 %v5018
  %5059 = vmatpush1.bf16.msra.mxu0 %v5017
  %5060 = vmatprep.subr.bf16.mxu0 %v5016
  %5061 = vmatpush1.bf16.msra.mxu0 %v5015
  %5062 = vmatprep.subr.bf16.mxu0 %v5014
  %5063 = vmatpush1.bf16.msra.mxu0 %v5013
  %5064 = vmatprep.subr.bf16.mxu0 %v5012
  %5065 = vmatpush1.bf16.msra.mxu0 %v5011
  %5066 = vmatprep.subr.bf16.mxu0 %v5010
  %5067 = vmatpush1.bf16.msra.mxu0 %v5009
  %5068 = vmatprep.subr.bf16.mxu0 0
  %5069 = vmatpush2.bf16.msra.mxu0 0
  %5070 = vmatprep.subr.bf16.mxu0 0
  %5071 = vmatpush2.bf16.msra.mxu0 0
  %5072 = vmatprep.subr.bf16.mxu0 0
  %5073 = vmatpush2.bf16.msra.mxu0 0
  %5074 = vmatprep.subr.bf16.mxu0 0
  %5075 = vmatpush2.bf16.msra.mxu0 0
  %5076 = vmatprep.subr.bf16.mxu0 0
  %5077 = vmatpush2.bf16.msra.mxu0 0
  %5078 = vmatprep.subr.bf16.mxu0 0
  %5079 = vmatpush2.bf16.msra.mxu0 0
  %5080 = vmatprep.subr.bf16.mxu0 %v5028
  %5081 = vmatpush2.bf16.msra.mxu0 %v5027
  %5082 = vmatprep.subr.bf16.mxu0 %v5026
  %5083 = vmatpush2.bf16.msra.mxu0 %v5025
  %5084 = vmatprep.mubr.bf16.mxu0 %v5050
  %5085 = vmatmul.mubr.bf16.gmra.mxu0 %v4934
  %v5086 = vpop.f32.mrf.mxu0
  %v5087 = vadd.f32 %v4942, %v5086
  %v5088 = vpop.f32.mrf.mxu0
  %v5089 = vadd.f32 %v4946, %v5088
  %v5090 = vpop.f32.mrf.mxu0
  %v5091 = vpop.f32.mrf.mxu0
  %5092 = vdwg.mxu0
  %v5093 = vmul.f32 %v5087, %v5087
  %v5094 = vmul.f32 %v5089, %v5089
  %v5095 = vmul.f32 %v5087, %v5093
  %v5096 = vmul.f32 %v5089, %v5094
  %v5097 = vmul.f32 %v5095, 0.044715
  %v5098 = vmul.f32 %v5096, 0.044715
  %v5099 = vadd.f32 %v5087, %v5097
  %v5100 = vadd.f32 %v5089, %v5098
  %v5101 = vmul.f32 %v5099, 0.7978846
  %v5102 = vmul.f32 %v5100, 0.7978846
  %v5103 = vtanh.pop %v5101
  %v5104 = vtanh.pop %v5102
  %v5105 = vadd.f32 %v5103, 1.0
  %v5106 = vadd.f32 %v5104, 1.0
  %v5107 = vmul.f32 %v5105, 0.5
  %v5108 = vmul.f32 %v5106, 0.5
  %v5109 = vmul.f32 %v5087, %v5107
  %v5110 = vmul.f32 %v5089, %v5108
  %v5111 = vld [vmem:[%s5 + $0x320] sm:$0xff]
  %v5112 = vld [vmem:[%s5 + $0x328] sm:$0xff]
  %v5113 = vld [vmem:[%s5 + $0x330] sm:$0xff]
  %v5114 = vld [vmem:[%s5 + $0x338] sm:$0xff]
  %v5115 = vld [vmem:[%s5 + $0x340] sm:$0xff]
  %v5116 = vld [vmem:[%s5 + $0x348] sm:$0xff]
  %v5117 = vld [vmem:[%s5 + $0x350] sm:$0xff]
  %v5118 = vld [vmem:[%s5 + $0x358] sm:$0xff]
  %v5119 = vld [vmem:[%s5 + $0x360] sm:$0xff]
  %v5120 = vld [vmem:[%s5 + $0x368] sm:$0xff]
  %v5121 = vld [vmem:[%s5 + $0x370] sm:$0xff]
  %v5122 = vld [vmem:[%s5 + $0x378] sm:$0xff]
  %v5123 = vld [vmem:[%s5 + $0x380] sm:$0xff]
  %v5124 = vld [vmem:[%s5 + $0x388] sm:$0xff]
  %v5125 = vld [vmem:[%s5 + $0x390] sm:$0xff]
  %v5126 = vld [vmem:[%s5 + $0x398] sm:$0xff]
  %v5127 = vld [vmem:[%s5 + $0x3a0] sm:$0xff]
  %v5128 = vld [vmem:[%s5 + $0x3a8] sm:$0xff]
  %v5129 = vld [vmem:[%s5 + $0x3b0] sm:$0xff]
  %v5130 = vld [vmem:[%s5 + $0x3b8] sm:$0xff]
  %v5131 = vpack.c.bf16 %v5109, %v5109
  %v5132 = vpack.c.bf16 %v5110, %v5110
  %s5133 = scalar_lea.vmem %s10, 3
  %v5134 = vld [vmem:[%s5133] ss:$8 sm:$0x3]
  %v5136 = vlaneseq
  %v5137 = vshrl.u32 %v5136, 7
  %v5138 = vsub.s32 0, %v5137
  %v5139 = vrot.slane %v5134, %v5138
  %v5140 = vlaneseq
  %v5141 = vshrl.u32 %v5140, 7
  %v5142 = vsub.s32 1, %v5141
  %v5143 = vrot.slane %v5134, %v5142
  %v5166 = vunpack.c.l.b16 %v5111
  %v5167 = vunpack.c.h.b16 %v5111
  %v5168 = vunpack.c.l.b16 %v5112
  %v5169 = vunpack.c.h.b16 %v5112
  %v5170 = vunpack.c.l.b16 %v5113
  %v5171 = vunpack.c.h.b16 %v5113
  %v5172 = vunpack.c.l.b16 %v5114
  %v5173 = vunpack.c.h.b16 %v5114
  %v5174 = vunpack.c.l.b16 %v5115
  %v5175 = vunpack.c.h.b16 %v5115
  %v5176 = vunpack.c.l.b16 %v5116
  %v5177 = vunpack.c.h.b16 %v5116
  %v5178 = vunpack.c.l.b16 %v5117
  %v5179 = vunpack.c.h.b16 %v5117
  %v5180 = vunpack.c.l.b16 %v5118
  %v5181 = vunpack.c.h.b16 %v5118
  %v5182 = vunpack.c.l.b16 %v5119
  %v5183 = vunpack.c.h.b16 %v5119
  %v5184 = vunpack.c.l.b16 %v5120
  %v5185 = vunpack.c.h.b16 %v5120
  %v5186 = vunpack.c.l.b16 %v5121
  %v5187 = vunpack.c.h.b16 %v5121
  %v5188 = vunpack.c.l.b16 %v5122
  %v5189 = vunpack.c.h.b16 %v5122
  %v5190 = vunpack.c.l.b16 %v5123
  %v5191 = vunpack.c.h.b16 %v5123
  %v5192 = vunpack.c.l.b16 %v5124
  %v5193 = vunpack.c.h.b16 %v5124
  %v5194 = vunpack.c.l.b16 %v5125
  %v5195 = vunpack.c.h.b16 %v5125
  %v5196 = vunpack.c.l.b16 %v5126
  %v5197 = vunpack.c.h.b16 %v5126
  %v5198 = vunpack.c.l.b16 %v5127
  %v5199 = vunpack.c.h.b16 %v5127
  %v5200 = vunpack.c.l.b16 %v5128
  %v5201 = vunpack.c.h.b16 %v5128
  %v5202 = vunpack.c.l.b16 %v5129
  %v5203 = vunpack.c.h.b16 %v5129
  %v5204 = vunpack.c.l.b16 %v5130
  %v5205 = vunpack.c.h.b16 %v5130
  %v5206 = vpack.c.b16 %v5168, %v5166
  %v5207 = vpack.c.b16 %v5169, %v5167
  %v5208 = vpack.c.b16 %v5172, %v5170
  %v5209 = vpack.c.b16 %v5173, %v5171
  %v5210 = vpack.c.b16 %v5176, %v5174
  %v5211 = vpack.c.b16 %v5177, %v5175
  %v5212 = vpack.c.b16 %v5180, %v5178
  %v5213 = vpack.c.b16 %v5181, %v5179
  %v5214 = vpack.c.b16 %v5184, %v5182
  %v5215 = vpack.c.b16 %v5185, %v5183
  %v5216 = vpack.c.b16 %v5188, %v5186
  %v5217 = vpack.c.b16 %v5189, %v5187
  %v5218 = vpack.c.b16 %v5192, %v5190
  %v5219 = vpack.c.b16 %v5193, %v5191
  %v5220 = vpack.c.b16 %v5196, %v5194
  %v5221 = vpack.c.b16 %v5197, %v5195
  %v5222 = vpack.c.b16 %v5200, %v5198
  %v5223 = vpack.c.b16 %v5201, %v5199
  %v5224 = vpack.c.b16 %v5204, %v5202
  %v5225 = vpack.c.b16 %v5205, %v5203
  %v5247 = vsel %vm4757, %v5132, 0
  %5249 = vmatprep.subr.bf16.mxu0 %v5221
  %5250 = vmatpush1.bf16.msra.mxu0 %v5220
  %5251 = vmatprep.subr.bf16.mxu0 %v5219
  %5252 = vmatpush1.bf16.msra.mxu0 %v5218
  %5253 = vmatprep.subr.bf16.mxu0 %v5217
  %5254 = vmatpush1.bf16.msra.mxu0 %v5216
  %5255 = vmatprep.subr.bf16.mxu0 %v5215
  %5256 = vmatpush1.bf16.msra.mxu0 %v5214
  %5257 = vmatprep.subr.bf16.mxu0 %v5213
  %5258 = vmatpush1.bf16.msra.mxu0 %v5212
  %5259 = vmatprep.subr.bf16.mxu0 %v5211
  %5260 = vmatpush1.bf16.msra.mxu0 %v5210
  %5261 = vmatprep.subr.bf16.mxu0 %v5209
  %5262 = vmatpush1.bf16.msra.mxu0 %v5208
  %5263 = vmatprep.subr.bf16.mxu0 %v5207
  %5264 = vmatpush1.bf16.msra.mxu0 %v5206
  %5265 = vmatprep.subr.bf16.mxu0 0
  %5266 = vmatpush2.bf16.msra.mxu0 0
  %5267 = vmatprep.subr.bf16.mxu0 0
  %5268 = vmatpush2.bf16.msra.mxu0 0
  %5269 = vmatprep.subr.bf16.mxu0 0
  %5270 = vmatpush2.bf16.msra.mxu0 0
  %5271 = vmatprep.subr.bf16.mxu0 0
  %5272 = vmatpush2.bf16.msra.mxu0 0
  %5273 = vmatprep.subr.bf16.mxu0 0
  %5274 = vmatpush2.bf16.msra.mxu0 0
  %5275 = vmatprep.subr.bf16.mxu0 0
  %5276 = vmatpush2.bf16.msra.mxu0 0
  %5277 = vmatprep.subr.bf16.mxu0 %v5225
  %5278 = vmatpush2.bf16.msra.mxu0 %v5224
  %5279 = vmatprep.subr.bf16.mxu0 %v5223
  %5280 = vmatpush2.bf16.msra.mxu0 %v5222
  %5281 = vmatprep.mubr.bf16.mxu0 %v5247
  %5282 = vmatmul.mubr.bf16.gmra.mxu0 %v5131
  %v5283 = vpop.f32.mrf.mxu0
  %v5284 = vadd.f32 %v5139, %v5283
  %v5285 = vpop.f32.mrf.mxu0
  %v5286 = vadd.f32 %v5143, %v5285
  %v5287 = vpop.f32.mrf.mxu0
  %v5288 = vpop.f32.mrf.mxu0
  %5289 = vdwg.mxu0
  %v5290 = vld [vmem:[%s5 + $0x3c0] sm:$0xff]
  %v5291 = vld [vmem:[%s5 + $0x3c8] sm:$0xff]
  %v5292 = vld [vmem:[%s5 + $0x3d0] sm:$0xff]
  %v5293 = vld [vmem:[%s5 + $0x3d8] sm:$0xff]
  %v5294 = vld [vmem:[%s5 + $0x3e0] sm:$0xff]
  %v5295 = vld [vmem:[%s5 + $0x3e8] sm:$0xff]
  %v5296 = vld [vmem:[%s5 + $0x3f0] sm:$0xff]
  %v5297 = vld [vmem:[%s5 + $0x3f8] sm:$0xff]
  %v5298 = vld [vmem:[%s5 + $0x400] sm:$0xff]
  %v5299 = vld [vmem:[%s5 + $0x408] sm:$0xff]
  %v5300 = vld [vmem:[%s5 + $0x410] sm:$0xff]
  %v5301 = vld [vmem:[%s5 + $0x418] sm:$0xff]
  %v5302 = vld [vmem:[%s5 + $0x420] sm:$0xff]
  %v5303 = vld [vmem:[%s5 + $0x428] sm:$0xff]
  %v5304 = vld [vmem:[%s5 + $0x430] sm:$0xff]
  %v5305 = vld [vmem:[%s5 + $0x438] sm:$0xff]
  %v5306 = vld [vmem:[%s5 + $0x440] sm:$0xff]
  %v5307 = vld [vmem:[%s5 + $0x448] sm:$0xff]
  %v5308 = vld [vmem:[%s5 + $0x450] sm:$0xff]
  %v5309 = vld [vmem:[%s5 + $0x458] sm:$0xff]
  %v5310 = vpack.c.bf16 %v4751, %v4751
  %v5311 = vpack.c.bf16 %v4753, %v4753
  %s5312 = scalar_lea.vmem %s10, 4
  %v5313 = vld [vmem:[%s5312] ss:$8 sm:$0x3]
  %v5315 = vlaneseq
  %v5316 = vshrl.u32 %v5315, 7
  %v5317 = vsub.s32 0, %v5316
  %v5318 = vrot.slane %v5313, %v5317
  %v5319 = vlaneseq
  %v5320 = vshrl.u32 %v5319, 7
  %v5321 = vsub.s32 1, %v5320
  %v5322 = vrot.slane %v5313, %v5321
  %v5345 = vunpack.c.l.b16 %v5290
  %v5346 = vunpack.c.h.b16 %v5290
  %v5347 = vunpack.c.l.b16 %v5291
  %v5348 = vunpack.c.h.b16 %v5291
  %v5349 = vunpack.c.l.b16 %v5292
  %v5350 = vunpack.c.h.b16 %v5292
  %v5351 = vunpack.c.l.b16 %v5293
  %v5352 = vunpack.c.h.b16 %v5293
  %v5353 = vunpack.c.l.b16 %v5294
  %v5354 = vunpack.c.h.b16 %v5294
  %v5355 = vunpack.c.l.b16 %v5295
  %v5356 = vunpack.c.h.b16 %v5295
  %v5357 = vunpack.c.l.b16 %v5296
  %v5358 = vunpack.c.h.b16 %v5296
  %v5359 = vunpack.c.l.b16 %v5297
  %v5360 = vunpack.c.h.b16 %v5297
  %v5361 = vunpack.c.l.b16 %v5298
  %v5362 = vunpack.c.h.b16 %v5298
  %v5363 = vunpack.c.l.b16 %v5299
  %v5364 = vunpack.c.h.b16 %v5299
  %v5365 = vunpack.c.l.b16 %v5300
  %v5366 = vunpack.c.h.b16 %v5300
  %v5367 = vunpack.c.l.b16 %v5301
  %v5368 = vunpack.c.h.b16 %v5301
  %v5369 = vunpack.c.l.b16 %v5302
  %v5370 = vunpack.c.h.b16 %v5302
  %v5371 = vunpack.c.l.b16 %v5303
  %v5372 = vunpack.c.h.b16 %v5303
  %v5373 = vunpack.c.l.b16 %v5304
  %v5374 = vunpack.c.h.b16 %v5304
  %v5375 = vunpack.c.l.b16 %v5305
  %v5376 = vunpack.c.h.b16 %v5305
  %v5377 = vunpack.c.l.b16 %v5306
  %v5378 = vunpack.c.h.b16 %v5306
  %v5379 = vunpack.c.l.b16 %v5307
  %v5380 = vunpack.c.h.b16 %v5307
  %v5381 = vunpack.c.l.b16 %v5308
  %v5382 = vunpack.c.h.b16 %v5308
  %v5383 = vunpack.c.l.b16 %v5309
  %v5384 = vunpack.c.h.b16 %v5309
  %v5385 = vpack.c.b16 %v5347, %v5345
  %v5386 = vpack.c.b16 %v5348, %v5346
  %v5387 = vpack.c.b16 %v5351, %v5349
  %v5388 = vpack.c.b16 %v5352, %v5350
  %v5389 = vpack.c.b16 %v5355, %v5353
  %v5390 = vpack.c.b16 %v5356, %v5354
  %v5391 = vpack.c.b16 %v5359, %v5357
  %v5392 = vpack.c.b16 %v5360, %v5358
  %v5393 = vpack.c.b16 %v5363, %v5361
  %v5394 = vpack.c.b16 %v5364, %v5362
  %v5395 = vpack.c.b16 %v5367, %v5365
  %v5396 = vpack.c.b16 %v5368, %v5366
  %v5397 = vpack.c.b16 %v5371, %v5369
  %v5398 = vpack.c.b16 %v5372, %v5370
  %v5399 = vpack.c.b16 %v5375, %v5373
  %v5400 = vpack.c.b16 %v5376, %v5374
  %v5401 = vpack.c.b16 %v5379, %v5377
  %v5402 = vpack.c.b16 %v5380, %v5378
  %v5403 = vpack.c.b16 %v5383, %v5381
  %v5404 = vpack.c.b16 %v5384, %v5382
  %v5426 = vsel %vm4757, %v5311, 0
  %5428 = vmatprep.subr.bf16.mxu0 %v5400
  %5429 = vmatpush1.bf16.msra.mxu0 %v5399
  %5430 = vmatprep.subr.bf16.mxu0 %v5398
  %5431 = vmatpush1.bf16.msra.mxu0 %v5397
  %5432 = vmatprep.subr.bf16.mxu0 %v5396
  %5433 = vmatpush1.bf16.msra.mxu0 %v5395
  %5434 = vmatprep.subr.bf16.mxu0 %v5394
  %5435 = vmatpush1.bf16.msra.mxu0 %v5393
  %5436 = vmatprep.subr.bf16.mxu0 %v5392
  %5437 = vmatpush1.bf16.msra.mxu0 %v5391
  %5438 = vmatprep.subr.bf16.mxu0 %v5390
  %5439 = vmatpush1.bf16.msra.mxu0 %v5389
  %5440 = vmatprep.subr.bf16.mxu0 %v5388
  %5441 = vmatpush1.bf16.msra.mxu0 %v5387
  %5442 = vmatprep.subr.bf16.mxu0 %v5386
  %5443 = vmatpush1.bf16.msra.mxu0 %v5385
  %5444 = vmatprep.subr.bf16.mxu0 0
  %5445 = vmatpush2.bf16.msra.mxu0 0
  %5446 = vmatprep.subr.bf16.mxu0 0
  %5447 = vmatpush2.bf16.msra.mxu0 0
  %5448 = vmatprep.subr.bf16.mxu0 0
  %5449 = vmatpush2.bf16.msra.mxu0 0
  %5450 = vmatprep.subr.bf16.mxu0 0
  %5451 = vmatpush2.bf16.msra.mxu0 0
  %5452 = vmatprep.subr.bf16.mxu0 0
  %5453 = vmatpush2.bf16.msra.mxu0 0
  %5454 = vmatprep.subr.bf16.mxu0 0
  %5455 = vmatpush2.bf16.msra.mxu0 0
  %5456 = vmatprep.subr.bf16.mxu0 %v5404
  %5457 = vmatpush2.bf16.msra.mxu0 %v5403
  %5458 = vmatprep.subr.bf16.mxu0 %v5402
  %5459 = vmatpush2.bf16.msra.mxu0 %v5401
  %5460 = vmatprep.mubr.bf16.mxu0 %v5426
  %5461 = vmatmul.mubr.bf16.gmra.mxu0 %v5310
  %v5462 = vpop.f32.mrf.mxu0
  %v5463 = vadd.f32 %v5318, %v5462
  %v5464 = vpop.f32.mrf.mxu0
  %v5465 = vadd.f32 %v5322, %v5464
  %v5466 = vpop.f32.mrf.mxu0
  %v5467 = vpop.f32.mrf.mxu0
  %5468 = vdwg.mxu0
  %v5469 = vadd.f32 %v4416, %v5284
  %v5470 = vadd.f32 %v4418, %v5286
  %v5472 = vsel %vm3928, %v5463, 0
  %v5475 = vsel %vm3928, %v5465, 0
  %5477 = vmatprep.subr.mxu0 0.0
  %5478 = vmatpush1.msra.mxu0 0.0
  %5479 = vmatprep.subr.mxu0 0.0
  %5480 = vmatpush1.msra.mxu0 0.0
  %5481 = vmatprep.subr.mxu0 0.0
  %5482 = vmatpush1.msra.mxu0 0.0
  %5483 = vmatprep.subr.mxu0 0.0
  %5484 = vmatpush1.msra.mxu0 0.0
  %5485 = vmatprep.subr.mxu0 0.0
  %5486 = vmatpush1.msra.mxu0 0.0
  %5487 = vmatprep.subr.mxu0 0.0
  %5488 = vmatpush1.msra.mxu0 0.0
  %5489 = vmatprep.subr.mxu0 0.0
  %5490 = vmatpush1.msra.mxu0 0.0
  %5491 = vmatprep.subr.mxu0 0.0
  %5492 = vmatpush1.msra.mxu0 0.0
  %5493 = vmatprep.subr.mxu0 0.0
  %5494 = vmatpush1.msra.mxu0 0.0
  %5495 = vmatprep.subr.mxu0 0.0
  %5496 = vmatpush1.msra.mxu0 0.0
  %5497 = vmatprep.subr.mxu0 0.0
  %5498 = vmatpush1.msra.mxu0 0.0
  %5499 = vmatprep.subr.mxu0 0.0
  %5500 = vmatpush1.msra.mxu0 0.0
  %5501 = vmatprep.subr.mxu0 0.0
  %5502 = vmatpush1.msra.mxu0 0.0
  %5503 = vmatprep.subr.mxu0 0.0
  %5504 = vmatpush1.msra.mxu0 0.0
  %5505 = vmatprep.subr.mxu0 0.0
  %5506 = vmatpush1.msra.mxu0 0.0
  %5507 = vmatprep.subr.mxu0 %v5475
  %5508 = vmatpush1.msra.mxu0 %v5472
  %5509 = vmatprep.subr.mxu0 0.0
  %5510 = vmatpush2.msra.mxu0 0.0
  %5511 = vmatprep.subr.mxu0 0.0
  %5512 = vmatpush2.msra.mxu0 0.0
  %5513 = vmatprep.subr.mxu0 0.0
  %5514 = vmatpush2.msra.mxu0 0.0
  %5515 = vmatprep.subr.mxu0 0.0
  %5516 = vmatpush2.msra.mxu0 0.0
  %5517 = vmatprep.subr.mxu0 0.0
  %5518 = vmatpush2.msra.mxu0 0.0
  %5519 = vmatprep.subr.mxu0 0.0
  %5520 = vmatpush2.msra.mxu0 0.0
  %5521 = vmatprep.subr.mxu0 0.0
  %5522 = vmatpush2.msra.mxu0 0.0
  %5523 = vmatprep.subr.mxu0 0.0
  %5524 = vmatpush2.msra.mxu0 0.0
  %5525 = vmatprep.subr.mxu0 0.0
  %5526 = vmatpush2.msra.mxu0 0.0
  %5527 = vmatprep.subr.mxu0 0.0
  %5528 = vmatpush2.msra.mxu0 0.0
  %5529 = vmatprep.subr.mxu0 0.0
  %5530 = vmatpush2.msra.mxu0 0.0
  %5531 = vmatprep.subr.mxu0 0.0
  %5532 = vmatpush2.msra.mxu0 0.0
  %5533 = vmatprep.subr.mxu0 0.0
  %5534 = vmatpush2.msra.mxu0 0.0
  %5535 = vmatprep.subr.mxu0 0.0
  %5536 = vmatpush2.msra.mxu0 0.0
  %5537 = vmatprep.subr.mxu0 0.0
  %5538 = vmatpush2.msra.mxu0 0.0
  %5539 = vmatprep.subr.mxu0 0.0
  %5540 = vmatpush2.msra.mxu0 0.0
  %5541 = vmatprep.mubr.f32.mxu0 0.0
  %5542 = vmatmul.mubr.f32.gmra.mxu0 %v3926
  %v5543 = vpop.f32.mrf.mxu0
  %v5544 = vadd.f32 0.0, %v5543
  %v5545 = vpop.f32.mrf.mxu0
  %v5546 = vadd.f32 0.0, %v5545
  %5547 = vdwg.mxu0
  %v5548 = vadd.f32 %v5469, %v5544
  %v5549 = vadd.f32 %v5470, %v5546
  %v5550 = vld [vmem:[%s6] sm:$0xf]
  %v5551 = vld [vmem:[%s6 + $0x4] sm:$0xf]
  %v5552 = vld [vmem:[%s6 + $0x8] sm:$0xf]
  %v5553 = vld [vmem:[%s6 + $0xc] sm:$0xf]
  %v5554 = vld [vmem:[%s6 + $0x10] sm:$0xf]
  %v5555 = vld [vmem:[%s6 + $0x14] sm:$0xf]
  %v5556 = vld [vmem:[%s6 + $0x18] sm:$0xf]
  %v5557 = vld [vmem:[%s6 + $0x1c] sm:$0xf]
  %v5558 = vld [vmem:[%s6 + $0x20] sm:$0xf]
  %v5559 = vld [vmem:[%s6 + $0x24] sm:$0xf]
  %v5560 = vld [vmem:[%s6 + $0x28] sm:$0xf]
  %v5561 = vld [vmem:[%s6 + $0x2c] sm:$0xf]
  %v5562 = vld [vmem:[%s6 + $0x30] sm:$0xf]
  %v5563 = vld [vmem:[%s6 + $0x34] sm:$0xf]
  %v5564 = vld [vmem:[%s6 + $0x38] sm:$0xf]
  %v5565 = vld [vmem:[%s6 + $0x3c] sm:$0xf]
  %v5566 = vld [vmem:[%s6 + $0x40] sm:$0xf]
  %v5567 = vld [vmem:[%s6 + $0x44] sm:$0xf]
  %v5568 = vld [vmem:[%s6 + $0x48] sm:$0xf]
  %v5569 = vld [vmem:[%s6 + $0x4c] sm:$0xf]
  %v5570 = vpack.c.bf16 %v5548, %v5548
  %v5571 = vpack.c.bf16 %v5549, %v5549
  %v5572 = vld [vmem:[%s11] sm:$0x1]
  %v5573 = vlaneseq
  %v5574 = vshrl.u32 %v5573, 7
  %v5575 = vsub.s32 0, %v5574
  %v5576 = vrot.slane %v5572, %v5575
  %v5597 = vunpack.c.l.b16 %v5550
  %v5598 = vunpack.c.l.b16 %v5551
  %v5599 = vunpack.c.l.b16 %v5552
  %v5600 = vunpack.c.l.b16 %v5553
  %v5601 = vunpack.c.l.b16 %v5554
  %v5602 = vunpack.c.l.b16 %v5555
  %v5603 = vunpack.c.l.b16 %v5556
  %v5604 = vunpack.c.l.b16 %v5557
  %v5605 = vunpack.c.l.b16 %v5558
  %v5606 = vunpack.c.l.b16 %v5559
  %v5607 = vunpack.c.l.b16 %v5560
  %v5608 = vunpack.c.l.b16 %v5561
  %v5609 = vunpack.c.l.b16 %v5562
  %v5610 = vunpack.c.l.b16 %v5563
  %v5611 = vunpack.c.l.b16 %v5564
  %v5612 = vunpack.c.l.b16 %v5565
  %v5613 = vunpack.c.l.b16 %v5566
  %v5614 = vunpack.c.l.b16 %v5567
  %v5615 = vunpack.c.l.b16 %v5568
  %v5616 = vunpack.c.l.b16 %v5569
  %v5617 = vpack.c.b16 %v5598, %v5597
  %v5618 = vpack.c.b16 %v5600, %v5599
  %v5619 = vpack.c.b16 %v5602, %v5601
  %v5620 = vpack.c.b16 %v5604, %v5603
  %v5621 = vpack.c.b16 %v5606, %v5605
  %v5622 = vpack.c.b16 %v5608, %v5607
  %v5623 = vpack.c.b16 %v5610, %v5609
  %v5624 = vpack.c.b16 %v5612, %v5611
  %v5625 = vpack.c.b16 %v5614, %v5613
  %v5626 = vpack.c.b16 %v5616, %v5615
  %v5638 = vsel %vm4757, %v5571, 0
  %5640 = vmatprep.subr.bf16.mxu0 0
  %5641 = vmatpush1.bf16.msra.mxu0 %v5624
  %5642 = vmatprep.subr.bf16.mxu0 0
  %5643 = vmatpush1.bf16.msra.mxu0 %v5623
  %5644 = vmatprep.subr.bf16.mxu0 0
  %5645 = vmatpush1.bf16.msra.mxu0 %v5622
  %5646 = vmatprep.subr.bf16.mxu0 0
  %5647 = vmatpush1.bf16.msra.mxu0 %v5621
  %5648 = vmatprep.subr.bf16.mxu0 0
  %5649 = vmatpush1.bf16.msra.mxu0 %v5620
  %5650 = vmatprep.subr.bf16.mxu0 0
  %5651 = vmatpush1.bf16.msra.mxu0 %v5619
  %5652 = vmatprep.subr.bf16.mxu0 0
  %5653 = vmatpush1.bf16.msra.mxu0 %v5618
  %5654 = vmatprep.subr.bf16.mxu0 0
  %5655 = vmatpush1.bf16.msra.mxu0 %v5617
  %5656 = vmatprep.subr.bf16.mxu0 0
  %5657 = vmatpush2.bf16.msra.mxu0 0
  %5658 = vmatprep.subr.bf16.mxu0 0
  %5659 = vmatpush2.bf16.msra.mxu0 0
  %5660 = vmatprep.subr.bf16.mxu0 0
  %5661 = vmatpush2.bf16.msra.mxu0 0
  %5662 = vmatprep.subr.bf16.mxu0 0
  %5663 = vmatpush2.bf16.msra.mxu0 0
  %5664 = vmatprep.subr.bf16.mxu0 0
  %5665 = vmatpush2.bf16.msra.mxu0 0
  %5666 = vmatprep.subr.bf16.mxu0 0
  %5667 = vmatpush2.bf16.msra.mxu0 0
  %5668 = vmatprep.subr.bf16.mxu0 0
  %5669 = vmatpush2.bf16.msra.mxu0 %v5626
  %5670 = vmatprep.subr.bf16.mxu0 0
  %5671 = vmatpush2.bf16.msra.mxu0 %v5625
  %5672 = vmatprep.mubr.bf16.mxu0 %v5638
  %5673 = vmatmul.mubr.bf16.gmra.mxu0 %v5570
  %v5674 = vpop.f32.mrf.mxu0
  %v5675 = vadd.f32 %v5576, %v5674
  %v5676 = vpop.f32.mrf.mxu0
  %v5677 = vpop.f32.mrf.mxu0
  %v5678 = vpop.f32.mrf.mxu0
  %5679 = vdwg.mxu0
  %v5680 = vld [vmem:[%s6 + $0x50] sm:$0xf]
  %v5681 = vld [vmem:[%s6 + $0x54] sm:$0xf]
  %v5682 = vld [vmem:[%s6 + $0x58] sm:$0xf]
  %v5683 = vld [vmem:[%s6 + $0x5c] sm:$0xf]
  %v5684 = vld [vmem:[%s6 + $0x60] sm:$0xf]
  %v5685 = vld [vmem:[%s6 + $0x64] sm:$0xf]
  %v5686 = vld [vmem:[%s6 + $0x68] sm:$0xf]
  %v5687 = vld [vmem:[%s6 + $0x6c] sm:$0xf]
  %v5688 = vld [vmem:[%s6 + $0x70] sm:$0xf]
  %v5689 = vld [vmem:[%s6 + $0x74] sm:$0xf]
  %v5690 = vld [vmem:[%s6 + $0x78] sm:$0xf]
  %v5691 = vld [vmem:[%s6 + $0x7c] sm:$0xf]
  %v5692 = vld [vmem:[%s6 + $0x80] sm:$0xf]
  %v5693 = vld [vmem:[%s6 + $0x84] sm:$0xf]
  %v5694 = vld [vmem:[%s6 + $0x88] sm:$0xf]
  %v5695 = vld [vmem:[%s6 + $0x8c] sm:$0xf]
  %v5696 = vld [vmem:[%s6 + $0x90] sm:$0xf]
  %v5697 = vld [vmem:[%s6 + $0x94] sm:$0xf]
  %v5698 = vld [vmem:[%s6 + $0x98] sm:$0xf]
  %v5699 = vld [vmem:[%s6 + $0x9c] sm:$0xf]
  %v5700 = vld [vmem:[%s11 + $0x1] sm:$0x1]
  %v5701 = vlaneseq
  %v5702 = vshrl.u32 %v5701, 7
  %v5703 = vsub.s32 0, %v5702
  %v5704 = vrot.slane %v5700, %v5703
  %v5725 = vunpack.c.l.b16 %v5680
  %v5726 = vunpack.c.l.b16 %v5681
  %v5727 = vunpack.c.l.b16 %v5682
  %v5728 = vunpack.c.l.b16 %v5683
  %v5729 = vunpack.c.l.b16 %v5684
  %v5730 = vunpack.c.l.b16 %v5685
  %v5731 = vunpack.c.l.b16 %v5686
  %v5732 = vunpack.c.l.b16 %v5687
  %v5733 = vunpack.c.l.b16 %v5688
  %v5734 = vunpack.c.l.b16 %v5689
  %v5735 = vunpack.c.l.b16 %v5690
  %v5736 = vunpack.c.l.b16 %v5691
  %v5737 = vunpack.c.l.b16 %v5692
  %v5738 = vunpack.c.l.b16 %v5693
  %v5739 = vunpack.c.l.b16 %v5694
  %v5740 = vunpack.c.l.b16 %v5695
  %v5741 = vunpack.c.l.b16 %v5696
  %v5742 = vunpack.c.l.b16 %v5697
  %v5743 = vunpack.c.l.b16 %v5698
  %v5744 = vunpack.c.l.b16 %v5699
  %v5745 = vpack.c.b16 %v5726, %v5725
  %v5746 = vpack.c.b16 %v5728, %v5727
  %v5747 = vpack.c.b16 %v5730, %v5729
  %v5748 = vpack.c.b16 %v5732, %v5731
  %v5749 = vpack.c.b16 %v5734, %v5733
  %v5750 = vpack.c.b16 %v5736, %v5735
  %v5751 = vpack.c.b16 %v5738, %v5737
  %v5752 = vpack.c.b16 %v5740, %v5739
  %v5753 = vpack.c.b16 %v5742, %v5741
  %v5754 = vpack.c.b16 %v5744, %v5743
  %5765 = vmatprep.subr.bf16.mxu0 0
  %5766 = vmatpush1.bf16.msra.mxu0 %v5752
  %5767 = vmatprep.subr.bf16.mxu0 0
  %5768 = vmatpush1.bf16.msra.mxu0 %v5751
  %5769 = vmatprep.subr.bf16.mxu0 0
  %5770 = vmatpush1.bf16.msra.mxu0 %v5750
  %5771 = vmatprep.subr.bf16.mxu0 0
  %5772 = vmatpush1.bf16.msra.mxu0 %v5749
  %5773 = vmatprep.subr.bf16.mxu0 0
  %5774 = vmatpush1.bf16.msra.mxu0 %v5748
  %5775 = vmatprep.subr.bf16.mxu0 0
  %5776 = vmatpush1.bf16.msra.mxu0 %v5747
  %5777 = vmatprep.subr.bf16.mxu0 0
  %5778 = vmatpush1.bf16.msra.mxu0 %v5746
  %5779 = vmatprep.subr.bf16.mxu0 0
  %5780 = vmatpush1.bf16.msra.mxu0 %v5745
  %5781 = vmatprep.subr.bf16.mxu0 0
  %5782 = vmatpush2.bf16.msra.mxu0 0
  %5783 = vmatprep.subr.bf16.mxu0 0
  %5784 = vmatpush2.bf16.msra.mxu0 0
  %5785 = vmatprep.subr.bf16.mxu0 0
  %5786 = vmatpush2.bf16.msra.mxu0 0
  %5787 = vmatprep.subr.bf16.mxu0 0
  %5788 = vmatpush2.bf16.msra.mxu0 0
  %5789 = vmatprep.subr.bf16.mxu0 0
  %5790 = vmatpush2.bf16.msra.mxu0 0
  %5791 = vmatprep.subr.bf16.mxu0 0
  %5792 = vmatpush2.bf16.msra.mxu0 0
  %5793 = vmatprep.subr.bf16.mxu0 0
  %5794 = vmatpush2.bf16.msra.mxu0 %v5754
  %5795 = vmatprep.subr.bf16.mxu0 0
  %5796 = vmatpush2.bf16.msra.mxu0 %v5753
  %5797 = vmatprep.mubr.bf16.mxu0 %v5426
  %5798 = vmatmul.mubr.bf16.gmra.mxu0 %v5310
  %v5799 = vpop.f32.mrf.mxu0
  %v5800 = vadd.f32 %v5704, %v5799
  %v5801 = vpop.f32.mrf.mxu0
  %v5802 = vpop.f32.mrf.mxu0
  %v5803 = vpop.f32.mrf.mxu0
  %5804 = vdwg.mxu0
  %vm5805 = vcmask 654336
  %v5807 = vsel %vm5805, %v5675, 0
  %5809 = vmatprep.subr.mxu0 0.0
  %5810 = vmatpush1.msra.mxu0 0.0
  %5811 = vmatprep.subr.mxu0 0.0
  %5812 = vmatpush1.msra.mxu0 0.0
  %5813 = vmatprep.subr.mxu0 0.0
  %5814 = vmatpush1.msra.mxu0 0.0
  %5815 = vmatprep.subr.mxu0 0.0
  %5816 = vmatpush1.msra.mxu0 0.0
  %5817 = vmatprep.subr.mxu0 0.0
  %5818 = vmatpush1.msra.mxu0 0.0
  %5819 = vmatprep.subr.mxu0 0.0
  %5820 = vmatpush1.msra.mxu0 0.0
  %5821 = vmatprep.subr.mxu0 0.0
  %5822 = vmatpush1.msra.mxu0 %v1552
  %5823 = vmatprep.subr.mxu0 0.0
  %5824 = vmatpush1.msra.mxu0 %v1551
  %5825 = vmatprep.subr.mxu0 0.0
  %5826 = vmatpush1.msra.mxu0 %v1550
  %5827 = vmatprep.subr.mxu0 0.0
  %5828 = vmatpush1.msra.mxu0 %v1549
  %5829 = vmatprep.subr.mxu0 0.0
  %5830 = vmatpush1.msra.mxu0 %v1548
  %5831 = vmatprep.subr.mxu0 0.0
  %5832 = vmatpush1.msra.mxu0 %v1547
  %5833 = vmatprep.subr.mxu0 0.0
  %5834 = vmatpush1.msra.mxu0 %v1546
  %5835 = vmatprep.subr.mxu0 0.0
  %5836 = vmatpush1.msra.mxu0 %v1545
  %5837 = vmatprep.subr.mxu0 0.0
  %5838 = vmatpush1.msra.mxu0 %v1544
  %5839 = vmatprep.subr.mxu0 0.0
  %5840 = vmatpush1.msra.mxu0 %v1543
  %5841 = vmatprep.subr.mxu0 0.0
  %5842 = vmatpush2.msra.mxu0 0.0
  %5843 = vmatprep.subr.mxu0 0.0
  %5844 = vmatpush2.msra.mxu0 0.0
  %5845 = vmatprep.subr.mxu0 0.0
  %5846 = vmatpush2.msra.mxu0 0.0
  %5847 = vmatprep.subr.mxu0 0.0
  %5848 = vmatpush2.msra.mxu0 0.0
  %5849 = vmatprep.subr.mxu0 0.0
  %5850 = vmatpush2.msra.mxu0 0.0
  %5851 = vmatprep.subr.mxu0 0.0
  %5852 = vmatpush2.msra.mxu0 0.0
  %5853 = vmatprep.subr.mxu0 0.0
  %5854 = vmatpush2.msra.mxu0 0.0
  %5855 = vmatprep.subr.mxu0 0.0
  %5856 = vmatpush2.msra.mxu0 0.0
  %5857 = vmatprep.subr.mxu0 0.0
  %5858 = vmatpush2.msra.mxu0 0.0
  %5859 = vmatprep.subr.mxu0 0.0
  %5860 = vmatpush2.msra.mxu0 0.0
  %5861 = vmatprep.subr.mxu0 0.0
  %5862 = vmatpush2.msra.mxu0 0.0
  %5863 = vmatprep.subr.mxu0 0.0
  %5864 = vmatpush2.msra.mxu0 0.0
  %5865 = vmatprep.subr.mxu0 0.0
  %5866 = vmatpush2.msra.mxu0 0.0
  %5867 = vmatprep.subr.mxu0 0.0
  %5868 = vmatpush2.msra.mxu0 0.0
  %5869 = vmatprep.subr.mxu0 0.0
  %5870 = vmatpush2.msra.mxu0 0.0
  %5871 = vmatprep.subr.mxu0 0.0
  %5872 = vmatpush2.msra.mxu0 0.0
  %5873 = vmatprep.mubr.f32.mxu0 0.0
  %5874 = vmatmul.mubr.f32.gmra.mxu0 %v5807
  %v5875 = vpop.f32.mrf.mxu0
  %v5876 = vadd.f32 0.0, %v5875
  %v5877 = vpop.f32.mrf.mxu0
  %5878 = vdwg.mxu0
  %v5879 = vsub.f32 %v5675, %v5876
  %v5880 = vmul.f32 %v5879, %v5879
  %v5882 = vsel %vm5805, %v5880, 0
  %5884 = vmatprep.subr.mxu0 0.0
  %5885 = vmatpush1.msra.mxu0 0.0
  %5886 = vmatprep.subr.mxu0 0.0
  %5887 = vmatpush1.msra.mxu0 0.0
  %5888 = vmatprep.subr.mxu0 0.0
  %5889 = vmatpush1.msra.mxu0 0.0
  %5890 = vmatprep.subr.mxu0 0.0
  %5891 = vmatpush1.msra.mxu0 0.0
  %5892 = vmatprep.subr.mxu0 0.0
  %5893 = vmatpush1.msra.mxu0 0.0
  %5894 = vmatprep.subr.mxu0 0.0
  %5895 = vmatpush1.msra.mxu0 0.0
  %5896 = vmatprep.subr.mxu0 0.0
  %5897 = vmatpush1.msra.mxu0 %v1552
  %5898 = vmatprep.subr.mxu0 0.0
  %5899 = vmatpush1.msra.mxu0 %v1551
  %5900 = vmatprep.subr.mxu0 0.0
  %5901 = vmatpush1.msra.mxu0 %v1550
  %5902 = vmatprep.subr.mxu0 0.0
  %5903 = vmatpush1.msra.mxu0 %v1549
  %5904 = vmatprep.subr.mxu0 0.0
  %5905 = vmatpush1.msra.mxu0 %v1548
  %5906 = vmatprep.subr.mxu0 0.0
  %5907 = vmatpush1.msra.mxu0 %v1547
  %5908 = vmatprep.subr.mxu0 0.0
  %5909 = vmatpush1.msra.mxu0 %v1546
  %5910 = vmatprep.subr.mxu0 0.0
  %5911 = vmatpush1.msra.mxu0 %v1545
  %5912 = vmatprep.subr.mxu0 0.0
  %5913 = vmatpush1.msra.mxu0 %v1544
  %5914 = vmatprep.subr.mxu0 0.0
  %5915 = vmatpush1.msra.mxu0 %v1543
  %5916 = vmatprep.subr.mxu0 0.0
  %5917 = vmatpush2.msra.mxu0 0.0
  %5918 = vmatprep.subr.mxu0 0.0
  %5919 = vmatpush2.msra.mxu0 0.0
  %5920 = vmatprep.subr.mxu0 0.0
  %5921 = vmatpush2.msra.mxu0 0.0
  %5922 = vmatprep.subr.mxu0 0.0
  %5923 = vmatpush2.msra.mxu0 0.0
  %5924 = vmatprep.subr.mxu0 0.0
  %5925 = vmatpush2.msra.mxu0 0.0
  %5926 = vmatprep.subr.mxu0 0.0
  %5927 = vmatpush2.msra.mxu0 0.0
  %5928 = vmatprep.subr.mxu0 0.0
  %5929 = vmatpush2.msra.mxu0 0.0
  %5930 = vmatprep.subr.mxu0 0.0
  %5931 = vmatpush2.msra.mxu0 0.0
  %5932 = vmatprep.subr.mxu0 0.0
  %5933 = vmatpush2.msra.mxu0 0.0
  %5934 = vmatprep.subr.mxu0 0.0
  %5935 = vmatpush2.msra.mxu0 0.0
  %5936 = vmatprep.subr.mxu0 0.0
  %5937 = vmatpush2.msra.mxu0 0.0
  %5938 = vmatprep.subr.mxu0 0.0
  %5939 = vmatpush2.msra.mxu0 0.0
  %5940 = vmatprep.subr.mxu0 0.0
  %5941 = vmatpush2.msra.mxu0 0.0
  %5942 = vmatprep.subr.mxu0 0.0
  %5943 = vmatpush2.msra.mxu0 0.0
  %5944 = vmatprep.subr.mxu0 0.0
  %5945 = vmatpush2.msra.mxu0 0.0
  %5946 = vmatprep.subr.mxu0 0.0
  %5947 = vmatpush2.msra.mxu0 0.0
  %5948 = vmatprep.mubr.f32.mxu0 0.0
  %5949 = vmatmul.mubr.f32.gmra.mxu0 %v5882
  %v5950 = vpop.f32.mrf.mxu0
  %v5951 = vadd.f32 1e-05, %v5950
  %v5952 = vpop.f32.mrf.mxu0
  %5953 = vdwg.mxu0
  %v5954 = vrsqrt.pop %v5951
  %v5955 = vmul.f32 %v5879, %v5954
  %v5956 = vld [vmem:[%s6 + $0xa0] sm:$0xf]
  %v5957 = vld [vmem:[%s6 + $0xa4] sm:$0xf]
  %v5958 = vld [vmem:[%s6 + $0xa8] sm:$0xf]
  %v5959 = vld [vmem:[%s6 + $0xac] sm:$0xf]
  %v5960 = vld [vmem:[%s6 + $0xb0] sm:$0xf]
  %v5961 = vld [vmem:[%s6 + $0xb4] sm:$0xf]
  %v5962 = vld [vmem:[%s6 + $0xb8] sm:$0xf]
  %v5963 = vld [vmem:[%s6 + $0xbc] sm:$0xf]
  %v5964 = vld [vmem:[%s6 + $0xc0] sm:$0xf]
  %v5965 = vld [vmem:[%s6 + $0xc4] sm:$0xf]
  %v5966 = vpack.c.bf16 %v5955, %v5955
  %v5967 = vld [vmem:[%s11 + $0x2] sm:$0x1]
  %v5968 = vlaneseq
  %v5969 = vshrl.u32 %v5968, 7
  %v5970 = vsub.s32 0, %v5969
  %v5971 = vrot.slane %v5967, %v5970
  %v5982 = vunpack.c.l.b16 %v5956
  %v5983 = vunpack.c.l.b16 %v5957
  %v5984 = vunpack.c.l.b16 %v5958
  %v5985 = vunpack.c.l.b16 %v5959
  %v5986 = vunpack.c.l.b16 %v5960
  %v5987 = vunpack.c.l.b16 %v5961
  %v5988 = vunpack.c.l.b16 %v5962
  %v5989 = vunpack.c.l.b16 %v5963
  %v5990 = vunpack.c.l.b16 %v5964
  %v5991 = vunpack.c.l.b16 %v5965
  %v5992 = vpack.c.b16 %v5983, %v5982
  %v5993 = vpack.c.b16 %v5985, %v5984
  %v5994 = vpack.c.b16 %v5987, %v5986
  %v5995 = vpack.c.b16 %v5989, %v5988
  %v5996 = vpack.c.b16 %v5991, %v5990
  %v6003 = vsel %vm5805, %v5966, 0
  %6005 = vmatprep.subr.bf16.mxu0 0
  %6006 = vmatpush1.bf16.msra.mxu0 0
  %6007 = vmatprep.subr.bf16.mxu0 0
  %6008 = vmatpush1.bf16.msra.mxu0 0
  %6009 = vmatprep.subr.bf16.mxu0 0
  %6010 = vmatpush1.bf16.msra.mxu0 0
  %6011 = vmatprep.subr.bf16.mxu0 0
  %6012 = vmatpush1.bf16.msra.mxu0 %v5996
  %6013 = vmatprep.subr.bf16.mxu0 0
  %6014 = vmatpush1.bf16.msra.mxu0 %v5995
  %6015 = vmatprep.subr.bf16.mxu0 0
  %6016 = vmatpush1.bf16.msra.mxu0 %v5994
  %6017 = vmatprep.subr.bf16.mxu0 0
  %6018 = vmatpush1.bf16.msra.mxu0 %v5993
  %6019 = vmatprep.subr.bf16.mxu0 0
  %6020 = vmatpush1.bf16.msra.mxu0 %v5992
  %6021 = vmatprep.subr.bf16.mxu0 0
  %6022 = vmatpush2.bf16.msra.mxu0 0
  %6023 = vmatprep.subr.bf16.mxu0 0
  %6024 = vmatpush2.bf16.msra.mxu0 0
  %6025 = vmatprep.subr.bf16.mxu0 0
  %6026 = vmatpush2.bf16.msra.mxu0 0
  %6027 = vmatprep.subr.bf16.mxu0 0
  %6028 = vmatpush2.bf16.msra.mxu0 0
  %6029 = vmatprep.subr.bf16.mxu0 0
  %6030 = vmatpush2.bf16.msra.mxu0 0
  %6031 = vmatprep.subr.bf16.mxu0 0
  %6032 = vmatpush2.bf16.msra.mxu0 0
  %6033 = vmatprep.subr.bf16.mxu0 0
  %6034 = vmatpush2.bf16.msra.mxu0 0
  %6035 = vmatprep.subr.bf16.mxu0 0
  %6036 = vmatpush2.bf16.msra.mxu0 0
  %6037 = vmatprep.mubr.bf16.mxu0 0
  %6038 = vmatmul.mubr.bf16.gmra.mxu0 %v6003
  %v6039 = vpop.f32.mrf.mxu0
  %v6040 = vadd.f32 %v5971, %v6039
  %v6041 = vpop.f32.mrf.mxu0
  %v6042 = vpop.f32.mrf.mxu0
  %v6043 = vpop.f32.mrf.mxu0
  %6044 = vdwg.mxu0
  %v6045 = vmul.f32 %v6040, %v6040
  %v6046 = vmul.f32 %v6040, %v6045
  %v6047 = vmul.f32 %v6046, 0.044715
  %v6048 = vadd.f32 %v6040, %v6047
  %v6049 = vmul.f32 %v6048, 0.7978846
  %v6050 = vtanh.pop %v6049
  %v6051 = vadd.f32 %v6050, 1.0
  %v6052 = vmul.f32 %v6051, 0.5
  %v6053 = vmul.f32 %v6040, %v6052
  %v6054 = vld [vmem:[%s6 + $0xc8] sm:$0xf]
  %v6055 = vld [vmem:[%s6 + $0xcc] sm:$0xf]
  %v6056 = vld [vmem:[%s6 + $0xd0] sm:$0xf]
  %v6057 = vld [vmem:[%s6 + $0xd4] sm:$0xf]
  %v6058 = vld [vmem:[%s6 + $0xd8] sm:$0xf]
  %v6059 = vld [vmem:[%s6 + $0xdc] sm:$0xf]
  %v6060 = vld [vmem:[%s6 + $0xe0] sm:$0xf]
  %v6061 = vld [vmem:[%s6 + $0xe4] sm:$0xf]
  %v6062 = vld [vmem:[%s6 + $0xe8] sm:$0xf]
  %v6063 = vld [vmem:[%s6 + $0xec] sm:$0xf]
  %v6064 = vpack.c.bf16 %v6053, %v6053
  %v6065 = vld [vmem:[%s11 + $0x3] sm:$0x1]
  %v6066 = vlaneseq
  %v6067 = vshrl.u32 %v6066, 7
  %v6068 = vsub.s32 0, %v6067
  %v6069 = vrot.slane %v6065, %v6068
  %v6080 = vunpack.c.l.b16 %v6054
  %v6081 = vunpack.c.l.b16 %v6055
  %v6082 = vunpack.c.l.b16 %v6056
  %v6083 = vunpack.c.l.b16 %v6057
  %v6084 = vunpack.c.l.b16 %v6058
  %v6085 = vunpack.c.l.b16 %v6059
  %v6086 = vunpack.c.l.b16 %v6060
  %v6087 = vunpack.c.l.b16 %v6061
  %v6088 = vunpack.c.l.b16 %v6062
  %v6089 = vunpack.c.l.b16 %v6063
  %v6090 = vpack.c.b16 %v6081, %v6080
  %v6091 = vpack.c.b16 %v6083, %v6082
  %v6092 = vpack.c.b16 %v6085, %v6084
  %v6093 = vpack.c.b16 %v6087, %v6086
  %v6094 = vpack.c.b16 %v6089, %v6088
  %v6101 = vsel %vm5805, %v6064, 0
  %6103 = vmatprep.subr.bf16.mxu0 0
  %6104 = vmatpush1.bf16.msra.mxu0 0
  %6105 = vmatprep.subr.bf16.mxu0 0
  %6106 = vmatpush1.bf16.msra.mxu0 0
  %6107 = vmatprep.subr.bf16.mxu0 0
  %6108 = vmatpush1.bf16.msra.mxu0 0
  %6109 = vmatprep.subr.bf16.mxu0 0
  %6110 = vmatpush1.bf16.msra.mxu0 %v6094
  %6111 = vmatprep.subr.bf16.mxu0 0
  %6112 = vmatpush1.bf16.msra.mxu0 %v6093
  %6113 = vmatprep.subr.bf16.mxu0 0
  %6114 = vmatpush1.bf16.msra.mxu0 %v6092
  %6115 = vmatprep.subr.bf16.mxu0 0
  %6116 = vmatpush1.bf16.msra.mxu0 %v6091
  %6117 = vmatprep.subr.bf16.mxu0 0
  %6118 = vmatpush1.bf16.msra.mxu0 %v6090
  %6119 = vmatprep.subr.bf16.mxu0 0
  %6120 = vmatpush2.bf16.msra.mxu0 0
  %6121 = vmatprep.subr.bf16.mxu0 0
  %6122 = vmatpush2.bf16.msra.mxu0 0
  %6123 = vmatprep.subr.bf16.mxu0 0
  %6124 = vmatpush2.bf16.msra.mxu0 0
  %6125 = vmatprep.subr.bf16.mxu0 0
  %6126 = vmatpush2.bf16.msra.mxu0 0
  %6127 = vmatprep.subr.bf16.mxu0 0
  %6128 = vmatpush2.bf16.msra.mxu0 0
  %6129 = vmatprep.subr.bf16.mxu0 0
  %6130 = vmatpush2.bf16.msra.mxu0 0
  %6131 = vmatprep.subr.bf16.mxu0 0
  %6132 = vmatpush2.bf16.msra.mxu0 0
  %6133 = vmatprep.subr.bf16.mxu0 0
  %6134 = vmatpush2.bf16.msra.mxu0 0
  %6135 = vmatprep.mubr.bf16.mxu0 0
  %6136 = vmatmul.mubr.bf16.gmra.mxu0 %v6101
  %v6137 = vpop.f32.mrf.mxu0
  %v6138 = vadd.f32 %v6069, %v6137
  %v6139 = vpop.f32.mrf.mxu0
  %v6140 = vpop.f32.mrf.mxu0
  %v6141 = vpop.f32.mrf.mxu0
  %6142 = vdwg.mxu0
  %v6143 = vld [vmem:[%s6 + $0xf0] sm:$0xf]
  %v6144 = vld [vmem:[%s6 + $0xf4] sm:$0xf]
  %v6145 = vld [vmem:[%s6 + $0xf8] sm:$0xf]
  %v6146 = vld [vmem:[%s6 + $0xfc] sm:$0xf]
  %v6147 = vld [vmem:[%s6 + $0x100] sm:$0xf]
  %v6148 = vld [vmem:[%s6 + $0x104] sm:$0xf]
  %v6149 = vld [vmem:[%s6 + $0x108] sm:$0xf]
  %v6150 = vld [vmem:[%s6 + $0x10c] sm:$0xf]
  %v6151 = vld [vmem:[%s6 + $0x110] sm:$0xf]
  %v6152 = vld [vmem:[%s6 + $0x114] sm:$0xf]
  %v6153 = vpack.c.bf16 %v5800, %v5800
  %v6154 = vld [vmem:[%s11 + $0x4] sm:$0x1]
  %v6155 = vlaneseq
  %v6156 = vshrl.u32 %v6155, 7
  %v6157 = vsub.s32 0, %v6156
  %v6158 = vrot.slane %v6154, %v6157
  %v6169 = vunpack.c.l.b16 %v6143
  %v6170 = vunpack.c.l.b16 %v6144
  %v6171 = vunpack.c.l.b16 %v6145
  %v6172 = vunpack.c.l.b16 %v6146
  %v6173 = vunpack.c.l.b16 %v6147
  %v6174 = vunpack.c.l.b16 %v6148
  %v6175 = vunpack.c.l.b16 %v6149
  %v6176 = vunpack.c.l.b16 %v6150
  %v6177 = vunpack.c.l.b16 %v6151
  %v6178 = vunpack.c.l.b16 %v6152
  %v6179 = vpack.c.b16 %v6170, %v6169
  %v6180 = vpack.c.b16 %v6172, %v6171
  %v6181 = vpack.c.b16 %v6174, %v6173
  %v6182 = vpack.c.b16 %v6176, %v6175
  %v6183 = vpack.c.b16 %v6178, %v6177
  %v6190 = vsel %vm5805, %v6153, 0
  %6192 = vmatprep.subr.bf16.mxu0 0
  %6193 = vmatpush1.bf16.msra.mxu0 0
  %6194 = vmatprep.subr.bf16.mxu0 0
  %6195 = vmatpush1.bf16.msra.mxu0 0
  %6196 = vmatprep.subr.bf16.mxu0 0
  %6197 = vmatpush1.bf16.msra.mxu0 0
  %6198 = vmatprep.subr.bf16.mxu0 0
  %6199 = vmatpush1.bf16.msra.mxu0 %v6183
  %6200 = vmatprep.subr.bf16.mxu0 0
  %6201 = vmatpush1.bf16.msra.mxu0 %v6182
  %6202 = vmatprep.subr.bf16.mxu0 0
  %6203 = vmatpush1.bf16.msra.mxu0 %v6181
  %6204 = vmatprep.subr.bf16.mxu0 0
  %6205 = vmatpush1.bf16.msra.mxu0 %v6180
  %6206 = vmatprep.subr.bf16.mxu0 0
  %6207 = vmatpush1.bf16.msra.mxu0 %v6179
  %6208 = vmatprep.subr.bf16.mxu0 0
  %6209 = vmatpush2.bf16.msra.mxu0 0
  %6210 = vmatprep.subr.bf16.mxu0 0
  %6211 = vmatpush2.bf16.msra.mxu0 0
  %6212 = vmatprep.subr.bf16.mxu0 0
  %6213 = vmatpush2.bf16.msra.mxu0 0
  %6214 = vmatprep.subr.bf16.mxu0 0
  %6215 = vmatpush2.bf16.msra.mxu0 0
  %6216 = vmatprep.subr.bf16.mxu0 0
  %6217 = vmatpush2.bf16.msra.mxu0 0
  %6218 = vmatprep.subr.bf16.mxu0 0
  %6219 = vmatpush2.bf16.msra.mxu0 0
  %6220 = vmatprep.subr.bf16.mxu0 0
  %6221 = vmatpush2.bf16.msra.mxu0 0
  %6222 = vmatprep.subr.bf16.mxu0 0
  %6223 = vmatpush2.bf16.msra.mxu0 0
  %6224 = vmatprep.mubr.bf16.mxu0 0
  %6225 = vmatmul.mubr.bf16.gmra.mxu0 %v6190
  %v6226 = vpop.f32.mrf.mxu0
  %v6227 = vadd.f32 %v6158, %v6226
  %v6228 = vpop.f32.mrf.mxu0
  %v6229 = vpop.f32.mrf.mxu0
  %v6230 = vpop.f32.mrf.mxu0
  %6231 = vdwg.mxu0
  %v6232 = vadd.f32 %v5675, %v6138
  %v6234 = vsel %vm3928, %v6227, 0
  %6236 = vmatprep.subr.mxu0 0.0
  %6237 = vmatpush1.msra.mxu0 0.0
  %6238 = vmatprep.subr.mxu0 0.0
  %6239 = vmatpush1.msra.mxu0 0.0
  %6240 = vmatprep.subr.mxu0 0.0
  %6241 = vmatpush1.msra.mxu0 0.0
  %6242 = vmatprep.subr.mxu0 0.0
  %6243 = vmatpush1.msra.mxu0 0.0
  %6244 = vmatprep.subr.mxu0 0.0
  %6245 = vmatpush1.msra.mxu0 0.0
  %6246 = vmatprep.subr.mxu0 0.0
  %6247 = vmatpush1.msra.mxu0 0.0
  %6248 = vmatprep.subr.mxu0 0.0
  %6249 = vmatpush1.msra.mxu0 0.0
  %6250 = vmatprep.subr.mxu0 0.0
  %6251 = vmatpush1.msra.mxu0 0.0
  %6252 = vmatprep.subr.mxu0 0.0
  %6253 = vmatpush1.msra.mxu0 0.0
  %6254 = vmatprep.subr.mxu0 0.0
  %6255 = vmatpush1.msra.mxu0 0.0
  %6256 = vmatprep.subr.mxu0 0.0
  %6257 = vmatpush1.msra.mxu0 0.0
  %6258 = vmatprep.subr.mxu0 0.0
  %6259 = vmatpush1.msra.mxu0 0.0
  %6260 = vmatprep.subr.mxu0 0.0
  %6261 = vmatpush1.msra.mxu0 0.0
  %6262 = vmatprep.subr.mxu0 0.0
  %6263 = vmatpush1.msra.mxu0 0.0
  %6264 = vmatprep.subr.mxu0 0.0
  %6265 = vmatpush1.msra.mxu0 0.0
  %6266 = vmatprep.subr.mxu0 0.0
  %6267 = vmatpush1.msra.mxu0 %v6234
  %6268 = vmatprep.subr.mxu0 0.0
  %6269 = vmatpush2.msra.mxu0 0.0
  %6270 = vmatprep.subr.mxu0 0.0
  %6271 = vmatpush2.msra.mxu0 0.0
  %6272 = vmatprep.subr.mxu0 0.0
  %6273 = vmatpush2.msra.mxu0 0.0
  %6274 = vmatprep.subr.mxu0 0.0
  %6275 = vmatpush2.msra.mxu0 0.0
  %6276 = vmatprep.subr.mxu0 0.0
  %6277 = vmatpush2.msra.mxu0 0.0
  %6278 = vmatprep.subr.mxu0 0.0
  %6279 = vmatpush2.msra.mxu0 0.0
  %6280 = vmatprep.subr.mxu0 0.0
  %6281 = vmatpush2.msra.mxu0 0.0
  %6282 = vmatprep.subr.mxu0 0.0
  %6283 = vmatpush2.msra.mxu0 0.0
  %6284 = vmatprep.subr.mxu0 0.0
  %6285 = vmatpush2.msra.mxu0 0.0
  %6286 = vmatprep.subr.mxu0 0.0
  %6287 = vmatpush2.msra.mxu0 0.0
  %6288 = vmatprep.subr.mxu0 0.0
  %6289 = vmatpush2.msra.mxu0 0.0
  %6290 = vmatprep.subr.mxu0 0.0
  %6291 = vmatpush2.msra.mxu0 0.0
  %6292 = vmatprep.subr.mxu0 0.0
  %6293 = vmatpush2.msra.mxu0 0.0
  %6294 = vmatprep.subr.mxu0 0.0
  %6295 = vmatpush2.msra.mxu0 0.0
  %6296 = vmatprep.subr.mxu0 0.0
  %6297 = vmatpush2.msra.mxu0 0.0
  %6298 = vmatprep.subr.mxu0 0.0
  %6299 = vmatpush2.msra.mxu0 0.0
  %6300 = vmatprep.mubr.f32.mxu0 0.0
  %6301 = vmatmul.mubr.f32.gmra.mxu0 %v3926
  %v6302 = vpop.f32.mrf.mxu0
  %v6303 = vadd.f32 0.0, %v6302
  %v6304 = vpop.f32.mrf.mxu0
  %6305 = vdwg.mxu0
  %v6306 = vadd.f32 %v6232, %v6303
  %v6307 = vld [vmem:[%s6 + $0x190] sm:$0xf]
  %v6308 = vld [vmem:[%s6 + $0x194] sm:$0xf]
  %v6309 = vld [vmem:[%s6 + $0x198] sm:$0xf]
  %v6310 = vld [vmem:[%s6 + $0x19c] sm:$0xf]
  %v6311 = vld [vmem:[%s6 + $0x1a0] sm:$0xf]
  %v6312 = vld [vmem:[%s6 + $0x1a4] sm:$0xf]
  %v6313 = vld [vmem:[%s6 + $0x1a8] sm:$0xf]
  %v6314 = vld [vmem:[%s6 + $0x1ac] sm:$0xf]
  %v6315 = vld [vmem:[%s6 + $0x1b0] sm:$0xf]
  %v6316 = vld [vmem:[%s6 + $0x1b4] sm:$0xf]
  %v6317 = vpack.c.bf16 %v6306, %v6306
  %v6318 = vld [vmem:[%s11 + $0x8] sm:$0x1]
  %v6319 = vlaneseq
  %v6320 = vshrl.u32 %v6319, 7
  %v6321 = vsub.s32 0, %v6320
  %v6322 = vrot.slane %v6318, %v6321
  %v6333 = vunpack.c.l.b16 %v6307
  %v6334 = vunpack.c.l.b16 %v6308
  %v6335 = vunpack.c.l.b16 %v6309
  %v6336 = vunpack.c.l.b16 %v6310
  %v6337 = vunpack.c.l.b16 %v6311
  %v6338 = vunpack.c.l.b16 %v6312
  %v6339 = vunpack.c.l.b16 %v6313
  %v6340 = vunpack.c.l.b16 %v6314
  %v6341 = vunpack.c.l.b16 %v6315
  %v6342 = vunpack.c.l.b16 %v6316
  %v6343 = vpack.c.b16 %v6334, %v6333
  %v6344 = vpack.c.b16 %v6336, %v6335
  %v6345 = vpack.c.b16 %v6338, %v6337
  %v6346 = vpack.c.b16 %v6340, %v6339
  %v6347 = vpack.c.b16 %v6342, %v6341
  %v6354 = vsel %vm5805, %v6317, 0
  %6356 = vmatprep.subr.bf16.mxu0 0
  %6357 = vmatpush1.bf16.msra.mxu0 0
  %6358 = vmatprep.subr.bf16.mxu0 0
  %6359 = vmatpush1.bf16.msra.mxu0 0
  %6360 = vmatprep.subr.bf16.mxu0 0
  %6361 = vmatpush1.bf16.msra.mxu0 0
  %6362 = vmatprep.subr.bf16.mxu0 0
  %6363 = vmatpush1.bf16.msra.mxu0 %v6347
  %6364 = vmatprep.subr.bf16.mxu0 0
  %6365 = vmatpush1.bf16.msra.mxu0 %v6346
  %6366 = vmatprep.subr.bf16.mxu0 0
  %6367 = vmatpush1.bf16.msra.mxu0 %v6345
  %6368 = vmatprep.subr.bf16.mxu0 0
  %6369 = vmatpush1.bf16.msra.mxu0 %v6344
  %6370 = vmatprep.subr.bf16.mxu0 0
  %6371 = vmatpush1.bf16.msra.mxu0 %v6343
  %6372 = vmatprep.subr.bf16.mxu0 0
  %6373 = vmatpush2.bf16.msra.mxu0 0
  %6374 = vmatprep.subr.bf16.mxu0 0
  %6375 = vmatpush2.bf16.msra.mxu0 0
  %6376 = vmatprep.subr.bf16.mxu0 0
  %6377 = vmatpush2.bf16.msra.mxu0 0
  %6378 = vmatprep.subr.bf16.mxu0 0
  %6379 = vmatpush2.bf16.msra.mxu0 0
  %6380 = vmatprep.subr.bf16.mxu0 0
  %6381 = vmatpush2.bf16.msra.mxu0 0
  %6382 = vmatprep.subr.bf16.mxu0 0
  %6383 = vmatpush2.bf16.msra.mxu0 0
  %6384 = vmatprep.subr.bf16.mxu0 0
  %6385 = vmatpush2.bf16.msra.mxu0 0
  %6386 = vmatprep.subr.bf16.mxu0 0
  %6387 = vmatpush2.bf16.msra.mxu0 0
  %6388 = vmatprep.mubr.bf16.mxu0 0
  %6389 = vmatmul.mubr.bf16.gmra.mxu0 %v6354
  %v6390 = vpop.f32.mrf.mxu0
  %v6391 = vadd.f32 %v6322, %v6390
  %v6392 = vpop.f32.mrf.mxu0
  %v6393 = vpop.f32.mrf.mxu0
  %v6394 = vpop.f32.mrf.mxu0
  %6395 = vdwg.mxu0
  %v6396 = vld [vmem:[%s6 + $0x1b8] sm:$0xf]
  %v6397 = vld [vmem:[%s6 + $0x1bc] sm:$0xf]
  %v6398 = vld [vmem:[%s6 + $0x1c0] sm:$0xf]
  %v6399 = vld [vmem:[%s6 + $0x1c4] sm:$0xf]
  %v6400 = vld [vmem:[%s6 + $0x1c8] sm:$0xf]
  %v6401 = vld [vmem:[%s6 + $0x1cc] sm:$0xf]
  %v6402 = vld [vmem:[%s6 + $0x1d0] sm:$0xf]
  %v6403 = vld [vmem:[%s6 + $0x1d4] sm:$0xf]
  %v6404 = vld [vmem:[%s6 + $0x1d8] sm:$0xf]
  %v6405 = vld [vmem:[%s6 + $0x1dc] sm:$0xf]
  %v6406 = vld [vmem:[%s11 + $0x9] sm:$0x1]
  %v6407 = vlaneseq
  %v6408 = vshrl.u32 %v6407, 7
  %v6409 = vsub.s32 0, %v6408
  %v6410 = vrot.slane %v6406, %v6409
  %v6421 = vunpack.c.l.b16 %v6396
  %v6422 = vunpack.c.l.b16 %v6397
  %v6423 = vunpack.c.l.b16 %v6398
  %v6424 = vunpack.c.l.b16 %v6399
  %v6425 = vunpack.c.l.b16 %v6400
  %v6426 = vunpack.c.l.b16 %v6401
  %v6427 = vunpack.c.l.b16 %v6402
  %v6428 = vunpack.c.l.b16 %v6403
  %v6429 = vunpack.c.l.b16 %v6404
  %v6430 = vunpack.c.l.b16 %v6405
  %v6431 = vpack.c.b16 %v6422, %v6421
  %v6432 = vpack.c.b16 %v6424, %v6423
  %v6433 = vpack.c.b16 %v6426, %v6425
  %v6434 = vpack.c.b16 %v6428, %v6427
  %v6435 = vpack.c.b16 %v6430, %v6429
  %6441 = vmatprep.subr.bf16.mxu0 0
  %6442 = vmatpush1.bf16.msra.mxu0 0
  %6443 = vmatprep.subr.bf16.mxu0 0
  %6444 = vmatpush1.bf16.msra.mxu0 0
  %6445 = vmatprep.subr.bf16.mxu0 0
  %6446 = vmatpush1.bf16.msra.mxu0 0
  %6447 = vmatprep.subr.bf16.mxu0 0
  %6448 = vmatpush1.bf16.msra.mxu0 %v6435
  %6449 = vmatprep.subr.bf16.mxu0 0
  %6450 = vmatpush1.bf16.msra.mxu0 %v6434
  %6451 = vmatprep.subr.bf16.mxu0 0
  %6452 = vmatpush1.bf16.msra.mxu0 %v6433
  %6453 = vmatprep.subr.bf16.mxu0 0
  %6454 = vmatpush1.bf16.msra.mxu0 %v6432
  %6455 = vmatprep.subr.bf16.mxu0 0
  %6456 = vmatpush1.bf16.msra.mxu0 %v6431
  %6457 = vmatprep.subr.bf16.mxu0 0
  %6458 = vmatpush2.bf16.msra.mxu0 0
  %6459 = vmatprep.subr.bf16.mxu0 0
  %6460 = vmatpush2.bf16.msra.mxu0 0
  %6461 = vmatprep.subr.bf16.mxu0 0
  %6462 = vmatpush2.bf16.msra.mxu0 0
  %6463 = vmatprep.subr.bf16.mxu0 0
  %6464 = vmatpush2.bf16.msra.mxu0 0
  %6465 = vmatprep.subr.bf16.mxu0 0
  %6466 = vmatpush2.bf16.msra.mxu0 0
  %6467 = vmatprep.subr.bf16.mxu0 0
  %6468 = vmatpush2.bf16.msra.mxu0 0
  %6469 = vmatprep.subr.bf16.mxu0 0
  %6470 = vmatpush2.bf16.msra.mxu0 0
  %6471 = vmatprep.subr.bf16.mxu0 0
  %6472 = vmatpush2.bf16.msra.mxu0 0
  %6473 = vmatprep.mubr.bf16.mxu0 0
  %6474 = vmatmul.mubr.bf16.gmra.mxu0 %v6354
  %v6475 = vpop.f32.mrf.mxu0
  %v6476 = vadd.f32 %v6410, %v6475
  %v6477 = vpop.f32.mrf.mxu0
  %v6478 = vpop.f32.mrf.mxu0
  %v6479 = vpop.f32.mrf.mxu0
  %6480 = vdwg.mxu0
  %v6481 = vmul.f32 %v6476, 0.5
  %v6482 = vmul.f32 %v6481, 1.442695
  %v6483 = vpow.pop %v6482
  %v6484 = vmul.f32 %v72, %v6483
  %v6485 = vadd.f32 %v6391, %v6484
  %v6487 = vsel %vm5805, %v6485, 0
  %6489 = vmatprep.subr.mxu0 0.0
  %6490 = vmatpush1.msra.mxu0 0.0
  %6491 = vmatprep.subr.mxu0 0.0
  %6492 = vmatpush1.msra.mxu0 0.0
  %6493 = vmatprep.subr.mxu0 0.0
  %6494 = vmatpush1.msra.mxu0 0.0
  %6495 = vmatprep.subr.mxu0 0.0
  %6496 = vmatpush1.msra.mxu0 0.0
  %6497 = vmatprep.subr.mxu0 0.0
  %6498 = vmatpush1.msra.mxu0 0.0
  %6499 = vmatprep.subr.mxu0 0.0
  %6500 = vmatpush1.msra.mxu0 0.0
  %6501 = vmatprep.subr.mxu0 0.0
  %6502 = vmatpush1.msra.mxu0 %v1552
  %6503 = vmatprep.subr.mxu0 0.0
  %6504 = vmatpush1.msra.mxu0 %v1551
  %6505 = vmatprep.subr.mxu0 0.0
  %6506 = vmatpush1.msra.mxu0 %v1550
  %6507 = vmatprep.subr.mxu0 0.0
  %6508 = vmatpush1.msra.mxu0 %v1549
  %6509 = vmatprep.subr.mxu0 0.0
  %6510 = vmatpush1.msra.mxu0 %v1548
  %6511 = vmatprep.subr.mxu0 0.0
  %6512 = vmatpush1.msra.mxu0 %v1547
  %6513 = vmatprep.subr.mxu0 0.0
  %6514 = vmatpush1.msra.mxu0 %v1546
  %6515 = vmatprep.subr.mxu0 0.0
  %6516 = vmatpush1.msra.mxu0 %v1545
  %6517 = vmatprep.subr.mxu0 0.0
  %6518 = vmatpush1.msra.mxu0 %v1544
  %6519 = vmatprep.subr.mxu0 0.0
  %6520 = vmatpush1.msra.mxu0 %v1543
  %6521 = vmatprep.subr.mxu0 0.0
  %6522 = vmatpush2.msra.mxu0 0.0
  %6523 = vmatprep.subr.mxu0 0.0
  %6524 = vmatpush2.msra.mxu0 0.0
  %6525 = vmatprep.subr.mxu0 0.0
  %6526 = vmatpush2.msra.mxu0 0.0
  %6527 = vmatprep.subr.mxu0 0.0
  %6528 = vmatpush2.msra.mxu0 0.0
  %6529 = vmatprep.subr.mxu0 0.0
  %6530 = vmatpush2.msra.mxu0 0.0
  %6531 = vmatprep.subr.mxu0 0.0
  %6532 = vmatpush2.msra.mxu0 0.0
  %6533 = vmatprep.subr.mxu0 0.0
  %6534 = vmatpush2.msra.mxu0 0.0
  %6535 = vmatprep.subr.mxu0 0.0
  %6536 = vmatpush2.msra.mxu0 0.0
  %6537 = vmatprep.subr.mxu0 0.0
  %6538 = vmatpush2.msra.mxu0 0.0
  %6539 = vmatprep.subr.mxu0 0.0
  %6540 = vmatpush2.msra.mxu0 0.0
  %6541 = vmatprep.subr.mxu0 0.0
  %6542 = vmatpush2.msra.mxu0 0.0
  %6543 = vmatprep.subr.mxu0 0.0
  %6544 = vmatpush2.msra.mxu0 0.0
  %6545 = vmatprep.subr.mxu0 0.0
  %6546 = vmatpush2.msra.mxu0 0.0
  %6547 = vmatprep.subr.mxu0 0.0
  %6548 = vmatpush2.msra.mxu0 0.0
  %6549 = vmatprep.subr.mxu0 0.0
  %6550 = vmatpush2.msra.mxu0 0.0
  %6551 = vmatprep.subr.mxu0 0.0
  %6552 = vmatpush2.msra.mxu0 0.0
  %6553 = vmatprep.mubr.f32.mxu0 0.0
  %6554 = vmatmul.mubr.f32.gmra.mxu0 %v6487
  %v6555 = vpop.f32.mrf.mxu0
  %v6556 = vadd.f32 0.0, %v6555
  %v6557 = vpop.f32.mrf.mxu0
  %6558 = vdwg.mxu0
  %v6559 = vsub.f32 %v6485, %v6556
  %v6560 = vmul.f32 %v6559, %v6559
  %v6562 = vsel %vm5805, %v6560, 0
  %6564 = vmatprep.subr.mxu0 0.0
  %6565 = vmatpush1.msra.mxu0 0.0
  %6566 = vmatprep.subr.mxu0 0.0
  %6567 = vmatpush1.msra.mxu0 0.0
  %6568 = vmatprep.subr.mxu0 0.0
  %6569 = vmatpush1.msra.mxu0 0.0
  %6570 = vmatprep.subr.mxu0 0.0
  %6571 = vmatpush1.msra.mxu0 0.0
  %6572 = vmatprep.subr.mxu0 0.0
  %6573 = vmatpush1.msra.mxu0 0.0
  %6574 = vmatprep.subr.mxu0 0.0
  %6575 = vmatpush1.msra.mxu0 0.0
  %6576 = vmatprep.subr.mxu0 0.0
  %6577 = vmatpush1.msra.mxu0 %v1552
  %6578 = vmatprep.subr.mxu0 0.0
  %6579 = vmatpush1.msra.mxu0 %v1551
  %6580 = vmatprep.subr.mxu0 0.0
  %6581 = vmatpush1.msra.mxu0 %v1550
  %6582 = vmatprep.subr.mxu0 0.0
  %6583 = vmatpush1.msra.mxu0 %v1549
  %6584 = vmatprep.subr.mxu0 0.0
  %6585 = vmatpush1.msra.mxu0 %v1548
  %6586 = vmatprep.subr.mxu0 0.0
  %6587 = vmatpush1.msra.mxu0 %v1547
  %6588 = vmatprep.subr.mxu0 0.0
  %6589 = vmatpush1.msra.mxu0 %v1546
  %6590 = vmatprep.subr.mxu0 0.0
  %6591 = vmatpush1.msra.mxu0 %v1545
  %6592 = vmatprep.subr.mxu0 0.0
  %6593 = vmatpush1.msra.mxu0 %v1544
  %6594 = vmatprep.subr.mxu0 0.0
  %6595 = vmatpush1.msra.mxu0 %v1543
  %6596 = vmatprep.subr.mxu0 0.0
  %6597 = vmatpush2.msra.mxu0 0.0
  %6598 = vmatprep.subr.mxu0 0.0
  %6599 = vmatpush2.msra.mxu0 0.0
  %6600 = vmatprep.subr.mxu0 0.0
  %6601 = vmatpush2.msra.mxu0 0.0
  %6602 = vmatprep.subr.mxu0 0.0
  %6603 = vmatpush2.msra.mxu0 0.0
  %6604 = vmatprep.subr.mxu0 0.0
  %6605 = vmatpush2.msra.mxu0 0.0
  %6606 = vmatprep.subr.mxu0 0.0
  %6607 = vmatpush2.msra.mxu0 0.0
  %6608 = vmatprep.subr.mxu0 0.0
  %6609 = vmatpush2.msra.mxu0 0.0
  %6610 = vmatprep.subr.mxu0 0.0
  %6611 = vmatpush2.msra.mxu0 0.0
  %6612 = vmatprep.subr.mxu0 0.0
  %6613 = vmatpush2.msra.mxu0 0.0
  %6614 = vmatprep.subr.mxu0 0.0
  %6615 = vmatpush2.msra.mxu0 0.0
  %6616 = vmatprep.subr.mxu0 0.0
  %6617 = vmatpush2.msra.mxu0 0.0
  %6618 = vmatprep.subr.mxu0 0.0
  %6619 = vmatpush2.msra.mxu0 0.0
  %6620 = vmatprep.subr.mxu0 0.0
  %6621 = vmatpush2.msra.mxu0 0.0
  %6622 = vmatprep.subr.mxu0 0.0
  %6623 = vmatpush2.msra.mxu0 0.0
  %6624 = vmatprep.subr.mxu0 0.0
  %6625 = vmatpush2.msra.mxu0 0.0
  %6626 = vmatprep.subr.mxu0 0.0
  %6627 = vmatpush2.msra.mxu0 0.0
  %6628 = vmatprep.mubr.f32.mxu0 0.0
  %6629 = vmatmul.mubr.f32.gmra.mxu0 %v6562
  %v6630 = vpop.f32.mrf.mxu0
  %v6631 = vadd.f32 1e-05, %v6630
  %v6632 = vpop.f32.mrf.mxu0
  %6633 = vdwg.mxu0
  %v6634 = vrsqrt.pop %v6631
  %v6635 = vmul.f32 %v6559, %v6634
  %v6636 = vld [vmem:[%s6 + $0x118] sm:$0xf]
  %v6637 = vld [vmem:[%s6 + $0x11c] sm:$0xf]
  %v6638 = vld [vmem:[%s6 + $0x120] sm:$0xf]
  %v6639 = vld [vmem:[%s6 + $0x124] sm:$0xf]
  %v6640 = vld [vmem:[%s6 + $0x128] sm:$0xf]
  %v6641 = vld [vmem:[%s6 + $0x12c] sm:$0xf]
  %v6642 = vld [vmem:[%s6 + $0x130] sm:$0xf]
  %v6643 = vld [vmem:[%s6 + $0x134] sm:$0xf]
  %v6644 = vld [vmem:[%s6 + $0x138] sm:$0xf]
  %v6645 = vld [vmem:[%s6 + $0x13c] sm:$0xf]
  %v6646 = vpack.c.bf16 %v6635, %v6635
  %v6647 = vld [vmem:[%s11 + $0x5] sm:$0x1]
  %v6648 = vlaneseq
  %v6649 = vshrl.u32 %v6648, 7
  %v6650 = vsub.s32 0, %v6649
  %v6651 = vrot.slane %v6647, %v6650
  %v6662 = vunpack.c.l.b16 %v6636
  %v6663 = vunpack.c.l.b16 %v6637
  %v6664 = vunpack.c.l.b16 %v6638
  %v6665 = vunpack.c.l.b16 %v6639
  %v6666 = vunpack.c.l.b16 %v6640
  %v6667 = vunpack.c.l.b16 %v6641
  %v6668 = vunpack.c.l.b16 %v6642
  %v6669 = vunpack.c.l.b16 %v6643
  %v6670 = vunpack.c.l.b16 %v6644
  %v6671 = vunpack.c.l.b16 %v6645
  %v6672 = vpack.c.b16 %v6663, %v6662
  %v6673 = vpack.c.b16 %v6665, %v6664
  %v6674 = vpack.c.b16 %v6667, %v6666
  %v6675 = vpack.c.b16 %v6669, %v6668
  %v6676 = vpack.c.b16 %v6671, %v6670
  %v6683 = vsel %vm5805, %v6646, 0
  %6685 = vmatprep.subr.bf16.mxu0 0
  %6686 = vmatpush1.bf16.msra.mxu0 0
  %6687 = vmatprep.subr.bf16.mxu0 0
  %6688 = vmatpush1.bf16.msra.mxu0 0
  %6689 = vmatprep.subr.bf16.mxu0 0
  %6690 = vmatpush1.bf16.msra.mxu0 0
  %6691 = vmatprep.subr.bf16.mxu0 0
  %6692 = vmatpush1.bf16.msra.mxu0 %v6676
  %6693 = vmatprep.subr.bf16.mxu0 0
  %6694 = vmatpush1.bf16.msra.mxu0 %v6675
  %6695 = vmatprep.subr.bf16.mxu0 0
  %6696 = vmatpush1.bf16.msra.mxu0 %v6674
  %6697 = vmatprep.subr.bf16.mxu0 0
  %6698 = vmatpush1.bf16.msra.mxu0 %v6673
  %6699 = vmatprep.subr.bf16.mxu0 0
  %6700 = vmatpush1.bf16.msra.mxu0 %v6672
  %6701 = vmatprep.subr.bf16.mxu0 0
  %6702 = vmatpush2.bf16.msra.mxu0 0
  %6703 = vmatprep.subr.bf16.mxu0 0
  %6704 = vmatpush2.bf16.msra.mxu0 0
  %6705 = vmatprep.subr.bf16.mxu0 0
  %6706 = vmatpush2.bf16.msra.mxu0 0
  %6707 = vmatprep.subr.bf16.mxu0 0
  %6708 = vmatpush2.bf16.msra.mxu0 0
  %6709 = vmatprep.subr.bf16.mxu0 0
  %6710 = vmatpush2.bf16.msra.mxu0 0
  %6711 = vmatprep.subr.bf16.mxu0 0
  %6712 = vmatpush2.bf16.msra.mxu0 0
  %6713 = vmatprep.subr.bf16.mxu0 0
  %6714 = vmatpush2.bf16.msra.mxu0 0
  %6715 = vmatprep.subr.bf16.mxu0 0
  %6716 = vmatpush2.bf16.msra.mxu0 0
  %6717 = vmatprep.mubr.bf16.mxu0 0
  %6718 = vmatmul.mubr.bf16.gmra.mxu0 %v6683
  %v6719 = vpop.f32.mrf.mxu0
  %v6720 = vadd.f32 %v6651, %v6719
  %v6721 = vpop.f32.mrf.mxu0
  %v6722 = vpop.f32.mrf.mxu0
  %v6723 = vpop.f32.mrf.mxu0
  %6724 = vdwg.mxu0
  %v6725 = vmul.f32 %v6720, %v6720
  %v6726 = vmul.f32 %v6720, %v6725
  %v6727 = vmul.f32 %v6726, 0.044715
  %v6728 = vadd.f32 %v6720, %v6727
  %v6729 = vmul.f32 %v6728, 0.7978846
  %v6730 = vtanh.pop %v6729
  %v6731 = vadd.f32 %v6730, 1.0
  %v6732 = vmul.f32 %v6731, 0.5
  %v6733 = vmul.f32 %v6720, %v6732
  %v6734 = vld [vmem:[%s6 + $0x140] sm:$0xf]
  %v6735 = vld [vmem:[%s6 + $0x144] sm:$0xf]
  %v6736 = vld [vmem:[%s6 + $0x148] sm:$0xf]
  %v6737 = vld [vmem:[%s6 + $0x14c] sm:$0xf]
  %v6738 = vld [vmem:[%s6 + $0x150] sm:$0xf]
  %v6739 = vld [vmem:[%s6 + $0x154] sm:$0xf]
  %v6740 = vld [vmem:[%s6 + $0x158] sm:$0xf]
  %v6741 = vld [vmem:[%s6 + $0x15c] sm:$0xf]
  %v6742 = vld [vmem:[%s6 + $0x160] sm:$0xf]
  %v6743 = vld [vmem:[%s6 + $0x164] sm:$0xf]
  %v6744 = vpack.c.bf16 %v6733, %v6733
  %v6745 = vld [vmem:[%s11 + $0x6] sm:$0x1]
  %v6746 = vlaneseq
  %v6747 = vshrl.u32 %v6746, 7
  %v6748 = vsub.s32 0, %v6747
  %v6749 = vrot.slane %v6745, %v6748
  %v6760 = vunpack.c.l.b16 %v6734
  %v6761 = vunpack.c.l.b16 %v6735
  %v6762 = vunpack.c.l.b16 %v6736
  %v6763 = vunpack.c.l.b16 %v6737
  %v6764 = vunpack.c.l.b16 %v6738
  %v6765 = vunpack.c.l.b16 %v6739
  %v6766 = vunpack.c.l.b16 %v6740
  %v6767 = vunpack.c.l.b16 %v6741
  %v6768 = vunpack.c.l.b16 %v6742
  %v6769 = vunpack.c.l.b16 %v6743
  %v6770 = vpack.c.b16 %v6761, %v6760
  %v6771 = vpack.c.b16 %v6763, %v6762
  %v6772 = vpack.c.b16 %v6765, %v6764
  %v6773 = vpack.c.b16 %v6767, %v6766
  %v6774 = vpack.c.b16 %v6769, %v6768
  %v6781 = vsel %vm5805, %v6744, 0
  %6783 = vmatprep.subr.bf16.mxu0 0
  %6784 = vmatpush1.bf16.msra.mxu0 0
  %6785 = vmatprep.subr.bf16.mxu0 0
  %6786 = vmatpush1.bf16.msra.mxu0 0
  %6787 = vmatprep.subr.bf16.mxu0 0
  %6788 = vmatpush1.bf16.msra.mxu0 0
  %6789 = vmatprep.subr.bf16.mxu0 0
  %6790 = vmatpush1.bf16.msra.mxu0 %v6774
  %6791 = vmatprep.subr.bf16.mxu0 0
  %6792 = vmatpush1.bf16.msra.mxu0 %v6773
  %6793 = vmatprep.subr.bf16.mxu0 0
  %6794 = vmatpush1.bf16.msra.mxu0 %v6772
  %6795 = vmatprep.subr.bf16.mxu0 0
  %6796 = vmatpush1.bf16.msra.mxu0 %v6771
  %6797 = vmatprep.subr.bf16.mxu0 0
  %6798 = vmatpush1.bf16.msra.mxu0 %v6770
  %6799 = vmatprep.subr.bf16.mxu0 0
  %6800 = vmatpush2.bf16.msra.mxu0 0
  %6801 = vmatprep.subr.bf16.mxu0 0
  %6802 = vmatpush2.bf16.msra.mxu0 0
  %6803 = vmatprep.subr.bf16.mxu0 0
  %6804 = vmatpush2.bf16.msra.mxu0 0
  %6805 = vmatprep.subr.bf16.mxu0 0
  %6806 = vmatpush2.bf16.msra.mxu0 0
  %6807 = vmatprep.subr.bf16.mxu0 0
  %6808 = vmatpush2.bf16.msra.mxu0 0
  %6809 = vmatprep.subr.bf16.mxu0 0
  %6810 = vmatpush2.bf16.msra.mxu0 0
  %6811 = vmatprep.subr.bf16.mxu0 0
  %6812 = vmatpush2.bf16.msra.mxu0 0
  %6813 = vmatprep.subr.bf16.mxu0 0
  %6814 = vmatpush2.bf16.msra.mxu0 0
  %6815 = vmatprep.mubr.bf16.mxu0 0
  %6816 = vmatmul.mubr.bf16.gmra.mxu0 %v6781
  %v6817 = vpop.f32.mrf.mxu0
  %v6818 = vadd.f32 %v6749, %v6817
  %v6819 = vpop.f32.mrf.mxu0
  %v6820 = vpop.f32.mrf.mxu0
  %v6821 = vpop.f32.mrf.mxu0
  %6822 = vdwg.mxu0
  %v6823 = vld [vmem:[%s6 + $0x168] sm:$0xf]
  %v6824 = vld [vmem:[%s6 + $0x16c] sm:$0xf]
  %v6825 = vld [vmem:[%s6 + $0x170] sm:$0xf]
  %v6826 = vld [vmem:[%s6 + $0x174] sm:$0xf]
  %v6827 = vld [vmem:[%s6 + $0x178] sm:$0xf]
  %v6828 = vld [vmem:[%s6 + $0x17c] sm:$0xf]
  %v6829 = vld [vmem:[%s6 + $0x180] sm:$0xf]
  %v6830 = vld [vmem:[%s6 + $0x184] sm:$0xf]
  %v6831 = vld [vmem:[%s6 + $0x188] sm:$0xf]
  %v6832 = vld [vmem:[%s6 + $0x18c] sm:$0xf]
  %v6833 = vld [vmem:[%s11 + $0x7] sm:$0x1]
  %v6834 = vlaneseq
  %v6835 = vshrl.u32 %v6834, 7
  %v6836 = vsub.s32 0, %v6835
  %v6837 = vrot.slane %v6833, %v6836
  %v6848 = vunpack.c.l.b16 %v6823
  %v6849 = vunpack.c.l.b16 %v6824
  %v6850 = vunpack.c.l.b16 %v6825
  %v6851 = vunpack.c.l.b16 %v6826
  %v6852 = vunpack.c.l.b16 %v6827
  %v6853 = vunpack.c.l.b16 %v6828
  %v6854 = vunpack.c.l.b16 %v6829
  %v6855 = vunpack.c.l.b16 %v6830
  %v6856 = vunpack.c.l.b16 %v6831
  %v6857 = vunpack.c.l.b16 %v6832
  %v6858 = vpack.c.b16 %v6849, %v6848
  %v6859 = vpack.c.b16 %v6851, %v6850
  %v6860 = vpack.c.b16 %v6853, %v6852
  %v6861 = vpack.c.b16 %v6855, %v6854
  %v6862 = vpack.c.b16 %v6857, %v6856
  %6868 = vmatprep.subr.bf16.mxu0 0
  %6869 = vmatpush1.bf16.msra.mxu0 0
  %6870 = vmatprep.subr.bf16.mxu0 0
  %6871 = vmatpush1.bf16.msra.mxu0 0
  %6872 = vmatprep.subr.bf16.mxu0 0
  %6873 = vmatpush1.bf16.msra.mxu0 0
  %6874 = vmatprep.subr.bf16.mxu0 0
  %6875 = vmatpush1.bf16.msra.mxu0 %v6862
  %6876 = vmatprep.subr.bf16.mxu0 0
  %6877 = vmatpush1.bf16.msra.mxu0 %v6861
  %6878 = vmatprep.subr.bf16.mxu0 0
  %6879 = vmatpush1.bf16.msra.mxu0 %v6860
  %6880 = vmatprep.subr.bf16.mxu0 0
  %6881 = vmatpush1.bf16.msra.mxu0 %v6859
  %6882 = vmatprep.subr.bf16.mxu0 0
  %6883 = vmatpush1.bf16.msra.mxu0 %v6858
  %6884 = vmatprep.subr.bf16.mxu0 0
  %6885 = vmatpush2.bf16.msra.mxu0 0
  %6886 = vmatprep.subr.bf16.mxu0 0
  %6887 = vmatpush2.bf16.msra.mxu0 0
  %6888 = vmatprep.subr.bf16.mxu0 0
  %6889 = vmatpush2.bf16.msra.mxu0 0
  %6890 = vmatprep.subr.bf16.mxu0 0
  %6891 = vmatpush2.bf16.msra.mxu0 0
  %6892 = vmatprep.subr.bf16.mxu0 0
  %6893 = vmatpush2.bf16.msra.mxu0 0
  %6894 = vmatprep.subr.bf16.mxu0 0
  %6895 = vmatpush2.bf16.msra.mxu0 0
  %6896 = vmatprep.subr.bf16.mxu0 0
  %6897 = vmatpush2.bf16.msra.mxu0 0
  %6898 = vmatprep.subr.bf16.mxu0 0
  %6899 = vmatpush2.bf16.msra.mxu0 0
  %6900 = vmatprep.mubr.bf16.mxu0 0
  %6901 = vmatmul.mubr.bf16.gmra.mxu0 %v6190
  %v6902 = vpop.f32.mrf.mxu0
  %v6903 = vadd.f32 %v6837, %v6902
  %v6904 = vpop.f32.mrf.mxu0
  %v6905 = vpop.f32.mrf.mxu0
  %v6906 = vpop.f32.mrf.mxu0
  %6907 = vdwg.mxu0
  %v6908 = vadd.f32 %v6485, %v6818
  %v6910 = vsel %vm3928, %v6903, 0
  %6912 = vmatprep.subr.mxu0 0.0
  %6913 = vmatpush1.msra.mxu0 0.0
  %6914 = vmatprep.subr.mxu0 0.0
  %6915 = vmatpush1.msra.mxu0 0.0
  %6916 = vmatprep.subr.mxu0 0.0
  %6917 = vmatpush1.msra.mxu0 0.0
  %6918 = vmatprep.subr.mxu0 0.0
  %6919 = vmatpush1.msra.mxu0 0.0
  %6920 = vmatprep.subr.mxu0 0.0
  %6921 = vmatpush1.msra.mxu0 0.0
  %6922 = vmatprep.subr.mxu0 0.0
  %6923 = vmatpush1.msra.mxu0 0.0
  %6924 = vmatprep.subr.mxu0 0.0
  %6925 = vmatpush1.msra.mxu0 0.0
  %6926 = vmatprep.subr.mxu0 0.0
  %6927 = vmatpush1.msra.mxu0 0.0
  %6928 = vmatprep.subr.mxu0 0.0
  %6929 = vmatpush1.msra.mxu0 0.0
  %6930 = vmatprep.subr.mxu0 0.0
  %6931 = vmatpush1.msra.mxu0 0.0
  %6932 = vmatprep.subr.mxu0 0.0
  %6933 = vmatpush1.msra.mxu0 0.0
  %6934 = vmatprep.subr.mxu0 0.0
  %6935 = vmatpush1.msra.mxu0 0.0
  %6936 = vmatprep.subr.mxu0 0.0
  %6937 = vmatpush1.msra.mxu0 0.0
  %6938 = vmatprep.subr.mxu0 0.0
  %6939 = vmatpush1.msra.mxu0 0.0
  %6940 = vmatprep.subr.mxu0 0.0
  %6941 = vmatpush1.msra.mxu0 0.0
  %6942 = vmatprep.subr.mxu0 0.0
  %6943 = vmatpush1.msra.mxu0 %v6910
  %6944 = vmatprep.subr.mxu0 0.0
  %6945 = vmatpush2.msra.mxu0 0.0
  %6946 = vmatprep.subr.mxu0 0.0
  %6947 = vmatpush2.msra.mxu0 0.0
  %6948 = vmatprep.subr.mxu0 0.0
  %6949 = vmatpush2.msra.mxu0 0.0
  %6950 = vmatprep.subr.mxu0 0.0
  %6951 = vmatpush2.msra.mxu0 0.0
  %6952 = vmatprep.subr.mxu0 0.0
  %6953 = vmatpush2.msra.mxu0 0.0
  %6954 = vmatprep.subr.mxu0 0.0
  %6955 = vmatpush2.msra.mxu0 0.0
  %6956 = vmatprep.subr.mxu0 0.0
  %6957 = vmatpush2.msra.mxu0 0.0
  %6958 = vmatprep.subr.mxu0 0.0
  %6959 = vmatpush2.msra.mxu0 0.0
  %6960 = vmatprep.subr.mxu0 0.0
  %6961 = vmatpush2.msra.mxu0 0.0
  %6962 = vmatprep.subr.mxu0 0.0
  %6963 = vmatpush2.msra.mxu0 0.0
  %6964 = vmatprep.subr.mxu0 0.0
  %6965 = vmatpush2.msra.mxu0 0.0
  %6966 = vmatprep.subr.mxu0 0.0
  %6967 = vmatpush2.msra.mxu0 0.0
  %6968 = vmatprep.subr.mxu0 0.0
  %6969 = vmatpush2.msra.mxu0 0.0
  %6970 = vmatprep.subr.mxu0 0.0
  %6971 = vmatpush2.msra.mxu0 0.0
  %6972 = vmatprep.subr.mxu0 0.0
  %6973 = vmatpush2.msra.mxu0 0.0
  %6974 = vmatprep.subr.mxu0 0.0
  %6975 = vmatpush2.msra.mxu0 0.0
  %6976 = vmatprep.mubr.f32.mxu0 0.0
  %6977 = vmatmul.mubr.f32.gmra.mxu0 %v3926
  %v6978 = vpop.f32.mrf.mxu0
  %v6979 = vadd.f32 0.0, %v6978
  %v6980 = vpop.f32.mrf.mxu0
  %6981 = vdwg.mxu0
  %v6982 = vadd.f32 %v6908, %v6979
  %v6983 = vld [vmem:[%s5 + $0x640] sm:$0xff]
  %v6984 = vld [vmem:[%s5 + $0x648] sm:$0xff]
  %v6985 = vld [vmem:[%s5 + $0x650] sm:$0xff]
  %v6986 = vld [vmem:[%s5 + $0x658] sm:$0xff]
  %v6987 = vld [vmem:[%s5 + $0x660] sm:$0xff]
  %v6988 = vld [vmem:[%s5 + $0x668] sm:$0xff]
  %v6989 = vld [vmem:[%s5 + $0x670] sm:$0xff]
  %v6990 = vld [vmem:[%s5 + $0x678] sm:$0xff]
  %v6991 = vld [vmem:[%s5 + $0x680] sm:$0xff]
  %v6992 = vld [vmem:[%s5 + $0x688] sm:$0xff]
  %v6993 = vpack.c.bf16 %v6982, %v6982
  %s6994 = scalar_lea.vmem %s10, 16
  %v6995 = vld [vmem:[%s6994] ss:$8 sm:$0x3]
  %v6997 = vlaneseq
  %v6998 = vshrl.u32 %v6997, 7
  %v6999 = vsub.s32 0, %v6998
  %v7000 = vrot.slane %v6995, %v6999
  %v7001 = vlaneseq
  %v7002 = vshrl.u32 %v7001, 7
  %v7003 = vsub.s32 1, %v7002
  %v7004 = vrot.slane %v6995, %v7003
  %v7017 = vunpack.c.l.b16 %v6983
  %v7018 = vunpack.c.h.b16 %v6983
  %v7019 = vunpack.c.l.b16 %v6984
  %v7020 = vunpack.c.h.b16 %v6984
  %v7021 = vunpack.c.l.b16 %v6985
  %v7022 = vunpack.c.h.b16 %v6985
  %v7023 = vunpack.c.l.b16 %v6986
  %v7024 = vunpack.c.h.b16 %v6986
  %v7025 = vunpack.c.l.b16 %v6987
  %v7026 = vunpack.c.h.b16 %v6987
  %v7027 = vunpack.c.l.b16 %v6988
  %v7028 = vunpack.c.h.b16 %v6988
  %v7029 = vunpack.c.l.b16 %v6989
  %v7030 = vunpack.c.h.b16 %v6989
  %v7031 = vunpack.c.l.b16 %v6990
  %v7032 = vunpack.c.h.b16 %v6990
  %v7033 = vunpack.c.l.b16 %v6991
  %v7034 = vunpack.c.h.b16 %v6991
  %v7035 = vunpack.c.l.b16 %v6992
  %v7036 = vunpack.c.h.b16 %v6992
  %v7037 = vpack.c.b16 %v7019, %v7017
  %v7038 = vpack.c.b16 %v7020, %v7018
  %v7039 = vpack.c.b16 %v7023, %v7021
  %v7040 = vpack.c.b16 %v7024, %v7022
  %v7041 = vpack.c.b16 %v7027, %v7025
  %v7042 = vpack.c.b16 %v7028, %v7026
  %v7043 = vpack.c.b16 %v7031, %v7029
  %v7044 = vpack.c.b16 %v7032, %v7030
  %v7045 = vpack.c.b16 %v7035, %v7033
  %v7046 = vpack.c.b16 %v7036, %v7034
  %v7058 = vsel %vm5805, %v6993, 0
  %7060 = vmatprep.subr.bf16.mxu0 0
  %7061 = vmatpush1.bf16.msra.mxu0 0
  %7062 = vmatprep.subr.bf16.mxu0 0
  %7063 = vmatpush1.bf16.msra.mxu0 0
  %7064 = vmatprep.subr.bf16.mxu0 0
  %7065 = vmatpush1.bf16.msra.mxu0 0
  %7066 = vmatprep.subr.bf16.mxu0 %v7046
  %7067 = vmatpush1.bf16.msra.mxu0 %v7045
  %7068 = vmatprep.subr.bf16.mxu0 %v7044
  %7069 = vmatpush1.bf16.msra.mxu0 %v7043
  %7070 = vmatprep.subr.bf16.mxu0 %v7042
  %7071 = vmatpush1.bf16.msra.mxu0 %v7041
  %7072 = vmatprep.subr.bf16.mxu0 %v7040
  %7073 = vmatpush1.bf16.msra.mxu0 %v7039
  %7074 = vmatprep.subr.bf16.mxu0 %v7038
  %7075 = vmatpush1.bf16.msra.mxu0 %v7037
  %7076 = vmatprep.subr.bf16.mxu0 0
  %7077 = vmatpush2.bf16.msra.mxu0 0
  %7078 = vmatprep.subr.bf16.mxu0 0
  %7079 = vmatpush2.bf16.msra.mxu0 0
  %7080 = vmatprep.subr.bf16.mxu0 0
  %7081 = vmatpush2.bf16.msra.mxu0 0
  %7082 = vmatprep.subr.bf16.mxu0 0
  %7083 = vmatpush2.bf16.msra.mxu0 0
  %7084 = vmatprep.subr.bf16.mxu0 0
  %7085 = vmatpush2.bf16.msra.mxu0 0
  %7086 = vmatprep.subr.bf16.mxu0 0
  %7087 = vmatpush2.bf16.msra.mxu0 0
  %7088 = vmatprep.subr.bf16.mxu0 0
  %7089 = vmatpush2.bf16.msra.mxu0 0
  %7090 = vmatprep.subr.bf16.mxu0 0
  %7091 = vmatpush2.bf16.msra.mxu0 0
  %7092 = vmatprep.mubr.bf16.mxu0 0
  %7093 = vmatmul.mubr.bf16.gmra.mxu0 %v7058
  %v7094 = vpop.f32.mrf.mxu0
  %v7095 = vadd.f32 %v7000, %v7094
  %v7096 = vpop.f32.mrf.mxu0
  %v7097 = vadd.f32 %v7004, %v7096
  %v7098 = vpop.f32.mrf.mxu0
  %v7099 = vpop.f32.mrf.mxu0
  %7100 = vdwg.mxu0
  %v7101 = vld [vmem:[%s5 + $0x690] sm:$0xff]
  %v7102 = vld [vmem:[%s5 + $0x698] sm:$0xff]
  %v7103 = vld [vmem:[%s5 + $0x6a0] sm:$0xff]
  %v7104 = vld [vmem:[%s5 + $0x6a8] sm:$0xff]
  %v7105 = vld [vmem:[%s5 + $0x6b0] sm:$0xff]
  %v7106 = vld [vmem:[%s5 + $0x6b8] sm:$0xff]
  %v7107 = vld [vmem:[%s5 + $0x6c0] sm:$0xff]
  %v7108 = vld [vmem:[%s5 + $0x6c8] sm:$0xff]
  %v7109 = vld [vmem:[%s5 + $0x6d0] sm:$0xff]
  %v7110 = vld [vmem:[%s5 + $0x6d8] sm:$0xff]
  %s7111 = scalar_lea.vmem %s10, 17
  %v7112 = vld [vmem:[%s7111] ss:$8 sm:$0x3]
  %v7114 = vlaneseq
  %v7115 = vshrl.u32 %v7114, 7
  %v7116 = vsub.s32 0, %v7115
  %v7117 = vrot.slane %v7112, %v7116
  %v7118 = vlaneseq
  %v7119 = vshrl.u32 %v7118, 7
  %v7120 = vsub.s32 1, %v7119
  %v7121 = vrot.slane %v7112, %v7120
  %v7134 = vunpack.c.l.b16 %v7101
  %v7135 = vunpack.c.h.b16 %v7101
  %v7136 = vunpack.c.l.b16 %v7102
  %v7137 = vunpack.c.h.b16 %v7102
  %v7138 = vunpack.c.l.b16 %v7103
  %v7139 = vunpack.c.h.b16 %v7103
  %v7140 = vunpack.c.l.b16 %v7104
  %v7141 = vunpack.c.h.b16 %v7104
  %v7142 = vunpack.c.l.b16 %v7105
  %v7143 = vunpack.c.h.b16 %v7105
  %v7144 = vunpack.c.l.b16 %v7106
  %v7145 = vunpack.c.h.b16 %v7106
  %v7146 = vunpack.c.l.b16 %v7107
  %v7147 = vunpack.c.h.b16 %v7107
  %v7148 = vunpack.c.l.b16 %v7108
  %v7149 = vunpack.c.h.b16 %v7108
  %v7150 = vunpack.c.l.b16 %v7109
  %v7151 = vunpack.c.h.b16 %v7109
  %v7152 = vunpack.c.l.b16 %v7110
  %v7153 = vunpack.c.h.b16 %v7110
  %v7154 = vpack.c.b16 %v7136, %v7134
  %v7155 = vpack.c.b16 %v7137, %v7135
  %v7156 = vpack.c.b16 %v7140, %v7138
  %v7157 = vpack.c.b16 %v7141, %v7139
  %v7158 = vpack.c.b16 %v7144, %v7142
  %v7159 = vpack.c.b16 %v7145, %v7143
  %v7160 = vpack.c.b16 %v7148, %v7146
  %v7161 = vpack.c.b16 %v7149, %v7147
  %v7162 = vpack.c.b16 %v7152, %v7150
  %v7163 = vpack.c.b16 %v7153, %v7151
  %7174 = vmatprep.subr.bf16.mxu0 0
  %7175 = vmatpush1.bf16.msra.mxu0 0
  %7176 = vmatprep.subr.bf16.mxu0 0
  %7177 = vmatpush1.bf16.msra.mxu0 0
  %7178 = vmatprep.subr.bf16.mxu0 0
  %7179 = vmatpush1.bf16.msra.mxu0 0
  %7180 = vmatprep.subr.bf16.mxu0 %v7163
  %7181 = vmatpush1.bf16.msra.mxu0 %v7162
  %7182 = vmatprep.subr.bf16.mxu0 %v7161
  %7183 = vmatpush1.bf16.msra.mxu0 %v7160
  %7184 = vmatprep.subr.bf16.mxu0 %v7159
  %7185 = vmatpush1.bf16.msra.mxu0 %v7158
  %7186 = vmatprep.subr.bf16.mxu0 %v7157
  %7187 = vmatpush1.bf16.msra.mxu0 %v7156
  %7188 = vmatprep.subr.bf16.mxu0 %v7155
  %7189 = vmatpush1.bf16.msra.mxu0 %v7154
  %7190 = vmatprep.subr.bf16.mxu0 0
  %7191 = vmatpush2.bf16.msra.mxu0 0
  %7192 = vmatprep.subr.bf16.mxu0 0
  %7193 = vmatpush2.bf16.msra.mxu0 0
  %7194 = vmatprep.subr.bf16.mxu0 0
  %7195 = vmatpush2.bf16.msra.mxu0 0
  %7196 = vmatprep.subr.bf16.mxu0 0
  %7197 = vmatpush2.bf16.msra.mxu0 0
  %7198 = vmatprep.subr.bf16.mxu0 0
  %7199 = vmatpush2.bf16.msra.mxu0 0
  %7200 = vmatprep.subr.bf16.mxu0 0
  %7201 = vmatpush2.bf16.msra.mxu0 0
  %7202 = vmatprep.subr.bf16.mxu0 0
  %7203 = vmatpush2.bf16.msra.mxu0 0
  %7204 = vmatprep.subr.bf16.mxu0 0
  %7205 = vmatpush2.bf16.msra.mxu0 0
  %7206 = vmatprep.mubr.bf16.mxu0 0
  %7207 = vmatmul.mubr.bf16.gmra.mxu0 %v6190
  %v7208 = vpop.f32.mrf.mxu0
  %v7209 = vadd.f32 %v7117, %v7208
  %v7210 = vpop.f32.mrf.mxu0
  %v7211 = vadd.f32 %v7121, %v7210
  %v7212 = vpop.f32.mrf.mxu0
  %v7213 = vpop.f32.mrf.mxu0
  %7214 = vdwg.mxu0
  %v7216 = vsel %vm4757, %v7097, 0
  %7218 = vmatprep.subr.mxu0 %v1534
  %7219 = vmatpush1.msra.mxu0 %v1533
  %7220 = vmatprep.subr.mxu0 %v1532
  %7221 = vmatpush1.msra.mxu0 %v1531
  %7222 = vmatprep.subr.mxu0 %v1530
  %7223 = vmatpush1.msra.mxu0 %v1529
  %7224 = vmatprep.subr.mxu0 %v1528
  %7225 = vmatpush1.msra.mxu0 %v1527
  %7226 = vmatprep.subr.mxu0 %v1526
  %7227 = vmatpush1.msra.mxu0 %v1525
  %7228 = vmatprep.subr.mxu0 %v1524
  %7229 = vmatpush1.msra.mxu0 %v1523
  %7230 = vmatprep.subr.mxu0 %v1522
  %7231 = vmatpush1.msra.mxu0 %v1521
  %7232 = vmatprep.subr.mxu0 %v1520
  %7233 = vmatpush1.msra.mxu0 %v1519
  %7234 = vmatprep.subr.mxu0 %v1518
  %7235 = vmatpush1.msra.mxu0 %v1517
  %7236 = vmatprep.subr.mxu0 %v1516
  %7237 = vmatpush1.msra.mxu0 %v1515
  %7238 = vmatprep.subr.mxu0 %v1514
  %7239 = vmatpush1.msra.mxu0 %v1513
  %7240 = vmatprep.subr.mxu0 %v1512
  %7241 = vmatpush1.msra.mxu0 %v1511
  %7242 = vmatprep.subr.mxu0 %v1510
  %7243 = vmatpush1.msra.mxu0 %v1509
  %7244 = vmatprep.subr.mxu0 %v1508
  %7245 = vmatpush1.msra.mxu0 %v1507
  %7246 = vmatprep.subr.mxu0 %v1506
  %7247 = vmatpush1.msra.mxu0 %v1505
  %7248 = vmatprep.subr.mxu0 %v1504
  %7249 = vmatpush1.msra.mxu0 %v1503
  %7250 = vmatprep.subr.mxu0 0.0
  %7251 = vmatpush2.msra.mxu0 0.0
  %7252 = vmatprep.subr.mxu0 0.0
  %7253 = vmatpush2.msra.mxu0 0.0
  %7254 = vmatprep.subr.mxu0 0.0
  %7255 = vmatpush2.msra.mxu0 0.0
  %7256 = vmatprep.subr.mxu0 0.0
  %7257 = vmatpush2.msra.mxu0 0.0
  %7258 = vmatprep.subr.mxu0 0.0
  %7259 = vmatpush2.msra.mxu0 0.0
  %7260 = vmatprep.subr.mxu0 0.0
  %7261 = vmatpush2.msra.mxu0 0.0
  %7262 = vmatprep.subr.mxu0 0.0
  %7263 = vmatpush2.msra.mxu0 0.0
  %7264 = vmatprep.subr.mxu0 0.0
  %7265 = vmatpush2.msra.mxu0 0.0
  %7266 = vmatprep.subr.mxu0 0.0
  %7267 = vmatpush2.msra.mxu0 0.0
  %7268 = vmatprep.subr.mxu0 0.0
  %7269 = vmatpush2.msra.mxu0 0.0
  %7270 = vmatprep.subr.mxu0 0.0
  %7271 = vmatpush2.msra.mxu0 0.0
  %7272 = vmatprep.subr.mxu0 0.0
  %7273 = vmatpush2.msra.mxu0 0.0
  %7274 = vmatprep.subr.mxu0 %v1542
  %7275 = vmatpush2.msra.mxu0 %v1541
  %7276 = vmatprep.subr.mxu0 %v1540
  %7277 = vmatpush2.msra.mxu0 %v1539
  %7278 = vmatprep.subr.mxu0 %v1538
  %7279 = vmatpush2.msra.mxu0 %v1537
  %7280 = vmatprep.subr.mxu0 %v1536
  %7281 = vmatpush2.msra.mxu0 %v1535
  %7282 = vmatprep.mubr.f32.mxu0 %v7216
  %7283 = vmatmul.mubr.f32.gmra.mxu0 %v7095
  %v7284 = vpop.f32.mrf.mxu0
  %v7285 = vadd.f32 0.0, %v7284
  %v7286 = vpop.f32.mrf.mxu0
  %v7287 = vadd.f32 0.0, %v7286
  %7288 = vdwg.mxu0
  %v7289 = vsub.f32 %v7095, %v7285
  %v7290 = vsub.f32 %v7097, %v7287
  %v7291 = vmul.f32 %v7289, %v7289
  %v7292 = vmul.f32 %v7290, %v7290
  %v7294 = vsel %vm4757, %v7292, 0
  %7296 = vmatprep.subr.mxu0 %v1534
  %7297 = vmatpush1.msra.mxu0 %v1533
  %7298 = vmatprep.subr.mxu0 %v1532
  %7299 = vmatpush1.msra.mxu0 %v1531
  %7300 = vmatprep.subr.mxu0 %v1530
  %7301 = vmatpush1.msra.mxu0 %v1529
  %7302 = vmatprep.subr.mxu0 %v1528
  %7303 = vmatpush1.msra.mxu0 %v1527
  %7304 = vmatprep.subr.mxu0 %v1526
  %7305 = vmatpush1.msra.mxu0 %v1525
  %7306 = vmatprep.subr.mxu0 %v1524
  %7307 = vmatpush1.msra.mxu0 %v1523
  %7308 = vmatprep.subr.mxu0 %v1522
  %7309 = vmatpush1.msra.mxu0 %v1521
  %7310 = vmatprep.subr.mxu0 %v1520
  %7311 = vmatpush1.msra.mxu0 %v1519
  %7312 = vmatprep.subr.mxu0 %v1518
  %7313 = vmatpush1.msra.mxu0 %v1517
  %7314 = vmatprep.subr.mxu0 %v1516
  %7315 = vmatpush1.msra.mxu0 %v1515
  %7316 = vmatprep.subr.mxu0 %v1514
  %7317 = vmatpush1.msra.mxu0 %v1513
  %7318 = vmatprep.subr.mxu0 %v1512
  %7319 = vmatpush1.msra.mxu0 %v1511
  %7320 = vmatprep.subr.mxu0 %v1510
  %7321 = vmatpush1.msra.mxu0 %v1509
  %7322 = vmatprep.subr.mxu0 %v1508
  %7323 = vmatpush1.msra.mxu0 %v1507
  %7324 = vmatprep.subr.mxu0 %v1506
  %7325 = vmatpush1.msra.mxu0 %v1505
  %7326 = vmatprep.subr.mxu0 %v1504
  %7327 = vmatpush1.msra.mxu0 %v1503
  %7328 = vmatprep.subr.mxu0 0.0
  %7329 = vmatpush2.msra.mxu0 0.0
  %7330 = vmatprep.subr.mxu0 0.0
  %7331 = vmatpush2.msra.mxu0 0.0
  %7332 = vmatprep.subr.mxu0 0.0
  %7333 = vmatpush2.msra.mxu0 0.0
  %7334 = vmatprep.subr.mxu0 0.0
  %7335 = vmatpush2.msra.mxu0 0.0
  %7336 = vmatprep.subr.mxu0 0.0
  %7337 = vmatpush2.msra.mxu0 0.0
  %7338 = vmatprep.subr.mxu0 0.0
  %7339 = vmatpush2.msra.mxu0 0.0
  %7340 = vmatprep.subr.mxu0 0.0
  %7341 = vmatpush2.msra.mxu0 0.0
  %7342 = vmatprep.subr.mxu0 0.0
  %7343 = vmatpush2.msra.mxu0 0.0
  %7344 = vmatprep.subr.mxu0 0.0
  %7345 = vmatpush2.msra.mxu0 0.0
  %7346 = vmatprep.subr.mxu0 0.0
  %7347 = vmatpush2.msra.mxu0 0.0
  %7348 = vmatprep.subr.mxu0 0.0
  %7349 = vmatpush2.msra.mxu0 0.0
  %7350 = vmatprep.subr.mxu0 0.0
  %7351 = vmatpush2.msra.mxu0 0.0
  %7352 = vmatprep.subr.mxu0 %v1542
  %7353 = vmatpush2.msra.mxu0 %v1541
  %7354 = vmatprep.subr.mxu0 %v1540
  %7355 = vmatpush2.msra.mxu0 %v1539
  %7356 = vmatprep.subr.mxu0 %v1538
  %7357 = vmatpush2.msra.mxu0 %v1537
  %7358 = vmatprep.subr.mxu0 %v1536
  %7359 = vmatpush2.msra.mxu0 %v1535
  %7360 = vmatprep.mubr.f32.mxu0 %v7294
  %7361 = vmatmul.mubr.f32.gmra.mxu0 %v7291
  %v7362 = vpop.f32.mrf.mxu0
  %v7363 = vadd.f32 1e-05, %v7362
  %v7364 = vpop.f32.mrf.mxu0
  %v7365 = vadd.f32 1e-05, %v7364
  %7366 = vdwg.mxu0
  %v7367 = vrsqrt.pop %v7363
  %v7368 = vrsqrt.pop %v7365
  %v7369 = vmul.f32 %v7289, %v7367
  %v7370 = vmul.f32 %v7290, %v7368
  %v7371 = vld [vmem:[%s5 + $0x460] sm:$0xff]
  %v7372 = vld [vmem:[%s5 + $0x468] sm:$0xff]
  %v7373 = vld [vmem:[%s5 + $0x470] sm:$0xff]
  %v7374 = vld [vmem:[%s5 + $0x478] sm:$0xff]
  %v7375 = vld [vmem:[%s5 + $0x480] sm:$0xff]
  %v7376 = vld [vmem:[%s5 + $0x488] sm:$0xff]
  %v7377 = vld [vmem:[%s5 + $0x490] sm:$0xff]
  %v7378 = vld [vmem:[%s5 + $0x498] sm:$0xff]
  %v7379 = vld [vmem:[%s5 + $0x4a0] sm:$0xff]
  %v7380 = vld [vmem:[%s5 + $0x4a8] sm:$0xff]
  %v7381 = vld [vmem:[%s5 + $0x4b0] sm:$0xff]
  %v7382 = vld [vmem:[%s5 + $0x4b8] sm:$0xff]
  %v7383 = vld [vmem:[%s5 + $0x4c0] sm:$0xff]
  %v7384 = vld [vmem:[%s5 + $0x4c8] sm:$0xff]
  %v7385 = vld [vmem:[%s5 + $0x4d0] sm:$0xff]
  %v7386 = vld [vmem:[%s5 + $0x4d8] sm:$0xff]
  %v7387 = vld [vmem:[%s5 + $0x4e0] sm:$0xff]
  %v7388 = vld [vmem:[%s5 + $0x4e8] sm:$0xff]
  %v7389 = vld [vmem:[%s5 + $0x4f0] sm:$0xff]
  %v7390 = vld [vmem:[%s5 + $0x4f8] sm:$0xff]
  %v7391 = vpack.c.bf16 %v7369, %v7369
  %v7392 = vpack.c.bf16 %v7370, %v7370
  %s7393 = scalar_lea.vmem %s10, 5
  %v7394 = vld [vmem:[%s7393] ss:$8 sm:$0x3]
  %v7396 = vlaneseq
  %v7397 = vshrl.u32 %v7396, 7
  %v7398 = vsub.s32 0, %v7397
  %v7399 = vrot.slane %v7394, %v7398
  %v7400 = vlaneseq
  %v7401 = vshrl.u32 %v7400, 7
  %v7402 = vsub.s32 1, %v7401
  %v7403 = vrot.slane %v7394, %v7402
  %v7426 = vunpack.c.l.b16 %v7371
  %v7427 = vunpack.c.h.b16 %v7371
  %v7428 = vunpack.c.l.b16 %v7372
  %v7429 = vunpack.c.h.b16 %v7372
  %v7430 = vunpack.c.l.b16 %v7373
  %v7431 = vunpack.c.h.b16 %v7373
  %v7432 = vunpack.c.l.b16 %v7374
  %v7433 = vunpack.c.h.b16 %v7374
  %v7434 = vunpack.c.l.b16 %v7375
  %v7435 = vunpack.c.h.b16 %v7375
  %v7436 = vunpack.c.l.b16 %v7376
  %v7437 = vunpack.c.h.b16 %v7376
  %v7438 = vunpack.c.l.b16 %v7377
  %v7439 = vunpack.c.h.b16 %v7377
  %v7440 = vunpack.c.l.b16 %v7378
  %v7441 = vunpack.c.h.b16 %v7378
  %v7442 = vunpack.c.l.b16 %v7379
  %v7443 = vunpack.c.h.b16 %v7379
  %v7444 = vunpack.c.l.b16 %v7380
  %v7445 = vunpack.c.h.b16 %v7380
  %v7446 = vunpack.c.l.b16 %v7381
  %v7447 = vunpack.c.h.b16 %v7381
  %v7448 = vunpack.c.l.b16 %v7382
  %v7449 = vunpack.c.h.b16 %v7382
  %v7450 = vunpack.c.l.b16 %v7383
  %v7451 = vunpack.c.h.b16 %v7383
  %v7452 = vunpack.c.l.b16 %v7384
  %v7453 = vunpack.c.h.b16 %v7384
  %v7454 = vunpack.c.l.b16 %v7385
  %v7455 = vunpack.c.h.b16 %v7385
  %v7456 = vunpack.c.l.b16 %v7386
  %v7457 = vunpack.c.h.b16 %v7386
  %v7458 = vunpack.c.l.b16 %v7387
  %v7459 = vunpack.c.h.b16 %v7387
  %v7460 = vunpack.c.l.b16 %v7388
  %v7461 = vunpack.c.h.b16 %v7388
  %v7462 = vunpack.c.l.b16 %v7389
  %v7463 = vunpack.c.h.b16 %v7389
  %v7464 = vunpack.c.l.b16 %v7390
  %v7465 = vunpack.c.h.b16 %v7390
  %v7466 = vpack.c.b16 %v7428, %v7426
  %v7467 = vpack.c.b16 %v7429, %v7427
  %v7468 = vpack.c.b16 %v7432, %v7430
  %v7469 = vpack.c.b16 %v7433, %v7431
  %v7470 = vpack.c.b16 %v7436, %v7434
  %v7471 = vpack.c.b16 %v7437, %v7435
  %v7472 = vpack.c.b16 %v7440, %v7438
  %v7473 = vpack.c.b16 %v7441, %v7439
  %v7474 = vpack.c.b16 %v7444, %v7442
  %v7475 = vpack.c.b16 %v7445, %v7443
  %v7476 = vpack.c.b16 %v7448, %v7446
  %v7477 = vpack.c.b16 %v7449, %v7447
  %v7478 = vpack.c.b16 %v7452, %v7450
  %v7479 = vpack.c.b16 %v7453, %v7451
  %v7480 = vpack.c.b16 %v7456, %v7454
  %v7481 = vpack.c.b16 %v7457, %v7455
  %v7482 = vpack.c.b16 %v7460, %v7458
  %v7483 = vpack.c.b16 %v7461, %v7459
  %v7484 = vpack.c.b16 %v7464, %v7462
  %v7485 = vpack.c.b16 %v7465, %v7463
  %v7507 = vsel %vm4757, %v7392, 0
  %7509 = vmatprep.subr.bf16.mxu0 %v7481
  %7510 = vmatpush1.bf16.msra.mxu0 %v7480
  %7511 = vmatprep.subr.bf16.mxu0 %v7479
  %7512 = vmatpush1.bf16.msra.mxu0 %v7478
  %7513 = vmatprep.subr.bf16.mxu0 %v7477
  %7514 = vmatpush1.bf16.msra.mxu0 %v7476
  %7515 = vmatprep.subr.bf16.mxu0 %v7475
  %7516 = vmatpush1.bf16.msra.mxu0 %v7474
  %7517 = vmatprep.subr.bf16.mxu0 %v7473
  %7518 = vmatpush1.bf16.msra.mxu0 %v7472
  %7519 = vmatprep.subr.bf16.mxu0 %v7471
  %7520 = vmatpush1.bf16.msra.mxu0 %v7470
  %7521 = vmatprep.subr.bf16.mxu0 %v7469
  %7522 = vmatpush1.bf16.msra.mxu0 %v7468
  %7523 = vmatprep.subr.bf16.mxu0 %v7467
  %7524 = vmatpush1.bf16.msra.mxu0 %v7466
  %7525 = vmatprep.subr.bf16.mxu0 0
  %7526 = vmatpush2.bf16.msra.mxu0 0
  %7527 = vmatprep.subr.bf16.mxu0 0
  %7528 = vmatpush2.bf16.msra.mxu0 0
  %7529 = vmatprep.subr.bf16.mxu0 0
  %7530 = vmatpush2.bf16.msra.mxu0 0
  %7531 = vmatprep.subr.bf16.mxu0 0
  %7532 = vmatpush2.bf16.msra.mxu0 0
  %7533 = vmatprep.subr.bf16.mxu0 0
  %7534 = vmatpush2.bf16.msra.mxu0 0
  %7535 = vmatprep.subr.bf16.mxu0 0
  %7536 = vmatpush2.bf16.msra.mxu0 0
  %7537 = vmatprep.subr.bf16.mxu0 %v7485
  %7538 = vmatpush2.bf16.msra.mxu0 %v7484
  %7539 = vmatprep.subr.bf16.mxu0 %v7483
  %7540 = vmatpush2.bf16.msra.mxu0 %v7482
  %7541 = vmatprep.mubr.bf16.mxu0 %v7507
  %7542 = vmatmul.mubr.bf16.gmra.mxu0 %v7391
  %v7543 = vpop.f32.mrf.mxu0
  %v7544 = vadd.f32 %v7399, %v7543
  %v7545 = vpop.f32.mrf.mxu0
  %v7546 = vadd.f32 %v7403, %v7545
  %v7547 = vpop.f32.mrf.mxu0
  %v7548 = vpop.f32.mrf.mxu0
  %7549 = vdwg.mxu0
  %v7550 = vmul.f32 %v7544, %v7544
  %v7551 = vmul.f32 %v7546, %v7546
  %v7552 = vmul.f32 %v7544, %v7550
  %v7553 = vmul.f32 %v7546, %v7551
  %v7554 = vmul.f32 %v7552, 0.044715
  %v7555 = vmul.f32 %v7553, 0.044715
  %v7556 = vadd.f32 %v7544, %v7554
  %v7557 = vadd.f32 %v7546, %v7555
  %v7558 = vmul.f32 %v7556, 0.7978846
  %v7559 = vmul.f32 %v7557, 0.7978846
  %v7560 = vtanh.pop %v7558
  %v7561 = vtanh.pop %v7559
  %v7562 = vadd.f32 %v7560, 1.0
  %v7563 = vadd.f32 %v7561, 1.0
  %v7564 = vmul.f32 %v7562, 0.5
  %v7565 = vmul.f32 %v7563, 0.5
  %v7566 = vmul.f32 %v7544, %v7564
  %v7567 = vmul.f32 %v7546, %v7565
  %v7568 = vld [vmem:[%s5 + $0x500] sm:$0xff]
  %v7569 = vld [vmem:[%s5 + $0x508] sm:$0xff]
  %v7570 = vld [vmem:[%s5 + $0x510] sm:$0xff]
  %v7571 = vld [vmem:[%s5 + $0x518] sm:$0xff]
  %v7572 = vld [vmem:[%s5 + $0x520] sm:$0xff]
  %v7573 = vld [vmem:[%s5 + $0x528] sm:$0xff]
  %v7574 = vld [vmem:[%s5 + $0x530] sm:$0xff]
  %v7575 = vld [vmem:[%s5 + $0x538] sm:$0xff]
  %v7576 = vld [vmem:[%s5 + $0x540] sm:$0xff]
  %v7577 = vld [vmem:[%s5 + $0x548] sm:$0xff]
  %v7578 = vld [vmem:[%s5 + $0x550] sm:$0xff]
  %v7579 = vld [vmem:[%s5 + $0x558] sm:$0xff]
  %v7580 = vld [vmem:[%s5 + $0x560] sm:$0xff]
  %v7581 = vld [vmem:[%s5 + $0x568] sm:$0xff]
  %v7582 = vld [vmem:[%s5 + $0x570] sm:$0xff]
  %v7583 = vld [vmem:[%s5 + $0x578] sm:$0xff]
  %v7584 = vld [vmem:[%s5 + $0x580] sm:$0xff]
  %v7585 = vld [vmem:[%s5 + $0x588] sm:$0xff]
  %v7586 = vld [vmem:[%s5 + $0x590] sm:$0xff]
  %v7587 = vld [vmem:[%s5 + $0x598] sm:$0xff]
  %v7588 = vpack.c.bf16 %v7566, %v7566
  %v7589 = vpack.c.bf16 %v7567, %v7567
  %s7590 = scalar_lea.vmem %s10, 6
  %v7591 = vld [vmem:[%s7590] ss:$8 sm:$0x3]
  %v7593 = vlaneseq
  %v7594 = vshrl.u32 %v7593, 7
  %v7595 = vsub.s32 0, %v7594
  %v7596 = vrot.slane %v7591, %v7595
  %v7597 = vlaneseq
  %v7598 = vshrl.u32 %v7597, 7
  %v7599 = vsub.s32 1, %v7598
  %v7600 = vrot.slane %v7591, %v7599
  %v7623 = vunpack.c.l.b16 %v7568
  %v7624 = vunpack.c.h.b16 %v7568
  %v7625 = vunpack.c.l.b16 %v7569
  %v7626 = vunpack.c.h.b16 %v7569
  %v7627 = vunpack.c.l.b16 %v7570
  %v7628 = vunpack.c.h.b16 %v7570
  %v7629 = vunpack.c.l.b16 %v7571
  %v7630 = vunpack.c.h.b16 %v7571
  %v7631 = vunpack.c.l.b16 %v7572
  %v7632 = vunpack.c.h.b16 %v7572
  %v7633 = vunpack.c.l.b16 %v7573
  %v7634 = vunpack.c.h.b16 %v7573
  %v7635 = vunpack.c.l.b16 %v7574
  %v7636 = vunpack.c.h.b16 %v7574
  %v7637 = vunpack.c.l.b16 %v7575
  %v7638 = vunpack.c.h.b16 %v7575
  %v7639 = vunpack.c.l.b16 %v7576
  %v7640 = vunpack.c.h.b16 %v7576
  %v7641 = vunpack.c.l.b16 %v7577
  %v7642 = vunpack.c.h.b16 %v7577
  %v7643 = vunpack.c.l.b16 %v7578
  %v7644 = vunpack.c.h.b16 %v7578
  %v7645 = vunpack.c.l.b16 %v7579
  %v7646 = vunpack.c.h.b16 %v7579
  %v7647 = vunpack.c.l.b16 %v7580
  %v7648 = vunpack.c.h.b16 %v7580
  %v7649 = vunpack.c.l.b16 %v7581
  %v7650 = vunpack.c.h.b16 %v7581
  %v7651 = vunpack.c.l.b16 %v7582
  %v7652 = vunpack.c.h.b16 %v7582
  %v7653 = vunpack.c.l.b16 %v7583
  %v7654 = vunpack.c.h.b16 %v7583
  %v7655 = vunpack.c.l.b16 %v7584
  %v7656 = vunpack.c.h.b16 %v7584
  %v7657 = vunpack.c.l.b16 %v7585
  %v7658 = vunpack.c.h.b16 %v7585
  %v7659 = vunpack.c.l.b16 %v7586
  %v7660 = vunpack.c.h.b16 %v7586
  %v7661 = vunpack.c.l.b16 %v7587
  %v7662 = vunpack.c.h.b16 %v7587
  %v7663 = vpack.c.b16 %v7625, %v7623
  %v7664 = vpack.c.b16 %v7626, %v7624
  %v7665 = vpack.c.b16 %v7629, %v7627
  %v7666 = vpack.c.b16 %v7630, %v7628
  %v7667 = vpack.c.b16 %v7633, %v7631
  %v7668 = vpack.c.b16 %v7634, %v7632
  %v7669 = vpack.c.b16 %v7637, %v7635
  %v7670 = vpack.c.b16 %v7638, %v7636
  %v7671 = vpack.c.b16 %v7641, %v7639
  %v7672 = vpack.c.b16 %v7642, %v7640
  %v7673 = vpack.c.b16 %v7645, %v7643
  %v7674 = vpack.c.b16 %v7646, %v7644
  %v7675 = vpack.c.b16 %v7649, %v7647
  %v7676 = vpack.c.b16 %v7650, %v7648
  %v7677 = vpack.c.b16 %v7653, %v7651
  %v7678 = vpack.c.b16 %v7654, %v7652
  %v7679 = vpack.c.b16 %v7657, %v7655
  %v7680 = vpack.c.b16 %v7658, %v7656
  %v7681 = vpack.c.b16 %v7661, %v7659
  %v7682 = vpack.c.b16 %v7662, %v7660
  %v7704 = vsel %vm4757, %v7589, 0
  %7706 = vmatprep.subr.bf16.mxu0 %v7678
  %7707 = vmatpush1.bf16.msra.mxu0 %v7677
  %7708 = vmatprep.subr.bf16.mxu0 %v7676
  %7709 = vmatpush1.bf16.msra.mxu0 %v7675
  %7710 = vmatprep.subr.bf16.mxu0 %v7674
  %7711 = vmatpush1.bf16.msra.mxu0 %v7673
  %7712 = vmatprep.subr.bf16.mxu0 %v7672
  %7713 = vmatpush1.bf16.msra.mxu0 %v7671
  %7714 = vmatprep.subr.bf16.mxu0 %v7670
  %7715 = vmatpush1.bf16.msra.mxu0 %v7669
  %7716 = vmatprep.subr.bf16.mxu0 %v7668
  %7717 = vmatpush1.bf16.msra.mxu0 %v7667
  %7718 = vmatprep.subr.bf16.mxu0 %v7666
  %7719 = vmatpush1.bf16.msra.mxu0 %v7665
  %7720 = vmatprep.subr.bf16.mxu0 %v7664
  %7721 = vmatpush1.bf16.msra.mxu0 %v7663
  %7722 = vmatprep.subr.bf16.mxu0 0
  %7723 = vmatpush2.bf16.msra.mxu0 0
  %7724 = vmatprep.subr.bf16.mxu0 0
  %7725 = vmatpush2.bf16.msra.mxu0 0
  %7726 = vmatprep.subr.bf16.mxu0 0
  %7727 = vmatpush2.bf16.msra.mxu0 0
  %7728 = vmatprep.subr.bf16.mxu0 0
  %7729 = vmatpush2.bf16.msra.mxu0 0
  %7730 = vmatprep.subr.bf16.mxu0 0
  %7731 = vmatpush2.bf16.msra.mxu0 0
  %7732 = vmatprep.subr.bf16.mxu0 0
  %7733 = vmatpush2.bf16.msra.mxu0 0
  %7734 = vmatprep.subr.bf16.mxu0 %v7682
  %7735 = vmatpush2.bf16.msra.mxu0 %v7681
  %7736 = vmatprep.subr.bf16.mxu0 %v7680
  %7737 = vmatpush2.bf16.msra.mxu0 %v7679
  %7738 = vmatprep.mubr.bf16.mxu0 %v7704
  %7739 = vmatmul.mubr.bf16.gmra.mxu0 %v7588
  %v7740 = vpop.f32.mrf.mxu0
  %v7741 = vadd.f32 %v7596, %v7740
  %v7742 = vpop.f32.mrf.mxu0
  %v7743 = vadd.f32 %v7600, %v7742
  %v7744 = vpop.f32.mrf.mxu0
  %v7745 = vpop.f32.mrf.mxu0
  %7746 = vdwg.mxu0
  %v7747 = vld [vmem:[%s5 + $0x5a0] sm:$0xff]
  %v7748 = vld [vmem:[%s5 + $0x5a8] sm:$0xff]
  %v7749 = vld [vmem:[%s5 + $0x5b0] sm:$0xff]
  %v7750 = vld [vmem:[%s5 + $0x5b8] sm:$0xff]
  %v7751 = vld [vmem:[%s5 + $0x5c0] sm:$0xff]
  %v7752 = vld [vmem:[%s5 + $0x5c8] sm:$0xff]
  %v7753 = vld [vmem:[%s5 + $0x5d0] sm:$0xff]
  %v7754 = vld [vmem:[%s5 + $0x5d8] sm:$0xff]
  %v7755 = vld [vmem:[%s5 + $0x5e0] sm:$0xff]
  %v7756 = vld [vmem:[%s5 + $0x5e8] sm:$0xff]
  %v7757 = vld [vmem:[%s5 + $0x5f0] sm:$0xff]
  %v7758 = vld [vmem:[%s5 + $0x5f8] sm:$0xff]
  %v7759 = vld [vmem:[%s5 + $0x600] sm:$0xff]
  %v7760 = vld [vmem:[%s5 + $0x608] sm:$0xff]
  %v7761 = vld [vmem:[%s5 + $0x610] sm:$0xff]
  %v7762 = vld [vmem:[%s5 + $0x618] sm:$0xff]
  %v7763 = vld [vmem:[%s5 + $0x620] sm:$0xff]
  %v7764 = vld [vmem:[%s5 + $0x628] sm:$0xff]
  %v7765 = vld [vmem:[%s5 + $0x630] sm:$0xff]
  %v7766 = vld [vmem:[%s5 + $0x638] sm:$0xff]
  %v7767 = vpack.c.bf16 %v7209, %v7209
  %v7768 = vpack.c.bf16 %v7211, %v7211
  %s7769 = scalar_lea.vmem %s10, 7
  %v7770 = vld [vmem:[%s7769] ss:$8 sm:$0x3]
  %v7772 = vlaneseq
  %v7773 = vshrl.u32 %v7772, 7
  %v7774 = vsub.s32 0, %v7773
  %v7775 = vrot.slane %v7770, %v7774
  %v7776 = vlaneseq
  %v7777 = vshrl.u32 %v7776, 7
  %v7778 = vsub.s32 1, %v7777
  %v7779 = vrot.slane %v7770, %v7778
  %v7802 = vunpack.c.l.b16 %v7747
  %v7803 = vunpack.c.h.b16 %v7747
  %v7804 = vunpack.c.l.b16 %v7748
  %v7805 = vunpack.c.h.b16 %v7748
  %v7806 = vunpack.c.l.b16 %v7749
  %v7807 = vunpack.c.h.b16 %v7749
  %v7808 = vunpack.c.l.b16 %v7750
  %v7809 = vunpack.c.h.b16 %v7750
  %v7810 = vunpack.c.l.b16 %v7751
  %v7811 = vunpack.c.h.b16 %v7751
  %v7812 = vunpack.c.l.b16 %v7752
  %v7813 = vunpack.c.h.b16 %v7752
  %v7814 = vunpack.c.l.b16 %v7753
  %v7815 = vunpack.c.h.b16 %v7753
  %v7816 = vunpack.c.l.b16 %v7754
  %v7817 = vunpack.c.h.b16 %v7754
  %v7818 = vunpack.c.l.b16 %v7755
  %v7819 = vunpack.c.h.b16 %v7755
  %v7820 = vunpack.c.l.b16 %v7756
  %v7821 = vunpack.c.h.b16 %v7756
  %v7822 = vunpack.c.l.b16 %v7757
  %v7823 = vunpack.c.h.b16 %v7757
  %v7824 = vunpack.c.l.b16 %v7758
  %v7825 = vunpack.c.h.b16 %v7758
  %v7826 = vunpack.c.l.b16 %v7759
  %v7827 = vunpack.c.h.b16 %v7759
  %v7828 = vunpack.c.l.b16 %v7760
  %v7829 = vunpack.c.h.b16 %v7760
  %v7830 = vunpack.c.l.b16 %v7761
  %v7831 = vunpack.c.h.b16 %v7761
  %v7832 = vunpack.c.l.b16 %v7762
  %v7833 = vunpack.c.h.b16 %v7762
  %v7834 = vunpack.c.l.b16 %v7763
  %v7835 = vunpack.c.h.b16 %v7763
  %v7836 = vunpack.c.l.b16 %v7764
  %v7837 = vunpack.c.h.b16 %v7764
  %v7838 = vunpack.c.l.b16 %v7765
  %v7839 = vunpack.c.h.b16 %v7765
  %v7840 = vunpack.c.l.b16 %v7766
  %v7841 = vunpack.c.h.b16 %v7766
  %v7842 = vpack.c.b16 %v7804, %v7802
  %v7843 = vpack.c.b16 %v7805, %v7803
  %v7844 = vpack.c.b16 %v7808, %v7806
  %v7845 = vpack.c.b16 %v7809, %v7807
  %v7846 = vpack.c.b16 %v7812, %v7810
  %v7847 = vpack.c.b16 %v7813, %v7811
  %v7848 = vpack.c.b16 %v7816, %v7814
  %v7849 = vpack.c.b16 %v7817, %v7815
  %v7850 = vpack.c.b16 %v7820, %v7818
  %v7851 = vpack.c.b16 %v7821, %v7819
  %v7852 = vpack.c.b16 %v7824, %v7822
  %v7853 = vpack.c.b16 %v7825, %v7823
  %v7854 = vpack.c.b16 %v7828, %v7826
  %v7855 = vpack.c.b16 %v7829, %v7827
  %v7856 = vpack.c.b16 %v7832, %v7830
  %v7857 = vpack.c.b16 %v7833, %v7831
  %v7858 = vpack.c.b16 %v7836, %v7834
  %v7859 = vpack.c.b16 %v7837, %v7835
  %v7860 = vpack.c.b16 %v7840, %v7838
  %v7861 = vpack.c.b16 %v7841, %v7839
  %v7883 = vsel %vm4757, %v7768, 0
  %7885 = vmatprep.subr.bf16.mxu0 %v7857
  %7886 = vmatpush1.bf16.msra.mxu0 %v7856
  %7887 = vmatprep.subr.bf16.mxu0 %v7855
  %7888 = vmatpush1.bf16.msra.mxu0 %v7854
  %7889 = vmatprep.subr.bf16.mxu0 %v7853
  %7890 = vmatpush1.bf16.msra.mxu0 %v7852
  %7891 = vmatprep.subr.bf16.mxu0 %v7851
  %7892 = vmatpush1.bf16.msra.mxu0 %v7850
  %7893 = vmatprep.subr.bf16.mxu0 %v7849
  %7894 = vmatpush1.bf16.msra.mxu0 %v7848
  %7895 = vmatprep.subr.bf16.mxu0 %v7847
  %7896 = vmatpush1.bf16.msra.mxu0 %v7846
  %7897 = vmatprep.subr.bf16.mxu0 %v7845
  %7898 = vmatpush1.bf16.msra.mxu0 %v7844
  %7899 = vmatprep.subr.bf16.mxu0 %v7843
  %7900 = vmatpush1.bf16.msra.mxu0 %v7842
  %7901 = vmatprep.subr.bf16.mxu0 0
  %7902 = vmatpush2.bf16.msra.mxu0 0
  %7903 = vmatprep.subr.bf16.mxu0 0
  %7904 = vmatpush2.bf16.msra.mxu0 0
  %7905 = vmatprep.subr.bf16.mxu0 0
  %7906 = vmatpush2.bf16.msra.mxu0 0
  %7907 = vmatprep.subr.bf16.mxu0 0
  %7908 = vmatpush2.bf16.msra.mxu0 0
  %7909 = vmatprep.subr.bf16.mxu0 0
  %7910 = vmatpush2.bf16.msra.mxu0 0
  %7911 = vmatprep.subr.bf16.mxu0 0
  %7912 = vmatpush2.bf16.msra.mxu0 0
  %7913 = vmatprep.subr.bf16.mxu0 %v7861
  %7914 = vmatpush2.bf16.msra.mxu0 %v7860
  %7915 = vmatprep.subr.bf16.mxu0 %v7859
  %7916 = vmatpush2.bf16.msra.mxu0 %v7858
  %7917 = vmatprep.mubr.bf16.mxu0 %v7883
  %7918 = vmatmul.mubr.bf16.gmra.mxu0 %v7767
  %v7919 = vpop.f32.mrf.mxu0
  %v7920 = vadd.f32 %v7775, %v7919
  %v7921 = vpop.f32.mrf.mxu0
  %v7922 = vadd.f32 %v7779, %v7921
  %v7923 = vpop.f32.mrf.mxu0
  %v7924 = vpop.f32.mrf.mxu0
  %7925 = vdwg.mxu0
  %v7926 = vadd.f32 %v7095, %v7741
  %v7927 = vadd.f32 %v7097, %v7743
  %v7929 = vsel %vm3928, %v7920, 0
  %v7932 = vsel %vm3928, %v7922, 0
  %7934 = vmatprep.subr.mxu0 0.0
  %7935 = vmatpush1.msra.mxu0 0.0
  %7936 = vmatprep.subr.mxu0 0.0
  %7937 = vmatpush1.msra.mxu0 0.0
  %7938 = vmatprep.subr.mxu0 0.0
  %7939 = vmatpush1.msra.mxu0 0.0
  %7940 = vmatprep.subr.mxu0 0.0
  %7941 = vmatpush1.msra.mxu0 0.0
  %7942 = vmatprep.subr.mxu0 0.0
  %7943 = vmatpush1.msra.mxu0 0.0
  %7944 = vmatprep.subr.mxu0 0.0
  %7945 = vmatpush1.msra.mxu0 0.0
  %7946 = vmatprep.subr.mxu0 0.0
  %7947 = vmatpush1.msra.mxu0 0.0
  %7948 = vmatprep.subr.mxu0 0.0
  %7949 = vmatpush1.msra.mxu0 0.0
  %7950 = vmatprep.subr.mxu0 0.0
  %7951 = vmatpush1.msra.mxu0 0.0
  %7952 = vmatprep.subr.mxu0 0.0
  %7953 = vmatpush1.msra.mxu0 0.0
  %7954 = vmatprep.subr.mxu0 0.0
  %7955 = vmatpush1.msra.mxu0 0.0
  %7956 = vmatprep.subr.mxu0 0.0
  %7957 = vmatpush1.msra.mxu0 0.0
  %7958 = vmatprep.subr.mxu0 0.0
  %7959 = vmatpush1.msra.mxu0 0.0
  %7960 = vmatprep.subr.mxu0 0.0
  %7961 = vmatpush1.msra.mxu0 0.0
  %7962 = vmatprep.subr.mxu0 0.0
  %7963 = vmatpush1.msra.mxu0 0.0
  %7964 = vmatprep.subr.mxu0 %v7932
  %7965 = vmatpush1.msra.mxu0 %v7929
  %7966 = vmatprep.subr.mxu0 0.0
  %7967 = vmatpush2.msra.mxu0 0.0
  %7968 = vmatprep.subr.mxu0 0.0
  %7969 = vmatpush2.msra.mxu0 0.0
  %7970 = vmatprep.subr.mxu0 0.0
  %7971 = vmatpush2.msra.mxu0 0.0
  %7972 = vmatprep.subr.mxu0 0.0
  %7973 = vmatpush2.msra.mxu0 0.0
  %7974 = vmatprep.subr.mxu0 0.0
  %7975 = vmatpush2.msra.mxu0 0.0
  %7976 = vmatprep.subr.mxu0 0.0
  %7977 = vmatpush2.msra.mxu0 0.0
  %7978 = vmatprep.subr.mxu0 0.0
  %7979 = vmatpush2.msra.mxu0 0.0
  %7980 = vmatprep.subr.mxu0 0.0
  %7981 = vmatpush2.msra.mxu0 0.0
  %7982 = vmatprep.subr.mxu0 0.0
  %7983 = vmatpush2.msra.mxu0 0.0
  %7984 = vmatprep.subr.mxu0 0.0
  %7985 = vmatpush2.msra.mxu0 0.0
  %7986 = vmatprep.subr.mxu0 0.0
  %7987 = vmatpush2.msra.mxu0 0.0
  %7988 = vmatprep.subr.mxu0 0.0
  %7989 = vmatpush2.msra.mxu0 0.0
  %7990 = vmatprep.subr.mxu0 0.0
  %7991 = vmatpush2.msra.mxu0 0.0
  %7992 = vmatprep.subr.mxu0 0.0
  %7993 = vmatpush2.msra.mxu0 0.0
  %7994 = vmatprep.subr.mxu0 0.0
  %7995 = vmatpush2.msra.mxu0 0.0
  %7996 = vmatprep.subr.mxu0 0.0
  %7997 = vmatpush2.msra.mxu0 0.0
  %7998 = vmatprep.mubr.f32.mxu0 0.0
  %7999 = vmatmul.mubr.f32.gmra.mxu0 %v3926
  %v8000 = vpop.f32.mrf.mxu0
  %v8001 = vadd.f32 0.0, %v8000
  %v8002 = vpop.f32.mrf.mxu0
  %v8003 = vadd.f32 0.0, %v8002
  %8004 = vdwg.mxu0
  %v8005 = vadd.f32 %v7926, %v8001
  %v8006 = vadd.f32 %v7927, %v8003
  %v8007 = vld [vmem:[%s4 + $0xe88] sm:$0xff]
  %v8008 = vld [vmem:[%s4 + $0xe90] sm:$0xf]
  %v8009 = vld [vmem:[%s4 + $0xe94] sm:$0xff]
  %v8010 = vld [vmem:[%s4 + $0xe9c] sm:$0xf]
  %v8011 = vld [vmem:[%s4 + $0xea0] sm:$0xff]
  %v8012 = vld [vmem:[%s4 + $0xea8] sm:$0xf]
  %v8013 = vld [vmem:[%s4 + $0xeac] sm:$0xff]
  %v8014 = vld [vmem:[%s4 + $0xeb4] sm:$0xf]
  %v8015 = vld [vmem:[%s4 + $0xeb8] sm:$0xff]
  %v8016 = vld [vmem:[%s4 + $0xec0] sm:$0xf]
  %v8017 = vld [vmem:[%s4 + $0xec4] sm:$0xff]
  %v8018 = vld [vmem:[%s4 + $0xecc] sm:$0xf]
  %v8019 = vld [vmem:[%s4 + $0xed0] sm:$0xff]
  %v8020 = vld [vmem:[%s4 + $0xed8] sm:$0xf]
  %v8021 = vld [vmem:[%s4 + $0xedc] sm:$0xff]
  %v8022 = vld [vmem:[%s4 + $0xee4] sm:$0xf]
  %v8023 = vld [vmem:[%s4 + $0xee8] sm:$0xff]
  %v8024 = vld [vmem:[%s4 + $0xef0] sm:$0xf]
  %v8025 = vld [vmem:[%s4 + $0xef4] sm:$0xff]
  %v8026 = vld [vmem:[%s4 + $0xefc] sm:$0xf]
  %v8027 = vld [vmem:[%s4 + $0xf00] sm:$0xff]
  %v8028 = vld [vmem:[%s4 + $0xf08] sm:$0xf]
  %v8029 = vld [vmem:[%s4 + $0xf0c] sm:$0xff]
  %v8030 = vld [vmem:[%s4 + $0xf14] sm:$0xf]
  %v8031 = vld [vmem:[%s4 + $0xf18] sm:$0xff]
  %v8032 = vld [vmem:[%s4 + $0xf20] sm:$0xf]
  %v8033 = vld [vmem:[%s4 + $0xf24] sm:$0xff]
  %v8034 = vld [vmem:[%s4 + $0xf2c] sm:$0xf]
  %v8035 = vld [vmem:[%s4 + $0xf30] sm:$0xff]
  %v8036 = vld [vmem:[%s4 + $0xf38] sm:$0xf]
  %v8037 = vld [vmem:[%s4 + $0xf3c] sm:$0xff]
  %v8038 = vld [vmem:[%s4 + $0xf44] sm:$0xf]
  %v8039 = vld [vmem:[%s4 + $0xf48] sm:$0xff]
  %v8040 = vld [vmem:[%s4 + $0xf50] sm:$0xf]
  %v8041 = vld [vmem:[%s4 + $0xf54] sm:$0xff]
  %v8042 = vld [vmem:[%s4 + $0xf5c] sm:$0xf]
  %v8043 = vld [vmem:[%s4 + $0xf60] sm:$0xff]
  %v8044 = vld [vmem:[%s4 + $0xf68] sm:$0xf]
  %v8045 = vld [vmem:[%s4 + $0xf6c] sm:$0xff]
  %v8046 = vld [vmem:[%s4 + $0xf74] sm:$0xf]
  %v8047 = vpack.c.bf16 %v8005, %v8005
  %v8048 = vpack.c.bf16 %v8006, %v8006
  %s8049 = scalar_lea.vmem %s9, 24
  %v8050 = vld [vmem:[%s8049] ss:$8 sm:$0x7]
  %v8052 = vlaneseq
  %v8053 = vshrl.u32 %v8052, 7
  %v8054 = vsub.s32 0, %v8053
  %v8055 = vrot.slane %v8050, %v8054
  %v8056 = vlaneseq
  %v8057 = vshrl.u32 %v8056, 7
  %v8058 = vsub.s32 1, %v8057
  %v8059 = vrot.slane %v8050, %v8058
  %v8060 = vlaneseq
  %v8061 = vshrl.u32 %v8060, 7
  %v8062 = vsub.s32 2, %v8061
  %v8063 = vrot.slane %v8050, %v8062
  %v8107 = vunpack.c.l.b16 %v8007
  %v8108 = vunpack.c.h.b16 %v8007
  %v8109 = vunpack.c.l.b16 %v8008
  %v8110 = vunpack.c.l.b16 %v8009
  %v8111 = vunpack.c.h.b16 %v8009
  %v8112 = vunpack.c.l.b16 %v8010
  %v8113 = vunpack.c.l.b16 %v8011
  %v8114 = vunpack.c.h.b16 %v8011
  %v8115 = vunpack.c.l.b16 %v8012
  %v8116 = vunpack.c.l.b16 %v8013
  %v8117 = vunpack.c.h.b16 %v8013
  %v8118 = vunpack.c.l.b16 %v8014
  %v8119 = vunpack.c.l.b16 %v8015
  %v8120 = vunpack.c.h.b16 %v8015
  %v8121 = vunpack.c.l.b16 %v8016
  %v8122 = vunpack.c.l.b16 %v8017
  %v8123 = vunpack.c.h.b16 %v8017
  %v8124 = vunpack.c.l.b16 %v8018
  %v8125 = vunpack.c.l.b16 %v8019
  %v8126 = vunpack.c.h.b16 %v8019
  %v8127 = vunpack.c.l.b16 %v8020
  %v8128 = vunpack.c.l.b16 %v8021
  %v8129 = vunpack.c.h.b16 %v8021
  %v8130 = vunpack.c.l.b16 %v8022
  %v8131 = vunpack.c.l.b16 %v8023
  %v8132 = vunpack.c.h.b16 %v8023
  %v8133 = vunpack.c.l.b16 %v8024
  %v8134 = vunpack.c.l.b16 %v8025
  %v8135 = vunpack.c.h.b16 %v8025
  %v8136 = vunpack.c.l.b16 %v8026
  %v8137 = vunpack.c.l.b16 %v8027
  %v8138 = vunpack.c.h.b16 %v8027
  %v8139 = vunpack.c.l.b16 %v8028
  %v8140 = vunpack.c.l.b16 %v8029
  %v8141 = vunpack.c.h.b16 %v8029
  %v8142 = vunpack.c.l.b16 %v8030
  %v8143 = vunpack.c.l.b16 %v8031
  %v8144 = vunpack.c.h.b16 %v8031
  %v8145 = vunpack.c.l.b16 %v8032
  %v8146 = vunpack.c.l.b16 %v8033
  %v8147 = vunpack.c.h.b16 %v8033
  %v8148 = vunpack.c.l.b16 %v8034
  %v8149 = vunpack.c.l.b16 %v8035
  %v8150 = vunpack.c.h.b16 %v8035
  %v8151 = vunpack.c.l.b16 %v8036
  %v8152 = vunpack.c.l.b16 %v8037
  %v8153 = vunpack.c.h.b16 %v8037
  %v8154 = vunpack.c.l.b16 %v8038
  %v8155 = vunpack.c.l.b16 %v8039
  %v8156 = vunpack.c.h.b16 %v8039
  %v8157 = vunpack.c.l.b16 %v8040
  %v8158 = vunpack.c.l.b16 %v8041
  %v8159 = vunpack.c.h.b16 %v8041
  %v8160 = vunpack.c.l.b16 %v8042
  %v8161 = vunpack.c.l.b16 %v8043
  %v8162 = vunpack.c.h.b16 %v8043
  %v8163 = vunpack.c.l.b16 %v8044
  %v8164 = vunpack.c.l.b16 %v8045
  %v8165 = vunpack.c.h.b16 %v8045
  %v8166 = vunpack.c.l.b16 %v8046
  %v8167 = vpack.c.b16 %v8110, %v8107
  %v8168 = vpack.c.b16 %v8111, %v8108
  %v8169 = vpack.c.b16 %v8112, %v8109
  %v8170 = vpack.c.b16 %v8116, %v8113
  %v8171 = vpack.c.b16 %v8117, %v8114
  %v8172 = vpack.c.b16 %v8118, %v8115
  %v8173 = vpack.c.b16 %v8122, %v8119
  %v8174 = vpack.c.b16 %v8123, %v8120
  %v8175 = vpack.c.b16 %v8124, %v8121
  %v8176 = vpack.c.b16 %v8128, %v8125
  %v8177 = vpack.c.b16 %v8129, %v8126
  %v8178 = vpack.c.b16 %v8130, %v8127
  %v8179 = vpack.c.b16 %v8134, %v8131
  %v8180 = vpack.c.b16 %v8135, %v8132
  %v8181 = vpack.c.b16 %v8136, %v8133
  %v8182 = vpack.c.b16 %v8140, %v8137
  %v8183 = vpack.c.b16 %v8141, %v8138
  %v8184 = vpack.c.b16 %v8142, %v8139
  %v8185 = vpack.c.b16 %v8146, %v8143
  %v8186 = vpack.c.b16 %v8147, %v8144
  %v8187 = vpack.c.b16 %v8148, %v8145
  %v8188 = vpack.c.b16 %v8152, %v8149
  %v8189 = vpack.c.b16 %v8153, %v8150
  %v8190 = vpack.c.b16 %v8154, %v8151
  %v8191 = vpack.c.b16 %v8158, %v8155
  %v8192 = vpack.c.b16 %v8159, %v8156
  %v8193 = vpack.c.b16 %v8160, %v8157
  %v8194 = vpack.c.b16 %v8164, %v8161
  %v8195 = vpack.c.b16 %v8165, %v8162
  %v8196 = vpack.c.b16 %v8166, %v8163
  %v8228 = vsel %vm4757, %v8048, 0
  %8230 = vmatprep.subr.bf16.mxu0 %v8189
  %8231 = vmatpush1.bf16.msra.mxu0 %v8188
  %8232 = vmatprep.subr.bf16.mxu0 %v8186
  %8233 = vmatpush1.bf16.msra.mxu0 %v8185
  %8234 = vmatprep.subr.bf16.mxu0 %v8183
  %8235 = vmatpush1.bf16.msra.mxu0 %v8182
  %8236 = vmatprep.subr.bf16.mxu0 %v8180
  %8237 = vmatpush1.bf16.msra.mxu0 %v8179
  %8238 = vmatprep.subr.bf16.mxu0 %v8177
  %8239 = vmatpush1.bf16.msra.mxu0 %v8176
  %8240 = vmatprep.subr.bf16.mxu0 %v8174
  %8241 = vmatpush1.bf16.msra.mxu0 %v8173
  %8242 = vmatprep.subr.bf16.mxu0 %v8171
  %8243 = vmatpush1.bf16.msra.mxu0 %v8170
  %8244 = vmatprep.subr.bf16.mxu0 %v8168
  %8245 = vmatpush1.bf16.msra.mxu0 %v8167
  %8246 = vmatprep.subr.bf16.mxu0 0
  %8247 = vmatpush2.bf16.msra.mxu0 0
  %8248 = vmatprep.subr.bf16.mxu0 0
  %8249 = vmatpush2.bf16.msra.mxu0 0
  %8250 = vmatprep.subr.bf16.mxu0 0
  %8251 = vmatpush2.bf16.msra.mxu0 0
  %8252 = vmatprep.subr.bf16.mxu0 0
  %8253 = vmatpush2.bf16.msra.mxu0 0
  %8254 = vmatprep.subr.bf16.mxu0 0
  %8255 = vmatpush2.bf16.msra.mxu0 0
  %8256 = vmatprep.subr.bf16.mxu0 0
  %8257 = vmatpush2.bf16.msra.mxu0 0
  %8258 = vmatprep.subr.bf16.mxu0 %v8195
  %8259 = vmatpush2.bf16.msra.mxu0 %v8194
  %8260 = vmatprep.subr.bf16.mxu0 %v8192
  %8261 = vmatpush2.bf16.msra.mxu0 %v8191
  %8262 = vmatprep.mubr.bf16.mxu0 %v8228
  %8263 = vmatmul.mubr.bf16.gmra.mxu0 %v8047
  %v8264 = vpop.f32.mrf.mxu0
  %v8265 = vadd.f32 %v8055, %v8264
  %v8266 = vpop.f32.mrf.mxu0
  %v8267 = vadd.f32 %v8059, %v8266
  %v8268 = vpop.f32.mrf.mxu0
  %v8269 = vpop.f32.mrf.mxu0
  %8270 = vdwg.mxu0
  %8271 = vmatprep.subr.bf16.mxu0 0
  %8272 = vmatpush1.bf16.msra.mxu0 %v8190
  %8273 = vmatprep.subr.bf16.mxu0 0
  %8274 = vmatpush1.bf16.msra.mxu0 %v8187
  %8275 = vmatprep.subr.bf16.mxu0 0
  %8276 = vmatpush1.bf16.msra.mxu0 %v8184
  %8277 = vmatprep.subr.bf16.mxu0 0
  %8278 = vmatpush1.bf16.msra.mxu0 %v8181
  %8279 = vmatprep.subr.bf16.mxu0 0
  %8280 = vmatpush1.bf16.msra.mxu0 %v8178
  %8281 = vmatprep.subr.bf16.mxu0 0
  %8282 = vmatpush1.bf16.msra.mxu0 %v8175
  %8283 = vmatprep.subr.bf16.mxu0 0
  %8284 = vmatpush1.bf16.msra.mxu0 %v8172
  %8285 = vmatprep.subr.bf16.mxu0 0
  %8286 = vmatpush1.bf16.msra.mxu0 %v8169
  %8287 = vmatprep.subr.bf16.mxu0 0
  %8288 = vmatpush2.bf16.msra.mxu0 0
  %8289 = vmatprep.subr.bf16.mxu0 0
  %8290 = vmatpush2.bf16.msra.mxu0 0
  %8291 = vmatprep.subr.bf16.mxu0 0
  %8292 = vmatpush2.bf16.msra.mxu0 0
  %8293 = vmatprep.subr.bf16.mxu0 0
  %8294 = vmatpush2.bf16.msra.mxu0 0
  %8295 = vmatprep.subr.bf16.mxu0 0
  %8296 = vmatpush2.bf16.msra.mxu0 0
  %8297 = vmatprep.subr.bf16.mxu0 0
  %8298 = vmatpush2.bf16.msra.mxu0 0
  %8299 = vmatprep.subr.bf16.mxu0 0
  %8300 = vmatpush2.bf16.msra.mxu0 %v8196
  %8301 = vmatprep.subr.bf16.mxu0 0
  %8302 = vmatpush2.bf16.msra.mxu0 %v8193
  %8303 = vmatprep.mubr.bf16.mxu0 %v8228
  %8304 = vmatmul.mubr.bf16.gmra.mxu0 %v8047
  %v8305 = vpop.f32.mrf.mxu0
  %v8306 = vadd.f32 %v8063, %v8305
  %v8307 = vpop.f32.mrf.mxu0
  %v8308 = vpop.f32.mrf.mxu0
  %v8309 = vpop.f32.mrf.mxu0
  %8310 = vdwg.mxu0
  %v8311 = vld [vmem:[%s4 + $0xf78] sm:$0xff]
  %v8312 = vld [vmem:[%s4 + $0xf80] sm:$0xf]
  %v8313 = vld [vmem:[%s4 + $0xf84] sm:$0xff]
  %v8314 = vld [vmem:[%s4 + $0xf8c] sm:$0xf]
  %v8315 = vld [vmem:[%s4 + $0xf90] sm:$0xff]
  %v8316 = vld [vmem:[%s4 + $0xf98] sm:$0xf]
  %v8317 = vld [vmem:[%s4 + $0xf9c] sm:$0xff]
  %v8318 = vld [vmem:[%s4 + $0xfa4] sm:$0xf]
  %v8319 = vld [vmem:[%s4 + $0xfa8] sm:$0xff]
  %v8320 = vld [vmem:[%s4 + $0xfb0] sm:$0xf]
  %v8321 = vld [vmem:[%s4 + $0xfb4] sm:$0xff]
  %v8322 = vld [vmem:[%s4 + $0xfbc] sm:$0xf]
  %v8323 = vld [vmem:[%s4 + $0xfc0] sm:$0xff]
  %v8324 = vld [vmem:[%s4 + $0xfc8] sm:$0xf]
  %v8325 = vld [vmem:[%s4 + $0xfcc] sm:$0xff]
  %v8326 = vld [vmem:[%s4 + $0xfd4] sm:$0xf]
  %v8327 = vld [vmem:[%s4 + $0xfd8] sm:$0xff]
  %v8328 = vld [vmem:[%s4 + $0xfe0] sm:$0xf]
  %v8329 = vld [vmem:[%s4 + $0xfe4] sm:$0xff]
  %v8330 = vld [vmem:[%s4 + $0xfec] sm:$0xf]
  %v8331 = vld [vmem:[%s4 + $0xff0] sm:$0xff]
  %v8332 = vld [vmem:[%s4 + $0xff8] sm:$0xf]
  %v8333 = vld [vmem:[%s4 + $0xffc] sm:$0xff]
  %v8334 = vld [vmem:[%s4 + $0x1004] sm:$0xf]
  %v8335 = vld [vmem:[%s4 + $0x1008] sm:$0xff]
  %v8336 = vld [vmem:[%s4 + $0x1010] sm:$0xf]
  %v8337 = vld [vmem:[%s4 + $0x1014] sm:$0xff]
  %v8338 = vld [vmem:[%s4 + $0x101c] sm:$0xf]
  %v8339 = vld [vmem:[%s4 + $0x1020] sm:$0xff]
  %v8340 = vld [vmem:[%s4 + $0x1028] sm:$0xf]
  %v8341 = vld [vmem:[%s4 + $0x102c] sm:$0xff]
  %v8342 = vld [vmem:[%s4 + $0x1034] sm:$0xf]
  %v8343 = vld [vmem:[%s4 + $0x1038] sm:$0xff]
  %v8344 = vld [vmem:[%s4 + $0x1040] sm:$0xf]
  %v8345 = vld [vmem:[%s4 + $0x1044] sm:$0xff]
  %v8346 = vld [vmem:[%s4 + $0x104c] sm:$0xf]
  %v8347 = vld [vmem:[%s4 + $0x1050] sm:$0xff]
  %v8348 = vld [vmem:[%s4 + $0x1058] sm:$0xf]
  %v8349 = vld [vmem:[%s4 + $0x105c] sm:$0xff]
  %v8350 = vld [vmem:[%s4 + $0x1064] sm:$0xf]
  %s8351 = scalar_lea.vmem %s9, 25
  %v8352 = vld [vmem:[%s8351] ss:$8 sm:$0x7]
  %v8354 = vlaneseq
  %v8355 = vshrl.u32 %v8354, 7
  %v8356 = vsub.s32 0, %v8355
  %v8357 = vrot.slane %v8352, %v8356
  %v8358 = vlaneseq
  %v8359 = vshrl.u32 %v8358, 7
  %v8360 = vsub.s32 1, %v8359
  %v8361 = vrot.slane %v8352, %v8360
  %v8362 = vlaneseq
  %v8363 = vshrl.u32 %v8362, 7
  %v8364 = vsub.s32 2, %v8363
  %v8365 = vrot.slane %v8352, %v8364
  %v8409 = vunpack.c.l.b16 %v8311
  %v8410 = vunpack.c.h.b16 %v8311
  %v8411 = vunpack.c.l.b16 %v8312
  %v8412 = vunpack.c.l.b16 %v8313
  %v8413 = vunpack.c.h.b16 %v8313
  %v8414 = vunpack.c.l.b16 %v8314
  %v8415 = vunpack.c.l.b16 %v8315
  %v8416 = vunpack.c.h.b16 %v8315
  %v8417 = vunpack.c.l.b16 %v8316
  %v8418 = vunpack.c.l.b16 %v8317
  %v8419 = vunpack.c.h.b16 %v8317
  %v8420 = vunpack.c.l.b16 %v8318
  %v8421 = vunpack.c.l.b16 %v8319
  %v8422 = vunpack.c.h.b16 %v8319
  %v8423 = vunpack.c.l.b16 %v8320
  %v8424 = vunpack.c.l.b16 %v8321
  %v8425 = vunpack.c.h.b16 %v8321
  %v8426 = vunpack.c.l.b16 %v8322
  %v8427 = vunpack.c.l.b16 %v8323
  %v8428 = vunpack.c.h.b16 %v8323
  %v8429 = vunpack.c.l.b16 %v8324
  %v8430 = vunpack.c.l.b16 %v8325
  %v8431 = vunpack.c.h.b16 %v8325
  %v8432 = vunpack.c.l.b16 %v8326
  %v8433 = vunpack.c.l.b16 %v8327
  %v8434 = vunpack.c.h.b16 %v8327
  %v8435 = vunpack.c.l.b16 %v8328
  %v8436 = vunpack.c.l.b16 %v8329
  %v8437 = vunpack.c.h.b16 %v8329
  %v8438 = vunpack.c.l.b16 %v8330
  %v8439 = vunpack.c.l.b16 %v8331
  %v8440 = vunpack.c.h.b16 %v8331
  %v8441 = vunpack.c.l.b16 %v8332
  %v8442 = vunpack.c.l.b16 %v8333
  %v8443 = vunpack.c.h.b16 %v8333
  %v8444 = vunpack.c.l.b16 %v8334
  %v8445 = vunpack.c.l.b16 %v8335
  %v8446 = vunpack.c.h.b16 %v8335
  %v8447 = vunpack.c.l.b16 %v8336
  %v8448 = vunpack.c.l.b16 %v8337
  %v8449 = vunpack.c.h.b16 %v8337
  %v8450 = vunpack.c.l.b16 %v8338
  %v8451 = vunpack.c.l.b16 %v8339
  %v8452 = vunpack.c.h.b16 %v8339
  %v8453 = vunpack.c.l.b16 %v8340
  %v8454 = vunpack.c.l.b16 %v8341
  %v8455 = vunpack.c.h.b16 %v8341
  %v8456 = vunpack.c.l.b16 %v8342
  %v8457 = vunpack.c.l.b16 %v8343
  %v8458 = vunpack.c.h.b16 %v8343
  %v8459 = vunpack.c.l.b16 %v8344
  %v8460 = vunpack.c.l.b16 %v8345
  %v8461 = vunpack.c.h.b16 %v8345
  %v8462 = vunpack.c.l.b16 %v8346
  %v8463 = vunpack.c.l.b16 %v8347
  %v8464 = vunpack.c.h.b16 %v8347
  %v8465 = vunpack.c.l.b16 %v8348
  %v8466 = vunpack.c.l.b16 %v8349
  %v8467 = vunpack.c.h.b16 %v8349
  %v8468 = vunpack.c.l.b16 %v8350
  %v8469 = vpack.c.b16 %v8412, %v8409
  %v8470 = vpack.c.b16 %v8413, %v8410
  %v8471 = vpack.c.b16 %v8414, %v8411
  %v8472 = vpack.c.b16 %v8418, %v8415
  %v8473 = vpack.c.b16 %v8419, %v8416
  %v8474 = vpack.c.b16 %v8420, %v8417
  %v8475 = vpack.c.b16 %v8424, %v8421
  %v8476 = vpack.c.b16 %v8425, %v8422
  %v8477 = vpack.c.b16 %v8426, %v8423
  %v8478 = vpack.c.b16 %v8430, %v8427
  %v8479 = vpack.c.b16 %v8431, %v8428
  %v8480 = vpack.c.b16 %v8432, %v8429
  %v8481 = vpack.c.b16 %v8436, %v8433
  %v8482 = vpack.c.b16 %v8437, %v8434
  %v8483 = vpack.c.b16 %v8438, %v8435
  %v8484 = vpack.c.b16 %v8442, %v8439
  %v8485 = vpack.c.b16 %v8443, %v8440
  %v8486 = vpack.c.b16 %v8444, %v8441
  %v8487 = vpack.c.b16 %v8448, %v8445
  %v8488 = vpack.c.b16 %v8449, %v8446
  %v8489 = vpack.c.b16 %v8450, %v8447
  %v8490 = vpack.c.b16 %v8454, %v8451
  %v8491 = vpack.c.b16 %v8455, %v8452
  %v8492 = vpack.c.b16 %v8456, %v8453
  %v8493 = vpack.c.b16 %v8460, %v8457
  %v8494 = vpack.c.b16 %v8461, %v8458
  %v8495 = vpack.c.b16 %v8462, %v8459
  %v8496 = vpack.c.b16 %v8466, %v8463
  %v8497 = vpack.c.b16 %v8467, %v8464
  %v8498 = vpack.c.b16 %v8468, %v8465
  %8529 = vmatprep.subr.bf16.mxu0 %v8491
  %8530 = vmatpush1.bf16.msra.mxu0 %v8490
  %8531 = vmatprep.subr.bf16.mxu0 %v8488
  %8532 = vmatpush1.bf16.msra.mxu0 %v8487
  %8533 = vmatprep.subr.bf16.mxu0 %v8485
  %8534 = vmatpush1.bf16.msra.mxu0 %v8484
  %8535 = vmatprep.subr.bf16.mxu0 %v8482
  %8536 = vmatpush1.bf16.msra.mxu0 %v8481
  %8537 = vmatprep.subr.bf16.mxu0 %v8479
  %8538 = vmatpush1.bf16.msra.mxu0 %v8478
  %8539 = vmatprep.subr.bf16.mxu0 %v8476
  %8540 = vmatpush1.bf16.msra.mxu0 %v8475
  %8541 = vmatprep.subr.bf16.mxu0 %v8473
  %8542 = vmatpush1.bf16.msra.mxu0 %v8472
  %8543 = vmatprep.subr.bf16.mxu0 %v8470
  %8544 = vmatpush1.bf16.msra.mxu0 %v8469
  %8545 = vmatprep.subr.bf16.mxu0 0
  %8546 = vmatpush2.bf16.msra.mxu0 0
  %8547 = vmatprep.subr.bf16.mxu0 0
  %8548 = vmatpush2.bf16.msra.mxu0 0
  %8549 = vmatprep.subr.bf16.mxu0 0
  %8550 = vmatpush2.bf16.msra.mxu0 0
  %8551 = vmatprep.subr.bf16.mxu0 0
  %8552 = vmatpush2.bf16.msra.mxu0 0
  %8553 = vmatprep.subr.bf16.mxu0 0
  %8554 = vmatpush2.bf16.msra.mxu0 0
  %8555 = vmatprep.subr.bf16.mxu0 0
  %8556 = vmatpush2.bf16.msra.mxu0 0
  %8557 = vmatprep.subr.bf16.mxu0 %v8497
  %8558 = vmatpush2.bf16.msra.mxu0 %v8496
  %8559 = vmatprep.subr.bf16.mxu0 %v8494
  %8560 = vmatpush2.bf16.msra.mxu0 %v8493
  %8561 = vmatprep.mubr.bf16.mxu0 %v7883
  %8562 = vmatmul.mubr.bf16.gmra.mxu0 %v7767
  %v8563 = vpop.f32.mrf.mxu0
  %v8564 = vadd.f32 %v8357, %v8563
  %v8565 = vpop.f32.mrf.mxu0
  %v8566 = vadd.f32 %v8361, %v8565
  %v8567 = vpop.f32.mrf.mxu0
  %v8568 = vpop.f32.mrf.mxu0
  %8569 = vdwg.mxu0
  %8570 = vmatprep.subr.bf16.mxu0 0
  %8571 = vmatpush1.bf16.msra.mxu0 %v8492
  %8572 = vmatprep.subr.bf16.mxu0 0
  %8573 = vmatpush1.bf16.msra.mxu0 %v8489
  %8574 = vmatprep.subr.bf16.mxu0 0
  %8575 = vmatpush1.bf16.msra.mxu0 %v8486
  %8576 = vmatprep.subr.bf16.mxu0 0
  %8577 = vmatpush1.bf16.msra.mxu0 %v8483
  %8578 = vmatprep.subr.bf16.mxu0 0
  %8579 = vmatpush1.bf16.msra.mxu0 %v8480
  %8580 = vmatprep.subr.bf16.mxu0 0
  %8581 = vmatpush1.bf16.msra.mxu0 %v8477
  %8582 = vmatprep.subr.bf16.mxu0 0
  %8583 = vmatpush1.bf16.msra.mxu0 %v8474
  %8584 = vmatprep.subr.bf16.mxu0 0
  %8585 = vmatpush1.bf16.msra.mxu0 %v8471
  %8586 = vmatprep.subr.bf16.mxu0 0
  %8587 = vmatpush2.bf16.msra.mxu0 0
  %8588 = vmatprep.subr.bf16.mxu0 0
  %8589 = vmatpush2.bf16.msra.mxu0 0
  %8590 = vmatprep.subr.bf16.mxu0 0
  %8591 = vmatpush2.bf16.msra.mxu0 0
  %8592 = vmatprep.subr.bf16.mxu0 0
  %8593 = vmatpush2.bf16.msra.mxu0 0
  %8594 = vmatprep.subr.bf16.mxu0 0
  %8595 = vmatpush2.bf16.msra.mxu0 0
  %8596 = vmatprep.subr.bf16.mxu0 0
  %8597 = vmatpush2.bf16.msra.mxu0 0
  %8598 = vmatprep.subr.bf16.mxu0 0
  %8599 = vmatpush2.bf16.msra.mxu0 %v8498
  %8600 = vmatprep.subr.bf16.mxu0 0
  %8601 = vmatpush2.bf16.msra.mxu0 %v8495
  %8602 = vmatprep.mubr.bf16.mxu0 %v7883
  %8603 = vmatmul.mubr.bf16.gmra.mxu0 %v7767
  %v8604 = vpop.f32.mrf.mxu0
  %v8605 = vadd.f32 %v8365, %v8604
  %v8606 = vpop.f32.mrf.mxu0
  %v8607 = vpop.f32.mrf.mxu0
  %v8608 = vpop.f32.mrf.mxu0
  %8609 = vdwg.mxu0
  %v8611 = vsel %vm1553, %v8306, 0
  %8613 = vmatprep.subr.mxu0 %v1429
  %8614 = vmatpush1.msra.mxu0 %v1428
  %8615 = vmatprep.subr.mxu0 %v1426
  %8616 = vmatpush1.msra.mxu0 %v1425
  %8617 = vmatprep.subr.mxu0 %v1423
  %8618 = vmatpush1.msra.mxu0 %v1422
  %8619 = vmatprep.subr.mxu0 %v1420
  %8620 = vmatpush1.msra.mxu0 %v1419
  %8621 = vmatprep.subr.mxu0 %v1417
  %8622 = vmatpush1.msra.mxu0 %v1416
  %8623 = vmatprep.subr.mxu0 %v1414
  %8624 = vmatpush1.msra.mxu0 %v1413
  %8625 = vmatprep.subr.mxu0 %v1411
  %8626 = vmatpush1.msra.mxu0 %v1410
  %8627 = vmatprep.subr.mxu0 %v1408
  %8628 = vmatpush1.msra.mxu0 %v1407
  %8629 = vmatprep.subr.mxu0 %v1405
  %8630 = vmatpush1.msra.mxu0 %v1404
  %8631 = vmatprep.subr.mxu0 %v1402
  %8632 = vmatpush1.msra.mxu0 %v1401
  %8633 = vmatprep.subr.mxu0 %v1399
  %8634 = vmatpush1.msra.mxu0 %v1398
  %8635 = vmatprep.subr.mxu0 %v1396
  %8636 = vmatpush1.msra.mxu0 %v1395
  %8637 = vmatprep.subr.mxu0 %v1393
  %8638 = vmatpush1.msra.mxu0 %v1392
  %8639 = vmatprep.subr.mxu0 %v1390
  %8640 = vmatpush1.msra.mxu0 %v1389
  %8641 = vmatprep.subr.mxu0 %v1387
  %8642 = vmatpush1.msra.mxu0 %v1386
  %8643 = vmatprep.subr.mxu0 %v1384
  %8644 = vmatpush1.msra.mxu0 %v1383
  %8645 = vmatprep.subr.mxu0 %v1477
  %8646 = vmatpush2.msra.mxu0 %v1476
  %8647 = vmatprep.subr.mxu0 %v1474
  %8648 = vmatpush2.msra.mxu0 %v1473
  %8649 = vmatprep.subr.mxu0 %v1471
  %8650 = vmatpush2.msra.mxu0 %v1470
  %8651 = vmatprep.subr.mxu0 %v1468
  %8652 = vmatpush2.msra.mxu0 %v1467
  %8653 = vmatprep.subr.mxu0 %v1465
  %8654 = vmatpush2.msra.mxu0 %v1464
  %8655 = vmatprep.subr.mxu0 %v1462
  %8656 = vmatpush2.msra.mxu0 %v1461
  %8657 = vmatprep.subr.mxu0 %v1459
  %8658 = vmatpush2.msra.mxu0 %v1458
  %8659 = vmatprep.subr.mxu0 %v1456
  %8660 = vmatpush2.msra.mxu0 %v1455
  %8661 = vmatprep.subr.mxu0 %v1453
  %8662 = vmatpush2.msra.mxu0 %v1452
  %8663 = vmatprep.subr.mxu0 %v1450
  %8664 = vmatpush2.msra.mxu0 %v1449
  %8665 = vmatprep.subr.mxu0 %v1447
  %8666 = vmatpush2.msra.mxu0 %v1446
  %8667 = vmatprep.subr.mxu0 %v1444
  %8668 = vmatpush2.msra.mxu0 %v1443
  %8669 = vmatprep.subr.mxu0 %v1441
  %8670 = vmatpush2.msra.mxu0 %v1440
  %8671 = vmatprep.subr.mxu0 %v1438
  %8672 = vmatpush2.msra.mxu0 %v1437
  %8673 = vmatprep.subr.mxu0 %v1435
  %8674 = vmatpush2.msra.mxu0 %v1434
  %8675 = vmatprep.subr.mxu0 %v1432
  %8676 = vmatpush2.msra.mxu0 %v1431
  %8677 = vmatprep.mubr.f32.mxu0 %v8267
  %8678 = vmatmul.mubr.f32.gmra.mxu0 %v8265
  %v8679 = vpop.f32.mrf.mxu0
  %v8680 = vadd.f32 0.0, %v8679
  %v8681 = vpop.f32.mrf.mxu0
  %v8682 = vadd.f32 0.0, %v8681
  %8683 = vdwg.mxu0
  %8684 = vmatprep.subr.mxu0 0.0
  %8685 = vmatpush1.msra.mxu0 0.0
  %8686 = vmatprep.subr.mxu0 0.0
  %8687 = vmatpush1.msra.mxu0 0.0
  %8688 = vmatprep.subr.mxu0 0.0
  %8689 = vmatpush1.msra.mxu0 0.0
  %8690 = vmatprep.subr.mxu0 0.0
  %8691 = vmatpush1.msra.mxu0 0.0
  %8692 = vmatprep.subr.mxu0 0.0
  %8693 = vmatpush1.msra.mxu0 0.0
  %8694 = vmatprep.subr.mxu0 0.0
  %8695 = vmatpush1.msra.mxu0 0.0
  %8696 = vmatprep.subr.mxu0 0.0
  %8697 = vmatpush1.msra.mxu0 0.0
  %8698 = vmatprep.subr.mxu0 0.0
  %8699 = vmatpush1.msra.mxu0 0.0
  %8700 = vmatprep.subr.mxu0 %v1501
  %8701 = vmatpush1.msra.mxu0 %v1500
  %8702 = vmatprep.subr.mxu0 %v1498
  %8703 = vmatpush1.msra.mxu0 %v1497
  %8704 = vmatprep.subr.mxu0 %v1495
  %8705 = vmatpush1.msra.mxu0 %v1494
  %8706 = vmatprep.subr.mxu0 %v1492
  %8707 = vmatpush1.msra.mxu0 %v1491
  %8708 = vmatprep.subr.mxu0 %v1489
  %8709 = vmatpush1.msra.mxu0 %v1488
  %8710 = vmatprep.subr.mxu0 %v1486
  %8711 = vmatpush1.msra.mxu0 %v1485
  %8712 = vmatprep.subr.mxu0 %v1483
  %8713 = vmatpush1.msra.mxu0 %v1482
  %8714 = vmatprep.subr.mxu0 %v1480
  %8715 = vmatpush1.msra.mxu0 %v1479
  %8716 = vmatprep.subr.mxu0 0.0
  %8717 = vmatpush2.msra.mxu0 0.0
  %8718 = vmatprep.subr.mxu0 0.0
  %8719 = vmatpush2.msra.mxu0 0.0
  %8720 = vmatprep.subr.mxu0 0.0
  %8721 = vmatpush2.msra.mxu0 0.0
  %8722 = vmatprep.subr.mxu0 0.0
  %8723 = vmatpush2.msra.mxu0 0.0
  %8724 = vmatprep.subr.mxu0 0.0
  %8725 = vmatpush2.msra.mxu0 0.0
  %8726 = vmatprep.subr.mxu0 0.0
  %8727 = vmatpush2.msra.mxu0 0.0
  %8728 = vmatprep.subr.mxu0 0.0
  %8729 = vmatpush2.msra.mxu0 0.0
  %8730 = vmatprep.subr.mxu0 0.0
  %8731 = vmatpush2.msra.mxu0 0.0
  %8732 = vmatprep.subr.mxu0 0.0
  %8733 = vmatpush2.msra.mxu0 0.0
  %8734 = vmatprep.subr.mxu0 0.0
  %8735 = vmatpush2.msra.mxu0 0.0
  %8736 = vmatprep.subr.mxu0 0.0
  %8737 = vmatpush2.msra.mxu0 0.0
  %8738 = vmatprep.subr.mxu0 0.0
  %8739 = vmatpush2.msra.mxu0 0.0
  %8740 = vmatprep.subr.mxu0 0.0
  %8741 = vmatpush2.msra.mxu0 0.0
  %8742 = vmatprep.subr.mxu0 0.0
  %8743 = vmatpush2.msra.mxu0 0.0
  %8744 = vmatprep.subr.mxu0 0.0
  %8745 = vmatpush2.msra.mxu0 0.0
  %8746 = vmatprep.subr.mxu0 0.0
  %8747 = vmatpush2.msra.mxu0 0.0
  %8748 = vmatprep.mubr.f32.mxu0 0.0
  %8749 = vmatmul.mubr.f32.gmra.mxu0 %v8611
  %v8750 = vpop.f32.mrf.mxu0
  %v8751 = vadd.f32 %v8680, %v8750
  %v8752 = vpop.f32.mrf.mxu0
  %v8753 = vadd.f32 %v8682, %v8752
  %8754 = vdwg.mxu0
  %8755 = vmatprep.subr.mxu0 0.0
  %8756 = vmatpush1.msra.mxu0 %v1430
  %8757 = vmatprep.subr.mxu0 0.0
  %8758 = vmatpush1.msra.mxu0 %v1427
  %8759 = vmatprep.subr.mxu0 0.0
  %8760 = vmatpush1.msra.mxu0 %v1424
  %8761 = vmatprep.subr.mxu0 0.0
  %8762 = vmatpush1.msra.mxu0 %v1421
  %8763 = vmatprep.subr.mxu0 0.0
  %8764 = vmatpush1.msra.mxu0 %v1418
  %8765 = vmatprep.subr.mxu0 0.0
  %8766 = vmatpush1.msra.mxu0 %v1415
  %8767 = vmatprep.subr.mxu0 0.0
  %8768 = vmatpush1.msra.mxu0 %v1412
  %8769 = vmatprep.subr.mxu0 0.0
  %8770 = vmatpush1.msra.mxu0 %v1409
  %8771 = vmatprep.subr.mxu0 0.0
  %8772 = vmatpush1.msra.mxu0 %v1406
  %8773 = vmatprep.subr.mxu0 0.0
  %8774 = vmatpush1.msra.mxu0 %v1403
  %8775 = vmatprep.subr.mxu0 0.0
  %8776 = vmatpush1.msra.mxu0 %v1400
  %8777 = vmatprep.subr.mxu0 0.0
  %8778 = vmatpush1.msra.mxu0 %v1397
  %8779 = vmatprep.subr.mxu0 0.0
  %8780 = vmatpush1.msra.mxu0 %v1394
  %8781 = vmatprep.subr.mxu0 0.0
  %8782 = vmatpush1.msra.mxu0 %v1391
  %8783 = vmatprep.subr.mxu0 0.0
  %8784 = vmatpush1.msra.mxu0 %v1388
  %8785 = vmatprep.subr.mxu0 0.0
  %8786 = vmatpush1.msra.mxu0 %v1385
  %8787 = vmatprep.subr.mxu0 0.0
  %8788 = vmatpush2.msra.mxu0 %v1478
  %8789 = vmatprep.subr.mxu0 0.0
  %8790 = vmatpush2.msra.mxu0 %v1475
  %8791 = vmatprep.subr.mxu0 0.0
  %8792 = vmatpush2.msra.mxu0 %v1472
  %8793 = vmatprep.subr.mxu0 0.0
  %8794 = vmatpush2.msra.mxu0 %v1469
  %8795 = vmatprep.subr.mxu0 0.0
  %8796 = vmatpush2.msra.mxu0 %v1466
  %8797 = vmatprep.subr.mxu0 0.0
  %8798 = vmatpush2.msra.mxu0 %v1463
  %8799 = vmatprep.subr.mxu0 0.0
  %8800 = vmatpush2.msra.mxu0 %v1460
  %8801 = vmatprep.subr.mxu0 0.0
  %8802 = vmatpush2.msra.mxu0 %v1457
  %8803 = vmatprep.subr.mxu0 0.0
  %8804 = vmatpush2.msra.mxu0 %v1454
  %8805 = vmatprep.subr.mxu0 0.0
  %8806 = vmatpush2.msra.mxu0 %v1451
  %8807 = vmatprep.subr.mxu0 0.0
  %8808 = vmatpush2.msra.mxu0 %v1448
  %8809 = vmatprep.subr.mxu0 0.0
  %8810 = vmatpush2.msra.mxu0 %v1445
  %8811 = vmatprep.subr.mxu0 0.0
  %8812 = vmatpush2.msra.mxu0 %v1442
  %8813 = vmatprep.subr.mxu0 0.0
  %8814 = vmatpush2.msra.mxu0 %v1439
  %8815 = vmatprep.subr.mxu0 0.0
  %8816 = vmatpush2.msra.mxu0 %v1436
  %8817 = vmatprep.subr.mxu0 0.0
  %8818 = vmatpush2.msra.mxu0 %v1433
  %8819 = vmatprep.mubr.f32.mxu0 %v8267
  %8820 = vmatmul.mubr.f32.gmra.mxu0 %v8265
  %v8821 = vpop.f32.mrf.mxu0
  %v8822 = vadd.f32 0.0, %v8821
  %v8823 = vpop.f32.mrf.mxu0
  %8824 = vdwg.mxu0
  %8825 = vmatprep.subr.mxu0 0.0
  %8826 = vmatpush1.msra.mxu0 0.0
  %8827 = vmatprep.subr.mxu0 0.0
  %8828 = vmatpush1.msra.mxu0 0.0
  %8829 = vmatprep.subr.mxu0 0.0
  %8830 = vmatpush1.msra.mxu0 0.0
  %8831 = vmatprep.subr.mxu0 0.0
  %8832 = vmatpush1.msra.mxu0 0.0
  %8833 = vmatprep.subr.mxu0 0.0
  %8834 = vmatpush1.msra.mxu0 0.0
  %8835 = vmatprep.subr.mxu0 0.0
  %8836 = vmatpush1.msra.mxu0 0.0
  %8837 = vmatprep.subr.mxu0 0.0
  %8838 = vmatpush1.msra.mxu0 0.0
  %8839 = vmatprep.subr.mxu0 0.0
  %8840 = vmatpush1.msra.mxu0 0.0
  %8841 = vmatprep.subr.mxu0 0.0
  %8842 = vmatpush1.msra.mxu0 %v1502
  %8843 = vmatprep.subr.mxu0 0.0
  %8844 = vmatpush1.msra.mxu0 %v1499
  %8845 = vmatprep.subr.mxu0 0.0
  %8846 = vmatpush1.msra.mxu0 %v1496
  %8847 = vmatprep.subr.mxu0 0.0
  %8848 = vmatpush1.msra.mxu0 %v1493
  %8849 = vmatprep.subr.mxu0 0.0
  %8850 = vmatpush1.msra.mxu0 %v1490
  %8851 = vmatprep.subr.mxu0 0.0
  %8852 = vmatpush1.msra.mxu0 %v1487
  %8853 = vmatprep.subr.mxu0 0.0
  %8854 = vmatpush1.msra.mxu0 %v1484
  %8855 = vmatprep.subr.mxu0 0.0
  %8856 = vmatpush1.msra.mxu0 %v1481
  %8857 = vmatprep.subr.mxu0 0.0
  %8858 = vmatpush2.msra.mxu0 0.0
  %8859 = vmatprep.subr.mxu0 0.0
  %8860 = vmatpush2.msra.mxu0 0.0
  %8861 = vmatprep.subr.mxu0 0.0
  %8862 = vmatpush2.msra.mxu0 0.0
  %8863 = vmatprep.subr.mxu0 0.0
  %8864 = vmatpush2.msra.mxu0 0.0
  %8865 = vmatprep.subr.mxu0 0.0
  %8866 = vmatpush2.msra.mxu0 0.0
  %8867 = vmatprep.subr.mxu0 0.0
  %8868 = vmatpush2.msra.mxu0 0.0
  %8869 = vmatprep.subr.mxu0 0.0
  %8870 = vmatpush2.msra.mxu0 0.0
  %8871 = vmatprep.subr.mxu0 0.0
  %8872 = vmatpush2.msra.mxu0 0.0
  %8873 = vmatprep.subr.mxu0 0.0
  %8874 = vmatpush2.msra.mxu0 0.0
  %8875 = vmatprep.subr.mxu0 0.0
  %8876 = vmatpush2.msra.mxu0 0.0
  %8877 = vmatprep.subr.mxu0 0.0
  %8878 = vmatpush2.msra.mxu0 0.0
  %8879 = vmatprep.subr.mxu0 0.0
  %8880 = vmatpush2.msra.mxu0 0.0
  %8881 = vmatprep.subr.mxu0 0.0
  %8882 = vmatpush2.msra.mxu0 0.0
  %8883 = vmatprep.subr.mxu0 0.0
  %8884 = vmatpush2.msra.mxu0 0.0
  %8885 = vmatprep.subr.mxu0 0.0
  %8886 = vmatpush2.msra.mxu0 0.0
  %8887 = vmatprep.subr.mxu0 0.0
  %8888 = vmatpush2.msra.mxu0 0.0
  %8889 = vmatprep.mubr.f32.mxu0 0.0
  %8890 = vmatmul.mubr.f32.gmra.mxu0 %v8611
  %v8891 = vpop.f32.mrf.mxu0
  %v8892 = vadd.f32 %v8822, %v8891
  %v8893 = vpop.f32.mrf.mxu0
  %8894 = vdwg.mxu0
  %v8895 = vsub.f32 %v8265, %v8751
  %v8896 = vsub.f32 %v8267, %v8753
  %v8897 = vsub.f32 %v8306, %v8892
  %v8898 = vmul.f32 %v8895, %v8895
  %v8899 = vmul.f32 %v8896, %v8896
  %v8900 = vmul.f32 %v8897, %v8897
  %v8902 = vsel %vm1553, %v8900, 0
  %8904 = vmatprep.subr.mxu0 %v1429
  %8905 = vmatpush1.msra.mxu0 %v1428
  %8906 = vmatprep.subr.mxu0 %v1426
  %8907 = vmatpush1.msra.mxu0 %v1425
  %8908 = vmatprep.subr.mxu0 %v1423
  %8909 = vmatpush1.msra.mxu0 %v1422
  %8910 = vmatprep.subr.mxu0 %v1420
  %8911 = vmatpush1.msra.mxu0 %v1419
  %8912 = vmatprep.subr.mxu0 %v1417
  %8913 = vmatpush1.msra.mxu0 %v1416
  %8914 = vmatprep.subr.mxu0 %v1414
  %8915 = vmatpush1.msra.mxu0 %v1413
  %8916 = vmatprep.subr.mxu0 %v1411
  %8917 = vmatpush1.msra.mxu0 %v1410
  %8918 = vmatprep.subr.mxu0 %v1408
  %8919 = vmatpush1.msra.mxu0 %v1407
  %8920 = vmatprep.subr.mxu0 %v1405
  %8921 = vmatpush1.msra.mxu0 %v1404
  %8922 = vmatprep.subr.mxu0 %v1402
  %8923 = vmatpush1.msra.mxu0 %v1401
  %8924 = vmatprep.subr.mxu0 %v1399
  %8925 = vmatpush1.msra.mxu0 %v1398
  %8926 = vmatprep.subr.mxu0 %v1396
  %8927 = vmatpush1.msra.mxu0 %v1395
  %8928 = vmatprep.subr.mxu0 %v1393
  %8929 = vmatpush1.msra.mxu0 %v1392
  %8930 = vmatprep.subr.mxu0 %v1390
  %8931 = vmatpush1.msra.mxu0 %v1389
  %8932 = vmatprep.subr.mxu0 %v1387
  %8933 = vmatpush1.msra.mxu0 %v1386
  %8934 = vmatprep.subr.mxu0 %v1384
  %8935 = vmatpush1.msra.mxu0 %v1383
  %8936 = vmatprep.subr.mxu0 %v1477
  %8937 = vmatpush2.msra.mxu0 %v1476
  %8938 = vmatprep.subr.mxu0 %v1474
  %8939 = vmatpush2.msra.mxu0 %v1473
  %8940 = vmatprep.subr.mxu0 %v1471
  %8941 = vmatpush2.msra.mxu0 %v1470
  %8942 = vmatprep.subr.mxu0 %v1468
  %8943 = vmatpush2.msra.mxu0 %v1467
  %8944 = vmatprep.subr.mxu0 %v1465
  %8945 = vmatpush2.msra.mxu0 %v1464
  %8946 = vmatprep.subr.mxu0 %v1462
  %8947 = vmatpush2.msra.mxu0 %v1461
  %8948 = vmatprep.subr.mxu0 %v1459
  %8949 = vmatpush2.msra.mxu0 %v1458
  %8950 = vmatprep.subr.mxu0 %v1456
  %8951 = vmatpush2.msra.mxu0 %v1455
  %8952 = vmatprep.subr.mxu0 %v1453
  %8953 = vmatpush2.msra.mxu0 %v1452
  %8954 = vmatprep.subr.mxu0 %v1450
  %8955 = vmatpush2.msra.mxu0 %v1449
  %8956 = vmatprep.subr.mxu0 %v1447
  %8957 = vmatpush2.msra.mxu0 %v1446
  %8958 = vmatprep.subr.mxu0 %v1444
  %8959 = vmatpush2.msra.mxu0 %v1443
  %8960 = vmatprep.subr.mxu0 %v1441
  %8961 = vmatpush2.msra.mxu0 %v1440
  %8962 = vmatprep.subr.mxu0 %v1438
  %8963 = vmatpush2.msra.mxu0 %v1437
  %8964 = vmatprep.subr.mxu0 %v1435
  %8965 = vmatpush2.msra.mxu0 %v1434
  %8966 = vmatprep.subr.mxu0 %v1432
  %8967 = vmatpush2.msra.mxu0 %v1431
  %8968 = vmatprep.mubr.f32.mxu0 %v8899
  %8969 = vmatmul.mubr.f32.gmra.mxu0 %v8898
  %v8970 = vpop.f32.mrf.mxu0
  %v8971 = vadd.f32 1e-05, %v8970
  %v8972 = vpop.f32.mrf.mxu0
  %v8973 = vadd.f32 1e-05, %v8972
  %8974 = vdwg.mxu0
  %8975 = vmatprep.subr.mxu0 0.0
  %8976 = vmatpush1.msra.mxu0 0.0
  %8977 = vmatprep.subr.mxu0 0.0
  %8978 = vmatpush1.msra.mxu0 0.0
  %8979 = vmatprep.subr.mxu0 0.0
  %8980 = vmatpush1.msra.mxu0 0.0
  %8981 = vmatprep.subr.mxu0 0.0
  %8982 = vmatpush1.msra.mxu0 0.0
  %8983 = vmatprep.subr.mxu0 0.0
  %8984 = vmatpush1.msra.mxu0 0.0
  %8985 = vmatprep.subr.mxu0 0.0
  %8986 = vmatpush1.msra.mxu0 0.0
  %8987 = vmatprep.subr.mxu0 0.0
  %8988 = vmatpush1.msra.mxu0 0.0
  %8989 = vmatprep.subr.mxu0 0.0
  %8990 = vmatpush1.msra.mxu0 0.0
  %8991 = vmatprep.subr.mxu0 %v1501
  %8992 = vmatpush1.msra.mxu0 %v1500
  %8993 = vmatprep.subr.mxu0 %v1498
  %8994 = vmatpush1.msra.mxu0 %v1497
  %8995 = vmatprep.subr.mxu0 %v1495
  %8996 = vmatpush1.msra.mxu0 %v1494
  %8997 = vmatprep.subr.mxu0 %v1492
  %8998 = vmatpush1.msra.mxu0 %v1491
  %8999 = vmatprep.subr.mxu0 %v1489
  %9000 = vmatpush1.msra.mxu0 %v1488
  %9001 = vmatprep.subr.mxu0 %v1486
  %9002 = vmatpush1.msra.mxu0 %v1485
  %9003 = vmatprep.subr.mxu0 %v1483
  %9004 = vmatpush1.msra.mxu0 %v1482
  %9005 = vmatprep.subr.mxu0 %v1480
  %9006 = vmatpush1.msra.mxu0 %v1479
  %9007 = vmatprep.subr.mxu0 0.0
  %9008 = vmatpush2.msra.mxu0 0.0
  %9009 = vmatprep.subr.mxu0 0.0
  %9010 = vmatpush2.msra.mxu0 0.0
  %9011 = vmatprep.subr.mxu0 0.0
  %9012 = vmatpush2.msra.mxu0 0.0
  %9013 = vmatprep.subr.mxu0 0.0
  %9014 = vmatpush2.msra.mxu0 0.0
  %9015 = vmatprep.subr.mxu0 0.0
  %9016 = vmatpush2.msra.mxu0 0.0
  %9017 = vmatprep.subr.mxu0 0.0
  %9018 = vmatpush2.msra.mxu0 0.0
  %9019 = vmatprep.subr.mxu0 0.0
  %9020 = vmatpush2.msra.mxu0 0.0
  %9021 = vmatprep.subr.mxu0 0.0
  %9022 = vmatpush2.msra.mxu0 0.0
  %9023 = vmatprep.subr.mxu0 0.0
  %9024 = vmatpush2.msra.mxu0 0.0
  %9025 = vmatprep.subr.mxu0 0.0
  %9026 = vmatpush2.msra.mxu0 0.0
  %9027 = vmatprep.subr.mxu0 0.0
  %9028 = vmatpush2.msra.mxu0 0.0
  %9029 = vmatprep.subr.mxu0 0.0
  %9030 = vmatpush2.msra.mxu0 0.0
  %9031 = vmatprep.subr.mxu0 0.0
  %9032 = vmatpush2.msra.mxu0 0.0
  %9033 = vmatprep.subr.mxu0 0.0
  %9034 = vmatpush2.msra.mxu0 0.0
  %9035 = vmatprep.subr.mxu0 0.0
  %9036 = vmatpush2.msra.mxu0 0.0
  %9037 = vmatprep.subr.mxu0 0.0
  %9038 = vmatpush2.msra.mxu0 0.0
  %9039 = vmatprep.mubr.f32.mxu0 0.0
  %9040 = vmatmul.mubr.f32.gmra.mxu0 %v8902
  %v9041 = vpop.f32.mrf.mxu0
  %v9042 = vadd.f32 %v8971, %v9041
  %v9043 = vpop.f32.mrf.mxu0
  %v9044 = vadd.f32 %v8973, %v9043
  %9045 = vdwg.mxu0
  %9046 = vmatprep.subr.mxu0 0.0
  %9047 = vmatpush1.msra.mxu0 %v1430
  %9048 = vmatprep.subr.mxu0 0.0
  %9049 = vmatpush1.msra.mxu0 %v1427
  %9050 = vmatprep.subr.mxu0 0.0
  %9051 = vmatpush1.msra.mxu0 %v1424
  %9052 = vmatprep.subr.mxu0 0.0
  %9053 = vmatpush1.msra.mxu0 %v1421
  %9054 = vmatprep.subr.mxu0 0.0
  %9055 = vmatpush1.msra.mxu0 %v1418
  %9056 = vmatprep.subr.mxu0 0.0
  %9057 = vmatpush1.msra.mxu0 %v1415
  %9058 = vmatprep.subr.mxu0 0.0
  %9059 = vmatpush1.msra.mxu0 %v1412
  %9060 = vmatprep.subr.mxu0 0.0
  %9061 = vmatpush1.msra.mxu0 %v1409
  %9062 = vmatprep.subr.mxu0 0.0
  %9063 = vmatpush1.msra.mxu0 %v1406
  %9064 = vmatprep.subr.mxu0 0.0
  %9065 = vmatpush1.msra.mxu0 %v1403
  %9066 = vmatprep.subr.mxu0 0.0
  %9067 = vmatpush1.msra.mxu0 %v1400
  %9068 = vmatprep.subr.mxu0 0.0
  %9069 = vmatpush1.msra.mxu0 %v1397
  %9070 = vmatprep.subr.mxu0 0.0
  %9071 = vmatpush1.msra.mxu0 %v1394
  %9072 = vmatprep.subr.mxu0 0.0
  %9073 = vmatpush1.msra.mxu0 %v1391
  %9074 = vmatprep.subr.mxu0 0.0
  %9075 = vmatpush1.msra.mxu0 %v1388
  %9076 = vmatprep.subr.mxu0 0.0
  %9077 = vmatpush1.msra.mxu0 %v1385
  %9078 = vmatprep.subr.mxu0 0.0
  %9079 = vmatpush2.msra.mxu0 %v1478
  %9080 = vmatprep.subr.mxu0 0.0
  %9081 = vmatpush2.msra.mxu0 %v1475
  %9082 = vmatprep.subr.mxu0 0.0
  %9083 = vmatpush2.msra.mxu0 %v1472
  %9084 = vmatprep.subr.mxu0 0.0
  %9085 = vmatpush2.msra.mxu0 %v1469
  %9086 = vmatprep.subr.mxu0 0.0
  %9087 = vmatpush2.msra.mxu0 %v1466
  %9088 = vmatprep.subr.mxu0 0.0
  %9089 = vmatpush2.msra.mxu0 %v1463
  %9090 = vmatprep.subr.mxu0 0.0
  %9091 = vmatpush2.msra.mxu0 %v1460
  %9092 = vmatprep.subr.mxu0 0.0
  %9093 = vmatpush2.msra.mxu0 %v1457
  %9094 = vmatprep.subr.mxu0 0.0
  %9095 = vmatpush2.msra.mxu0 %v1454
  %9096 = vmatprep.subr.mxu0 0.0
  %9097 = vmatpush2.msra.mxu0 %v1451
  %9098 = vmatprep.subr.mxu0 0.0
  %9099 = vmatpush2.msra.mxu0 %v1448
  %9100 = vmatprep.subr.mxu0 0.0
  %9101 = vmatpush2.msra.mxu0 %v1445
  %9102 = vmatprep.subr.mxu0 0.0
  %9103 = vmatpush2.msra.mxu0 %v1442
  %9104 = vmatprep.subr.mxu0 0.0
  %9105 = vmatpush2.msra.mxu0 %v1439
  %9106 = vmatprep.subr.mxu0 0.0
  %9107 = vmatpush2.msra.mxu0 %v1436
  %9108 = vmatprep.subr.mxu0 0.0
  %9109 = vmatpush2.msra.mxu0 %v1433
  %9110 = vmatprep.mubr.f32.mxu0 %v8899
  %9111 = vmatmul.mubr.f32.gmra.mxu0 %v8898
  %v9112 = vpop.f32.mrf.mxu0
  %v9113 = vadd.f32 1e-05, %v9112
  %v9114 = vpop.f32.mrf.mxu0
  %9115 = vdwg.mxu0
  %9116 = vmatprep.subr.mxu0 0.0
  %9117 = vmatpush1.msra.mxu0 0.0
  %9118 = vmatprep.subr.mxu0 0.0
  %9119 = vmatpush1.msra.mxu0 0.0
  %9120 = vmatprep.subr.mxu0 0.0
  %9121 = vmatpush1.msra.mxu0 0.0
  %9122 = vmatprep.subr.mxu0 0.0
  %9123 = vmatpush1.msra.mxu0 0.0
  %9124 = vmatprep.subr.mxu0 0.0
  %9125 = vmatpush1.msra.mxu0 0.0
  %9126 = vmatprep.subr.mxu0 0.0
  %9127 = vmatpush1.msra.mxu0 0.0
  %9128 = vmatprep.subr.mxu0 0.0
  %9129 = vmatpush1.msra.mxu0 0.0
  %9130 = vmatprep.subr.mxu0 0.0
  %9131 = vmatpush1.msra.mxu0 0.0
  %9132 = vmatprep.subr.mxu0 0.0
  %9133 = vmatpush1.msra.mxu0 %v1502
  %9134 = vmatprep.subr.mxu0 0.0
  %9135 = vmatpush1.msra.mxu0 %v1499
  %9136 = vmatprep.subr.mxu0 0.0
  %9137 = vmatpush1.msra.mxu0 %v1496
  %9138 = vmatprep.subr.mxu0 0.0
  %9139 = vmatpush1.msra.mxu0 %v1493
  %9140 = vmatprep.subr.mxu0 0.0
  %9141 = vmatpush1.msra.mxu0 %v1490
  %9142 = vmatprep.subr.mxu0 0.0
  %9143 = vmatpush1.msra.mxu0 %v1487
  %9144 = vmatprep.subr.mxu0 0.0
  %9145 = vmatpush1.msra.mxu0 %v1484
  %9146 = vmatprep.subr.mxu0 0.0
  %9147 = vmatpush1.msra.mxu0 %v1481
  %9148 = vmatprep.subr.mxu0 0.0
  %9149 = vmatpush2.msra.mxu0 0.0
  %9150 = vmatprep.subr.mxu0 0.0
  %9151 = vmatpush2.msra.mxu0 0.0
  %9152 = vmatprep.subr.mxu0 0.0
  %9153 = vmatpush2.msra.mxu0 0.0
  %9154 = vmatprep.subr.mxu0 0.0
  %9155 = vmatpush2.msra.mxu0 0.0
  %9156 = vmatprep.subr.mxu0 0.0
  %9157 = vmatpush2.msra.mxu0 0.0
  %9158 = vmatprep.subr.mxu0 0.0
  %9159 = vmatpush2.msra.mxu0 0.0
  %9160 = vmatprep.subr.mxu0 0.0
  %9161 = vmatpush2.msra.mxu0 0.0
  %9162 = vmatprep.subr.mxu0 0.0
  %9163 = vmatpush2.msra.mxu0 0.0
  %9164 = vmatprep.subr.mxu0 0.0
  %9165 = vmatpush2.msra.mxu0 0.0
  %9166 = vmatprep.subr.mxu0 0.0
  %9167 = vmatpush2.msra.mxu0 0.0
  %9168 = vmatprep.subr.mxu0 0.0
  %9169 = vmatpush2.msra.mxu0 0.0
  %9170 = vmatprep.subr.mxu0 0.0
  %9171 = vmatpush2.msra.mxu0 0.0
  %9172 = vmatprep.subr.mxu0 0.0
  %9173 = vmatpush2.msra.mxu0 0.0
  %9174 = vmatprep.subr.mxu0 0.0
  %9175 = vmatpush2.msra.mxu0 0.0
  %9176 = vmatprep.subr.mxu0 0.0
  %9177 = vmatpush2.msra.mxu0 0.0
  %9178 = vmatprep.subr.mxu0 0.0
  %9179 = vmatpush2.msra.mxu0 0.0
  %9180 = vmatprep.mubr.f32.mxu0 0.0
  %9181 = vmatmul.mubr.f32.gmra.mxu0 %v8902
  %v9182 = vpop.f32.mrf.mxu0
  %v9183 = vadd.f32 %v9113, %v9182
  %v9184 = vpop.f32.mrf.mxu0
  %9185 = vdwg.mxu0
  %v9186 = vrsqrt.pop %v9042
  %v9187 = vrsqrt.pop %v9044
  %v9188 = vrsqrt.pop %v9183
  %v9189 = vmul.f32 %v8895, %v9186
  %v9190 = vmul.f32 %v8896, %v9187
  %v9191 = vmul.f32 %v8897, %v9188
  %v9192 = vld [vmem:[%s4 + $0x8e8] sm:$0xff]
  %v9193 = vld [vmem:[%s4 + $0x8f0] sm:$0xf]
  %v9194 = vld [vmem:[%s4 + $0x8f4] sm:$0xff]
  %v9195 = vld [vmem:[%s4 + $0x8fc] sm:$0xf]
  %v9196 = vld [vmem:[%s4 + $0x900] sm:$0xff]
  %v9197 = vld [vmem:[%s4 + $0x908] sm:$0xf]
  %v9198 = vld [vmem:[%s4 + $0x90c] sm:$0xff]
  %v9199 = vld [vmem:[%s4 + $0x914] sm:$0xf]
  %v9200 = vld [vmem:[%s4 + $0x918] sm:$0xff]
  %v9201 = vld [vmem:[%s4 + $0x920] sm:$0xf]
  %v9202 = vld [vmem:[%s4 + $0x924] sm:$0xff]
  %v9203 = vld [vmem:[%s4 + $0x92c] sm:$0xf]
  %v9204 = vld [vmem:[%s4 + $0x930] sm:$0xff]
  %v9205 = vld [vmem:[%s4 + $0x938] sm:$0xf]
  %v9206 = vld [vmem:[%s4 + $0x93c] sm:$0xff]
  %v9207 = vld [vmem:[%s4 + $0x944] sm:$0xf]
  %v9208 = vld [vmem:[%s4 + $0x948] sm:$0xff]
  %v9209 = vld [vmem:[%s4 + $0x950] sm:$0xf]
  %v9210 = vld [vmem:[%s4 + $0x954] sm:$0xff]
  %v9211 = vld [vmem:[%s4 + $0x95c] sm:$0xf]
  %v9212 = vld [vmem:[%s4 + $0x960] sm:$0xff]
  %v9213 = vld [vmem:[%s4 + $0x968] sm:$0xf]
  %v9214 = vld [vmem:[%s4 + $0x96c] sm:$0xff]
  %v9215 = vld [vmem:[%s4 + $0x974] sm:$0xf]
  %v9216 = vld [vmem:[%s4 + $0x978] sm:$0xff]
  %v9217 = vld [vmem:[%s4 + $0x980] sm:$0xf]
  %v9218 = vld [vmem:[%s4 + $0x984] sm:$0xff]
  %v9219 = vld [vmem:[%s4 + $0x98c] sm:$0xf]
  %v9220 = vld [vmem:[%s4 + $0x990] sm:$0xff]
  %v9221 = vld [vmem:[%s4 + $0x998] sm:$0xf]
  %v9222 = vld [vmem:[%s4 + $0x99c] sm:$0xff]
  %v9223 = vld [vmem:[%s4 + $0x9a4] sm:$0xf]
  %v9224 = vld [vmem:[%s4 + $0x9a8] sm:$0xff]
  %v9225 = vld [vmem:[%s4 + $0x9b0] sm:$0xf]
  %v9226 = vld [vmem:[%s4 + $0x9b4] sm:$0xff]
  %v9227 = vld [vmem:[%s4 + $0x9bc] sm:$0xf]
  %v9228 = vld [vmem:[%s4 + $0x9c0] sm:$0xff]
  %v9229 = vld [vmem:[%s4 + $0x9c8] sm:$0xf]
  %v9230 = vld [vmem:[%s4 + $0x9cc] sm:$0xff]
  %v9231 = vld [vmem:[%s4 + $0x9d4] sm:$0xf]
  %v9232 = vld [vmem:[%s4 + $0x9d8] sm:$0xff]
  %v9233 = vld [vmem:[%s4 + $0x9e0] sm:$0xf]
  %v9234 = vld [vmem:[%s4 + $0x9e4] sm:$0xff]
  %v9235 = vld [vmem:[%s4 + $0x9ec] sm:$0xf]
  %v9236 = vld [vmem:[%s4 + $0x9f0] sm:$0xff]
  %v9237 = vld [vmem:[%s4 + $0x9f8] sm:$0xf]
  %v9238 = vld [vmem:[%s4 + $0x9fc] sm:$0xff]
  %v9239 = vld [vmem:[%s4 + $0xa04] sm:$0xf]
  %v9240 = vld [vmem:[%s4 + $0xa08] sm:$0xff]
  %v9241 = vld [vmem:[%s4 + $0xa10] sm:$0xf]
  %v9242 = vld [vmem:[%s4 + $0xa14] sm:$0xff]
  %v9243 = vld [vmem:[%s4 + $0xa1c] sm:$0xf]
  %v9244 = vld [vmem:[%s4 + $0xa20] sm:$0xff]
  %v9245 = vld [vmem:[%s4 + $0xa28] sm:$0xf]
  %v9246 = vld [vmem:[%s4 + $0xa2c] sm:$0xff]
  %v9247 = vld [vmem:[%s4 + $0xa34] sm:$0xf]
  %v9248 = vld [vmem:[%s4 + $0xa38] sm:$0xff]
  %v9249 = vld [vmem:[%s4 + $0xa40] sm:$0xf]
  %v9250 = vld [vmem:[%s4 + $0xa44] sm:$0xff]
  %v9251 = vld [vmem:[%s4 + $0xa4c] sm:$0xf]
  %v9252 = vld [vmem:[%s4 + $0xa50] sm:$0xff]
  %v9253 = vld [vmem:[%s4 + $0xa58] sm:$0xf]
  %v9254 = vld [vmem:[%s4 + $0xa5c] sm:$0xff]
  %v9255 = vld [vmem:[%s4 + $0xa64] sm:$0xf]
  %v9256 = vld [vmem:[%s4 + $0xa68] sm:$0xff]
  %v9257 = vld [vmem:[%s4 + $0xa70] sm:$0xf]
  %v9258 = vld [vmem:[%s4 + $0xa74] sm:$0xff]
  %v9259 = vld [vmem:[%s4 + $0xa7c] sm:$0xf]
  %v9260 = vld [vmem:[%s4 + $0xa80] sm:$0xff]
  %v9261 = vld [vmem:[%s4 + $0xa88] sm:$0xf]
  %v9262 = vld [vmem:[%s4 + $0xa8c] sm:$0xff]
  %v9263 = vld [vmem:[%s4 + $0xa94] sm:$0xf]
  %v9264 = vld [vmem:[%s4 + $0xa98] sm:$0xff]
  %v9265 = vld [vmem:[%s4 + $0xaa0] sm:$0xf]
  %v9266 = vld [vmem:[%s4 + $0xaa4] sm:$0xff]
  %v9267 = vld [vmem:[%s4 + $0xaac] sm:$0xf]
  %v9268 = vld [vmem:[%s4 + $0xab0] sm:$0xff]
  %v9269 = vld [vmem:[%s4 + $0xab8] sm:$0xf]
  %v9270 = vld [vmem:[%s4 + $0xabc] sm:$0xff]
  %v9271 = vld [vmem:[%s4 + $0xac4] sm:$0xf]
  %v9272 = vpack.c.bf16 %v9189, %v9189
  %v9273 = vpack.c.bf16 %v9190, %v9190
  %v9274 = vpack.c.bf16 %v9191, %v9191
  %s9275 = scalar_lea.vmem %s9, 5
  %v9276 = vld [vmem:[%s9275] ss:$8 sm:$0x7]
  %v9278 = vlaneseq
  %v9279 = vshrl.u32 %v9278, 7
  %v9280 = vsub.s32 0, %v9279
  %v9281 = vrot.slane %v9276, %v9280
  %v9282 = vlaneseq
  %v9283 = vshrl.u32 %v9282, 7
  %v9284 = vsub.s32 1, %v9283
  %v9285 = vrot.slane %v9276, %v9284
  %v9286 = vlaneseq
  %v9287 = vshrl.u32 %v9286, 7
  %v9288 = vsub.s32 2, %v9287
  %v9289 = vrot.slane %v9276, %v9288
  %v9373 = vunpack.c.l.b16 %v9192
  %v9374 = vunpack.c.h.b16 %v9192
  %v9375 = vunpack.c.l.b16 %v9193
  %v9376 = vunpack.c.l.b16 %v9194
  %v9377 = vunpack.c.h.b16 %v9194
  %v9378 = vunpack.c.l.b16 %v9195
  %v9379 = vunpack.c.l.b16 %v9196
  %v9380 = vunpack.c.h.b16 %v9196
  %v9381 = vunpack.c.l.b16 %v9197
  %v9382 = vunpack.c.l.b16 %v9198
  %v9383 = vunpack.c.h.b16 %v9198
  %v9384 = vunpack.c.l.b16 %v9199
  %v9385 = vunpack.c.l.b16 %v9200
  %v9386 = vunpack.c.h.b16 %v9200
  %v9387 = vunpack.c.l.b16 %v9201
  %v9388 = vunpack.c.l.b16 %v9202
  %v9389 = vunpack.c.h.b16 %v9202
  %v9390 = vunpack.c.l.b16 %v9203
  %v9391 = vunpack.c.l.b16 %v9204
  %v9392 = vunpack.c.h.b16 %v9204
  %v9393 = vunpack.c.l.b16 %v9205
  %v9394 = vunpack.c.l.b16 %v9206
  %v9395 = vunpack.c.h.b16 %v9206
  %v9396 = vunpack.c.l.b16 %v9207
  %v9397 = vunpack.c.l.b16 %v9208
  %v9398 = vunpack.c.h.b16 %v9208
  %v9399 = vunpack.c.l.b16 %v9209
  %v9400 = vunpack.c.l.b16 %v9210
  %v9401 = vunpack.c.h.b16 %v9210
  %v9402 = vunpack.c.l.b16 %v9211
  %v9403 = vunpack.c.l.b16 %v9212
  %v9404 = vunpack.c.h.b16 %v9212
  %v9405 = vunpack.c.l.b16 %v9213
  %v9406 = vunpack.c.l.b16 %v9214
  %v9407 = vunpack.c.h.b16 %v9214
  %v9408 = vunpack.c.l.b16 %v9215
  %v9409 = vunpack.c.l.b16 %v9216
  %v9410 = vunpack.c.h.b16 %v9216
  %v9411 = vunpack.c.l.b16 %v9217
  %v9412 = vunpack.c.l.b16 %v9218
  %v9413 = vunpack.c.h.b16 %v9218
  %v9414 = vunpack.c.l.b16 %v9219
  %v9415 = vunpack.c.l.b16 %v9220
  %v9416 = vunpack.c.h.b16 %v9220
  %v9417 = vunpack.c.l.b16 %v9221
  %v9418 = vunpack.c.l.b16 %v9222
  %v9419 = vunpack.c.h.b16 %v9222
  %v9420 = vunpack.c.l.b16 %v9223
  %v9421 = vunpack.c.l.b16 %v9224
  %v9422 = vunpack.c.h.b16 %v9224
  %v9423 = vunpack.c.l.b16 %v9225
  %v9424 = vunpack.c.l.b16 %v9226
  %v9425 = vunpack.c.h.b16 %v9226
  %v9426 = vunpack.c.l.b16 %v9227
  %v9427 = vunpack.c.l.b16 %v9228
  %v9428 = vunpack.c.h.b16 %v9228
  %v9429 = vunpack.c.l.b16 %v9229
  %v9430 = vunpack.c.l.b16 %v9230
  %v9431 = vunpack.c.h.b16 %v9230
  %v9432 = vunpack.c.l.b16 %v9231
  %v9433 = vunpack.c.l.b16 %v9232
  %v9434 = vunpack.c.h.b16 %v9232
  %v9435 = vunpack.c.l.b16 %v9233
  %v9436 = vunpack.c.l.b16 %v9234
  %v9437 = vunpack.c.h.b16 %v9234
  %v9438 = vunpack.c.l.b16 %v9235
  %v9439 = vunpack.c.l.b16 %v9236
  %v9440 = vunpack.c.h.b16 %v9236
  %v9441 = vunpack.c.l.b16 %v9237
  %v9442 = vunpack.c.l.b16 %v9238
  %v9443 = vunpack.c.h.b16 %v9238
  %v9444 = vunpack.c.l.b16 %v9239
  %v9445 = vunpack.c.l.b16 %v9240
  %v9446 = vunpack.c.h.b16 %v9240
  %v9447 = vunpack.c.l.b16 %v9241
  %v9448 = vunpack.c.l.b16 %v9242
  %v9449 = vunpack.c.h.b16 %v9242
  %v9450 = vunpack.c.l.b16 %v9243
  %v9451 = vunpack.c.l.b16 %v9244
  %v9452 = vunpack.c.h.b16 %v9244
  %v9453 = vunpack.c.l.b16 %v9245
  %v9454 = vunpack.c.l.b16 %v9246
  %v9455 = vunpack.c.h.b16 %v9246
  %v9456 = vunpack.c.l.b16 %v9247
  %v9457 = vunpack.c.l.b16 %v9248
  %v9458 = vunpack.c.h.b16 %v9248
  %v9459 = vunpack.c.l.b16 %v9249
  %v9460 = vunpack.c.l.b16 %v9250
  %v9461 = vunpack.c.h.b16 %v9250
  %v9462 = vunpack.c.l.b16 %v9251
  %v9463 = vunpack.c.l.b16 %v9252
  %v9464 = vunpack.c.h.b16 %v9252
  %v9465 = vunpack.c.l.b16 %v9253
  %v9466 = vunpack.c.l.b16 %v9254
  %v9467 = vunpack.c.h.b16 %v9254
  %v9468 = vunpack.c.l.b16 %v9255
  %v9469 = vunpack.c.l.b16 %v9256
  %v9470 = vunpack.c.h.b16 %v9256
  %v9471 = vunpack.c.l.b16 %v9257
  %v9472 = vunpack.c.l.b16 %v9258
  %v9473 = vunpack.c.h.b16 %v9258
  %v9474 = vunpack.c.l.b16 %v9259
  %v9475 = vunpack.c.l.b16 %v9260
  %v9476 = vunpack.c.h.b16 %v9260
  %v9477 = vunpack.c.l.b16 %v9261
  %v9478 = vunpack.c.l.b16 %v9262
  %v9479 = vunpack.c.h.b16 %v9262
  %v9480 = vunpack.c.l.b16 %v9263
  %v9481 = vunpack.c.l.b16 %v9264
  %v9482 = vunpack.c.h.b16 %v9264
  %v9483 = vunpack.c.l.b16 %v9265
  %v9484 = vunpack.c.l.b16 %v9266
  %v9485 = vunpack.c.h.b16 %v9266
  %v9486 = vunpack.c.l.b16 %v9267
  %v9487 = vunpack.c.l.b16 %v9268
  %v9488 = vunpack.c.h.b16 %v9268
  %v9489 = vunpack.c.l.b16 %v9269
  %v9490 = vunpack.c.l.b16 %v9270
  %v9491 = vunpack.c.h.b16 %v9270
  %v9492 = vunpack.c.l.b16 %v9271
  %v9493 = vpack.c.b16 %v9376, %v9373
  %v9494 = vpack.c.b16 %v9377, %v9374
  %v9495 = vpack.c.b16 %v9378, %v9375
  %v9496 = vpack.c.b16 %v9382, %v9379
  %v9497 = vpack.c.b16 %v9383, %v9380
  %v9498 = vpack.c.b16 %v9384, %v9381
  %v9499 = vpack.c.b16 %v9388, %v9385
  %v9500 = vpack.c.b16 %v9389, %v9386
  %v9501 = vpack.c.b16 %v9390, %v9387
  %v9502 = vpack.c.b16 %v9394, %v9391
  %v9503 = vpack.c.b16 %v9395, %v9392
  %v9504 = vpack.c.b16 %v9396, %v9393
  %v9505 = vpack.c.b16 %v9400, %v9397
  %v9506 = vpack.c.b16 %v9401, %v9398
  %v9507 = vpack.c.b16 %v9402, %v9399
  %v9508 = vpack.c.b16 %v9406, %v9403
  %v9509 = vpack.c.b16 %v9407, %v9404
  %v9510 = vpack.c.b16 %v9408, %v9405
  %v9511 = vpack.c.b16 %v9412, %v9409
  %v9512 = vpack.c.b16 %v9413, %v9410
  %v9513 = vpack.c.b16 %v9414, %v9411
  %v9514 = vpack.c.b16 %v9418, %v9415
  %v9515 = vpack.c.b16 %v9419, %v9416
  %v9516 = vpack.c.b16 %v9420, %v9417
  %v9517 = vpack.c.b16 %v9424, %v9421
  %v9518 = vpack.c.b16 %v9425, %v9422
  %v9519 = vpack.c.b16 %v9426, %v9423
  %v9520 = vpack.c.b16 %v9430, %v9427
  %v9521 = vpack.c.b16 %v9431, %v9428
  %v9522 = vpack.c.b16 %v9432, %v9429
  %v9523 = vpack.c.b16 %v9436, %v9433
  %v9524 = vpack.c.b16 %v9437, %v9434
  %v9525 = vpack.c.b16 %v9438, %v9435
  %v9526 = vpack.c.b16 %v9442, %v9439
  %v9527 = vpack.c.b16 %v9443, %v9440
  %v9528 = vpack.c.b16 %v9444, %v9441
  %v9529 = vpack.c.b16 %v9448, %v9445
  %v9530 = vpack.c.b16 %v9449, %v9446
  %v9531 = vpack.c.b16 %v9450, %v9447
  %v9532 = vpack.c.b16 %v9454, %v9451
  %v9533 = vpack.c.b16 %v9455, %v9452
  %v9534 = vpack.c.b16 %v9456, %v9453
  %v9535 = vpack.c.b16 %v9460, %v9457
  %v9536 = vpack.c.b16 %v9461, %v9458
  %v9537 = vpack.c.b16 %v9462, %v9459
  %v9538 = vpack.c.b16 %v9466, %v9463
  %v9539 = vpack.c.b16 %v9467, %v9464
  %v9540 = vpack.c.b16 %v9468, %v9465
  %v9541 = vpack.c.b16 %v9472, %v9469
  %v9542 = vpack.c.b16 %v9473, %v9470
  %v9543 = vpack.c.b16 %v9474, %v9471
  %v9544 = vpack.c.b16 %v9478, %v9475
  %v9545 = vpack.c.b16 %v9479, %v9476
  %v9546 = vpack.c.b16 %v9480, %v9477
  %v9547 = vpack.c.b16 %v9484, %v9481
  %v9548 = vpack.c.b16 %v9485, %v9482
  %v9549 = vpack.c.b16 %v9486, %v9483
  %v9550 = vpack.c.b16 %v9490, %v9487
  %v9551 = vpack.c.b16 %v9491, %v9488
  %v9552 = vpack.c.b16 %v9492, %v9489
  %v9614 = vsel %vm1553, %v9274, 0
  %9616 = vmatprep.subr.bf16.mxu0 %v9515
  %9617 = vmatpush1.bf16.msra.mxu0 %v9514
  %9618 = vmatprep.subr.bf16.mxu0 %v9512
  %9619 = vmatpush1.bf16.msra.mxu0 %v9511
  %9620 = vmatprep.subr.bf16.mxu0 %v9509
  %9621 = vmatpush1.bf16.msra.mxu0 %v9508
  %9622 = vmatprep.subr.bf16.mxu0 %v9506
  %9623 = vmatpush1.bf16.msra.mxu0 %v9505
  %9624 = vmatprep.subr.bf16.mxu0 %v9503
  %9625 = vmatpush1.bf16.msra.mxu0 %v9502
  %9626 = vmatprep.subr.bf16.mxu0 %v9500
  %9627 = vmatpush1.bf16.msra.mxu0 %v9499
  %9628 = vmatprep.subr.bf16.mxu0 %v9497
  %9629 = vmatpush1.bf16.msra.mxu0 %v9496
  %9630 = vmatprep.subr.bf16.mxu0 %v9494
  %9631 = vmatpush1.bf16.msra.mxu0 %v9493
  %9632 = vmatprep.subr.bf16.mxu0 %v9539
  %9633 = vmatpush2.bf16.msra.mxu0 %v9538
  %9634 = vmatprep.subr.bf16.mxu0 %v9536
  %9635 = vmatpush2.bf16.msra.mxu0 %v9535
  %9636 = vmatprep.subr.bf16.mxu0 %v9533
  %9637 = vmatpush2.bf16.msra.mxu0 %v9532
  %9638 = vmatprep.subr.bf16.mxu0 %v9530
  %9639 = vmatpush2.bf16.msra.mxu0 %v9529
  %9640 = vmatprep.subr.bf16.mxu0 %v9527
  %9641 = vmatpush2.bf16.msra.mxu0 %v9526
  %9642 = vmatprep.subr.bf16.mxu0 %v9524
  %9643 = vmatpush2.bf16.msra.mxu0 %v9523
  %9644 = vmatprep.subr.bf16.mxu0 %v9521
  %9645 = vmatpush2.bf16.msra.mxu0 %v9520
  %9646 = vmatprep.subr.bf16.mxu0 %v9518
  %9647 = vmatpush2.bf16.msra.mxu0 %v9517
  %9648 = vmatprep.mubr.bf16.mxu0 %v9273
  %9649 = vmatmul.mubr.bf16.gmra.mxu0 %v9272
  %v9650 = vpop.f32.mrf.mxu0
  %v9651 = vadd.f32 %v9281, %v9650
  %v9652 = vpop.f32.mrf.mxu0
  %v9653 = vadd.f32 %v9285, %v9652
  %v9654 = vpop.f32.mrf.mxu0
  %v9655 = vpop.f32.mrf.mxu0
  %9656 = vdwg.mxu0
  %9657 = vmatprep.subr.bf16.mxu0 0
  %9658 = vmatpush1.bf16.msra.mxu0 0
  %9659 = vmatprep.subr.bf16.mxu0 0
  %9660 = vmatpush1.bf16.msra.mxu0 0
  %9661 = vmatprep.subr.bf16.mxu0 0
  %9662 = vmatpush1.bf16.msra.mxu0 0
  %9663 = vmatprep.subr.bf16.mxu0 0
  %9664 = vmatpush1.bf16.msra.mxu0 0
  %9665 = vmatprep.subr.bf16.mxu0 %v9551
  %9666 = vmatpush1.bf16.msra.mxu0 %v9550
  %9667 = vmatprep.subr.bf16.mxu0 %v9548
  %9668 = vmatpush1.bf16.msra.mxu0 %v9547
  %9669 = vmatprep.subr.bf16.mxu0 %v9545
  %9670 = vmatpush1.bf16.msra.mxu0 %v9544
  %9671 = vmatprep.subr.bf16.mxu0 %v9542
  %9672 = vmatpush1.bf16.msra.mxu0 %v9541
  %9673 = vmatprep.subr.bf16.mxu0 0
  %9674 = vmatpush2.bf16.msra.mxu0 0
  %9675 = vmatprep.subr.bf16.mxu0 0
  %9676 = vmatpush2.bf16.msra.mxu0 0
  %9677 = vmatprep.subr.bf16.mxu0 0
  %9678 = vmatpush2.bf16.msra.mxu0 0
  %9679 = vmatprep.subr.bf16.mxu0 0
  %9680 = vmatpush2.bf16.msra.mxu0 0
  %9681 = vmatprep.subr.bf16.mxu0 0
  %9682 = vmatpush2.bf16.msra.mxu0 0
  %9683 = vmatprep.subr.bf16.mxu0 0
  %9684 = vmatpush2.bf16.msra.mxu0 0
  %9685 = vmatprep.subr.bf16.mxu0 0
  %9686 = vmatpush2.bf16.msra.mxu0 0
  %9687 = vmatprep.subr.bf16.mxu0 0
  %9688 = vmatpush2.bf16.msra.mxu0 0
  %9689 = vmatprep.mubr.bf16.mxu0 0
  %9690 = vmatmul.mubr.bf16.gmra.mxu0 %v9614
  %v9691 = vpop.f32.mrf.mxu0
  %v9692 = vadd.f32 %v9651, %v9691
  %v9693 = vpop.f32.mrf.mxu0
  %v9694 = vadd.f32 %v9653, %v9693
  %v9695 = vpop.f32.mrf.mxu0
  %v9696 = vpop.f32.mrf.mxu0
  %9697 = vdwg.mxu0
  %9698 = vmatprep.subr.bf16.mxu0 0
  %9699 = vmatpush1.bf16.msra.mxu0 %v9516
  %9700 = vmatprep.subr.bf16.mxu0 0
  %9701 = vmatpush1.bf16.msra.mxu0 %v9513
  %9702 = vmatprep.subr.bf16.mxu0 0
  %9703 = vmatpush1.bf16.msra.mxu0 %v9510
  %9704 = vmatprep.subr.bf16.mxu0 0
  %9705 = vmatpush1.bf16.msra.mxu0 %v9507
  %9706 = vmatprep.subr.bf16.mxu0 0
  %9707 = vmatpush1.bf16.msra.mxu0 %v9504
  %9708 = vmatprep.subr.bf16.mxu0 0
  %9709 = vmatpush1.bf16.msra.mxu0 %v9501
  %9710 = vmatprep.subr.bf16.mxu0 0
  %9711 = vmatpush1.bf16.msra.mxu0 %v9498
  %9712 = vmatprep.subr.bf16.mxu0 0
  %9713 = vmatpush1.bf16.msra.mxu0 %v9495
  %9714 = vmatprep.subr.bf16.mxu0 0
  %9715 = vmatpush2.bf16.msra.mxu0 %v9540
  %9716 = vmatprep.subr.bf16.mxu0 0
  %9717 = vmatpush2.bf16.msra.mxu0 %v9537
  %9718 = vmatprep.subr.bf16.mxu0 0
  %9719 = vmatpush2.bf16.msra.mxu0 %v9534
  %9720 = vmatprep.subr.bf16.mxu0 0
  %9721 = vmatpush2.bf16.msra.mxu0 %v9531
  %9722 = vmatprep.subr.bf16.mxu0 0
  %9723 = vmatpush2.bf16.msra.mxu0 %v9528
  %9724 = vmatprep.subr.bf16.mxu0 0
  %9725 = vmatpush2.bf16.msra.mxu0 %v9525
  %9726 = vmatprep.subr.bf16.mxu0 0
  %9727 = vmatpush2.bf16.msra.mxu0 %v9522
  %9728 = vmatprep.subr.bf16.mxu0 0
  %9729 = vmatpush2.bf16.msra.mxu0 %v9519
  %9730 = vmatprep.mubr.bf16.mxu0 %v9273
  %9731 = vmatmul.mubr.bf16.gmra.mxu0 %v9272
  %v9732 = vpop.f32.mrf.mxu0
  %v9733 = vadd.f32 %v9289, %v9732
  %v9734 = vpop.f32.mrf.mxu0
  %v9735 = vpop.f32.mrf.mxu0
  %v9736 = vpop.f32.mrf.mxu0
  %9737 = vdwg.mxu0
  %9738 = vmatprep.subr.bf16.mxu0 0
  %9739 = vmatpush1.bf16.msra.mxu0 0
  %9740 = vmatprep.subr.bf16.mxu0 0
  %9741 = vmatpush1.bf16.msra.mxu0 0
  %9742 = vmatprep.subr.bf16.mxu0 0
  %9743 = vmatpush1.bf16.msra.mxu0 0
  %9744 = vmatprep.subr.bf16.mxu0 0
  %9745 = vmatpush1.bf16.msra.mxu0 0
  %9746 = vmatprep.subr.bf16.mxu0 0
  %9747 = vmatpush1.bf16.msra.mxu0 %v9552
  %9748 = vmatprep.subr.bf16.mxu0 0
  %9749 = vmatpush1.bf16.msra.mxu0 %v9549
  %9750 = vmatprep.subr.bf16.mxu0 0
  %9751 = vmatpush1.bf16.msra.mxu0 %v9546
  %9752 = vmatprep.subr.bf16.mxu0 0
  %9753 = vmatpush1.bf16.msra.mxu0 %v9543
  %9754 = vmatprep.subr.bf16.mxu0 0
  %9755 = vmatpush2.bf16.msra.mxu0 0
  %9756 = vmatprep.subr.bf16.mxu0 0
  %9757 = vmatpush2.bf16.msra.mxu0 0
  %9758 = vmatprep.subr.bf16.mxu0 0
  %9759 = vmatpush2.bf16.msra.mxu0 0
  %9760 = vmatprep.subr.bf16.mxu0 0
  %9761 = vmatpush2.bf16.msra.mxu0 0
  %9762 = vmatprep.subr.bf16.mxu0 0
  %9763 = vmatpush2.bf16.msra.mxu0 0
  %9764 = vmatprep.subr.bf16.mxu0 0
  %9765 = vmatpush2.bf16.msra.mxu0 0
  %9766 = vmatprep.subr.bf16.mxu0 0
  %9767 = vmatpush2.bf16.msra.mxu0 0
  %9768 = vmatprep.subr.bf16.mxu0 0
  %9769 = vmatpush2.bf16.msra.mxu0 0
  %9770 = vmatprep.mubr.bf16.mxu0 0
  %9771 = vmatmul.mubr.bf16.gmra.mxu0 %v9614
  %v9772 = vpop.f32.mrf.mxu0
  %v9773 = vadd.f32 %v9733, %v9772
  %v9774 = vpop.f32.mrf.mxu0
  %v9775 = vpop.f32.mrf.mxu0
  %v9776 = vpop.f32.mrf.mxu0
  %9777 = vdwg.mxu0
  %v9778 = vmul.f32 %v9692, %v9692
  %v9779 = vmul.f32 %v9694, %v9694
  %v9780 = vmul.f32 %v9773, %v9773
  %v9781 = vmul.f32 %v9692, %v9778
  %v9782 = vmul.f32 %v9694, %v9779
  %v9783 = vmul.f32 %v9773, %v9780
  %v9784 = vmul.f32 %v9781, 0.044715
  %v9785 = vmul.f32 %v9782, 0.044715
  %v9786 = vmul.f32 %v9783, 0.044715
  %v9787 = vadd.f32 %v9692, %v9784
  %v9788 = vadd.f32 %v9694, %v9785
  %v9789 = vadd.f32 %v9773, %v9786
  %v9790 = vmul.f32 %v9787, 0.7978846
  %v9791 = vmul.f32 %v9788, 0.7978846
  %v9792 = vmul.f32 %v9789, 0.7978846
  %v9793 = vtanh.pop %v9790
  %v9794 = vtanh.pop %v9791
  %v9795 = vtanh.pop %v9792
  %v9796 = vadd.f32 %v9793, 1.0
  %v9797 = vadd.f32 %v9794, 1.0
  %v9798 = vadd.f32 %v9795, 1.0
  %v9799 = vmul.f32 %v9796, 0.5
  %v9800 = vmul.f32 %v9797, 0.5
  %v9801 = vmul.f32 %v9798, 0.5
  %v9802 = vmul.f32 %v9692, %v9799
  %v9803 = vmul.f32 %v9694, %v9800
  %v9804 = vmul.f32 %v9773, %v9801
  %v9805 = vld [vmem:[%s4 + $0xac8] sm:$0xff]
  %v9806 = vld [vmem:[%s4 + $0xad0] sm:$0xf]
  %v9807 = vld [vmem:[%s4 + $0xad4] sm:$0xff]
  %v9808 = vld [vmem:[%s4 + $0xadc] sm:$0xf]
  %v9809 = vld [vmem:[%s4 + $0xae0] sm:$0xff]
  %v9810 = vld [vmem:[%s4 + $0xae8] sm:$0xf]
  %v9811 = vld [vmem:[%s4 + $0xaec] sm:$0xff]
  %v9812 = vld [vmem:[%s4 + $0xaf4] sm:$0xf]
  %v9813 = vld [vmem:[%s4 + $0xaf8] sm:$0xff]
  %v9814 = vld [vmem:[%s4 + $0xb00] sm:$0xf]
  %v9815 = vld [vmem:[%s4 + $0xb04] sm:$0xff]
  %v9816 = vld [vmem:[%s4 + $0xb0c] sm:$0xf]
  %v9817 = vld [vmem:[%s4 + $0xb10] sm:$0xff]
  %v9818 = vld [vmem:[%s4 + $0xb18] sm:$0xf]
  %v9819 = vld [vmem:[%s4 + $0xb1c] sm:$0xff]
  %v9820 = vld [vmem:[%s4 + $0xb24] sm:$0xf]
  %v9821 = vld [vmem:[%s4 + $0xb28] sm:$0xff]
  %v9822 = vld [vmem:[%s4 + $0xb30] sm:$0xf]
  %v9823 = vld [vmem:[%s4 + $0xb34] sm:$0xff]
  %v9824 = vld [vmem:[%s4 + $0xb3c] sm:$0xf]
  %v9825 = vld [vmem:[%s4 + $0xb40] sm:$0xff]
  %v9826 = vld [vmem:[%s4 + $0xb48] sm:$0xf]
  %v9827 = vld [vmem:[%s4 + $0xb4c] sm:$0xff]
  %v9828 = vld [vmem:[%s4 + $0xb54] sm:$0xf]
  %v9829 = vld [vmem:[%s4 + $0xb58] sm:$0xff]
  %v9830 = vld [vmem:[%s4 + $0xb60] sm:$0xf]
  %v9831 = vld [vmem:[%s4 + $0xb64] sm:$0xff]
  %v9832 = vld [vmem:[%s4 + $0xb6c] sm:$0xf]
  %v9833 = vld [vmem:[%s4 + $0xb70] sm:$0xff]
  %v9834 = vld [vmem:[%s4 + $0xb78] sm:$0xf]
  %v9835 = vld [vmem:[%s4 + $0xb7c] sm:$0xff]
  %v9836 = vld [vmem:[%s4 + $0xb84] sm:$0xf]
  %v9837 = vld [vmem:[%s4 + $0xb88] sm:$0xff]
  %v9838 = vld [vmem:[%s4 + $0xb90] sm:$0xf]
  %v9839 = vld [vmem:[%s4 + $0xb94] sm:$0xff]
  %v9840 = vld [vmem:[%s4 + $0xb9c] sm:$0xf]
  %v9841 = vld [vmem:[%s4 + $0xba0] sm:$0xff]
  %v9842 = vld [vmem:[%s4 + $0xba8] sm:$0xf]
  %v9843 = vld [vmem:[%s4 + $0xbac] sm:$0xff]
  %v9844 = vld [vmem:[%s4 + $0xbb4] sm:$0xf]
  %v9845 = vld [vmem:[%s4 + $0xbb8] sm:$0xff]
  %v9846 = vld [vmem:[%s4 + $0xbc0] sm:$0xf]
  %v9847 = vld [vmem:[%s4 + $0xbc4] sm:$0xff]
  %v9848 = vld [vmem:[%s4 + $0xbcc] sm:$0xf]
  %v9849 = vld [vmem:[%s4 + $0xbd0] sm:$0xff]
  %v9850 = vld [vmem:[%s4 + $0xbd8] sm:$0xf]
  %v9851 = vld [vmem:[%s4 + $0xbdc] sm:$0xff]
  %v9852 = vld [vmem:[%s4 + $0xbe4] sm:$0xf]
  %v9853 = vld [vmem:[%s4 + $0xbe8] sm:$0xff]
  %v9854 = vld [vmem:[%s4 + $0xbf0] sm:$0xf]
  %v9855 = vld [vmem:[%s4 + $0xbf4] sm:$0xff]
  %v9856 = vld [vmem:[%s4 + $0xbfc] sm:$0xf]
  %v9857 = vld [vmem:[%s4 + $0xc00] sm:$0xff]
  %v9858 = vld [vmem:[%s4 + $0xc08] sm:$0xf]
  %v9859 = vld [vmem:[%s4 + $0xc0c] sm:$0xff]
  %v9860 = vld [vmem:[%s4 + $0xc14] sm:$0xf]
  %v9861 = vld [vmem:[%s4 + $0xc18] sm:$0xff]
  %v9862 = vld [vmem:[%s4 + $0xc20] sm:$0xf]
  %v9863 = vld [vmem:[%s4 + $0xc24] sm:$0xff]
  %v9864 = vld [vmem:[%s4 + $0xc2c] sm:$0xf]
  %v9865 = vld [vmem:[%s4 + $0xc30] sm:$0xff]
  %v9866 = vld [vmem:[%s4 + $0xc38] sm:$0xf]
  %v9867 = vld [vmem:[%s4 + $0xc3c] sm:$0xff]
  %v9868 = vld [vmem:[%s4 + $0xc44] sm:$0xf]
  %v9869 = vld [vmem:[%s4 + $0xc48] sm:$0xff]
  %v9870 = vld [vmem:[%s4 + $0xc50] sm:$0xf]
  %v9871 = vld [vmem:[%s4 + $0xc54] sm:$0xff]
  %v9872 = vld [vmem:[%s4 + $0xc5c] sm:$0xf]
  %v9873 = vld [vmem:[%s4 + $0xc60] sm:$0xff]
  %v9874 = vld [vmem:[%s4 + $0xc68] sm:$0xf]
  %v9875 = vld [vmem:[%s4 + $0xc6c] sm:$0xff]
  %v9876 = vld [vmem:[%s4 + $0xc74] sm:$0xf]
  %v9877 = vld [vmem:[%s4 + $0xc78] sm:$0xff]
  %v9878 = vld [vmem:[%s4 + $0xc80] sm:$0xf]
  %v9879 = vld [vmem:[%s4 + $0xc84] sm:$0xff]
  %v9880 = vld [vmem:[%s4 + $0xc8c] sm:$0xf]
  %v9881 = vld [vmem:[%s4 + $0xc90] sm:$0xff]
  %v9882 = vld [vmem:[%s4 + $0xc98] sm:$0xf]
  %v9883 = vld [vmem:[%s4 + $0xc9c] sm:$0xff]
  %v9884 = vld [vmem:[%s4 + $0xca4] sm:$0xf]
  %v9885 = vpack.c.bf16 %v9802, %v9802
  %v9886 = vpack.c.bf16 %v9803, %v9803
  %v9887 = vpack.c.bf16 %v9804, %v9804
  %s9888 = scalar_lea.vmem %s9, 6
  %v9889 = vld [vmem:[%s9888] ss:$8 sm:$0x7]
  %v9891 = vlaneseq
  %v9892 = vshrl.u32 %v9891, 7
  %v9893 = vsub.s32 0, %v9892
  %v9894 = vrot.slane %v9889, %v9893
  %v9895 = vlaneseq
  %v9896 = vshrl.u32 %v9895, 7
  %v9897 = vsub.s32 1, %v9896
  %v9898 = vrot.slane %v9889, %v9897
  %v9899 = vlaneseq
  %v9900 = vshrl.u32 %v9899, 7
  %v9901 = vsub.s32 2, %v9900
  %v9902 = vrot.slane %v9889, %v9901
  %v9986 = vunpack.c.l.b16 %v9805
  %v9987 = vunpack.c.h.b16 %v9805
  %v9988 = vunpack.c.l.b16 %v9806
  %v9989 = vunpack.c.l.b16 %v9807
  %v9990 = vunpack.c.h.b16 %v9807
  %v9991 = vunpack.c.l.b16 %v9808
  %v9992 = vunpack.c.l.b16 %v9809
  %v9993 = vunpack.c.h.b16 %v9809
  %v9994 = vunpack.c.l.b16 %v9810
  %v9995 = vunpack.c.l.b16 %v9811
  %v9996 = vunpack.c.h.b16 %v9811
  %v9997 = vunpack.c.l.b16 %v9812
  %v9998 = vunpack.c.l.b16 %v9813
  %v9999 = vunpack.c.h.b16 %v9813
  %v10000 = vunpack.c.l.b16 %v9814
  %v10001 = vunpack.c.l.b16 %v9815
  %v10002 = vunpack.c.h.b16 %v9815
  %v10003 = vunpack.c.l.b16 %v9816
  %v10004 = vunpack.c.l.b16 %v9817
  %v10005 = vunpack.c.h.b16 %v9817
  %v10006 = vunpack.c.l.b16 %v9818
  %v10007 = vunpack.c.l.b16 %v9819
  %v10008 = vunpack.c.h.b16 %v9819
  %v10009 = vunpack.c.l.b16 %v9820
  %v10010 = vunpack.c.l.b16 %v9821
  %v10011 = vunpack.c.h.b16 %v9821
  %v10012 = vunpack.c.l.b16 %v9822
  %v10013 = vunpack.c.l.b16 %v9823
  %v10014 = vunpack.c.h.b16 %v9823
  %v10015 = vunpack.c.l.b16 %v9824
  %v10016 = vunpack.c.l.b16 %v9825
  %v10017 = vunpack.c.h.b16 %v9825
  %v10018 = vunpack.c.l.b16 %v9826
  %v10019 = vunpack.c.l.b16 %v9827
  %v10020 = vunpack.c.h.b16 %v9827
  %v10021 = vunpack.c.l.b16 %v9828
  %v10022 = vunpack.c.l.b16 %v9829
  %v10023 = vunpack.c.h.b16 %v9829
  %v10024 = vunpack.c.l.b16 %v9830
  %v10025 = vunpack.c.l.b16 %v9831
  %v10026 = vunpack.c.h.b16 %v9831
  %v10027 = vunpack.c.l.b16 %v9832
  %v10028 = vunpack.c.l.b16 %v9833
  %v10029 = vunpack.c.h.b16 %v9833
  %v10030 = vunpack.c.l.b16 %v9834
  %v10031 = vunpack.c.l.b16 %v9835
  %v10032 = vunpack.c.h.b16 %v9835
  %v10033 = vunpack.c.l.b16 %v9836
  %v10034 = vunpack.c.l.b16 %v9837
  %v10035 = vunpack.c.h.b16 %v9837
  %v10036 = vunpack.c.l.b16 %v9838
  %v10037 = vunpack.c.l.b16 %v9839
  %v10038 = vunpack.c.h.b16 %v9839
  %v10039 = vunpack.c.l.b16 %v9840
  %v10040 = vunpack.c.l.b16 %v9841
  %v10041 = vunpack.c.h.b16 %v9841
  %v10042 = vunpack.c.l.b16 %v9842
  %v10043 = vunpack.c.l.b16 %v9843
  %v10044 = vunpack.c.h.b16 %v9843
  %v10045 = vunpack.c.l.b16 %v9844
  %v10046 = vunpack.c.l.b16 %v9845
  %v10047 = vunpack.c.h.b16 %v9845
  %v10048 = vunpack.c.l.b16 %v9846
  %v10049 = vunpack.c.l.b16 %v9847
  %v10050 = vunpack.c.h.b16 %v9847
  %v10051 = vunpack.c.l.b16 %v9848
  %v10052 = vunpack.c.l.b16 %v9849
  %v10053 = vunpack.c.h.b16 %v9849
  %v10054 = vunpack.c.l.b16 %v9850
  %v10055 = vunpack.c.l.b16 %v9851
  %v10056 = vunpack.c.h.b16 %v9851
  %v10057 = vunpack.c.l.b16 %v9852
  %v10058 = vunpack.c.l.b16 %v9853
  %v10059 = vunpack.c.h.b16 %v9853
  %v10060 = vunpack.c.l.b16 %v9854
  %v10061 = vunpack.c.l.b16 %v9855
  %v10062 = vunpack.c.h.b16 %v9855
  %v10063 = vunpack.c.l.b16 %v9856
  %v10064 = vunpack.c.l.b16 %v9857
  %v10065 = vunpack.c.h.b16 %v9857
  %v10066 = vunpack.c.l.b16 %v9858
  %v10067 = vunpack.c.l.b16 %v9859
  %v10068 = vunpack.c.h.b16 %v9859
  %v10069 = vunpack.c.l.b16 %v9860
  %v10070 = vunpack.c.l.b16 %v9861
  %v10071 = vunpack.c.h.b16 %v9861
  %v10072 = vunpack.c.l.b16 %v9862
  %v10073 = vunpack.c.l.b16 %v9863
  %v10074 = vunpack.c.h.b16 %v9863
  %v10075 = vunpack.c.l.b16 %v9864
  %v10076 = vunpack.c.l.b16 %v9865
  %v10077 = vunpack.c.h.b16 %v9865
  %v10078 = vunpack.c.l.b16 %v9866
  %v10079 = vunpack.c.l.b16 %v9867
  %v10080 = vunpack.c.h.b16 %v9867
  %v10081 = vunpack.c.l.b16 %v9868
  %v10082 = vunpack.c.l.b16 %v9869
  %v10083 = vunpack.c.h.b16 %v9869
  %v10084 = vunpack.c.l.b16 %v9870
  %v10085 = vunpack.c.l.b16 %v9871
  %v10086 = vunpack.c.h.b16 %v9871
  %v10087 = vunpack.c.l.b16 %v9872
  %v10088 = vunpack.c.l.b16 %v9873
  %v10089 = vunpack.c.h.b16 %v9873
  %v10090 = vunpack.c.l.b16 %v9874
  %v10091 = vunpack.c.l.b16 %v9875
  %v10092 = vunpack.c.h.b16 %v9875
  %v10093 = vunpack.c.l.b16 %v9876
  %v10094 = vunpack.c.l.b16 %v9877
  %v10095 = vunpack.c.h.b16 %v9877
  %v10096 = vunpack.c.l.b16 %v9878
  %v10097 = vunpack.c.l.b16 %v9879
  %v10098 = vunpack.c.h.b16 %v9879
  %v10099 = vunpack.c.l.b16 %v9880
  %v10100 = vunpack.c.l.b16 %v9881
  %v10101 = vunpack.c.h.b16 %v9881
  %v10102 = vunpack.c.l.b16 %v9882
  %v10103 = vunpack.c.l.b16 %v9883
  %v10104 = vunpack.c.h.b16 %v9883
  %v10105 = vunpack.c.l.b16 %v9884
  %v10106 = vpack.c.b16 %v9989, %v9986
  %v10107 = vpack.c.b16 %v9990, %v9987
  %v10108 = vpack.c.b16 %v9991, %v9988
  %v10109 = vpack.c.b16 %v9995, %v9992
  %v10110 = vpack.c.b16 %v9996, %v9993
  %v10111 = vpack.c.b16 %v9997, %v9994
  %v10112 = vpack.c.b16 %v10001, %v9998
  %v10113 = vpack.c.b16 %v10002, %v9999
  %v10114 = vpack.c.b16 %v10003, %v10000
  %v10115 = vpack.c.b16 %v10007, %v10004
  %v10116 = vpack.c.b16 %v10008, %v10005
  %v10117 = vpack.c.b16 %v10009, %v10006
  %v10118 = vpack.c.b16 %v10013, %v10010
  %v10119 = vpack.c.b16 %v10014, %v10011
  %v10120 = vpack.c.b16 %v10015, %v10012
  %v10121 = vpack.c.b16 %v10019, %v10016
  %v10122 = vpack.c.b16 %v10020, %v10017
  %v10123 = vpack.c.b16 %v10021, %v10018
  %v10124 = vpack.c.b16 %v10025, %v10022
  %v10125 = vpack.c.b16 %v10026, %v10023
  %v10126 = vpack.c.b16 %v10027, %v10024
  %v10127 = vpack.c.b16 %v10031, %v10028
  %v10128 = vpack.c.b16 %v10032, %v10029
  %v10129 = vpack.c.b16 %v10033, %v10030
  %v10130 = vpack.c.b16 %v10037, %v10034
  %v10131 = vpack.c.b16 %v10038, %v10035
  %v10132 = vpack.c.b16 %v10039, %v10036
  %v10133 = vpack.c.b16 %v10043, %v10040
  %v10134 = vpack.c.b16 %v10044, %v10041
  %v10135 = vpack.c.b16 %v10045, %v10042
  %v10136 = vpack.c.b16 %v10049, %v10046
  %v10137 = vpack.c.b16 %v10050, %v10047
  %v10138 = vpack.c.b16 %v10051, %v10048
  %v10139 = vpack.c.b16 %v10055, %v10052
  %v10140 = vpack.c.b16 %v10056, %v10053
  %v10141 = vpack.c.b16 %v10057, %v10054
  %v10142 = vpack.c.b16 %v10061, %v10058
  %v10143 = vpack.c.b16 %v10062, %v10059
  %v10144 = vpack.c.b16 %v10063, %v10060
  %v10145 = vpack.c.b16 %v10067, %v10064
  %v10146 = vpack.c.b16 %v10068, %v10065
  %v10147 = vpack.c.b16 %v10069, %v10066
  %v10148 = vpack.c.b16 %v10073, %v10070
  %v10149 = vpack.c.b16 %v10074, %v10071
  %v10150 = vpack.c.b16 %v10075, %v10072
  %v10151 = vpack.c.b16 %v10079, %v10076
  %v10152 = vpack.c.b16 %v10080, %v10077
  %v10153 = vpack.c.b16 %v10081, %v10078
  %v10154 = vpack.c.b16 %v10085, %v10082
  %v10155 = vpack.c.b16 %v10086, %v10083
  %v10156 = vpack.c.b16 %v10087, %v10084
  %v10157 = vpack.c.b16 %v10091, %v10088
  %v10158 = vpack.c.b16 %v10092, %v10089
  %v10159 = vpack.c.b16 %v10093, %v10090
  %v10160 = vpack.c.b16 %v10097, %v10094
  %v10161 = vpack.c.b16 %v10098, %v10095
  %v10162 = vpack.c.b16 %v10099, %v10096
  %v10163 = vpack.c.b16 %v10103, %v10100
  %v10164 = vpack.c.b16 %v10104, %v10101
  %v10165 = vpack.c.b16 %v10105, %v10102
  %v10227 = vsel %vm1553, %v9887, 0
  %10229 = vmatprep.subr.bf16.mxu0 %v10128
  %10230 = vmatpush1.bf16.msra.mxu0 %v10127
  %10231 = vmatprep.subr.bf16.mxu0 %v10125
  %10232 = vmatpush1.bf16.msra.mxu0 %v10124
  %10233 = vmatprep.subr.bf16.mxu0 %v10122
  %10234 = vmatpush1.bf16.msra.mxu0 %v10121
  %10235 = vmatprep.subr.bf16.mxu0 %v10119
  %10236 = vmatpush1.bf16.msra.mxu0 %v10118
  %10237 = vmatprep.subr.bf16.mxu0 %v10116
  %10238 = vmatpush1.bf16.msra.mxu0 %v10115
  %10239 = vmatprep.subr.bf16.mxu0 %v10113
  %10240 = vmatpush1.bf16.msra.mxu0 %v10112
  %10241 = vmatprep.subr.bf16.mxu0 %v10110
  %10242 = vmatpush1.bf16.msra.mxu0 %v10109
  %10243 = vmatprep.subr.bf16.mxu0 %v10107
  %10244 = vmatpush1.bf16.msra.mxu0 %v10106
  %10245 = vmatprep.subr.bf16.mxu0 %v10152
  %10246 = vmatpush2.bf16.msra.mxu0 %v10151
  %10247 = vmatprep.subr.bf16.mxu0 %v10149
  %10248 = vmatpush2.bf16.msra.mxu0 %v10148
  %10249 = vmatprep.subr.bf16.mxu0 %v10146
  %10250 = vmatpush2.bf16.msra.mxu0 %v10145
  %10251 = vmatprep.subr.bf16.mxu0 %v10143
  %10252 = vmatpush2.bf16.msra.mxu0 %v10142
  %10253 = vmatprep.subr.bf16.mxu0 %v10140
  %10254 = vmatpush2.bf16.msra.mxu0 %v10139
  %10255 = vmatprep.subr.bf16.mxu0 %v10137
  %10256 = vmatpush2.bf16.msra.mxu0 %v10136
  %10257 = vmatprep.subr.bf16.mxu0 %v10134
  %10258 = vmatpush2.bf16.msra.mxu0 %v10133
  %10259 = vmatprep.subr.bf16.mxu0 %v10131
  %10260 = vmatpush2.bf16.msra.mxu0 %v10130
  %10261 = vmatprep.mubr.bf16.mxu0 %v9886
  %10262 = vmatmul.mubr.bf16.gmra.mxu0 %v9885
  %v10263 = vpop.f32.mrf.mxu0
  %v10264 = vadd.f32 %v9894, %v10263
  %v10265 = vpop.f32.mrf.mxu0
  %v10266 = vadd.f32 %v9898, %v10265
  %v10267 = vpop.f32.mrf.mxu0
  %v10268 = vpop.f32.mrf.mxu0
  %10269 = vdwg.mxu0
  %10270 = vmatprep.subr.bf16.mxu0 0
  %10271 = vmatpush1.bf16.msra.mxu0 0
  %10272 = vmatprep.subr.bf16.mxu0 0
  %10273 = vmatpush1.bf16.msra.mxu0 0
  %10274 = vmatprep.subr.bf16.mxu0 0
  %10275 = vmatpush1.bf16.msra.mxu0 0
  %10276 = vmatprep.subr.bf16.mxu0 0
  %10277 = vmatpush1.bf16.msra.mxu0 0
  %10278 = vmatprep.subr.bf16.mxu0 %v10164
  %10279 = vmatpush1.bf16.msra.mxu0 %v10163
  %10280 = vmatprep.subr.bf16.mxu0 %v10161
  %10281 = vmatpush1.bf16.msra.mxu0 %v10160
  %10282 = vmatprep.subr.bf16.mxu0 %v10158
  %10283 = vmatpush1.bf16.msra.mxu0 %v10157
  %10284 = vmatprep.subr.bf16.mxu0 %v10155
  %10285 = vmatpush1.bf16.msra.mxu0 %v10154
  %10286 = vmatprep.subr.bf16.mxu0 0
  %10287 = vmatpush2.bf16.msra.mxu0 0
  %10288 = vmatprep.subr.bf16.mxu0 0
  %10289 = vmatpush2.bf16.msra.mxu0 0
  %10290 = vmatprep.subr.bf16.mxu0 0
  %10291 = vmatpush2.bf16.msra.mxu0 0
  %10292 = vmatprep.subr.bf16.mxu0 0
  %10293 = vmatpush2.bf16.msra.mxu0 0
  %10294 = vmatprep.subr.bf16.mxu0 0
  %10295 = vmatpush2.bf16.msra.mxu0 0
  %10296 = vmatprep.subr.bf16.mxu0 0
  %10297 = vmatpush2.bf16.msra.mxu0 0
  %10298 = vmatprep.subr.bf16.mxu0 0
  %10299 = vmatpush2.bf16.msra.mxu0 0
  %10300 = vmatprep.subr.bf16.mxu0 0
  %10301 = vmatpush2.bf16.msra.mxu0 0
  %10302 = vmatprep.mubr.bf16.mxu0 0
  %10303 = vmatmul.mubr.bf16.gmra.mxu0 %v10227
  %v10304 = vpop.f32.mrf.mxu0
  %v10305 = vadd.f32 %v10264, %v10304
  %v10306 = vpop.f32.mrf.mxu0
  %v10307 = vadd.f32 %v10266, %v10306
  %v10308 = vpop.f32.mrf.mxu0
  %v10309 = vpop.f32.mrf.mxu0
  %10310 = vdwg.mxu0
  %10311 = vmatprep.subr.bf16.mxu0 0
  %10312 = vmatpush1.bf16.msra.mxu0 %v10129
  %10313 = vmatprep.subr.bf16.mxu0 0
  %10314 = vmatpush1.bf16.msra.mxu0 %v10126
  %10315 = vmatprep.subr.bf16.mxu0 0
  %10316 = vmatpush1.bf16.msra.mxu0 %v10123
  %10317 = vmatprep.subr.bf16.mxu0 0
  %10318 = vmatpush1.bf16.msra.mxu0 %v10120
  %10319 = vmatprep.subr.bf16.mxu0 0
  %10320 = vmatpush1.bf16.msra.mxu0 %v10117
  %10321 = vmatprep.subr.bf16.mxu0 0
  %10322 = vmatpush1.bf16.msra.mxu0 %v10114
  %10323 = vmatprep.subr.bf16.mxu0 0
  %10324 = vmatpush1.bf16.msra.mxu0 %v10111
  %10325 = vmatprep.subr.bf16.mxu0 0
  %10326 = vmatpush1.bf16.msra.mxu0 %v10108
  %10327 = vmatprep.subr.bf16.mxu0 0
  %10328 = vmatpush2.bf16.msra.mxu0 %v10153
  %10329 = vmatprep.subr.bf16.mxu0 0
  %10330 = vmatpush2.bf16.msra.mxu0 %v10150
  %10331 = vmatprep.subr.bf16.mxu0 0
  %10332 = vmatpush2.bf16.msra.mxu0 %v10147
  %10333 = vmatprep.subr.bf16.mxu0 0
  %10334 = vmatpush2.bf16.msra.mxu0 %v10144
  %10335 = vmatprep.subr.bf16.mxu0 0
  %10336 = vmatpush2.bf16.msra.mxu0 %v10141
  %10337 = vmatprep.subr.bf16.mxu0 0
  %10338 = vmatpush2.bf16.msra.mxu0 %v10138
  %10339 = vmatprep.subr.bf16.mxu0 0
  %10340 = vmatpush2.bf16.msra.mxu0 %v10135
  %10341 = vmatprep.subr.bf16.mxu0 0
  %10342 = vmatpush2.bf16.msra.mxu0 %v10132
  %10343 = vmatprep.mubr.bf16.mxu0 %v9886
  %10344 = vmatmul.mubr.bf16.gmra.mxu0 %v9885
  %v10345 = vpop.f32.mrf.mxu0
  %v10346 = vadd.f32 %v9902, %v10345
  %v10347 = vpop.f32.mrf.mxu0
  %v10348 = vpop.f32.mrf.mxu0
  %v10349 = vpop.f32.mrf.mxu0
  %10350 = vdwg.mxu0
  %10351 = vmatprep.subr.bf16.mxu0 0
  %10352 = vmatpush1.bf16.msra.mxu0 0
  %10353 = vmatprep.subr.bf16.mxu0 0
  %10354 = vmatpush1.bf16.msra.mxu0 0
  %10355 = vmatprep.subr.bf16.mxu0 0
  %10356 = vmatpush1.bf16.msra.mxu0 0
  %10357 = vmatprep.subr.bf16.mxu0 0
  %10358 = vmatpush1.bf16.msra.mxu0 0
  %10359 = vmatprep.subr.bf16.mxu0 0
  %10360 = vmatpush1.bf16.msra.mxu0 %v10165
  %10361 = vmatprep.subr.bf16.mxu0 0
  %10362 = vmatpush1.bf16.msra.mxu0 %v10162
  %10363 = vmatprep.subr.bf16.mxu0 0
  %10364 = vmatpush1.bf16.msra.mxu0 %v10159
  %10365 = vmatprep.subr.bf16.mxu0 0
  %10366 = vmatpush1.bf16.msra.mxu0 %v10156
  %10367 = vmatprep.subr.bf16.mxu0 0
  %10368 = vmatpush2.bf16.msra.mxu0 0
  %10369 = vmatprep.subr.bf16.mxu0 0
  %10370 = vmatpush2.bf16.msra.mxu0 0
  %10371 = vmatprep.subr.bf16.mxu0 0
  %10372 = vmatpush2.bf16.msra.mxu0 0
  %10373 = vmatprep.subr.bf16.mxu0 0
  %10374 = vmatpush2.bf16.msra.mxu0 0
  %10375 = vmatprep.subr.bf16.mxu0 0
  %10376 = vmatpush2.bf16.msra.mxu0 0
  %10377 = vmatprep.subr.bf16.mxu0 0
  %10378 = vmatpush2.bf16.msra.mxu0 0
  %10379 = vmatprep.subr.bf16.mxu0 0
  %10380 = vmatpush2.bf16.msra.mxu0 0
  %10381 = vmatprep.subr.bf16.mxu0 0
  %10382 = vmatpush2.bf16.msra.mxu0 0
  %10383 = vmatprep.mubr.bf16.mxu0 0
  %10384 = vmatmul.mubr.bf16.gmra.mxu0 %v10227
  %v10385 = vpop.f32.mrf.mxu0
  %v10386 = vadd.f32 %v10346, %v10385
  %v10387 = vpop.f32.mrf.mxu0
  %v10388 = vpop.f32.mrf.mxu0
  %v10389 = vpop.f32.mrf.mxu0
  %10390 = vdwg.mxu0
  %v10391 = vld [vmem:[%s4 + $0xca8] sm:$0xff]
  %v10392 = vld [vmem:[%s4 + $0xcb0] sm:$0xf]
  %v10393 = vld [vmem:[%s4 + $0xcb4] sm:$0xff]
  %v10394 = vld [vmem:[%s4 + $0xcbc] sm:$0xf]
  %v10395 = vld [vmem:[%s4 + $0xcc0] sm:$0xff]
  %v10396 = vld [vmem:[%s4 + $0xcc8] sm:$0xf]
  %v10397 = vld [vmem:[%s4 + $0xccc] sm:$0xff]
  %v10398 = vld [vmem:[%s4 + $0xcd4] sm:$0xf]
  %v10399 = vld [vmem:[%s4 + $0xcd8] sm:$0xff]
  %v10400 = vld [vmem:[%s4 + $0xce0] sm:$0xf]
  %v10401 = vld [vmem:[%s4 + $0xce4] sm:$0xff]
  %v10402 = vld [vmem:[%s4 + $0xcec] sm:$0xf]
  %v10403 = vld [vmem:[%s4 + $0xcf0] sm:$0xff]
  %v10404 = vld [vmem:[%s4 + $0xcf8] sm:$0xf]
  %v10405 = vld [vmem:[%s4 + $0xcfc] sm:$0xff]
  %v10406 = vld [vmem:[%s4 + $0xd04] sm:$0xf]
  %v10407 = vld [vmem:[%s4 + $0xd08] sm:$0xff]
  %v10408 = vld [vmem:[%s4 + $0xd10] sm:$0xf]
  %v10409 = vld [vmem:[%s4 + $0xd14] sm:$0xff]
  %v10410 = vld [vmem:[%s4 + $0xd1c] sm:$0xf]
  %v10411 = vld [vmem:[%s4 + $0xd20] sm:$0xff]
  %v10412 = vld [vmem:[%s4 + $0xd28] sm:$0xf]
  %v10413 = vld [vmem:[%s4 + $0xd2c] sm:$0xff]
  %v10414 = vld [vmem:[%s4 + $0xd34] sm:$0xf]
  %v10415 = vld [vmem:[%s4 + $0xd38] sm:$0xff]
  %v10416 = vld [vmem:[%s4 + $0xd40] sm:$0xf]
  %v10417 = vld [vmem:[%s4 + $0xd44] sm:$0xff]
  %v10418 = vld [vmem:[%s4 + $0xd4c] sm:$0xf]
  %v10419 = vld [vmem:[%s4 + $0xd50] sm:$0xff]
  %v10420 = vld [vmem:[%s4 + $0xd58] sm:$0xf]
  %v10421 = vld [vmem:[%s4 + $0xd5c] sm:$0xff]
  %v10422 = vld [vmem:[%s4 + $0xd64] sm:$0xf]
  %v10423 = vld [vmem:[%s4 + $0xd68] sm:$0xff]
  %v10424 = vld [vmem:[%s4 + $0xd70] sm:$0xf]
  %v10425 = vld [vmem:[%s4 + $0xd74] sm:$0xff]
  %v10426 = vld [vmem:[%s4 + $0xd7c] sm:$0xf]
  %v10427 = vld [vmem:[%s4 + $0xd80] sm:$0xff]
  %v10428 = vld [vmem:[%s4 + $0xd88] sm:$0xf]
  %v10429 = vld [vmem:[%s4 + $0xd8c] sm:$0xff]
  %v10430 = vld [vmem:[%s4 + $0xd94] sm:$0xf]
  %v10431 = vld [vmem:[%s4 + $0xd98] sm:$0xff]
  %v10432 = vld [vmem:[%s4 + $0xda0] sm:$0xf]
  %v10433 = vld [vmem:[%s4 + $0xda4] sm:$0xff]
  %v10434 = vld [vmem:[%s4 + $0xdac] sm:$0xf]
  %v10435 = vld [vmem:[%s4 + $0xdb0] sm:$0xff]
  %v10436 = vld [vmem:[%s4 + $0xdb8] sm:$0xf]
  %v10437 = vld [vmem:[%s4 + $0xdbc] sm:$0xff]
  %v10438 = vld [vmem:[%s4 + $0xdc4] sm:$0xf]
  %v10439 = vld [vmem:[%s4 + $0xdc8] sm:$0xff]
  %v10440 = vld [vmem:[%s4 + $0xdd0] sm:$0xf]
  %v10441 = vld [vmem:[%s4 + $0xdd4] sm:$0xff]
  %v10442 = vld [vmem:[%s4 + $0xddc] sm:$0xf]
  %v10443 = vld [vmem:[%s4 + $0xde0] sm:$0xff]
  %v10444 = vld [vmem:[%s4 + $0xde8] sm:$0xf]
  %v10445 = vld [vmem:[%s4 + $0xdec] sm:$0xff]
  %v10446 = vld [vmem:[%s4 + $0xdf4] sm:$0xf]
  %v10447 = vld [vmem:[%s4 + $0xdf8] sm:$0xff]
  %v10448 = vld [vmem:[%s4 + $0xe00] sm:$0xf]
  %v10449 = vld [vmem:[%s4 + $0xe04] sm:$0xff]
  %v10450 = vld [vmem:[%s4 + $0xe0c] sm:$0xf]
  %v10451 = vld [vmem:[%s4 + $0xe10] sm:$0xff]
  %v10452 = vld [vmem:[%s4 + $0xe18] sm:$0xf]
  %v10453 = vld [vmem:[%s4 + $0xe1c] sm:$0xff]
  %v10454 = vld [vmem:[%s4 + $0xe24] sm:$0xf]
  %v10455 = vld [vmem:[%s4 + $0xe28] sm:$0xff]
  %v10456 = vld [vmem:[%s4 + $0xe30] sm:$0xf]
  %v10457 = vld [vmem:[%s4 + $0xe34] sm:$0xff]
  %v10458 = vld [vmem:[%s4 + $0xe3c] sm:$0xf]
  %v10459 = vld [vmem:[%s4 + $0xe40] sm:$0xff]
  %v10460 = vld [vmem:[%s4 + $0xe48] sm:$0xf]
  %v10461 = vld [vmem:[%s4 + $0xe4c] sm:$0xff]
  %v10462 = vld [vmem:[%s4 + $0xe54] sm:$0xf]
  %v10463 = vld [vmem:[%s4 + $0xe58] sm:$0xff]
  %v10464 = vld [vmem:[%s4 + $0xe60] sm:$0xf]
  %v10465 = vld [vmem:[%s4 + $0xe64] sm:$0xff]
  %v10466 = vld [vmem:[%s4 + $0xe6c] sm:$0xf]
  %v10467 = vld [vmem:[%s4 + $0xe70] sm:$0xff]
  %v10468 = vld [vmem:[%s4 + $0xe78] sm:$0xf]
  %v10469 = vld [vmem:[%s4 + $0xe7c] sm:$0xff]
  %v10470 = vld [vmem:[%s4 + $0xe84] sm:$0xf]
  %v10471 = vpack.c.bf16 %v8564, %v8564
  %v10472 = vpack.c.bf16 %v8566, %v8566
  %v10473 = vpack.c.bf16 %v8605, %v8605
  %s10474 = scalar_lea.vmem %s9, 7
  %v10475 = vld [vmem:[%s10474] ss:$8 sm:$0x7]
  %v10477 = vlaneseq
  %v10478 = vshrl.u32 %v10477, 7
  %v10479 = vsub.s32 0, %v10478
  %v10480 = vrot.slane %v10475, %v10479
  %v10481 = vlaneseq
  %v10482 = vshrl.u32 %v10481, 7
  %v10483 = vsub.s32 1, %v10482
  %v10484 = vrot.slane %v10475, %v10483
  %v10485 = vlaneseq
  %v10486 = vshrl.u32 %v10485, 7
  %v10487 = vsub.s32 2, %v10486
  %v10488 = vrot.slane %v10475, %v10487
  %v10572 = vunpack.c.l.b16 %v10391
  %v10573 = vunpack.c.h.b16 %v10391
  %v10574 = vunpack.c.l.b16 %v10392
  %v10575 = vunpack.c.l.b16 %v10393
  %v10576 = vunpack.c.h.b16 %v10393
  %v10577 = vunpack.c.l.b16 %v10394
  %v10578 = vunpack.c.l.b16 %v10395
  %v10579 = vunpack.c.h.b16 %v10395
  %v10580 = vunpack.c.l.b16 %v10396
  %v10581 = vunpack.c.l.b16 %v10397
  %v10582 = vunpack.c.h.b16 %v10397
  %v10583 = vunpack.c.l.b16 %v10398
  %v10584 = vunpack.c.l.b16 %v10399
  %v10585 = vunpack.c.h.b16 %v10399
  %v10586 = vunpack.c.l.b16 %v10400
  %v10587 = vunpack.c.l.b16 %v10401
  %v10588 = vunpack.c.h.b16 %v10401
  %v10589 = vunpack.c.l.b16 %v10402
  %v10590 = vunpack.c.l.b16 %v10403
  %v10591 = vunpack.c.h.b16 %v10403
  %v10592 = vunpack.c.l.b16 %v10404
  %v10593 = vunpack.c.l.b16 %v10405
  %v10594 = vunpack.c.h.b16 %v10405
  %v10595 = vunpack.c.l.b16 %v10406
  %v10596 = vunpack.c.l.b16 %v10407
  %v10597 = vunpack.c.h.b16 %v10407
  %v10598 = vunpack.c.l.b16 %v10408
  %v10599 = vunpack.c.l.b16 %v10409
  %v10600 = vunpack.c.h.b16 %v10409
  %v10601 = vunpack.c.l.b16 %v10410
  %v10602 = vunpack.c.l.b16 %v10411
  %v10603 = vunpack.c.h.b16 %v10411
  %v10604 = vunpack.c.l.b16 %v10412
  %v10605 = vunpack.c.l.b16 %v10413
  %v10606 = vunpack.c.h.b16 %v10413
  %v10607 = vunpack.c.l.b16 %v10414
  %v10608 = vunpack.c.l.b16 %v10415
  %v10609 = vunpack.c.h.b16 %v10415
  %v10610 = vunpack.c.l.b16 %v10416
  %v10611 = vunpack.c.l.b16 %v10417
  %v10612 = vunpack.c.h.b16 %v10417
  %v10613 = vunpack.c.l.b16 %v10418
  %v10614 = vunpack.c.l.b16 %v10419
  %v10615 = vunpack.c.h.b16 %v10419
  %v10616 = vunpack.c.l.b16 %v10420
  %v10617 = vunpack.c.l.b16 %v10421
  %v10618 = vunpack.c.h.b16 %v10421
  %v10619 = vunpack.c.l.b16 %v10422
  %v10620 = vunpack.c.l.b16 %v10423
  %v10621 = vunpack.c.h.b16 %v10423
  %v10622 = vunpack.c.l.b16 %v10424
  %v10623 = vunpack.c.l.b16 %v10425
  %v10624 = vunpack.c.h.b16 %v10425
  %v10625 = vunpack.c.l.b16 %v10426
  %v10626 = vunpack.c.l.b16 %v10427
  %v10627 = vunpack.c.h.b16 %v10427
  %v10628 = vunpack.c.l.b16 %v10428
  %v10629 = vunpack.c.l.b16 %v10429
  %v10630 = vunpack.c.h.b16 %v10429
  %v10631 = vunpack.c.l.b16 %v10430
  %v10632 = vunpack.c.l.b16 %v10431
  %v10633 = vunpack.c.h.b16 %v10431
  %v10634 = vunpack.c.l.b16 %v10432
  %v10635 = vunpack.c.l.b16 %v10433
  %v10636 = vunpack.c.h.b16 %v10433
  %v10637 = vunpack.c.l.b16 %v10434
  %v10638 = vunpack.c.l.b16 %v10435
  %v10639 = vunpack.c.h.b16 %v10435
  %v10640 = vunpack.c.l.b16 %v10436
  %v10641 = vunpack.c.l.b16 %v10437
  %v10642 = vunpack.c.h.b16 %v10437
  %v10643 = vunpack.c.l.b16 %v10438
  %v10644 = vunpack.c.l.b16 %v10439
  %v10645 = vunpack.c.h.b16 %v10439
  %v10646 = vunpack.c.l.b16 %v10440
  %v10647 = vunpack.c.l.b16 %v10441
  %v10648 = vunpack.c.h.b16 %v10441
  %v10649 = vunpack.c.l.b16 %v10442
  %v10650 = vunpack.c.l.b16 %v10443
  %v10651 = vunpack.c.h.b16 %v10443
  %v10652 = vunpack.c.l.b16 %v10444
  %v10653 = vunpack.c.l.b16 %v10445
  %v10654 = vunpack.c.h.b16 %v10445
  %v10655 = vunpack.c.l.b16 %v10446
  %v10656 = vunpack.c.l.b16 %v10447
  %v10657 = vunpack.c.h.b16 %v10447
  %v10658 = vunpack.c.l.b16 %v10448
  %v10659 = vunpack.c.l.b16 %v10449
  %v10660 = vunpack.c.h.b16 %v10449
  %v10661 = vunpack.c.l.b16 %v10450
  %v10662 = vunpack.c.l.b16 %v10451
  %v10663 = vunpack.c.h.b16 %v10451
  %v10664 = vunpack.c.l.b16 %v10452
  %v10665 = vunpack.c.l.b16 %v10453
  %v10666 = vunpack.c.h.b16 %v10453
  %v10667 = vunpack.c.l.b16 %v10454
  %v10668 = vunpack.c.l.b16 %v10455
  %v10669 = vunpack.c.h.b16 %v10455
  %v10670 = vunpack.c.l.b16 %v10456
  %v10671 = vunpack.c.l.b16 %v10457
  %v10672 = vunpack.c.h.b16 %v10457
  %v10673 = vunpack.c.l.b16 %v10458
  %v10674 = vunpack.c.l.b16 %v10459
  %v10675 = vunpack.c.h.b16 %v10459
  %v10676 = vunpack.c.l.b16 %v10460
  %v10677 = vunpack.c.l.b16 %v10461
  %v10678 = vunpack.c.h.b16 %v10461
  %v10679 = vunpack.c.l.b16 %v10462
  %v10680 = vunpack.c.l.b16 %v10463
  %v10681 = vunpack.c.h.b16 %v10463
  %v10682 = vunpack.c.l.b16 %v10464
  %v10683 = vunpack.c.l.b16 %v10465
  %v10684 = vunpack.c.h.b16 %v10465
  %v10685 = vunpack.c.l.b16 %v10466
  %v10686 = vunpack.c.l.b16 %v10467
  %v10687 = vunpack.c.h.b16 %v10467
  %v10688 = vunpack.c.l.b16 %v10468
  %v10689 = vunpack.c.l.b16 %v10469
  %v10690 = vunpack.c.h.b16 %v10469
  %v10691 = vunpack.c.l.b16 %v10470
  %v10692 = vpack.c.b16 %v10575, %v10572
  %v10693 = vpack.c.b16 %v10576, %v10573
  %v10694 = vpack.c.b16 %v10577, %v10574
  %v10695 = vpack.c.b16 %v10581, %v10578
  %v10696 = vpack.c.b16 %v10582, %v10579
  %v10697 = vpack.c.b16 %v10583, %v10580
  %v10698 = vpack.c.b16 %v10587, %v10584
  %v10699 = vpack.c.b16 %v10588, %v10585
  %v10700 = vpack.c.b16 %v10589, %v10586
  %v10701 = vpack.c.b16 %v10593, %v10590
  %v10702 = vpack.c.b16 %v10594, %v10591
  %v10703 = vpack.c.b16 %v10595, %v10592
  %v10704 = vpack.c.b16 %v10599, %v10596
  %v10705 = vpack.c.b16 %v10600, %v10597
  %v10706 = vpack.c.b16 %v10601, %v10598
  %v10707 = vpack.c.b16 %v10605, %v10602
  %v10708 = vpack.c.b16 %v10606, %v10603
  %v10709 = vpack.c.b16 %v10607, %v10604
  %v10710 = vpack.c.b16 %v10611, %v10608
  %v10711 = vpack.c.b16 %v10612, %v10609
  %v10712 = vpack.c.b16 %v10613, %v10610
  %v10713 = vpack.c.b16 %v10617, %v10614
  %v10714 = vpack.c.b16 %v10618, %v10615
  %v10715 = vpack.c.b16 %v10619, %v10616
  %v10716 = vpack.c.b16 %v10623, %v10620
  %v10717 = vpack.c.b16 %v10624, %v10621
  %v10718 = vpack.c.b16 %v10625, %v10622
  %v10719 = vpack.c.b16 %v10629, %v10626
  %v10720 = vpack.c.b16 %v10630, %v10627
  %v10721 = vpack.c.b16 %v10631, %v10628
  %v10722 = vpack.c.b16 %v10635, %v10632
  %v10723 = vpack.c.b16 %v10636, %v10633
  %v10724 = vpack.c.b16 %v10637, %v10634
  %v10725 = vpack.c.b16 %v10641, %v10638
  %v10726 = vpack.c.b16 %v10642, %v10639
  %v10727 = vpack.c.b16 %v10643, %v10640
  %v10728 = vpack.c.b16 %v10647, %v10644
  %v10729 = vpack.c.b16 %v10648, %v10645
  %v10730 = vpack.c.b16 %v10649, %v10646
  %v10731 = vpack.c.b16 %v10653, %v10650
  %v10732 = vpack.c.b16 %v10654, %v10651
  %v10733 = vpack.c.b16 %v10655, %v10652
  %v10734 = vpack.c.b16 %v10659, %v10656
  %v10735 = vpack.c.b16 %v10660, %v10657
  %v10736 = vpack.c.b16 %v10661, %v10658
  %v10737 = vpack.c.b16 %v10665, %v10662
  %v10738 = vpack.c.b16 %v10666, %v10663
  %v10739 = vpack.c.b16 %v10667, %v10664
  %v10740 = vpack.c.b16 %v10671, %v10668
  %v10741 = vpack.c.b16 %v10672, %v10669
  %v10742 = vpack.c.b16 %v10673, %v10670
  %v10743 = vpack.c.b16 %v10677, %v10674
  %v10744 = vpack.c.b16 %v10678, %v10675
  %v10745 = vpack.c.b16 %v10679, %v10676
  %v10746 = vpack.c.b16 %v10683, %v10680
  %v10747 = vpack.c.b16 %v10684, %v10681
  %v10748 = vpack.c.b16 %v10685, %v10682
  %v10749 = vpack.c.b16 %v10689, %v10686
  %v10750 = vpack.c.b16 %v10690, %v10687
  %v10751 = vpack.c.b16 %v10691, %v10688
  %v10813 = vsel %vm1553, %v10473, 0
  %10815 = vmatprep.subr.bf16.mxu0 %v10714
  %10816 = vmatpush1.bf16.msra.mxu0 %v10713
  %10817 = vmatprep.subr.bf16.mxu0 %v10711
  %10818 = vmatpush1.bf16.msra.mxu0 %v10710
  %10819 = vmatprep.subr.bf16.mxu0 %v10708
  %10820 = vmatpush1.bf16.msra.mxu0 %v10707
  %10821 = vmatprep.subr.bf16.mxu0 %v10705
  %10822 = vmatpush1.bf16.msra.mxu0 %v10704
  %10823 = vmatprep.subr.bf16.mxu0 %v10702
  %10824 = vmatpush1.bf16.msra.mxu0 %v10701
  %10825 = vmatprep.subr.bf16.mxu0 %v10699
  %10826 = vmatpush1.bf16.msra.mxu0 %v10698
  %10827 = vmatprep.subr.bf16.mxu0 %v10696
  %10828 = vmatpush1.bf16.msra.mxu0 %v10695
  %10829 = vmatprep.subr.bf16.mxu0 %v10693
  %10830 = vmatpush1.bf16.msra.mxu0 %v10692
  %10831 = vmatprep.subr.bf16.mxu0 %v10738
  %10832 = vmatpush2.bf16.msra.mxu0 %v10737
  %10833 = vmatprep.subr.bf16.mxu0 %v10735
  %10834 = vmatpush2.bf16.msra.mxu0 %v10734
  %10835 = vmatprep.subr.bf16.mxu0 %v10732
  %10836 = vmatpush2.bf16.msra.mxu0 %v10731
  %10837 = vmatprep.subr.bf16.mxu0 %v10729
  %10838 = vmatpush2.bf16.msra.mxu0 %v10728
  %10839 = vmatprep.subr.bf16.mxu0 %v10726
  %10840 = vmatpush2.bf16.msra.mxu0 %v10725
  %10841 = vmatprep.subr.bf16.mxu0 %v10723
  %10842 = vmatpush2.bf16.msra.mxu0 %v10722
  %10843 = vmatprep.subr.bf16.mxu0 %v10720
  %10844 = vmatpush2.bf16.msra.mxu0 %v10719
  %10845 = vmatprep.subr.bf16.mxu0 %v10717
  %10846 = vmatpush2.bf16.msra.mxu0 %v10716
  %10847 = vmatprep.mubr.bf16.mxu0 %v10472
  %10848 = vmatmul.mubr.bf16.gmra.mxu0 %v10471
  %v10849 = vpop.f32.mrf.mxu0
  %v10850 = vadd.f32 %v10480, %v10849
  %v10851 = vpop.f32.mrf.mxu0
  %v10852 = vadd.f32 %v10484, %v10851
  %v10853 = vpop.f32.mrf.mxu0
  %v10854 = vpop.f32.mrf.mxu0
  %10855 = vdwg.mxu0
  %10856 = vmatprep.subr.bf16.mxu0 0
  %10857 = vmatpush1.bf16.msra.mxu0 0
  %10858 = vmatprep.subr.bf16.mxu0 0
  %10859 = vmatpush1.bf16.msra.mxu0 0
  %10860 = vmatprep.subr.bf16.mxu0 0
  %10861 = vmatpush1.bf16.msra.mxu0 0
  %10862 = vmatprep.subr.bf16.mxu0 0
  %10863 = vmatpush1.bf16.msra.mxu0 0
  %10864 = vmatprep.subr.bf16.mxu0 %v10750
  %10865 = vmatpush1.bf16.msra.mxu0 %v10749
  %10866 = vmatprep.subr.bf16.mxu0 %v10747
  %10867 = vmatpush1.bf16.msra.mxu0 %v10746
  %10868 = vmatprep.subr.bf16.mxu0 %v10744
  %10869 = vmatpush1.bf16.msra.mxu0 %v10743
  %10870 = vmatprep.subr.bf16.mxu0 %v10741
  %10871 = vmatpush1.bf16.msra.mxu0 %v10740
  %10872 = vmatprep.subr.bf16.mxu0 0
  %10873 = vmatpush2.bf16.msra.mxu0 0
  %10874 = vmatprep.subr.bf16.mxu0 0
  %10875 = vmatpush2.bf16.msra.mxu0 0
  %10876 = vmatprep.subr.bf16.mxu0 0
  %10877 = vmatpush2.bf16.msra.mxu0 0
  %10878 = vmatprep.subr.bf16.mxu0 0
  %10879 = vmatpush2.bf16.msra.mxu0 0
  %10880 = vmatprep.subr.bf16.mxu0 0
  %10881 = vmatpush2.bf16.msra.mxu0 0
  %10882 = vmatprep.subr.bf16.mxu0 0
  %10883 = vmatpush2.bf16.msra.mxu0 0
  %10884 = vmatprep.subr.bf16.mxu0 0
  %10885 = vmatpush2.bf16.msra.mxu0 0
  %10886 = vmatprep.subr.bf16.mxu0 0
  %10887 = vmatpush2.bf16.msra.mxu0 0
  %10888 = vmatprep.mubr.bf16.mxu0 0
  %10889 = vmatmul.mubr.bf16.gmra.mxu0 %v10813
  %v10890 = vpop.f32.mrf.mxu0
  %v10891 = vadd.f32 %v10850, %v10890
  %v10892 = vpop.f32.mrf.mxu0
  %v10893 = vadd.f32 %v10852, %v10892
  %v10894 = vpop.f32.mrf.mxu0
  %v10895 = vpop.f32.mrf.mxu0
  %10896 = vdwg.mxu0
  %10897 = vmatprep.subr.bf16.mxu0 0
  %10898 = vmatpush1.bf16.msra.mxu0 %v10715
  %10899 = vmatprep.subr.bf16.mxu0 0
  %10900 = vmatpush1.bf16.msra.mxu0 %v10712
  %10901 = vmatprep.subr.bf16.mxu0 0
  %10902 = vmatpush1.bf16.msra.mxu0 %v10709
  %10903 = vmatprep.subr.bf16.mxu0 0
  %10904 = vmatpush1.bf16.msra.mxu0 %v10706
  %10905 = vmatprep.subr.bf16.mxu0 0
  %10906 = vmatpush1.bf16.msra.mxu0 %v10703
  %10907 = vmatprep.subr.bf16.mxu0 0
  %10908 = vmatpush1.bf16.msra.mxu0 %v10700
  %10909 = vmatprep.subr.bf16.mxu0 0
  %10910 = vmatpush1.bf16.msra.mxu0 %v10697
  %10911 = vmatprep.subr.bf16.mxu0 0
  %10912 = vmatpush1.bf16.msra.mxu0 %v10694
  %10913 = vmatprep.subr.bf16.mxu0 0
  %10914 = vmatpush2.bf16.msra.mxu0 %v10739
  %10915 = vmatprep.subr.bf16.mxu0 0
  %10916 = vmatpush2.bf16.msra.mxu0 %v10736
  %10917 = vmatprep.subr.bf16.mxu0 0
  %10918 = vmatpush2.bf16.msra.mxu0 %v10733
  %10919 = vmatprep.subr.bf16.mxu0 0
  %10920 = vmatpush2.bf16.msra.mxu0 %v10730
  %10921 = vmatprep.subr.bf16.mxu0 0
  %10922 = vmatpush2.bf16.msra.mxu0 %v10727
  %10923 = vmatprep.subr.bf16.mxu0 0
  %10924 = vmatpush2.bf16.msra.mxu0 %v10724
  %10925 = vmatprep.subr.bf16.mxu0 0
  %10926 = vmatpush2.bf16.msra.mxu0 %v10721
  %10927 = vmatprep.subr.bf16.mxu0 0
  %10928 = vmatpush2.bf16.msra.mxu0 %v10718
  %10929 = vmatprep.mubr.bf16.mxu0 %v10472
  %10930 = vmatmul.mubr.bf16.gmra.mxu0 %v10471
  %v10931 = vpop.f32.mrf.mxu0
  %v10932 = vadd.f32 %v10488, %v10931
  %v10933 = vpop.f32.mrf.mxu0
  %v10934 = vpop.f32.mrf.mxu0
  %v10935 = vpop.f32.mrf.mxu0
  %10936 = vdwg.mxu0
  %10937 = vmatprep.subr.bf16.mxu0 0
  %10938 = vmatpush1.bf16.msra.mxu0 0
  %10939 = vmatprep.subr.bf16.mxu0 0
  %10940 = vmatpush1.bf16.msra.mxu0 0
  %10941 = vmatprep.subr.bf16.mxu0 0
  %10942 = vmatpush1.bf16.msra.mxu0 0
  %10943 = vmatprep.subr.bf16.mxu0 0
  %10944 = vmatpush1.bf16.msra.mxu0 0
  %10945 = vmatprep.subr.bf16.mxu0 0
  %10946 = vmatpush1.bf16.msra.mxu0 %v10751
  %10947 = vmatprep.subr.bf16.mxu0 0
  %10948 = vmatpush1.bf16.msra.mxu0 %v10748
  %10949 = vmatprep.subr.bf16.mxu0 0
  %10950 = vmatpush1.bf16.msra.mxu0 %v10745
  %10951 = vmatprep.subr.bf16.mxu0 0
  %10952 = vmatpush1.bf16.msra.mxu0 %v10742
  %10953 = vmatprep.subr.bf16.mxu0 0
  %10954 = vmatpush2.bf16.msra.mxu0 0
  %10955 = vmatprep.subr.bf16.mxu0 0
  %10956 = vmatpush2.bf16.msra.mxu0 0
  %10957 = vmatprep.subr.bf16.mxu0 0
  %10958 = vmatpush2.bf16.msra.mxu0 0
  %10959 = vmatprep.subr.bf16.mxu0 0
  %10960 = vmatpush2.bf16.msra.mxu0 0
  %10961 = vmatprep.subr.bf16.mxu0 0
  %10962 = vmatpush2.bf16.msra.mxu0 0
  %10963 = vmatprep.subr.bf16.mxu0 0
  %10964 = vmatpush2.bf16.msra.mxu0 0
  %10965 = vmatprep.subr.bf16.mxu0 0
  %10966 = vmatpush2.bf16.msra.mxu0 0
  %10967 = vmatprep.subr.bf16.mxu0 0
  %10968 = vmatpush2.bf16.msra.mxu0 0
  %10969 = vmatprep.mubr.bf16.mxu0 0
  %10970 = vmatmul.mubr.bf16.gmra.mxu0 %v10813
  %v10971 = vpop.f32.mrf.mxu0
  %v10972 = vadd.f32 %v10932, %v10971
  %v10973 = vpop.f32.mrf.mxu0
  %v10974 = vpop.f32.mrf.mxu0
  %v10975 = vpop.f32.mrf.mxu0
  %10976 = vdwg.mxu0
  %v10977 = vadd.f32 %v8265, %v10305
  %v10978 = vadd.f32 %v8267, %v10307
  %v10979 = vadd.f32 %v8306, %v10386
  %v10981 = vsel %vm3928, %v10891, 0
  %v10984 = vsel %vm3928, %v10893, 0
  %v10987 = vsel %vm3928, %v10972, 0
  %10989 = vmatprep.subr.mxu0 0.0
  %10990 = vmatpush1.msra.mxu0 0.0
  %10991 = vmatprep.subr.mxu0 0.0
  %10992 = vmatpush1.msra.mxu0 0.0
  %10993 = vmatprep.subr.mxu0 0.0
  %10994 = vmatpush1.msra.mxu0 0.0
  %10995 = vmatprep.subr.mxu0 0.0
  %10996 = vmatpush1.msra.mxu0 0.0
  %10997 = vmatprep.subr.mxu0 0.0
  %10998 = vmatpush1.msra.mxu0 0.0
  %10999 = vmatprep.subr.mxu0 0.0
  %11000 = vmatpush1.msra.mxu0 0.0
  %11001 = vmatprep.subr.mxu0 0.0
  %11002 = vmatpush1.msra.mxu0 0.0
  %11003 = vmatprep.subr.mxu0 0.0
  %11004 = vmatpush1.msra.mxu0 0.0
  %11005 = vmatprep.subr.mxu0 0.0
  %11006 = vmatpush1.msra.mxu0 0.0
  %11007 = vmatprep.subr.mxu0 0.0
  %11008 = vmatpush1.msra.mxu0 0.0
  %11009 = vmatprep.subr.mxu0 0.0
  %11010 = vmatpush1.msra.mxu0 0.0
  %11011 = vmatprep.subr.mxu0 0.0
  %11012 = vmatpush1.msra.mxu0 0.0
  %11013 = vmatprep.subr.mxu0 0.0
  %11014 = vmatpush1.msra.mxu0 0.0
  %11015 = vmatprep.subr.mxu0 0.0
  %11016 = vmatpush1.msra.mxu0 0.0
  %11017 = vmatprep.subr.mxu0 0.0
  %11018 = vmatpush1.msra.mxu0 0.0
  %11019 = vmatprep.subr.mxu0 %v10984
  %11020 = vmatpush1.msra.mxu0 %v10981
  %11021 = vmatprep.subr.mxu0 0.0
  %11022 = vmatpush2.msra.mxu0 0.0
  %11023 = vmatprep.subr.mxu0 0.0
  %11024 = vmatpush2.msra.mxu0 0.0
  %11025 = vmatprep.subr.mxu0 0.0
  %11026 = vmatpush2.msra.mxu0 0.0
  %11027 = vmatprep.subr.mxu0 0.0
  %11028 = vmatpush2.msra.mxu0 0.0
  %11029 = vmatprep.subr.mxu0 0.0
  %11030 = vmatpush2.msra.mxu0 0.0
  %11031 = vmatprep.subr.mxu0 0.0
  %11032 = vmatpush2.msra.mxu0 0.0
  %11033 = vmatprep.subr.mxu0 0.0
  %11034 = vmatpush2.msra.mxu0 0.0
  %11035 = vmatprep.subr.mxu0 0.0
  %11036 = vmatpush2.msra.mxu0 0.0
  %11037 = vmatprep.subr.mxu0 0.0
  %11038 = vmatpush2.msra.mxu0 0.0
  %11039 = vmatprep.subr.mxu0 0.0
  %11040 = vmatpush2.msra.mxu0 0.0
  %11041 = vmatprep.subr.mxu0 0.0
  %11042 = vmatpush2.msra.mxu0 0.0
  %11043 = vmatprep.subr.mxu0 0.0
  %11044 = vmatpush2.msra.mxu0 0.0
  %11045 = vmatprep.subr.mxu0 0.0
  %11046 = vmatpush2.msra.mxu0 0.0
  %11047 = vmatprep.subr.mxu0 0.0
  %11048 = vmatpush2.msra.mxu0 0.0
  %11049 = vmatprep.subr.mxu0 0.0
  %11050 = vmatpush2.msra.mxu0 0.0
  %11051 = vmatprep.subr.mxu0 0.0
  %11052 = vmatpush2.msra.mxu0 0.0
  %11053 = vmatprep.mubr.f32.mxu0 0.0
  %11054 = vmatmul.mubr.f32.gmra.mxu0 %v3926
  %v11055 = vpop.f32.mrf.mxu0
  %v11056 = vadd.f32 0.0, %v11055
  %v11057 = vpop.f32.mrf.mxu0
  %v11058 = vadd.f32 0.0, %v11057
  %11059 = vdwg.mxu0
  %11060 = vmatprep.subr.mxu0 0.0
  %11061 = vmatpush1.msra.mxu0 0.0
  %11062 = vmatprep.subr.mxu0 0.0
  %11063 = vmatpush1.msra.mxu0 0.0
  %11064 = vmatprep.subr.mxu0 0.0
  %11065 = vmatpush1.msra.mxu0 0.0
  %11066 = vmatprep.subr.mxu0 0.0
  %11067 = vmatpush1.msra.mxu0 0.0
  %11068 = vmatprep.subr.mxu0 0.0
  %11069 = vmatpush1.msra.mxu0 0.0
  %11070 = vmatprep.subr.mxu0 0.0
  %11071 = vmatpush1.msra.mxu0 0.0
  %11072 = vmatprep.subr.mxu0 0.0
  %11073 = vmatpush1.msra.mxu0 0.0
  %11074 = vmatprep.subr.mxu0 0.0
  %11075 = vmatpush1.msra.mxu0 0.0
  %11076 = vmatprep.subr.mxu0 0.0
  %11077 = vmatpush1.msra.mxu0 0.0
  %11078 = vmatprep.subr.mxu0 0.0
  %11079 = vmatpush1.msra.mxu0 0.0
  %11080 = vmatprep.subr.mxu0 0.0
  %11081 = vmatpush1.msra.mxu0 0.0
  %11082 = vmatprep.subr.mxu0 0.0
  %11083 = vmatpush1.msra.mxu0 0.0
  %11084 = vmatprep.subr.mxu0 0.0
  %11085 = vmatpush1.msra.mxu0 0.0
  %11086 = vmatprep.subr.mxu0 0.0
  %11087 = vmatpush1.msra.mxu0 0.0
  %11088 = vmatprep.subr.mxu0 0.0
  %11089 = vmatpush1.msra.mxu0 0.0
  %11090 = vmatprep.subr.mxu0 0.0
  %11091 = vmatpush1.msra.mxu0 %v10987
  %11092 = vmatprep.subr.mxu0 0.0
  %11093 = vmatpush2.msra.mxu0 0.0
  %11094 = vmatprep.subr.mxu0 0.0
  %11095 = vmatpush2.msra.mxu0 0.0
  %11096 = vmatprep.subr.mxu0 0.0
  %11097 = vmatpush2.msra.mxu0 0.0
  %11098 = vmatprep.subr.mxu0 0.0
  %11099 = vmatpush2.msra.mxu0 0.0
  %11100 = vmatprep.subr.mxu0 0.0
  %11101 = vmatpush2.msra.mxu0 0.0
  %11102 = vmatprep.subr.mxu0 0.0
  %11103 = vmatpush2.msra.mxu0 0.0
  %11104 = vmatprep.subr.mxu0 0.0
  %11105 = vmatpush2.msra.mxu0 0.0
  %11106 = vmatprep.subr.mxu0 0.0
  %11107 = vmatpush2.msra.mxu0 0.0
  %11108 = vmatprep.subr.mxu0 0.0
  %11109 = vmatpush2.msra.mxu0 0.0
  %11110 = vmatprep.subr.mxu0 0.0
  %11111 = vmatpush2.msra.mxu0 0.0
  %11112 = vmatprep.subr.mxu0 0.0
  %11113 = vmatpush2.msra.mxu0 0.0
  %11114 = vmatprep.subr.mxu0 0.0
  %11115 = vmatpush2.msra.mxu0 0.0
  %11116 = vmatprep.subr.mxu0 0.0
  %11117 = vmatpush2.msra.mxu0 0.0
  %11118 = vmatprep.subr.mxu0 0.0
  %11119 = vmatpush2.msra.mxu0 0.0
  %11120 = vmatprep.subr.mxu0 0.0
  %11121 = vmatpush2.msra.mxu0 0.0
  %11122 = vmatprep.subr.mxu0 0.0
  %11123 = vmatpush2.msra.mxu0 0.0
  %11124 = vmatprep.mubr.f32.mxu0 0.0
  %11125 = vmatmul.mubr.f32.gmra.mxu0 %v3926
  %v11126 = vpop.f32.mrf.mxu0
  %v11127 = vadd.f32 0.0, %v11126
  %v11128 = vpop.f32.mrf.mxu0
  %11129 = vdwg.mxu0
  %v11130 = vadd.f32 %v10977, %v11056
  %v11131 = vadd.f32 %v10978, %v11058
  %v11132 = vadd.f32 %v10979, %v11127
  %v11133 = vld [vmem:[%s8] sm:$0xff]
  %v11134 = vld [vmem:[%s8 + $0x8] sm:$0xff]
  %v11135 = vld [vmem:[%s8 + $0x10] sm:$0xff]
  %v11136 = vld [vmem:[%s8 + $0x18] sm:$0xff]
  %v11137 = vld [vmem:[%s8 + $0x20] sm:$0xff]
  %v11138 = vld [vmem:[%s8 + $0x28] sm:$0xff]
  %v11139 = vld [vmem:[%s8 + $0x30] sm:$0xff]
  %v11140 = vld [vmem:[%s8 + $0x38] sm:$0xff]
  %v11141 = vld [vmem:[%s8 + $0x40] sm:$0xff]
  %v11142 = vld [vmem:[%s8 + $0x48] sm:$0xff]
  %v11143 = vld [vmem:[%s8 + $0x50] sm:$0xff]
  %v11144 = vld [vmem:[%s8 + $0x58] sm:$0xff]
  %v11145 = vld [vmem:[%s8 + $0x60] sm:$0xff]
  %v11146 = vld [vmem:[%s8 + $0x68] sm:$0xff]
  %v11147 = vld [vmem:[%s8 + $0x70] sm:$0xff]
  %v11148 = vld [vmem:[%s8 + $0x78] sm:$0xff]
  %v11149 = vld [vmem:[%s8 + $0x80] sm:$0xff]
  %v11150 = vld [vmem:[%s8 + $0x88] sm:$0xff]
  %v11151 = vld [vmem:[%s8 + $0x90] sm:$0xff]
  %v11152 = vld [vmem:[%s8 + $0x98] sm:$0xff]
  %v11153 = vld [vmem:[%s8 + $0xa0] sm:$0xff]
  %v11154 = vld [vmem:[%s8 + $0xa8] sm:$0xff]
  %v11155 = vld [vmem:[%s8 + $0xb0] sm:$0xff]
  %v11156 = vld [vmem:[%s8 + $0xb8] sm:$0xff]
  %v11157 = vld [vmem:[%s8 + $0xc0] sm:$0xff]
  %v11158 = vld [vmem:[%s8 + $0xc8] sm:$0xff]
  %v11159 = vld [vmem:[%s8 + $0xd0] sm:$0xff]
  %v11160 = vld [vmem:[%s8 + $0xd8] sm:$0xff]
  %v11161 = vld [vmem:[%s8 + $0xe0] sm:$0xff]
  %v11162 = vld [vmem:[%s8 + $0xe8] sm:$0xff]
  %v11163 = vld [vmem:[%s8 + $0xf0] sm:$0xff]
  %v11164 = vld [vmem:[%s8 + $0xf8] sm:$0xff]
  %v11165 = vld [vmem:[%s8 + $0x100] sm:$0xff]
  %v11166 = vld [vmem:[%s8 + $0x108] sm:$0xff]
  %v11167 = vld [vmem:[%s8 + $0x110] sm:$0xff]
  %v11168 = vld [vmem:[%s8 + $0x118] sm:$0xff]
  %v11169 = vld [vmem:[%s8 + $0x120] sm:$0xff]
  %v11170 = vld [vmem:[%s8 + $0x128] sm:$0xff]
  %v11171 = vld [vmem:[%s8 + $0x130] sm:$0xff]
  %v11172 = vld [vmem:[%s8 + $0x138] sm:$0xff]
  %v11173 = vld [vmem:[%s8 + $0x140] sm:$0xff]
  %v11174 = vld [vmem:[%s8 + $0x148] sm:$0xff]
  %v11175 = vld [vmem:[%s8 + $0x150] sm:$0xff]
  %v11176 = vld [vmem:[%s8 + $0x158] sm:$0xff]
  %v11177 = vld [vmem:[%s8 + $0x160] sm:$0xff]
  %v11178 = vld [vmem:[%s8 + $0x168] sm:$0xff]
  %v11179 = vld [vmem:[%s8 + $0x170] sm:$0xff]
  %v11180 = vld [vmem:[%s8 + $0x178] sm:$0xff]
  %v11181 = vld [vmem:[%s8 + $0x180] sm:$0xff]
  %v11182 = vld [vmem:[%s8 + $0x188] sm:$0xff]
  %v11183 = vld [vmem:[%s8 + $0x190] sm:$0xff]
  %v11184 = vld [vmem:[%s8 + $0x198] sm:$0xff]
  %v11185 = vld [vmem:[%s8 + $0x1a0] sm:$0xff]
  %v11186 = vld [vmem:[%s8 + $0x1a8] sm:$0xff]
  %v11187 = vld [vmem:[%s8 + $0x1b0] sm:$0xff]
  %v11188 = vld [vmem:[%s8 + $0x1b8] sm:$0xff]
  %v11189 = vld [vmem:[%s8 + $0x1c0] sm:$0xff]
  %v11190 = vld [vmem:[%s8 + $0x1c8] sm:$0xff]
  %v11191 = vld [vmem:[%s8 + $0x1d0] sm:$0xff]
  %v11192 = vld [vmem:[%s8 + $0x1d8] sm:$0xff]
  %v11193 = vld [vmem:[%s8 + $0x1e0] sm:$0xff]
  %v11194 = vld [vmem:[%s8 + $0x1e8] sm:$0xff]
  %v11195 = vld [vmem:[%s8 + $0x1f0] sm:$0xff]
  %v11196 = vld [vmem:[%s8 + $0x1f8] sm:$0xff]
  %v11197 = vld [vmem:[%s8 + $0x200] sm:$0xff]
  %v11198 = vld [vmem:[%s8 + $0x208] sm:$0xff]
  %v11199 = vld [vmem:[%s8 + $0x210] sm:$0xff]
  %v11200 = vld [vmem:[%s8 + $0x218] sm:$0xff]
  %v11201 = vld [vmem:[%s8 + $0x220] sm:$0xff]
  %v11202 = vld [vmem:[%s8 + $0x228] sm:$0xff]
  %v11203 = vld [vmem:[%s8 + $0x230] sm:$0xff]
  %v11204 = vld [vmem:[%s8 + $0x238] sm:$0xff]
  %v11205 = vld [vmem:[%s8 + $0x240] sm:$0xff]
  %v11206 = vld [vmem:[%s8 + $0x248] sm:$0xff]
  %v11207 = vld [vmem:[%s8 + $0x250] sm:$0xff]
  %v11208 = vld [vmem:[%s8 + $0x258] sm:$0xff]
  %v11209 = vld [vmem:[%s8 + $0x260] sm:$0xff]
  %v11210 = vld [vmem:[%s8 + $0x268] sm:$0xff]
  %v11211 = vld [vmem:[%s8 + $0x270] sm:$0xff]
  %v11212 = vld [vmem:[%s8 + $0x278] sm:$0xff]
  %v11213 = vld [vmem:[%s8 + $0x280] sm:$0xff]
  %v11214 = vld [vmem:[%s8 + $0x288] sm:$0xff]
  %v11215 = vld [vmem:[%s8 + $0x290] sm:$0xff]
  %v11216 = vld [vmem:[%s8 + $0x298] sm:$0xff]
  %v11217 = vld [vmem:[%s8 + $0x2a0] sm:$0xff]
  %v11218 = vld [vmem:[%s8 + $0x2a8] sm:$0xff]
  %v11219 = vld [vmem:[%s8 + $0x2b0] sm:$0xff]
  %v11220 = vld [vmem:[%s8 + $0x2b8] sm:$0xff]
  %v11221 = vld [vmem:[%s8 + $0x2c0] sm:$0xff]
  %v11222 = vld [vmem:[%s8 + $0x2c8] sm:$0xff]
  %v11223 = vld [vmem:[%s8 + $0x2d0] sm:$0xff]
  %v11224 = vld [vmem:[%s8 + $0x2d8] sm:$0xff]
  %v11225 = vld [vmem:[%s8 + $0x2e0] sm:$0xff]
  %v11226 = vld [vmem:[%s8 + $0x2e8] sm:$0xff]
  %v11227 = vld [vmem:[%s8 + $0x2f0] sm:$0xff]
  %v11228 = vld [vmem:[%s8 + $0x2f8] sm:$0xff]
  %v11229 = vld [vmem:[%s8 + $0x300] sm:$0xff]
  %v11230 = vld [vmem:[%s8 + $0x308] sm:$0xff]
  %v11231 = vld [vmem:[%s8 + $0x310] sm:$0xff]
  %v11232 = vld [vmem:[%s8 + $0x318] sm:$0xff]
  %v11233 = vld [vmem:[%s8 + $0x320] sm:$0xff]
  %v11234 = vld [vmem:[%s8 + $0x328] sm:$0xff]
  %v11235 = vld [vmem:[%s8 + $0x330] sm:$0xff]
  %v11236 = vld [vmem:[%s8 + $0x338] sm:$0xff]
  %v11237 = vld [vmem:[%s8 + $0x340] sm:$0xff]
  %v11238 = vld [vmem:[%s8 + $0x348] sm:$0xff]
  %v11239 = vld [vmem:[%s8 + $0x350] sm:$0xff]
  %v11240 = vld [vmem:[%s8 + $0x358] sm:$0xff]
  %v11241 = vld [vmem:[%s8 + $0x360] sm:$0xff]
  %v11242 = vld [vmem:[%s8 + $0x368] sm:$0xff]
  %v11243 = vld [vmem:[%s8 + $0x370] sm:$0xff]
  %v11244 = vld [vmem:[%s8 + $0x378] sm:$0xff]
  %v11245 = vld [vmem:[%s8 + $0x380] sm:$0xff]
  %v11246 = vld [vmem:[%s8 + $0x388] sm:$0xff]
  %v11247 = vld [vmem:[%s8 + $0x390] sm:$0xff]
  %v11248 = vld [vmem:[%s8 + $0x398] sm:$0xff]
  %v11249 = vld [vmem:[%s8 + $0x3a0] sm:$0xff]
  %v11250 = vld [vmem:[%s8 + $0x3a8] sm:$0xff]
  %v11251 = vld [vmem:[%s8 + $0x3b0] sm:$0xff]
  %v11252 = vld [vmem:[%s8 + $0x3b8] sm:$0xff]
  %v11253 = vld [vmem:[%s8 + $0x3c0] sm:$0xff]
  %v11254 = vld [vmem:[%s8 + $0x3c8] sm:$0xff]
  %v11255 = vld [vmem:[%s8 + $0x3d0] sm:$0xff]
  %v11256 = vld [vmem:[%s8 + $0x3d8] sm:$0xff]
  %v11257 = vld [vmem:[%s8 + $0x3e0] sm:$0xff]
  %v11258 = vld [vmem:[%s8 + $0x3e8] sm:$0xff]
  %v11259 = vld [vmem:[%s8 + $0x3f0] sm:$0xff]
  %v11260 = vld [vmem:[%s8 + $0x3f8] sm:$0xff]
  %v11261 = vpack.c.bf16 %v11130, %v11130
  %v11262 = vld [vmem:[%s13] sm:$0xff]
  %v11263 = vld [vmem:[%s13 + $0x8] sm:$0xff]
  %v11266 = vlaneseq
  %v11267 = vshrl.u32 %v11266, 7
  %v11268 = vsub.s32 0, %v11267
  %v11269 = vrot.slane %v11262, %v11268
  %v11270 = vlaneseq
  %v11271 = vshrl.u32 %v11270, 7
  %v11272 = vsub.s32 1, %v11271
  %v11273 = vrot.slane %v11262, %v11272
  %v11274 = vlaneseq
  %v11275 = vshrl.u32 %v11274, 7
  %v11276 = vsub.s32 2, %v11275
  %v11277 = vrot.slane %v11262, %v11276
  %v11278 = vlaneseq
  %v11279 = vshrl.u32 %v11278, 7
  %v11280 = vsub.s32 3, %v11279
  %v11281 = vrot.slane %v11262, %v11280
  %v11282 = vlaneseq
  %v11283 = vshrl.u32 %v11282, 7
  %v11284 = vsub.s32 4, %v11283
  %v11285 = vrot.slane %v11262, %v11284
  %v11286 = vlaneseq
  %v11287 = vshrl.u32 %v11286, 7
  %v11288 = vsub.s32 5, %v11287
  %v11289 = vrot.slane %v11262, %v11288
  %v11290 = vlaneseq
  %v11291 = vshrl.u32 %v11290, 7
  %v11292 = vsub.s32 6, %v11291
  %v11293 = vrot.slane %v11262, %v11292
  %v11294 = vlaneseq
  %v11295 = vshrl.u32 %v11294, 7
  %v11296 = vsub.s32 7, %v11295
  %v11297 = vrot.slane %v11262, %v11296
  %v11298 = vlaneseq
  %v11299 = vshrl.u32 %v11298, 7
  %v11300 = vsub.s32 0, %v11299
  %v11301 = vrot.slane %v11263, %v11300
  %v11302 = vlaneseq
  %v11303 = vshrl.u32 %v11302, 7
  %v11304 = vsub.s32 1, %v11303
  %v11305 = vrot.slane %v11263, %v11304
  %v11306 = vlaneseq
  %v11307 = vshrl.u32 %v11306, 7
  %v11308 = vsub.s32 2, %v11307
  %v11309 = vrot.slane %v11263, %v11308
  %v11310 = vlaneseq
  %v11311 = vshrl.u32 %v11310, 7
  %v11312 = vsub.s32 3, %v11311
  %v11313 = vrot.slane %v11263, %v11312
  %v11314 = vlaneseq
  %v11315 = vshrl.u32 %v11314, 7
  %v11316 = vsub.s32 4, %v11315
  %v11317 = vrot.slane %v11263, %v11316
  %v11318 = vlaneseq
  %v11319 = vshrl.u32 %v11318, 7
  %v11320 = vsub.s32 5, %v11319
  %v11321 = vrot.slane %v11263, %v11320
  %v11322 = vlaneseq
  %v11323 = vshrl.u32 %v11322, 7
  %v11324 = vsub.s32 6, %v11323
  %v11325 = vrot.slane %v11263, %v11324
  %v11326 = vlaneseq
  %v11327 = vshrl.u32 %v11326, 7
  %v11328 = vsub.s32 7, %v11327
  %v11329 = vrot.slane %v11263, %v11328
  %v11474 = vunpack.c.l.b16 %v11133
  %v11475 = vunpack.c.h.b16 %v11133
  %v11476 = vunpack.c.l.b16 %v11134
  %v11477 = vunpack.c.h.b16 %v11134
  %v11478 = vunpack.c.l.b16 %v11135
  %v11479 = vunpack.c.h.b16 %v11135
  %v11480 = vunpack.c.l.b16 %v11136
  %v11481 = vunpack.c.h.b16 %v11136
  %v11482 = vunpack.c.l.b16 %v11137
  %v11483 = vunpack.c.h.b16 %v11137
  %v11484 = vunpack.c.l.b16 %v11138
  %v11485 = vunpack.c.h.b16 %v11138
  %v11486 = vunpack.c.l.b16 %v11139
  %v11487 = vunpack.c.h.b16 %v11139
  %v11488 = vunpack.c.l.b16 %v11140
  %v11489 = vunpack.c.h.b16 %v11140
  %v11490 = vunpack.c.l.b16 %v11141
  %v11491 = vunpack.c.h.b16 %v11141
  %v11492 = vunpack.c.l.b16 %v11142
  %v11493 = vunpack.c.h.b16 %v11142
  %v11494 = vunpack.c.l.b16 %v11143
  %v11495 = vunpack.c.h.b16 %v11143
  %v11496 = vunpack.c.l.b16 %v11144
  %v11497 = vunpack.c.h.b16 %v11144
  %v11498 = vunpack.c.l.b16 %v11145
  %v11499 = vunpack.c.h.b16 %v11145
  %v11500 = vunpack.c.l.b16 %v11146
  %v11501 = vunpack.c.h.b16 %v11146
  %v11502 = vunpack.c.l.b16 %v11147
  %v11503 = vunpack.c.h.b16 %v11147
  %v11504 = vunpack.c.l.b16 %v11148
  %v11505 = vunpack.c.h.b16 %v11148
  %v11506 = vunpack.c.l.b16 %v11149
  %v11507 = vunpack.c.h.b16 %v11149
  %v11508 = vunpack.c.l.b16 %v11150
  %v11509 = vunpack.c.h.b16 %v11150
  %v11510 = vunpack.c.l.b16 %v11151
  %v11511 = vunpack.c.h.b16 %v11151
  %v11512 = vunpack.c.l.b16 %v11152
  %v11513 = vunpack.c.h.b16 %v11152
  %v11514 = vunpack.c.l.b16 %v11153
  %v11515 = vunpack.c.h.b16 %v11153
  %v11516 = vunpack.c.l.b16 %v11154
  %v11517 = vunpack.c.h.b16 %v11154
  %v11518 = vunpack.c.l.b16 %v11155
  %v11519 = vunpack.c.h.b16 %v11155
  %v11520 = vunpack.c.l.b16 %v11156
  %v11521 = vunpack.c.h.b16 %v11156
  %v11522 = vunpack.c.l.b16 %v11157
  %v11523 = vunpack.c.h.b16 %v11157
  %v11524 = vunpack.c.l.b16 %v11158
  %v11525 = vunpack.c.h.b16 %v11158
  %v11526 = vunpack.c.l.b16 %v11159
  %v11527 = vunpack.c.h.b16 %v11159
  %v11528 = vunpack.c.l.b16 %v11160
  %v11529 = vunpack.c.h.b16 %v11160
  %v11530 = vunpack.c.l.b16 %v11161
  %v11531 = vunpack.c.h.b16 %v11161
  %v11532 = vunpack.c.l.b16 %v11162
  %v11533 = vunpack.c.h.b16 %v11162
  %v11534 = vunpack.c.l.b16 %v11163
  %v11535 = vunpack.c.h.b16 %v11163
  %v11536 = vunpack.c.l.b16 %v11164
  %v11537 = vunpack.c.h.b16 %v11164
  %v11538 = vunpack.c.l.b16 %v11165
  %v11539 = vunpack.c.h.b16 %v11165
  %v11540 = vunpack.c.l.b16 %v11166
  %v11541 = vunpack.c.h.b16 %v11166
  %v11542 = vunpack.c.l.b16 %v11167
  %v11543 = vunpack.c.h.b16 %v11167
  %v11544 = vunpack.c.l.b16 %v11168
  %v11545 = vunpack.c.h.b16 %v11168
  %v11546 = vunpack.c.l.b16 %v11169
  %v11547 = vunpack.c.h.b16 %v11169
  %v11548 = vunpack.c.l.b16 %v11170
  %v11549 = vunpack.c.h.b16 %v11170
  %v11550 = vunpack.c.l.b16 %v11171
  %v11551 = vunpack.c.h.b16 %v11171
  %v11552 = vunpack.c.l.b16 %v11172
  %v11553 = vunpack.c.h.b16 %v11172
  %v11554 = vunpack.c.l.b16 %v11173
  %v11555 = vunpack.c.h.b16 %v11173
  %v11556 = vunpack.c.l.b16 %v11174
  %v11557 = vunpack.c.h.b16 %v11174
  %v11558 = vunpack.c.l.b16 %v11175
  %v11559 = vunpack.c.h.b16 %v11175
  %v11560 = vunpack.c.l.b16 %v11176
  %v11561 = vunpack.c.h.b16 %v11176
  %v11562 = vunpack.c.l.b16 %v11177
  %v11563 = vunpack.c.h.b16 %v11177
  %v11564 = vunpack.c.l.b16 %v11178
  %v11565 = vunpack.c.h.b16 %v11178
  %v11566 = vunpack.c.l.b16 %v11179
  %v11567 = vunpack.c.h.b16 %v11179
  %v11568 = vunpack.c.l.b16 %v11180
  %v11569 = vunpack.c.h.b16 %v11180
  %v11570 = vunpack.c.l.b16 %v11181
  %v11571 = vunpack.c.h.b16 %v11181
  %v11572 = vunpack.c.l.b16 %v11182
  %v11573 = vunpack.c.h.b16 %v11182
  %v11574 = vunpack.c.l.b16 %v11183
  %v11575 = vunpack.c.h.b16 %v11183
  %v11576 = vunpack.c.l.b16 %v11184
  %v11577 = vunpack.c.h.b16 %v11184
  %v11578 = vunpack.c.l.b16 %v11185
  %v11579 = vunpack.c.h.b16 %v11185
  %v11580 = vunpack.c.l.b16 %v11186
  %v11581 = vunpack.c.h.b16 %v11186
  %v11582 = vunpack.c.l.b16 %v11187
  %v11583 = vunpack.c.h.b16 %v11187
  %v11584 = vunpack.c.l.b16 %v11188
  %v11585 = vunpack.c.h.b16 %v11188
  %v11586 = vunpack.c.l.b16 %v11189
  %v11587 = vunpack.c.h.b16 %v11189
  %v11588 = vunpack.c.l.b16 %v11190
  %v11589 = vunpack.c.h.b16 %v11190
  %v11590 = vunpack.c.l.b16 %v11191
  %v11591 = vunpack.c.h.b16 %v11191
  %v11592 = vunpack.c.l.b16 %v11192
  %v11593 = vunpack.c.h.b16 %v11192
  %v11594 = vunpack.c.l.b16 %v11193
  %v11595 = vunpack.c.h.b16 %v11193
  %v11596 = vunpack.c.l.b16 %v11194
  %v11597 = vunpack.c.h.b16 %v11194
  %v11598 = vunpack.c.l.b16 %v11195
  %v11599 = vunpack.c.h.b16 %v11195
  %v11600 = vunpack.c.l.b16 %v11196
  %v11601 = vunpack.c.h.b16 %v11196
  %v11602 = vunpack.c.l.b16 %v11197
  %v11603 = vunpack.c.h.b16 %v11197
  %v11604 = vunpack.c.l.b16 %v11198
  %v11605 = vunpack.c.h.b16 %v11198
  %v11606 = vunpack.c.l.b16 %v11199
  %v11607 = vunpack.c.h.b16 %v11199
  %v11608 = vunpack.c.l.b16 %v11200
  %v11609 = vunpack.c.h.b16 %v11200
  %v11610 = vunpack.c.l.b16 %v11201
  %v11611 = vunpack.c.h.b16 %v11201
  %v11612 = vunpack.c.l.b16 %v11202
  %v11613 = vunpack.c.h.b16 %v11202
  %v11614 = vunpack.c.l.b16 %v11203
  %v11615 = vunpack.c.h.b16 %v11203
  %v11616 = vunpack.c.l.b16 %v11204
  %v11617 = vunpack.c.h.b16 %v11204
  %v11618 = vunpack.c.l.b16 %v11205
  %v11619 = vunpack.c.h.b16 %v11205
  %v11620 = vunpack.c.l.b16 %v11206
  %v11621 = vunpack.c.h.b16 %v11206
  %v11622 = vunpack.c.l.b16 %v11207
  %v11623 = vunpack.c.h.b16 %v11207
  %v11624 = vunpack.c.l.b16 %v11208
  %v11625 = vunpack.c.h.b16 %v11208
  %v11626 = vunpack.c.l.b16 %v11209
  %v11627 = vunpack.c.h.b16 %v11209
  %v11628 = vunpack.c.l.b16 %v11210
  %v11629 = vunpack.c.h.b16 %v11210
  %v11630 = vunpack.c.l.b16 %v11211
  %v11631 = vunpack.c.h.b16 %v11211
  %v11632 = vunpack.c.l.b16 %v11212
  %v11633 = vunpack.c.h.b16 %v11212
  %v11634 = vunpack.c.l.b16 %v11213
  %v11635 = vunpack.c.h.b16 %v11213
  %v11636 = vunpack.c.l.b16 %v11214
  %v11637 = vunpack.c.h.b16 %v11214
  %v11638 = vunpack.c.l.b16 %v11215
  %v11639 = vunpack.c.h.b16 %v11215
  %v11640 = vunpack.c.l.b16 %v11216
  %v11641 = vunpack.c.h.b16 %v11216
  %v11642 = vunpack.c.l.b16 %v11217
  %v11643 = vunpack.c.h.b16 %v11217
  %v11644 = vunpack.c.l.b16 %v11218
  %v11645 = vunpack.c.h.b16 %v11218
  %v11646 = vunpack.c.l.b16 %v11219
  %v11647 = vunpack.c.h.b16 %v11219
  %v11648 = vunpack.c.l.b16 %v11220
  %v11649 = vunpack.c.h.b16 %v11220
  %v11650 = vunpack.c.l.b16 %v11221
  %v11651 = vunpack.c.h.b16 %v11221
  %v11652 = vunpack.c.l.b16 %v11222
  %v11653 = vunpack.c.h.b16 %v11222
  %v11654 = vunpack.c.l.b16 %v11223
  %v11655 = vunpack.c.h.b16 %v11223
  %v11656 = vunpack.c.l.b16 %v11224
  %v11657 = vunpack.c.h.b16 %v11224
  %v11658 = vunpack.c.l.b16 %v11225
  %v11659 = vunpack.c.h.b16 %v11225
  %v11660 = vunpack.c.l.b16 %v11226
  %v11661 = vunpack.c.h.b16 %v11226
  %v11662 = vunpack.c.l.b16 %v11227
  %v11663 = vunpack.c.h.b16 %v11227
  %v11664 = vunpack.c.l.b16 %v11228
  %v11665 = vunpack.c.h.b16 %v11228
  %v11666 = vunpack.c.l.b16 %v11229
  %v11667 = vunpack.c.h.b16 %v11229
  %v11668 = vunpack.c.l.b16 %v11230
  %v11669 = vunpack.c.h.b16 %v11230
  %v11670 = vunpack.c.l.b16 %v11231
  %v11671 = vunpack.c.h.b16 %v11231
  %v11672 = vunpack.c.l.b16 %v11232
  %v11673 = vunpack.c.h.b16 %v11232
  %v11674 = vunpack.c.l.b16 %v11233
  %v11675 = vunpack.c.h.b16 %v11233
  %v11676 = vunpack.c.l.b16 %v11234
  %v11677 = vunpack.c.h.b16 %v11234
  %v11678 = vunpack.c.l.b16 %v11235
  %v11679 = vunpack.c.h.b16 %v11235
  %v11680 = vunpack.c.l.b16 %v11236
  %v11681 = vunpack.c.h.b16 %v11236
  %v11682 = vunpack.c.l.b16 %v11237
  %v11683 = vunpack.c.h.b16 %v11237
  %v11684 = vunpack.c.l.b16 %v11238
  %v11685 = vunpack.c.h.b16 %v11238
  %v11686 = vunpack.c.l.b16 %v11239
  %v11687 = vunpack.c.h.b16 %v11239
  %v11688 = vunpack.c.l.b16 %v11240
  %v11689 = vunpack.c.h.b16 %v11240
  %v11690 = vunpack.c.l.b16 %v11241
  %v11691 = vunpack.c.h.b16 %v11241
  %v11692 = vunpack.c.l.b16 %v11242
  %v11693 = vunpack.c.h.b16 %v11242
  %v11694 = vunpack.c.l.b16 %v11243
  %v11695 = vunpack.c.h.b16 %v11243
  %v11696 = vunpack.c.l.b16 %v11244
  %v11697 = vunpack.c.h.b16 %v11244
  %v11698 = vunpack.c.l.b16 %v11245
  %v11699 = vunpack.c.h.b16 %v11245
  %v11700 = vunpack.c.l.b16 %v11246
  %v11701 = vunpack.c.h.b16 %v11246
  %v11702 = vunpack.c.l.b16 %v11247
  %v11703 = vunpack.c.h.b16 %v11247
  %v11704 = vunpack.c.l.b16 %v11248
  %v11705 = vunpack.c.h.b16 %v11248
  %v11706 = vunpack.c.l.b16 %v11249
  %v11707 = vunpack.c.h.b16 %v11249
  %v11708 = vunpack.c.l.b16 %v11250
  %v11709 = vunpack.c.h.b16 %v11250
  %v11710 = vunpack.c.l.b16 %v11251
  %v11711 = vunpack.c.h.b16 %v11251
  %v11712 = vunpack.c.l.b16 %v11252
  %v11713 = vunpack.c.h.b16 %v11252
  %v11714 = vunpack.c.l.b16 %v11253
  %v11715 = vunpack.c.h.b16 %v11253
  %v11716 = vunpack.c.l.b16 %v11254
  %v11717 = vunpack.c.h.b16 %v11254
  %v11718 = vunpack.c.l.b16 %v11255
  %v11719 = vunpack.c.h.b16 %v11255
  %v11720 = vunpack.c.l.b16 %v11256
  %v11721 = vunpack.c.h.b16 %v11256
  %v11722 = vunpack.c.l.b16 %v11257
  %v11723 = vunpack.c.h.b16 %v11257
  %v11724 = vunpack.c.l.b16 %v11258
  %v11725 = vunpack.c.h.b16 %v11258
  %v11726 = vunpack.c.l.b16 %v11259
  %v11727 = vunpack.c.h.b16 %v11259
  %v11728 = vunpack.c.l.b16 %v11260
  %v11729 = vunpack.c.h.b16 %v11260
  %v11730 = vpack.c.b16 %v11490, %v11474
  %v11731 = vpack.c.b16 %v11491, %v11475
  %v11732 = vpack.c.b16 %v11492, %v11476
  %v11733 = vpack.c.b16 %v11493, %v11477
  %v11734 = vpack.c.b16 %v11494, %v11478
  %v11735 = vpack.c.b16 %v11495, %v11479
  %v11736 = vpack.c.b16 %v11496, %v11480
  %v11737 = vpack.c.b16 %v11497, %v11481
  %v11738 = vpack.c.b16 %v11498, %v11482
  %v11739 = vpack.c.b16 %v11499, %v11483
  %v11740 = vpack.c.b16 %v11500, %v11484
  %v11741 = vpack.c.b16 %v11501, %v11485
  %v11742 = vpack.c.b16 %v11502, %v11486
  %v11743 = vpack.c.b16 %v11503, %v11487
  %v11744 = vpack.c.b16 %v11504, %v11488
  %v11745 = vpack.c.b16 %v11505, %v11489
  %v11746 = vpack.c.b16 %v11522, %v11506
  %v11747 = vpack.c.b16 %v11523, %v11507
  %v11748 = vpack.c.b16 %v11524, %v11508
  %v11749 = vpack.c.b16 %v11525, %v11509
  %v11750 = vpack.c.b16 %v11526, %v11510
  %v11751 = vpack.c.b16 %v11527, %v11511
  %v11752 = vpack.c.b16 %v11528, %v11512
  %v11753 = vpack.c.b16 %v11529, %v11513
  %v11754 = vpack.c.b16 %v11530, %v11514
  %v11755 = vpack.c.b16 %v11531, %v11515
  %v11756 = vpack.c.b16 %v11532, %v11516
  %v11757 = vpack.c.b16 %v11533, %v11517
  %v11758 = vpack.c.b16 %v11534, %v11518
  %v11759 = vpack.c.b16 %v11535, %v11519
  %v11760 = vpack.c.b16 %v11536, %v11520
  %v11761 = vpack.c.b16 %v11537, %v11521
  %v11762 = vpack.c.b16 %v11554, %v11538
  %v11763 = vpack.c.b16 %v11555, %v11539
  %v11764 = vpack.c.b16 %v11556, %v11540
  %v11765 = vpack.c.b16 %v11557, %v11541
  %v11766 = vpack.c.b16 %v11558, %v11542
  %v11767 = vpack.c.b16 %v11559, %v11543
  %v11768 = vpack.c.b16 %v11560, %v11544
  %v11769 = vpack.c.b16 %v11561, %v11545
  %v11770 = vpack.c.b16 %v11562, %v11546
  %v11771 = vpack.c.b16 %v11563, %v11547
  %v11772 = vpack.c.b16 %v11564, %v11548
  %v11773 = vpack.c.b16 %v11565, %v11549
  %v11774 = vpack.c.b16 %v11566, %v11550
  %v11775 = vpack.c.b16 %v11567, %v11551
  %v11776 = vpack.c.b16 %v11568, %v11552
  %v11777 = vpack.c.b16 %v11569, %v11553
  %v11778 = vpack.c.b16 %v11586, %v11570
  %v11779 = vpack.c.b16 %v11587, %v11571
  %v11780 = vpack.c.b16 %v11588, %v11572
  %v11781 = vpack.c.b16 %v11589, %v11573
  %v11782 = vpack.c.b16 %v11590, %v11574
  %v11783 = vpack.c.b16 %v11591, %v11575
  %v11784 = vpack.c.b16 %v11592, %v11576
  %v11785 = vpack.c.b16 %v11593, %v11577
  %v11786 = vpack.c.b16 %v11594, %v11578
  %v11787 = vpack.c.b16 %v11595, %v11579
  %v11788 = vpack.c.b16 %v11596, %v11580
  %v11789 = vpack.c.b16 %v11597, %v11581
  %v11790 = vpack.c.b16 %v11598, %v11582
  %v11791 = vpack.c.b16 %v11599, %v11583
  %v11792 = vpack.c.b16 %v11600, %v11584
  %v11793 = vpack.c.b16 %v11601, %v11585
  %v11794 = vpack.c.b16 %v11618, %v11602
  %v11795 = vpack.c.b16 %v11619, %v11603
  %v11796 = vpack.c.b16 %v11620, %v11604
  %v11797 = vpack.c.b16 %v11621, %v11605
  %v11798 = vpack.c.b16 %v11622, %v11606
  %v11799 = vpack.c.b16 %v11623, %v11607
  %v11800 = vpack.c.b16 %v11624, %v11608
  %v11801 = vpack.c.b16 %v11625, %v11609
  %v11802 = vpack.c.b16 %v11626, %v11610
  %v11803 = vpack.c.b16 %v11627, %v11611
  %v11804 = vpack.c.b16 %v11628, %v11612
  %v11805 = vpack.c.b16 %v11629, %v11613
  %v11806 = vpack.c.b16 %v11630, %v11614
  %v11807 = vpack.c.b16 %v11631, %v11615
  %v11808 = vpack.c.b16 %v11632, %v11616
  %v11809 = vpack.c.b16 %v11633, %v11617
  %v11810 = vpack.c.b16 %v11650, %v11634
  %v11811 = vpack.c.b16 %v11651, %v11635
  %v11812 = vpack.c.b16 %v11652, %v11636
  %v11813 = vpack.c.b16 %v11653, %v11637
  %v11814 = vpack.c.b16 %v11654, %v11638
  %v11815 = vpack.c.b16 %v11655, %v11639
  %v11816 = vpack.c.b16 %v11656, %v11640
  %v11817 = vpack.c.b16 %v11657, %v11641
  %v11818 = vpack.c.b16 %v11658, %v11642
  %v11819 = vpack.c.b16 %v11659, %v11643
  %v11820 = vpack.c.b16 %v11660, %v11644
  %v11821 = vpack.c.b16 %v11661, %v11645
  %v11822 = vpack.c.b16 %v11662, %v11646
  %v11823 = vpack.c.b16 %v11663, %v11647
  %v11824 = vpack.c.b16 %v11664, %v11648
  %v11825 = vpack.c.b16 %v11665, %v11649
  %v11826 = vpack.c.b16 %v11682, %v11666
  %v11827 = vpack.c.b16 %v11683, %v11667
  %v11828 = vpack.c.b16 %v11684, %v11668
  %v11829 = vpack.c.b16 %v11685, %v11669
  %v11830 = vpack.c.b16 %v11686, %v11670
  %v11831 = vpack.c.b16 %v11687, %v11671
  %v11832 = vpack.c.b16 %v11688, %v11672
  %v11833 = vpack.c.b16 %v11689, %v11673
  %v11834 = vpack.c.b16 %v11690, %v11674
  %v11835 = vpack.c.b16 %v11691, %v11675
  %v11836 = vpack.c.b16 %v11692, %v11676
  %v11837 = vpack.c.b16 %v11693, %v11677
  %v11838 = vpack.c.b16 %v11694, %v11678
  %v11839 = vpack.c.b16 %v11695, %v11679
  %v11840 = vpack.c.b16 %v11696, %v11680
  %v11841 = vpack.c.b16 %v11697, %v11681
  %v11842 = vpack.c.b16 %v11714, %v11698
  %v11843 = vpack.c.b16 %v11715, %v11699
  %v11844 = vpack.c.b16 %v11716, %v11700
  %v11845 = vpack.c.b16 %v11717, %v11701
  %v11846 = vpack.c.b16 %v11718, %v11702
  %v11847 = vpack.c.b16 %v11719, %v11703
  %v11848 = vpack.c.b16 %v11720, %v11704
  %v11849 = vpack.c.b16 %v11721, %v11705
  %v11850 = vpack.c.b16 %v11722, %v11706
  %v11851 = vpack.c.b16 %v11723, %v11707
  %v11852 = vpack.c.b16 %v11724, %v11708
  %v11853 = vpack.c.b16 %v11725, %v11709
  %v11854 = vpack.c.b16 %v11726, %v11710
  %v11855 = vpack.c.b16 %v11727, %v11711
  %v11856 = vpack.c.b16 %v11728, %v11712
  %v11857 = vpack.c.b16 %v11729, %v11713
  %11986 = vmatprep.subr.bf16.mxu0 %v11843
  %11987 = vmatpush1.bf16.msra.mxu0 %v11842
  %11988 = vmatprep.subr.bf16.mxu0 %v11827
  %11989 = vmatpush1.bf16.msra.mxu0 %v11826
  %11990 = vmatprep.subr.bf16.mxu0 %v11811
  %11991 = vmatpush1.bf16.msra.mxu0 %v11810
  %11992 = vmatprep.subr.bf16.mxu0 %v11795
  %11993 = vmatpush1.bf16.msra.mxu0 %v11794
  %11994 = vmatprep.subr.bf16.mxu0 %v11779
  %11995 = vmatpush1.bf16.msra.mxu0 %v11778
  %11996 = vmatprep.subr.bf16.mxu0 %v11763
  %11997 = vmatpush1.bf16.msra.mxu0 %v11762
  %11998 = vmatprep.subr.bf16.mxu0 %v11747
  %11999 = vmatpush1.bf16.msra.mxu0 %v11746
  %12000 = vmatprep.subr.bf16.mxu0 %v11731
  %12001 = vmatpush1.bf16.msra.mxu0 %v11730
  %12002 = vmatprep.subr.bf16.mxu0 0
  %12003 = vmatpush2.bf16.msra.mxu0 0
  %12004 = vmatprep.subr.bf16.mxu0 0
  %12005 = vmatpush2.bf16.msra.mxu0 0
  %12006 = vmatprep.subr.bf16.mxu0 0
  %12007 = vmatpush2.bf16.msra.mxu0 0
  %12008 = vmatprep.subr.bf16.mxu0 0
  %12009 = vmatpush2.bf16.msra.mxu0 0
  %12010 = vmatprep.subr.bf16.mxu0 0
  %12011 = vmatpush2.bf16.msra.mxu0 0
  %12012 = vmatprep.subr.bf16.mxu0 0
  %12013 = vmatpush2.bf16.msra.mxu0 0
  %12014 = vmatprep.subr.bf16.mxu0 0
  %12015 = vmatpush2.bf16.msra.mxu0 0
  %12016 = vmatprep.subr.bf16.mxu0 0
  %12017 = vmatpush2.bf16.msra.mxu0 0
  %12018 = vmatprep.mubr.bf16.mxu0 0
  %12019 = vmatmul.mubr.bf16.gmra.mxu0 %v11261
  %v12020 = vpop.f32.mrf.mxu0
  %v12021 = vadd.f32 %v11269, %v12020
  %v12022 = vpop.f32.mrf.mxu0
  %v12023 = vadd.f32 %v11273, %v12022
  %v12024 = vpop.f32.mrf.mxu0
  %v12025 = vpop.f32.mrf.mxu0
  %12026 = vdwg.mxu0
  %12027 = vmatprep.subr.bf16.mxu0 %v11845
  %12028 = vmatpush1.bf16.msra.mxu0 %v11844
  %12029 = vmatprep.subr.bf16.mxu0 %v11829
  %12030 = vmatpush1.bf16.msra.mxu0 %v11828
  %12031 = vmatprep.subr.bf16.mxu0 %v11813
  %12032 = vmatpush1.bf16.msra.mxu0 %v11812
  %12033 = vmatprep.subr.bf16.mxu0 %v11797
  %12034 = vmatpush1.bf16.msra.mxu0 %v11796
  %12035 = vmatprep.subr.bf16.mxu0 %v11781
  %12036 = vmatpush1.bf16.msra.mxu0 %v11780
  %12037 = vmatprep.subr.bf16.mxu0 %v11765
  %12038 = vmatpush1.bf16.msra.mxu0 %v11764
  %12039 = vmatprep.subr.bf16.mxu0 %v11749
  %12040 = vmatpush1.bf16.msra.mxu0 %v11748
  %12041 = vmatprep.subr.bf16.mxu0 %v11733
  %12042 = vmatpush1.bf16.msra.mxu0 %v11732
  %12043 = vmatprep.subr.bf16.mxu0 0
  %12044 = vmatpush2.bf16.msra.mxu0 0
  %12045 = vmatprep.subr.bf16.mxu0 0
  %12046 = vmatpush2.bf16.msra.mxu0 0
  %12047 = vmatprep.subr.bf16.mxu0 0
  %12048 = vmatpush2.bf16.msra.mxu0 0
  %12049 = vmatprep.subr.bf16.mxu0 0
  %12050 = vmatpush2.bf16.msra.mxu0 0
  %12051 = vmatprep.subr.bf16.mxu0 0
  %12052 = vmatpush2.bf16.msra.mxu0 0
  %12053 = vmatprep.subr.bf16.mxu0 0
  %12054 = vmatpush2.bf16.msra.mxu0 0
  %12055 = vmatprep.subr.bf16.mxu0 0
  %12056 = vmatpush2.bf16.msra.mxu0 0
  %12057 = vmatprep.subr.bf16.mxu0 0
  %12058 = vmatpush2.bf16.msra.mxu0 0
  %12059 = vmatprep.mubr.bf16.mxu0 0
  %12060 = vmatmul.mubr.bf16.gmra.mxu0 %v11261
  %v12061 = vpop.f32.mrf.mxu0
  %v12062 = vadd.f32 %v11277, %v12061
  %v12063 = vpop.f32.mrf.mxu0
  %v12064 = vadd.f32 %v11281, %v12063
  %v12065 = vpop.f32.mrf.mxu0
  %v12066 = vpop.f32.mrf.mxu0
  %12067 = vdwg.mxu0
  %12068 = vmatprep.subr.bf16.mxu0 %v11847
  %12069 = vmatpush1.bf16.msra.mxu0 %v11846
  %12070 = vmatprep.subr.bf16.mxu0 %v11831
  %12071 = vmatpush1.bf16.msra.mxu0 %v11830
  %12072 = vmatprep.subr.bf16.mxu0 %v11815
  %12073 = vmatpush1.bf16.msra.mxu0 %v11814
  %12074 = vmatprep.subr.bf16.mxu0 %v11799
  %12075 = vmatpush1.bf16.msra.mxu0 %v11798
  %12076 = vmatprep.subr.bf16.mxu0 %v11783
  %12077 = vmatpush1.bf16.msra.mxu0 %v11782
  %12078 = vmatprep.subr.bf16.mxu0 %v11767
  %12079 = vmatpush1.bf16.msra.mxu0 %v11766
  %12080 = vmatprep.subr.bf16.mxu0 %v11751
  %12081 = vmatpush1.bf16.msra.mxu0 %v11750
  %12082 = vmatprep.subr.bf16.mxu0 %v11735
  %12083 = vmatpush1.bf16.msra.mxu0 %v11734
  %12084 = vmatprep.subr.bf16.mxu0 0
  %12085 = vmatpush2.bf16.msra.mxu0 0
  %12086 = vmatprep.subr.bf16.mxu0 0
  %12087 = vmatpush2.bf16.msra.mxu0 0
  %12088 = vmatprep.subr.bf16.mxu0 0
  %12089 = vmatpush2.bf16.msra.mxu0 0
  %12090 = vmatprep.subr.bf16.mxu0 0
  %12091 = vmatpush2.bf16.msra.mxu0 0
  %12092 = vmatprep.subr.bf16.mxu0 0
  %12093 = vmatpush2.bf16.msra.mxu0 0
  %12094 = vmatprep.subr.bf16.mxu0 0
  %12095 = vmatpush2.bf16.msra.mxu0 0
  %12096 = vmatprep.subr.bf16.mxu0 0
  %12097 = vmatpush2.bf16.msra.mxu0 0
  %12098 = vmatprep.subr.bf16.mxu0 0
  %12099 = vmatpush2.bf16.msra.mxu0 0
  %12100 = vmatprep.mubr.bf16.mxu0 0
  %12101 = vmatmul.mubr.bf16.gmra.mxu0 %v11261
  %v12102 = vpop.f32.mrf.mxu0
  %v12103 = vadd.f32 %v11285, %v12102
  %v12104 = vpop.f32.mrf.mxu0
  %v12105 = vadd.f32 %v11289, %v12104
  %v12106 = vpop.f32.mrf.mxu0
  %v12107 = vpop.f32.mrf.mxu0
  %12108 = vdwg.mxu0
  %12109 = vmatprep.subr.bf16.mxu0 %v11849
  %12110 = vmatpush1.bf16.msra.mxu0 %v11848
  %12111 = vmatprep.subr.bf16.mxu0 %v11833
  %12112 = vmatpush1.bf16.msra.mxu0 %v11832
  %12113 = vmatprep.subr.bf16.mxu0 %v11817
  %12114 = vmatpush1.bf16.msra.mxu0 %v11816
  %12115 = vmatprep.subr.bf16.mxu0 %v11801
  %12116 = vmatpush1.bf16.msra.mxu0 %v11800
  %12117 = vmatprep.subr.bf16.mxu0 %v11785
  %12118 = vmatpush1.bf16.msra.mxu0 %v11784
  %12119 = vmatprep.subr.bf16.mxu0 %v11769
  %12120 = vmatpush1.bf16.msra.mxu0 %v11768
  %12121 = vmatprep.subr.bf16.mxu0 %v11753
  %12122 = vmatpush1.bf16.msra.mxu0 %v11752
  %12123 = vmatprep.subr.bf16.mxu0 %v11737
  %12124 = vmatpush1.bf16.msra.mxu0 %v11736
  %12125 = vmatprep.subr.bf16.mxu0 0
  %12126 = vmatpush2.bf16.msra.mxu0 0
  %12127 = vmatprep.subr.bf16.mxu0 0
  %12128 = vmatpush2.bf16.msra.mxu0 0
  %12129 = vmatprep.subr.bf16.mxu0 0
  %12130 = vmatpush2.bf16.msra.mxu0 0
  %12131 = vmatprep.subr.bf16.mxu0 0
  %12132 = vmatpush2.bf16.msra.mxu0 0
  %12133 = vmatprep.subr.bf16.mxu0 0
  %12134 = vmatpush2.bf16.msra.mxu0 0
  %12135 = vmatprep.subr.bf16.mxu0 0
  %12136 = vmatpush2.bf16.msra.mxu0 0
  %12137 = vmatprep.subr.bf16.mxu0 0
  %12138 = vmatpush2.bf16.msra.mxu0 0
  %12139 = vmatprep.subr.bf16.mxu0 0
  %12140 = vmatpush2.bf16.msra.mxu0 0
  %12141 = vmatprep.mubr.bf16.mxu0 0
  %12142 = vmatmul.mubr.bf16.gmra.mxu0 %v11261
  %v12143 = vpop.f32.mrf.mxu0
  %v12144 = vadd.f32 %v11293, %v12143
  %v12145 = vpop.f32.mrf.mxu0
  %v12146 = vadd.f32 %v11297, %v12145
  %v12147 = vpop.f32.mrf.mxu0
  %v12148 = vpop.f32.mrf.mxu0
  %12149 = vdwg.mxu0
  %12150 = vmatprep.subr.bf16.mxu0 %v11851
  %12151 = vmatpush1.bf16.msra.mxu0 %v11850
  %12152 = vmatprep.subr.bf16.mxu0 %v11835
  %12153 = vmatpush1.bf16.msra.mxu0 %v11834
  %12154 = vmatprep.subr.bf16.mxu0 %v11819
  %12155 = vmatpush1.bf16.msra.mxu0 %v11818
  %12156 = vmatprep.subr.bf16.mxu0 %v11803
  %12157 = vmatpush1.bf16.msra.mxu0 %v11802
  %12158 = vmatprep.subr.bf16.mxu0 %v11787
  %12159 = vmatpush1.bf16.msra.mxu0 %v11786
  %12160 = vmatprep.subr.bf16.mxu0 %v11771
  %12161 = vmatpush1.bf16.msra.mxu0 %v11770
  %12162 = vmatprep.subr.bf16.mxu0 %v11755
  %12163 = vmatpush1.bf16.msra.mxu0 %v11754
  %12164 = vmatprep.subr.bf16.mxu0 %v11739
  %12165 = vmatpush1.bf16.msra.mxu0 %v11738
  %12166 = vmatprep.subr.bf16.mxu0 0
  %12167 = vmatpush2.bf16.msra.mxu0 0
  %12168 = vmatprep.subr.bf16.mxu0 0
  %12169 = vmatpush2.bf16.msra.mxu0 0
  %12170 = vmatprep.subr.bf16.mxu0 0
  %12171 = vmatpush2.bf16.msra.mxu0 0
  %12172 = vmatprep.subr.bf16.mxu0 0
  %12173 = vmatpush2.bf16.msra.mxu0 0
  %12174 = vmatprep.subr.bf16.mxu0 0
  %12175 = vmatpush2.bf16.msra.mxu0 0
  %12176 = vmatprep.subr.bf16.mxu0 0
  %12177 = vmatpush2.bf16.msra.mxu0 0
  %12178 = vmatprep.subr.bf16.mxu0 0
  %12179 = vmatpush2.bf16.msra.mxu0 0
  %12180 = vmatprep.subr.bf16.mxu0 0
  %12181 = vmatpush2.bf16.msra.mxu0 0
  %12182 = vmatprep.mubr.bf16.mxu0 0
  %12183 = vmatmul.mubr.bf16.gmra.mxu0 %v11261
  %v12184 = vpop.f32.mrf.mxu0
  %v12185 = vadd.f32 %v11301, %v12184
  %v12186 = vpop.f32.mrf.mxu0
  %v12187 = vadd.f32 %v11305, %v12186
  %v12188 = vpop.f32.mrf.mxu0
  %v12189 = vpop.f32.mrf.mxu0
  %12190 = vdwg.mxu0
  %12191 = vmatprep.subr.bf16.mxu0 %v11853
  %12192 = vmatpush1.bf16.msra.mxu0 %v11852
  %12193 = vmatprep.subr.bf16.mxu0 %v11837
  %12194 = vmatpush1.bf16.msra.mxu0 %v11836
  %12195 = vmatprep.subr.bf16.mxu0 %v11821
  %12196 = vmatpush1.bf16.msra.mxu0 %v11820
  %12197 = vmatprep.subr.bf16.mxu0 %v11805
  %12198 = vmatpush1.bf16.msra.mxu0 %v11804
  %12199 = vmatprep.subr.bf16.mxu0 %v11789
  %12200 = vmatpush1.bf16.msra.mxu0 %v11788
  %12201 = vmatprep.subr.bf16.mxu0 %v11773
  %12202 = vmatpush1.bf16.msra.mxu0 %v11772
  %12203 = vmatprep.subr.bf16.mxu0 %v11757
  %12204 = vmatpush1.bf16.msra.mxu0 %v11756
  %12205 = vmatprep.subr.bf16.mxu0 %v11741
  %12206 = vmatpush1.bf16.msra.mxu0 %v11740
  %12207 = vmatprep.subr.bf16.mxu0 0
  %12208 = vmatpush2.bf16.msra.mxu0 0
  %12209 = vmatprep.subr.bf16.mxu0 0
  %12210 = vmatpush2.bf16.msra.mxu0 0
  %12211 = vmatprep.subr.bf16.mxu0 0
  %12212 = vmatpush2.bf16.msra.mxu0 0
  %12213 = vmatprep.subr.bf16.mxu0 0
  %12214 = vmatpush2.bf16.msra.mxu0 0
  %12215 = vmatprep.subr.bf16.mxu0 0
  %12216 = vmatpush2.bf16.msra.mxu0 0
  %12217 = vmatprep.subr.bf16.mxu0 0
  %12218 = vmatpush2.bf16.msra.mxu0 0
  %12219 = vmatprep.subr.bf16.mxu0 0
  %12220 = vmatpush2.bf16.msra.mxu0 0
  %12221 = vmatprep.subr.bf16.mxu0 0
  %12222 = vmatpush2.bf16.msra.mxu0 0
  %12223 = vmatprep.mubr.bf16.mxu0 0
  %12224 = vmatmul.mubr.bf16.gmra.mxu0 %v11261
  %v12225 = vpop.f32.mrf.mxu0
  %v12226 = vadd.f32 %v11309, %v12225
  %v12227 = vpop.f32.mrf.mxu0
  %v12228 = vadd.f32 %v11313, %v12227
  %v12229 = vpop.f32.mrf.mxu0
  %v12230 = vpop.f32.mrf.mxu0
  %12231 = vdwg.mxu0
  %12232 = vmatprep.subr.bf16.mxu0 %v11855
  %12233 = vmatpush1.bf16.msra.mxu0 %v11854
  %12234 = vmatprep.subr.bf16.mxu0 %v11839
  %12235 = vmatpush1.bf16.msra.mxu0 %v11838
  %12236 = vmatprep.subr.bf16.mxu0 %v11823
  %12237 = vmatpush1.bf16.msra.mxu0 %v11822
  %12238 = vmatprep.subr.bf16.mxu0 %v11807
  %12239 = vmatpush1.bf16.msra.mxu0 %v11806
  %12240 = vmatprep.subr.bf16.mxu0 %v11791
  %12241 = vmatpush1.bf16.msra.mxu0 %v11790
  %12242 = vmatprep.subr.bf16.mxu0 %v11775
  %12243 = vmatpush1.bf16.msra.mxu0 %v11774
  %12244 = vmatprep.subr.bf16.mxu0 %v11759
  %12245 = vmatpush1.bf16.msra.mxu0 %v11758
  %12246 = vmatprep.subr.bf16.mxu0 %v11743
  %12247 = vmatpush1.bf16.msra.mxu0 %v11742
  %12248 = vmatprep.subr.bf16.mxu0 0
  %12249 = vmatpush2.bf16.msra.mxu0 0
  %12250 = vmatprep.subr.bf16.mxu0 0
  %12251 = vmatpush2.bf16.msra.mxu0 0
  %12252 = vmatprep.subr.bf16.mxu0 0
  %12253 = vmatpush2.bf16.msra.mxu0 0
  %12254 = vmatprep.subr.bf16.mxu0 0
  %12255 = vmatpush2.bf16.msra.mxu0 0
  %12256 = vmatprep.subr.bf16.mxu0 0
  %12257 = vmatpush2.bf16.msra.mxu0 0
  %12258 = vmatprep.subr.bf16.mxu0 0
  %12259 = vmatpush2.bf16.msra.mxu0 0
  %12260 = vmatprep.subr.bf16.mxu0 0
  %12261 = vmatpush2.bf16.msra.mxu0 0
  %12262 = vmatprep.subr.bf16.mxu0 0
  %12263 = vmatpush2.bf16.msra.mxu0 0
  %12264 = vmatprep.mubr.bf16.mxu0 0
  %12265 = vmatmul.mubr.bf16.gmra.mxu0 %v11261
  %v12266 = vpop.f32.mrf.mxu0
  %v12267 = vadd.f32 %v11317, %v12266
  %v12268 = vpop.f32.mrf.mxu0
  %v12269 = vadd.f32 %v11321, %v12268
  %v12270 = vpop.f32.mrf.mxu0
  %v12271 = vpop.f32.mrf.mxu0
  %12272 = vdwg.mxu0
  %12273 = vmatprep.subr.bf16.mxu0 %v11857
  %12274 = vmatpush1.bf16.msra.mxu0 %v11856
  %12275 = vmatprep.subr.bf16.mxu0 %v11841
  %12276 = vmatpush1.bf16.msra.mxu0 %v11840
  %12277 = vmatprep.subr.bf16.mxu0 %v11825
  %12278 = vmatpush1.bf16.msra.mxu0 %v11824
  %12279 = vmatprep.subr.bf16.mxu0 %v11809
  %12280 = vmatpush1.bf16.msra.mxu0 %v11808
  %12281 = vmatprep.subr.bf16.mxu0 %v11793
  %12282 = vmatpush1.bf16.msra.mxu0 %v11792
  %12283 = vmatprep.subr.bf16.mxu0 %v11777
  %12284 = vmatpush1.bf16.msra.mxu0 %v11776
  %12285 = vmatprep.subr.bf16.mxu0 %v11761
  %12286 = vmatpush1.bf16.msra.mxu0 %v11760
  %12287 = vmatprep.subr.bf16.mxu0 %v11745
  %12288 = vmatpush1.bf16.msra.mxu0 %v11744
  %12289 = vmatprep.subr.bf16.mxu0 0
  %12290 = vmatpush2.bf16.msra.mxu0 0
  %12291 = vmatprep.subr.bf16.mxu0 0
  %12292 = vmatpush2.bf16.msra.mxu0 0
  %12293 = vmatprep.subr.bf16.mxu0 0
  %12294 = vmatpush2.bf16.msra.mxu0 0
  %12295 = vmatprep.subr.bf16.mxu0 0
  %12296 = vmatpush2.bf16.msra.mxu0 0
  %12297 = vmatprep.subr.bf16.mxu0 0
  %12298 = vmatpush2.bf16.msra.mxu0 0
  %12299 = vmatprep.subr.bf16.mxu0 0
  %12300 = vmatpush2.bf16.msra.mxu0 0
  %12301 = vmatprep.subr.bf16.mxu0 0
  %12302 = vmatpush2.bf16.msra.mxu0 0
  %12303 = vmatprep.subr.bf16.mxu0 0
  %12304 = vmatpush2.bf16.msra.mxu0 0
  %12305 = vmatprep.mubr.bf16.mxu0 0
  %12306 = vmatmul.mubr.bf16.gmra.mxu0 %v11261
  %v12307 = vpop.f32.mrf.mxu0
  %v12308 = vadd.f32 %v11325, %v12307
  %v12309 = vpop.f32.mrf.mxu0
  %v12310 = vadd.f32 %v11329, %v12309
  %v12311 = vpop.f32.mrf.mxu0
  %v12312 = vpop.f32.mrf.mxu0
  %12313 = vdwg.mxu0
  %12314 = vst [vmem:[%s21] sm:$0xff] %v12021
  %12315 = vst [vmem:[%s21 + $0x8] sm:$0xff] %v12023
  %12316 = vst [vmem:[%s21 + $0x10] sm:$0xff] %v12062
  %12317 = vst [vmem:[%s21 + $0x18] sm:$0xff] %v12064
  %12318 = vst [vmem:[%s21 + $0x20] sm:$0xff] %v12103
  %12319 = vst [vmem:[%s21 + $0x28] sm:$0xff] %v12105
  %12320 = vst [vmem:[%s21 + $0x30] sm:$0xff] %v12144
  %12321 = vst [vmem:[%s21 + $0x38] sm:$0xff] %v12146
  %12322 = vst [vmem:[%s21 + $0x40] sm:$0xff] %v12185
  %12323 = vst [vmem:[%s21 + $0x48] sm:$0xff] %v12187
  %12324 = vst [vmem:[%s21 + $0x50] sm:$0xff] %v12226
  %12325 = vst [vmem:[%s21 + $0x58] sm:$0xff] %v12228
  %12326 = vst [vmem:[%s21 + $0x60] sm:$0xff] %v12267
  %12327 = vst [vmem:[%s21 + $0x68] sm:$0xff] %v12269
  %12328 = vst [vmem:[%s21 + $0x70] sm:$0xff] %v12308
  %12329 = vst [vmem:[%s21 + $0x78] sm:$0xff] %v12310
  %v12330 = vld [vmem:[%s7] sm:$0xf]
  %v12331 = vld [vmem:[%s7 + $0x4] sm:$0xf]
  %v12332 = vld [vmem:[%s7 + $0x8] sm:$0xf]
  %v12333 = vld [vmem:[%s7 + $0xc] sm:$0xf]
  %v12334 = vld [vmem:[%s7 + $0x10] sm:$0xf]
  %v12335 = vld [vmem:[%s7 + $0x14] sm:$0xf]
  %v12336 = vld [vmem:[%s7 + $0x18] sm:$0xf]
  %v12337 = vld [vmem:[%s7 + $0x1c] sm:$0xf]
  %v12338 = vld [vmem:[%s7 + $0x20] sm:$0xf]
  %v12339 = vld [vmem:[%s7 + $0x24] sm:$0xf]
  %v12340 = vld [vmem:[%s7 + $0x28] sm:$0xf]
  %v12341 = vld [vmem:[%s7 + $0x2c] sm:$0xf]
  %v12342 = vld [vmem:[%s7 + $0x30] sm:$0xf]
  %v12343 = vld [vmem:[%s7 + $0x34] sm:$0xf]
  %v12344 = vld [vmem:[%s7 + $0x38] sm:$0xf]
  %v12345 = vld [vmem:[%s7 + $0x3c] sm:$0xf]
  %v12346 = vld [vmem:[%s7 + $0x40] sm:$0xf]
  %v12347 = vld [vmem:[%s7 + $0x44] sm:$0xf]
  %v12348 = vld [vmem:[%s7 + $0x48] sm:$0xf]
  %v12349 = vld [vmem:[%s7 + $0x4c] sm:$0xf]
  %v12350 = vld [vmem:[%s7 + $0x50] sm:$0xf]
  %v12351 = vld [vmem:[%s7 + $0x54] sm:$0xf]
  %v12352 = vld [vmem:[%s7 + $0x58] sm:$0xf]
  %v12353 = vld [vmem:[%s7 + $0x5c] sm:$0xf]
  %v12354 = vpack.c.bf16 %v11131, %v11131
  %v12355 = vpack.c.bf16 %v11132, %v11132
  %v12356 = vld [vmem:[%s12] sm:$0x1]
  %v12358 = vlaneseq
  %v12359 = vshrl.u32 %v12358, 7
  %v12360 = vsub.s32 0, %v12359
  %v12361 = vrot.slane %v12356, %v12360
  %v12387 = vunpack.c.l.b16 %v12330
  %v12388 = vunpack.c.l.b16 %v12331
  %v12389 = vunpack.c.l.b16 %v12332
  %v12390 = vunpack.c.l.b16 %v12333
  %v12391 = vunpack.c.l.b16 %v12334
  %v12392 = vunpack.c.l.b16 %v12335
  %v12393 = vunpack.c.l.b16 %v12336
  %v12394 = vunpack.c.l.b16 %v12337
  %v12395 = vunpack.c.l.b16 %v12338
  %v12396 = vunpack.c.l.b16 %v12339
  %v12397 = vunpack.c.l.b16 %v12340
  %v12398 = vunpack.c.l.b16 %v12341
  %v12399 = vunpack.c.l.b16 %v12342
  %v12400 = vunpack.c.l.b16 %v12343
  %v12401 = vunpack.c.l.b16 %v12344
  %v12402 = vunpack.c.l.b16 %v12345
  %v12403 = vunpack.c.l.b16 %v12346
  %v12404 = vunpack.c.l.b16 %v12347
  %v12405 = vunpack.c.l.b16 %v12348
  %v12406 = vunpack.c.l.b16 %v12349
  %v12407 = vunpack.c.l.b16 %v12350
  %v12408 = vunpack.c.l.b16 %v12351
  %v12409 = vunpack.c.l.b16 %v12352
  %v12410 = vunpack.c.l.b16 %v12353
  %v12411 = vpack.c.b16 %v12388, %v12387
  %v12412 = vpack.c.b16 %v12390, %v12389
  %v12413 = vpack.c.b16 %v12392, %v12391
  %v12414 = vpack.c.b16 %v12394, %v12393
  %v12415 = vpack.c.b16 %v12396, %v12395
  %v12416 = vpack.c.b16 %v12398, %v12397
  %v12417 = vpack.c.b16 %v12400, %v12399
  %v12418 = vpack.c.b16 %v12402, %v12401
  %v12419 = vpack.c.b16 %v12404, %v12403
  %v12420 = vpack.c.b16 %v12406, %v12405
  %v12421 = vpack.c.b16 %v12408, %v12407
  %v12422 = vpack.c.b16 %v12410, %v12409
  %v12436 = vsel %vm1553, %v12355, 0
  %12438 = vmatprep.subr.bf16.mxu0 0
  %12439 = vmatpush1.bf16.msra.mxu0 %v12418
  %12440 = vmatprep.subr.bf16.mxu0 0
  %12441 = vmatpush1.bf16.msra.mxu0 %v12417
  %12442 = vmatprep.subr.bf16.mxu0 0
  %12443 = vmatpush1.bf16.msra.mxu0 %v12416
  %12444 = vmatprep.subr.bf16.mxu0 0
  %12445 = vmatpush1.bf16.msra.mxu0 %v12415
  %12446 = vmatprep.subr.bf16.mxu0 0
  %12447 = vmatpush1.bf16.msra.mxu0 %v12414
  %12448 = vmatprep.subr.bf16.mxu0 0
  %12449 = vmatpush1.bf16.msra.mxu0 %v12413
  %12450 = vmatprep.subr.bf16.mxu0 0
  %12451 = vmatpush1.bf16.msra.mxu0 %v12412
  %12452 = vmatprep.subr.bf16.mxu0 0
  %12453 = vmatpush1.bf16.msra.mxu0 %v12411
  %12454 = vmatprep.subr.bf16.mxu0 0
  %12455 = vmatpush2.bf16.msra.mxu0 0
  %12456 = vmatprep.subr.bf16.mxu0 0
  %12457 = vmatpush2.bf16.msra.mxu0 0
  %12458 = vmatprep.subr.bf16.mxu0 0
  %12459 = vmatpush2.bf16.msra.mxu0 0
  %12460 = vmatprep.subr.bf16.mxu0 0
  %12461 = vmatpush2.bf16.msra.mxu0 0
  %12462 = vmatprep.subr.bf16.mxu0 0
  %12463 = vmatpush2.bf16.msra.mxu0 %v12422
  %12464 = vmatprep.subr.bf16.mxu0 0
  %12465 = vmatpush2.bf16.msra.mxu0 %v12421
  %12466 = vmatprep.subr.bf16.mxu0 0
  %12467 = vmatpush2.bf16.msra.mxu0 %v12420
  %12468 = vmatprep.subr.bf16.mxu0 0
  %12469 = vmatpush2.bf16.msra.mxu0 %v12419
  %12470 = vmatprep.mubr.bf16.mxu0 %v12436
  %12471 = vmatmul.mubr.bf16.gmra.mxu0 %v12354
  %v12472 = vpop.f32.mrf.mxu0
  %v12473 = vadd.f32 %v12361, %v12472
  %v12474 = vpop.f32.mrf.mxu0
  %v12475 = vpop.f32.mrf.mxu0
  %v12476 = vpop.f32.mrf.mxu0
  %12477 = vdwg.mxu0
  %v12478 = vmul.f32 %v12473, %v381
  %v12479 = vadd.f32 %v12478, %v226
  %12481 = vrot.lane.b32.xlu0 %v6476, 80
  %v12482 = vpop.permute.xlu0 %12481
  %12485 = vrot.lane.b32.xlu0 %v12479, 32
  %v12486 = vpop.permute.xlu0 %12485
  %v12488 = vsel %vm5805, %v6391, %v12482
  %v12489 = vsel %vm4757, %v12482, %v12486
  %v12490 = vsel %vm5805, %v12489, 0.0
  %12491 = vst [vmem:[%s20] sm:$0xff] %v12488
  %12492 = vst [vmem:[%s20 + $0x8] sm:$0xff] %v12490
  // Predicated region
  $region82: #{forward.1} parent=0 // pred_check
    _
  $region83: #{forward.1} parent=0 // pred_check_branch
    %12494 = sbr.rel (0) target = $region85
  $region84: #{forward.1} parent=0 // pred_region
    _
  $region85: #{forward.1} parent=0 // pred_fallthru
    _
  // Predicated region
  $region86: #{forward.1} parent=0 // pred_check
    _
  $region87: #{forward.1} parent=0 // pred_check_branch
    %12496 = sbr.rel (0) target = $region89
  $region88: #{forward.1} parent=0 // pred_region
    _
  $region89: #{forward.1} parent=0 // pred_fallthru
    _
  // Predicated region
  $region90: #{forward.1} parent=0 // pred_check
    _
  $region91: #{forward.1} parent=0 // pred_check_branch
    %12498 = sbr.rel (0) target = $region93
  $region92: #{forward.1} parent=0 // pred_region
    _
  $region93: #{forward.1} parent=0 // pred_fallthru
    _
  // Predicated region
  $region94: #{forward.1} parent=0 // pred_check
    _
  $region95: #{forward.1} parent=0 // pred_check_branch
    %12500 = sbr.rel (0) target = $region97
  $region96: #{forward.1} parent=0 // pred_region
    _
  $region97: #{forward.1} parent=0 // pred_fallthru
    _

</llo_original>
